<compile_context>
chip_gen: v5e
topology: v5e:2x2
jax: 0.10.0
libtpu: 0.0.40
codegen_flags: <defaults>
</compile_context>

<pallas_src>
import jax
import jax.numpy as jnp
from jax import lax
from jax.experimental import pallas as pl
from jax.experimental.pallas import tpu as pltpu

# ----------------------------- config ---------------------------------------
B = 2                      # batch
C = 128                    # stand-in for 2048 backbone channels
C8 = C // 8                # PAM query/key channels
QKV = 2 * C8 + C           # stacked q/k/v output rows (160)
FEATS = 32                 # stand-in for 256
NUM_PARTS = 8
F8 = NUM_PARTS * FEATS     # 256 (lane-dense head output width)
EPS = 1e-5                 # PyTorch BatchNorm default eps

H_IN, W_IN = 48, 16        # input image spatial
H2, W2 = 24, 8             # p2/p3 branch spatial
N2 = H2 * W2               # 192
N1 = (H2 // 2) * (W2 // 2)  # 48 (p1 branch, last_stride=2)


# --------------------------- Pallas kernels ----------------------------------
def _mgn_main_kernel(gam_ref, xp_ref, xpp_ref, wbb_ref, wbr_ref,
                     wqkv_ref, bqkv_ref, z_ref):
    """Fused MGN trunk for ONE batch element (grid=(B,)).

    backbone 1x1 conv (3 VPU FMAs) -> stacked branch 1x1 convs ->
    3x fused DANet CAM+PAM (stacked q/k/v matmul, exact softmax) ->
    all 8 MGN average pools -> write pooled (C, 8) column block.
    """
    xp = xp_ref[0]            # (3, N2)   2x2-pooled input
    xpp = xpp_ref[0]          # (3, N1)   4x4-pooled input (p1, last_stride=2)

    # ---- backbone stand-in 1x1 conv: K=3 done as 3 VPU FMAs (no MXU K-pad) ----
    feat = (wbb_ref[0] * xp[0:1, :] + wbb_ref[1] * xp[1:2, :]
            + wbb_ref[2] * xp[2:3, :])                               # (C, N2)
    feat_s = (wbb_ref[0] * xpp[0:1, :] + wbb_ref[1] * xpp[1:2, :]
              + wbb_ref[2] * xpp[2:3, :])                            # (C, N1)

    # ---- branch 1x1 convs from ONE stacked (3C, C) weight ----
    wbr = wbr_ref[...]
    p1x = jnp.dot(wbr[0:C], feat_s, preferred_element_type=jnp.float32)      # (C, N1)
    p23 = jnp.dot(wbr[C:3 * C], feat, preferred_element_type=jnp.float32)    # (2C, N2)
    p2x = p23[0:C]                                                           # (C, N2)
    p3x = p23[C:2 * C]                                                       # (C, N2)

    def cam_pam_pool(j, x):
        # Fused DANet CAM+PAM for branch j (x is (C, N)); returns the global
        # average pool of (cam(x) + pam(x)) as a (C, 1) column.
        y = jnp.dot(wqkv_ref[j], x, preferred_element_type=jnp.float32) + bqkv_ref[j]
        q = y[0:C8]                       # (C8, N)
        k = y[C8:2 * C8]                  # (C8, N)
        v = y[2 * C8:QKV]                 # (C,  N)

        # PAM: energy[n1, n2] = sum_c q[c, n1] k[c, n2]  (== bmm(q^T, k))
        energy = lax.dot_general(q, k, (((0,), (0,)), ((), ())),
                                 preferred_element_type=jnp.float32)          # (N, N)
        pe = jnp.exp(energy - jnp.max(energy, axis=-1, keepdims=True))
        attn = pe / jnp.sum(pe, axis=-1, keepdims=True)                       # exact softmax
        # out[c, n1] = sum_n2 v[c, n2] attn[n1, n2]  (== bmm(v, attn^T), no transpose)
        pam = lax.dot_general(v, attn, (((1,), (1,)), ((), ())),
                              preferred_element_type=jnp.float32)             # (C, N)

        # CAM: channel attention with the "max - energy" trick
        ce = lax.dot_general(x, x, (((1,), (1,)), ((), ())),
                             preferred_element_type=jnp.float32)              # (C, C)
        ce = jnp.max(ce, axis=-1, keepdims=True) - ce
        cpe = jnp.exp(ce - jnp.max(ce, axis=-1, keepdims=True))
        cattn = cpe / jnp.sum(cpe, axis=-1, keepdims=True)
        cam = jnp.dot(cattn, x, preferred_element_type=jnp.float32)           # (C, N)

        # cam(x) + pam(x): each DANet module returns gamma*attn_out + x, so the
        # sum carries 2*x (verified against CAM_Module / PAM_Module definitions).
        out = gam_ref[j, 0] * pam + gam_ref[j, 1] * cam + 2.0 * x
        return jnp.mean(out, axis=-1, keepdims=True)                          # (C, 1)

    # global pools of the attended maps (parts 0..2)
    zg1 = cam_pam_pool(0, p1x)           # AvgPool2d((12, 4)) on p1_cam
    zg2 = cam_pam_pool(1, p2x)           # AvgPool2d((24, 8)) on p2_cam
    zg3 = cam_pam_pool(2, p3x)           # AvgPool2d((24, 8)) on p3_cam

    # part pools of the PRE-attention branch maps (parts 3..7)
    half = N2 // 2
    third = N2 // 3
    z3 = jnp.mean(p2x[:, 0:half], axis=-1, keepdims=True)          # AvgPool2d((12,8)) row 0
    z4 = jnp.mean(p2x[:, half:N2], axis=-1, keepdims=True)         # AvgPool2d((12,8)) row 1
    z5 = jnp.mean(p3x[:, 0:third], axis=-1, keepdims=True)         # AvgPool2d((8,8)) row 0
    z6 = jnp.mean(p3x[:, third:2 * third], axis=-1, keepdims=True)
    z7 = jnp.mean(p3x[:, 2 * third:N2], axis=-1, keepdims=True)

    # parts as columns -> (C, 8); avoids any in-kernel transposes.
    z_ref[0] = jnp.concatenate([zg1, zg2, zg3, z3, z4, z5, z6, z7], axis=-1)


def _head_kernel(z_ref, w_ref, rs_ref, rt_ref, ns_ref, nt_ref, o_ref):
    """8 dense per-part reduction convs + folded BN(eval) + ReLU + sep bnneck
    BN1d(eval); writes one lane-dense (B, 8*FEATS) tile (== eval `predict`).

    At this stand-in size (8 x (B,C)x(C,F) = 65K MACs) the per-part reduction is
    done as a VPU multiply + sublane reduce, which needs no layout shuffles of
    the (B, C, 8) pooled tensor; at production scale (C=2048, FEATS=256) switch
    to per-part MXU jnp.dot with a (B, 8, C) layout and bf16 operands.
    """
    z = z_ref[...]            # (B, C, 8)
    w = w_ref[...]            # (8, C, FEATS) dense per-part weights
    parts = []
    for p_idx in range(NUM_PARTS):
        zp = z[:, :, p_idx:p_idx + 1]                       # (B, C, 1)
        yp = jnp.sum(zp * w[p_idx][None, :, :], axis=1)     # (B, FEATS)
        parts.append(yp)
    y = jnp.concatenate(parts, axis=-1)                     # (B, 8*FEATS), lane-dense
    fg = jnp.maximum(y * rs_ref[...] + rt_ref[...], 0.0)    # reduction BN(eval) + ReLU
    o_ref[...] = fg * ns_ref[...] + nt_ref[...]             # sep bnneck BN1d(eval)


# ----------------------------- forward ---------------------------------------
def _pool2d_input(x, kh, kw):
    b_, c, h, w = x.shape
    return x.reshape(b_, c, h // kh, kh, w // kw, kw).mean(axis=(3, 5))


def mgn_forward(x_img, p):
    b_ = x_img.shape[0]
    # Input-side average pools (tiny, one XLA op each on the 18 KB input).
    # The stand-in backbone / branch convs are 1x1 (linear per-pixel), so
    # AvgPool commutes with them: pooling the INPUT first is mathematically
    # identical to the conv -> pool order of the original stand-in, and lets
    # the fused kernel avoid all in-kernel reshapes / HBM round trips.
    x_p = _pool2d_input(x_img, 2, 2).reshape(b_, 3, N2)     # (B, 3, 192)
    x_pp = _pool2d_input(x_img, 4, 4).reshape(b_, 3, N1)    # (B, 3, 48)

    z = pl.pallas_call(
        _mgn_main_kernel,
        out_shape=jax.ShapeDtypeStruct((b_, C, NUM_PARTS), jnp.float32),
        grid=(b_,),
        in_specs=[
            pl.BlockSpec(memory_space=pltpu.SMEM),               # gammas (3, 2)
            pl.BlockSpec((1, 3, N2), lambda b: (b, 0, 0)),       # x_p
            pl.BlockSpec((1, 3, N1), lambda b: (b, 0, 0)),       # x_pp
            pl.BlockSpec((3, C, 1), lambda b: (0, 0, 0)),        # w_bb
            pl.BlockSpec((3 * C, C), lambda b: (0, 0)),          # w_branch (stacked)
            pl.BlockSpec((3, QKV, C), lambda b: (0, 0, 0)),      # wqkv (stacked q/k/v)
            pl.BlockSpec((3, QKV, 1), lambda b: (0, 0, 0)),      # bqkv
        ],
        out_specs=pl.BlockSpec((1, C, NUM_PARTS), lambda b: (b, 0, 0)),
        compiler_params=pltpu.CompilerParams(
            dimension_semantics=("parallel",)),
    )(p["gammas"], x_p, x_pp, p["w_bb"], p["w_branch"], p["wqkv"], p["bqkv"])

    predict = pl.pallas_call(
        _head_kernel,
        out_shape=jax.ShapeDtypeStruct((b_, F8), jnp.float32),
        grid=(1,),
        in_specs=[
            pl.BlockSpec((b_, C, NUM_PARTS), lambda i: (0, 0, 0)),
            pl.BlockSpec((NUM_PARTS, C, FEATS), lambda i: (0, 0, 0)),
            pl.BlockSpec((1, F8), lambda i: (0, 0)),
            pl.BlockSpec((1, F8), lambda i: (0, 0)),
            pl.BlockSpec((1, F8), lambda i: (0, 0)),
            pl.BlockSpec((1, F8), lambda i: (0, 0)),
        ],
        out_specs=pl.BlockSpec((b_, F8), lambda i: (0, 0)),
    )(z, p["w_red"], p["red_scale"], p["red_shift"],
      p["neck_scale"], p["neck_shift"])
    return predict


# --------------------------- parameters --------------------------------------
def init_params(key):
    ks = iter(jax.random.split(key, 16))

    def kaiming(shape, fan_in):
        return jax.random.normal(next(ks), shape, jnp.float32) * jnp.sqrt(2.0 / fan_in)

    p = {}
    # TODO(synk): the ResNet-50 backbone (conv1..layer3[0]) and the p1/p2/p3
    # Bottleneck stages are not defined in the provided source; substituted by
    # deterministic 1x1-conv + average-pool stand-ins that preserve the
    # channel / spatial contract of the original branches
    # (p1: (B, C, 12, 4), p2/p3: (B, C, 24, 8)).
    p["w_bb"] = kaiming((3, C, 1), 3)               # backbone stand-in 1x1 conv
    p["w_branch"] = kaiming((3 * C, C), C)          # stacked p1/p2/p3 branch convs

    # PAM q/k/v 1x1 convs, stacked per branch: rows [0:C8]=q, [C8:2C8]=k, [2C8:]=v
    p["wqkv"] = kaiming((3, QKV, C), C)
    p["bqkv"] = jnp.zeros((3, QKV, 1), jnp.float32)
    # [pam_gamma, cam_gamma] per branch; DANet initializes both to 0.
    p["gammas"] = jnp.zeros((3, 2), jnp.float32)

    # 8 reduction blocks: Conv2d(C, FEATS, 1, bias=False) + BN2d(eval) + ReLU,
    # kept DENSE per part (8, C, FEATS) — no block-diagonal zero padding.
    p["w_red"] = kaiming((NUM_PARTS, C, FEATS), C)
    rg = 1.0 + 0.02 * jax.random.normal(next(ks), (NUM_PARTS, FEATS), jnp.float32)
    rb = jnp.zeros((NUM_PARTS, FEATS), jnp.float32)
    rm = jnp.zeros((NUM_PARTS, FEATS), jnp.float32)       # running_mean
    rv = jnp.ones((NUM_PARTS, FEATS), jnp.float32)        # running_var
    rs = rg * lax.rsqrt(rv + EPS)
    p["red_scale"] = rs.reshape(1, F8)
    p["red_shift"] = (rb - rm * rs).reshape(1, F8)

    # 8 separate bnneck BatchNorm1d (sep_bn=True), kaiming BN init: w=1, b=0.
    ng = jnp.ones((NUM_PARTS, FEATS), jnp.float32)
    nb = jnp.zeros((NUM_PARTS, FEATS), jnp.float32)
    nm = jnp.zeros((NUM_PARTS, FEATS), jnp.float32)
    nv = jnp.ones((NUM_PARTS, FEATS), jnp.float32)
    ns = ng * lax.rsqrt(nv + EPS)
    p["neck_scale"] = ns.reshape(1, F8)
    p["neck_shift"] = (nb - nm * ns).reshape(1, F8)

    # fc_id_* classifier weights exist in __init__ but are only used on the
    # training path; the eval path (implemented here) never touches them.
    return p


# ------------------------ pure-JAX reference ----------------------------------
def mgn_forward_ref(x_img, p):
    b_ = x_img.shape[0]
    x_p = _pool2d_input(x_img, 2, 2).reshape(b_, 3, N2)
    x_pp = _pool2d_input(x_img, 4, 4).reshape(b_, 3, N1)
    wbb = p["w_bb"][:, :, 0]                                    # (3, C)
    feat = jnp.einsum('kc,bkn->bcn', wbb, x_p)
    feat_s = jnp.einsum('kc,bkn->bcn', wbb, x_pp)
    wbr = p["w_branch"]
    p1 = jnp.einsum('oc,bcn->bon', wbr[0:C], feat_s)
    p23 = jnp.einsum('oc,bcn->bon', wbr[C:3 * C], feat)
    p2 = p23[:, 0:C]
    p3 = p23[:, C:2 * C]

    def cam_pam_pool(j, x):
        y = jnp.einsum('oc,bcn->bon', p["wqkv"][j], x) + p["bqkv"][j][None]
        q, k, v = y[:, 0:C8], y[:, C8:2 * C8], y[:, 2 * C8:QKV]
        energy = jnp.einsum('bcn,bcm->bnm', q, k)
        pe = jnp.exp(energy - jnp.max(energy, axis=-1, keepdims=True))
        attn = pe / jnp.sum(pe, axis=-1, keepdims=True)
        pam = jnp.einsum('bcm,bnm->bcn', v, attn)
        ce = jnp.einsum('bcn,bdn->bcd', x, x)
        ce = jnp.max(ce, axis=-1, keepdims=True) - ce
        cpe = jnp.exp(ce - jnp.max(ce, axis=-1, keepdims=True))
        cattn = cpe / jnp.sum(cpe, axis=-1, keepdims=True)
        cam = jnp.einsum('bcd,bdn->bcn', cattn, x)
        g = p["gammas"][j]
        out = g[0] * pam + g[1] * cam + 2.0 * x
        return jnp.mean(out, axis=-1)                           # (B, C)

    zs = [cam_pam_pool(0, p1), cam_pam_pool(1, p2), cam_pam_pool(2, p3),
          jnp.mean(p2[:, :, 0:N2 // 2], axis=-1),
          jnp.mean(p2[:, :, N2 // 2:N2], axis=-1),
          jnp.mean(p3[:, :, 0:N2 // 3], axis=-1),
          jnp.mean(p3[:, :, N2 // 3:2 * N2 // 3], axis=-1),
          jnp.mean(p3[:, :, 2 * N2 // 3:N2], axis=-1)]
    y = jnp.concatenate([zs[i] @ p["w_red"][i] for i in range(NUM_PARTS)], axis=-1)
    fg = jnp.maximum(y * p["red_scale"] + p["red_shift"], 0.0)
    return fg * p["neck_scale"] + p["neck_shift"]


# ------------------------------- main -----------------------------------------
if __name__ == "__main__":
    root = jax.random.PRNGKey(0)
    k_params, k_x = jax.random.split(root)
    params = init_params(k_params)
    x = jax.random.normal(k_x, (B, 3, H_IN, W_IN), jnp.float32)   # NCHW input

    fwd = jax.jit(mgn_forward)

    # module-faithful run (DANet gammas = 0, as in the original init)
    out = fwd(x, params)
    jax.block_until_ready(out)
    assert out.shape == (B, F8), out.shape
    assert bool(jnp.all(jnp.isfinite(out)))

    # numerical validation of the attention path against a pure-JAX reference
    # with NON-zero gammas (the gamma=0 init would hide attention bugs).
    params_nz = dict(params)
    params_nz["gammas"] = jnp.array([[0.7, 0.3], [0.5, 0.9], [0.4, 0.6]],
                                    jnp.float32)
    out_k = fwd(x, params_nz)
    out_r = mgn_forward_ref(x, params_nz)
    jax.block_until_ready((out_k, out_r))
    scale = float(jnp.max(jnp.abs(out_r)))
    err = float(jnp.max(jnp.abs(out_k - out_r)))
    assert err <= 2e-2 * scale + 1e-5, (err, scale)

    print("KERNEL_OK")
</pallas_src>

<mosaic_0001>
module attributes {stable_mosaic.version = 11 : i64} {
  func.func @_head_kernel(%arg0: i32, %arg1: memref<2x128x8xf32, #tpu.memory_space<vmem>>, %arg2: memref<8x128x32xf32, #tpu.memory_space<vmem>>, %arg3: memref<1x256xf32, #tpu.memory_space<vmem>>, %arg4: memref<1x256xf32, #tpu.memory_space<vmem>>, %arg5: memref<1x256xf32, #tpu.memory_space<vmem>>, %arg6: memref<1x256xf32, #tpu.memory_space<vmem>>, %arg7: memref<2x256xf32, #tpu.memory_space<vmem>>) attributes {dimension_semantics = [#tpu.dimension_semantics<arbitrary>], iteration_bounds = array<i64: 1>, scalar_prefetch = 0 : i64, scratch_operands = 0 : i64, tpu.core_type = #tpu.core_type<tc>, window_params = [{pipeline_mode = #tpu.pipeline_mode<synchronous>, transform_indices = @transform_0, window_bounds = array<i64: 2, 128, 8>}, {pipeline_mode = #tpu.pipeline_mode<synchronous>, transform_indices = @transform_1, window_bounds = array<i64: 8, 128, 32>}, {pipeline_mode = #tpu.pipeline_mode<synchronous>, transform_indices = @transform_2, window_bounds = array<i64: 1, 256>}, {pipeline_mode = #tpu.pipeline_mode<synchronous>, transform_indices = @transform_3, window_bounds = array<i64: 1, 256>}, {pipeline_mode = #tpu.pipeline_mode<synchronous>, transform_indices = @transform_4, window_bounds = array<i64: 1, 256>}, {pipeline_mode = #tpu.pipeline_mode<synchronous>, transform_indices = @transform_5, window_bounds = array<i64: 1, 256>}, {pipeline_mode = #tpu.pipeline_mode<synchronous>, transform_indices = @transform_6, window_bounds = array<i64: 2, 256>}]} {
    %c0 = arith.constant 0 : index
    %c0_0 = arith.constant 0 : index
    %c0_1 = arith.constant 0 : index
    %0 = vector.load %arg1[%c0, %c0_0, %c0_1] : memref<2x128x8xf32, #tpu.memory_space<vmem>>, vector<2x128x8xf32>
    %c0_2 = arith.constant 0 : index
    %c0_3 = arith.constant 0 : index
    %c0_4 = arith.constant 0 : index
    %1 = vector.load %arg2[%c0_2, %c0_3, %c0_4] : memref<8x128x32xf32, #tpu.memory_space<vmem>>, vector<8x128x32xf32>
    %2 = vector.extract_strided_slice %0 {offsets = [0, 0, 0], sizes = [2, 128, 1], strides = [1, 1, 1]} : vector<2x128x8xf32> to vector<2x128x1xf32>
    %3 = vector.extract_strided_slice %1 {offsets = [0, 0, 0], sizes = [1, 128, 32], strides = [1, 1, 1]} : vector<8x128x32xf32> to vector<1x128x32xf32>
    %4 = vector.shape_cast %3 : vector<1x128x32xf32> to vector<128x32xf32>
    %5 = vector.shape_cast %4 : vector<128x32xf32> to vector<1x128x32xf32>
    %6 = vector.broadcast %2 : vector<2x128x1xf32> to vector<2x128x32xf32>
    %7 = vector.broadcast %5 : vector<1x128x32xf32> to vector<2x128x32xf32>
    %8 = arith.mulf %6, %7 : vector<2x128x32xf32>
    %cst = arith.constant dense<0.000000e+00> : vector<2x32xf32>
    %9 = vector.multi_reduction <add>, %8, %cst [1] : vector<2x128x32xf32> to vector<2x32xf32>
    %10 = vector.extract_strided_slice %0 {offsets = [0, 0, 1], sizes = [2, 128, 1], strides = [1, 1, 1]} : vector<2x128x8xf32> to vector<2x128x1xf32>
    %11 = vector.extract_strided_slice %1 {offsets = [1, 0, 0], sizes = [1, 128, 32], strides = [1, 1, 1]} : vector<8x128x32xf32> to vector<1x128x32xf32>
    %12 = vector.shape_cast %11 : vector<1x128x32xf32> to vector<128x32xf32>
    %13 = vector.shape_cast %12 : vector<128x32xf32> to vector<1x128x32xf32>
    %14 = vector.broadcast %10 : vector<2x128x1xf32> to vector<2x128x32xf32>
    %15 = vector.broadcast %13 : vector<1x128x32xf32> to vector<2x128x32xf32>
    %16 = arith.mulf %14, %15 : vector<2x128x32xf32>
    %cst_5 = arith.constant dense<0.000000e+00> : vector<2x32xf32>
    %17 = vector.multi_reduction <add>, %16, %cst_5 [1] : vector<2x128x32xf32> to vector<2x32xf32>
    %18 = vector.extract_strided_slice %0 {offsets = [0, 0, 2], sizes = [2, 128, 1], strides = [1, 1, 1]} : vector<2x128x8xf32> to vector<2x128x1xf32>
    %19 = vector.extract_strided_slice %1 {offsets = [2, 0, 0], sizes = [1, 128, 32], strides = [1, 1, 1]} : vector<8x128x32xf32> to vector<1x128x32xf32>
    %20 = vector.shape_cast %19 : vector<1x128x32xf32> to vector<128x32xf32>
    %21 = vector.shape_cast %20 : vector<128x32xf32> to vector<1x128x32xf32>
    %22 = vector.broadcast %18 : vector<2x128x1xf32> to vector<2x128x32xf32>
    %23 = vector.broadcast %21 : vector<1x128x32xf32> to vector<2x128x32xf32>
    %24 = arith.mulf %22, %23 : vector<2x128x32xf32>
    %cst_6 = arith.constant dense<0.000000e+00> : vector<2x32xf32>
    %25 = vector.multi_reduction <add>, %24, %cst_6 [1] : vector<2x128x32xf32> to vector<2x32xf32>
    %26 = vector.extract_strided_slice %0 {offsets = [0, 0, 3], sizes = [2, 128, 1], strides = [1, 1, 1]} : vector<2x128x8xf32> to vector<2x128x1xf32>
    %27 = vector.extract_strided_slice %1 {offsets = [3, 0, 0], sizes = [1, 128, 32], strides = [1, 1, 1]} : vector<8x128x32xf32> to vector<1x128x32xf32>
    %28 = vector.shape_cast %27 : vector<1x128x32xf32> to vector<128x32xf32>
    %29 = vector.shape_cast %28 : vector<128x32xf32> to vector<1x128x32xf32>
    %30 = vector.broadcast %26 : vector<2x128x1xf32> to vector<2x128x32xf32>
    %31 = vector.broadcast %29 : vector<1x128x32xf32> to vector<2x128x32xf32>
    %32 = arith.mulf %30, %31 : vector<2x128x32xf32>
    %cst_7 = arith.constant dense<0.000000e+00> : vector<2x32xf32>
    %33 = vector.multi_reduction <add>, %32, %cst_7 [1] : vector<2x128x32xf32> to vector<2x32xf32>
    %34 = vector.extract_strided_slice %0 {offsets = [0, 0, 4], sizes = [2, 128, 1], strides = [1, 1, 1]} : vector<2x128x8xf32> to vector<2x128x1xf32>
    %35 = vector.extract_strided_slice %1 {offsets = [4, 0, 0], sizes = [1, 128, 32], strides = [1, 1, 1]} : vector<8x128x32xf32> to vector<1x128x32xf32>
    %36 = vector.shape_cast %35 : vector<1x128x32xf32> to vector<128x32xf32>
    %37 = vector.shape_cast %36 : vector<128x32xf32> to vector<1x128x32xf32>
    %38 = vector.broadcast %34 : vector<2x128x1xf32> to vector<2x128x32xf32>
    %39 = vector.broadcast %37 : vector<1x128x32xf32> to vector<2x128x32xf32>
    %40 = arith.mulf %38, %39 : vector<2x128x32xf32>
    %cst_8 = arith.constant dense<0.000000e+00> : vector<2x32xf32>
    %41 = vector.multi_reduction <add>, %40, %cst_8 [1] : vector<2x128x32xf32> to vector<2x32xf32>
    %42 = vector.extract_strided_slice %0 {offsets = [0, 0, 5], sizes = [2, 128, 1], strides = [1, 1, 1]} : vector<2x128x8xf32> to vector<2x128x1xf32>
    %43 = vector.extract_strided_slice %1 {offsets = [5, 0, 0], sizes = [1, 128, 32], strides = [1, 1, 1]} : vector<8x128x32xf32> to vector<1x128x32xf32>
    %44 = vector.shape_cast %43 : vector<1x128x32xf32> to vector<128x32xf32>
    %45 = vector.shape_cast %44 : vector<128x32xf32> to vector<1x128x32xf32>
    %46 = vector.broadcast %42 : vector<2x128x1xf32> to vector<2x128x32xf32>
    %47 = vector.broadcast %45 : vector<1x128x32xf32> to vector<2x128x32xf32>
    %48 = arith.mulf %46, %47 : vector<2x128x32xf32>
    %cst_9 = arith.constant dense<0.000000e+00> : vector<2x32xf32>
    %49 = vector.multi_reduction <add>, %48, %cst_9 [1] : vector<2x128x32xf32> to vector<2x32xf32>
    %50 = vector.extract_strided_slice %0 {offsets = [0, 0, 6], sizes = [2, 128, 1], strides = [1, 1, 1]} : vector<2x128x8xf32> to vector<2x128x1xf32>
    %51 = vector.extract_strided_slice %1 {offsets = [6, 0, 0], sizes = [1, 128, 32], strides = [1, 1, 1]} : vector<8x128x32xf32> to vector<1x128x32xf32>
    %52 = vector.shape_cast %51 : vector<1x128x32xf32> to vector<128x32xf32>
    %53 = vector.shape_cast %52 : vector<128x32xf32> to vector<1x128x32xf32>
    %54 = vector.broadcast %50 : vector<2x128x1xf32> to vector<2x128x32xf32>
    %55 = vector.broadcast %53 : vector<1x128x32xf32> to vector<2x128x32xf32>
    %56 = arith.mulf %54, %55 : vector<2x128x32xf32>
    %cst_10 = arith.constant dense<0.000000e+00> : vector<2x32xf32>
    %57 = vector.multi_reduction <add>, %56, %cst_10 [1] : vector<2x128x32xf32> to vector<2x32xf32>
    %58 = vector.extract_strided_slice %0 {offsets = [0, 0, 7], sizes = [2, 128, 1], strides = [1, 1, 1]} : vector<2x128x8xf32> to vector<2x128x1xf32>
    %59 = vector.extract_strided_slice %1 {offsets = [7, 0, 0], sizes = [1, 128, 32], strides = [1, 1, 1]} : vector<8x128x32xf32> to vector<1x128x32xf32>
    %60 = vector.shape_cast %59 : vector<1x128x32xf32> to vector<128x32xf32>
    %61 = vector.shape_cast %60 : vector<128x32xf32> to vector<1x128x32xf32>
    %62 = vector.broadcast %58 : vector<2x128x1xf32> to vector<2x128x32xf32>
    %63 = vector.broadcast %61 : vector<1x128x32xf32> to vector<2x128x32xf32>
    %64 = arith.mulf %62, %63 : vector<2x128x32xf32>
    %cst_11 = arith.constant dense<0.000000e+00> : vector<2x32xf32>
    %65 = vector.multi_reduction <add>, %64, %cst_11 [1] : vector<2x128x32xf32> to vector<2x32xf32>
    %66 = tpu.concatenate %9, %17, %25, %33, %41, %49, %57, %65 in 1 : vector<2x32xf32>, vector<2x32xf32>, vector<2x32xf32>, vector<2x32xf32>, vector<2x32xf32>, vector<2x32xf32>, vector<2x32xf32>, vector<2x32xf32> -> vector<2x256xf32>
    %c0_12 = arith.constant 0 : index
    %c0_13 = arith.constant 0 : index
    %67 = vector.load %arg3[%c0_12, %c0_13] : memref<1x256xf32, #tpu.memory_space<vmem>>, vector<1x256xf32>
    %68 = vector.broadcast %67 : vector<1x256xf32> to vector<2x256xf32>
    %69 = arith.mulf %66, %68 : vector<2x256xf32>
    %c0_14 = arith.constant 0 : index
    %c0_15 = arith.constant 0 : index
    %70 = vector.load %arg4[%c0_14, %c0_15] : memref<1x256xf32, #tpu.memory_space<vmem>>, vector<1x256xf32>
    %71 = vector.broadcast %70 : vector<1x256xf32> to vector<2x256xf32>
    %72 = arith.addf %69, %71 : vector<2x256xf32>
    %cst_16 = arith.constant 0.000000e+00 : f32
    %73 = vector.broadcast %cst_16 : f32 to vector<2x256xf32>
    %74 = arith.maximumf %72, %73 : vector<2x256xf32>
    %c0_17 = arith.constant 0 : index
    %c0_18 = arith.constant 0 : index
    %75 = vector.load %arg5[%c0_17, %c0_18] : memref<1x256xf32, #tpu.memory_space<vmem>>, vector<1x256xf32>
    %76 = vector.broadcast %75 : vector<1x256xf32> to vector<2x256xf32>
    %77 = arith.mulf %74, %76 : vector<2x256xf32>
    %c0_19 = arith.constant 0 : index
    %c0_20 = arith.constant 0 : index
    %78 = vector.load %arg6[%c0_19, %c0_20] : memref<1x256xf32, #tpu.memory_space<vmem>>, vector<1x256xf32>
    %79 = vector.broadcast %78 : vector<1x256xf32> to vector<2x256xf32>
    %80 = arith.addf %77, %79 : vector<2x256xf32>
    %c0_21 = arith.constant 0 : index
    %c0_22 = arith.constant 0 : index
    %81 = vector.load %arg7[%c0_21, %c0_22] : memref<2x256xf32, #tpu.memory_space<vmem>>, vector<2x256xf32>
    tpu.vector_store %arg7[%c0_21, %c0_22], %80 {strides = array<i32>} : memref<2x256xf32, #tpu.memory_space<vmem>>, vector<2x256xf32>,
    return
  }
  func.func @transform_0(%arg0: i32) -> (i32, i32, i32) {
    %c0_i32 = arith.constant 0 : i32
    %c0_i32_0 = arith.constant 0 : i32
    %c0_i32_1 = arith.constant 0 : i32
    %c0_i32_2 = arith.constant 0 : i32
    return %c0_i32, %c0_i32_0, %c0_i32_1 : i32, i32, i32
  }
  func.func @transform_1(%arg0: i32) -> (i32, i32, i32) {
    %c0_i32 = arith.constant 0 : i32
    %c0_i32_0 = arith.constant 0 : i32
    %c0_i32_1 = arith.constant 0 : i32
    %c0_i32_2 = arith.constant 0 : i32
    return %c0_i32, %c0_i32_0, %c0_i32_1 : i32, i32, i32
  }
  func.func @transform_2(%arg0: i32) -> (i32, i32) {
    %c0_i32 = arith.constant 0 : i32
    %c0_i32_0 = arith.constant 0 : i32
    %c0_i32_1 = arith.constant 0 : i32
    return %c0_i32, %c0_i32_0 : i32, i32
  }
  func.func @transform_3(%arg0: i32) -> (i32, i32) {
    %c0_i32 = arith.constant 0 : i32
    %c0_i32_0 = arith.constant 0 : i32
    %c0_i32_1 = arith.constant 0 : i32
    return %c0_i32, %c0_i32_0 : i32, i32
  }
  func.func @transform_4(%arg0: i32) -> (i32, i32) {
    %c0_i32 = arith.constant 0 : i32
    %c0_i32_0 = arith.constant 0 : i32
    %c0_i32_1 = arith.constant 0 : i32
    return %c0_i32, %c0_i32_0 : i32, i32
  }
  func.func @transform_5(%arg0: i32) -> (i32, i32) {
    %c0_i32 = arith.constant 0 : i32
    %c0_i32_0 = arith.constant 0 : i32
    %c0_i32_1 = arith.constant 0 : i32
    return %c0_i32, %c0_i32_0 : i32, i32
  }
  func.func @transform_6(%arg0: i32) -> (i32, i32) {
    %c0_i32 = arith.constant 0 : i32
    %c0_i32_0 = arith.constant 0 : i32
    %c0_i32_1 = arith.constant 0 : i32
    return %c0_i32, %c0_i32_0 : i32, i32
  }
}

module attributes {stable_mosaic.version = 11 : i64} {
  func.func @_mgn_main_kernel(%arg0: i32, %arg1: memref<3x2xf32, #tpu.memory_space<smem>>, %arg2: memref<1x3x192xf32, #tpu.memory_space<vmem>>, %arg3: memref<1x3x48xf32, #tpu.memory_space<vmem>>, %arg4: memref<3x128x1xf32, #tpu.memory_space<vmem>>, %arg5: memref<384x128xf32, #tpu.memory_space<vmem>>, %arg6: memref<3x160x128xf32, #tpu.memory_space<vmem>>, %arg7: memref<3x160x1xf32, #tpu.memory_space<vmem>>, %arg8: memref<1x128x8xf32, #tpu.memory_space<vmem>>) attributes {dimension_semantics = [#tpu.dimension_semantics<parallel>], iteration_bounds = array<i64: 2>, scalar_prefetch = 0 : i64, scratch_operands = 0 : i64, tpu.core_type = #tpu.core_type<tc>, window_params = [{transform_indices = @transform_0, window_bounds = array<i64: 3, 2>}, {transform_indices = @transform_1, window_bounds = array<i64: 1, 3, 192>}, {transform_indices = @transform_2, window_bounds = array<i64: 1, 3, 48>}, {pipeline_mode = #tpu.pipeline_mode<synchronous>, transform_indices = @transform_3, window_bounds = array<i64: 3, 128, 1>}, {pipeline_mode = #tpu.pipeline_mode<synchronous>, transform_indices = @transform_4, window_bounds = array<i64: 384, 128>}, {pipeline_mode = #tpu.pipeline_mode<synchronous>, transform_indices = @transform_5, window_bounds = array<i64: 3, 160, 128>}, {pipeline_mode = #tpu.pipeline_mode<synchronous>, transform_indices = @transform_6, window_bounds = array<i64: 3, 160, 1>}, {transform_indices = @transform_7, window_bounds = array<i64: 1, 128, 8>}]} {
    %c0 = arith.constant 0 : index
    %c0_0 = arith.constant 0 : index
    %c0_1 = arith.constant 0 : index
    %0 = vector.load %arg2[%c0, %c0_0, %c0_1] : memref<1x3x192xf32, #tpu.memory_space<vmem>>, vector<1x3x192xf32>
    %1 = vector.shape_cast %0 : vector<1x3x192xf32> to vector<3x192xf32>
    %c0_2 = arith.constant 0 : index
    %c0_3 = arith.constant 0 : index
    %c0_4 = arith.constant 0 : index
    %2 = vector.load %arg3[%c0_2, %c0_3, %c0_4] : memref<1x3x48xf32, #tpu.memory_space<vmem>>, vector<1x3x48xf32>
    %3 = vector.shape_cast %2 : vector<1x3x48xf32> to vector<3x48xf32>
    %c0_5 = arith.constant 0 : index
    %c0_6 = arith.constant 0 : index
    %c0_7 = arith.constant 0 : index
    %4 = vector.load %arg4[%c0_5, %c0_6, %c0_7] : memref<3x128x1xf32, #tpu.memory_space<vmem>>, vector<1x128x1xf32>
    %5 = vector.shape_cast %4 : vector<1x128x1xf32> to vector<128x1xf32>
    %6 = vector.extract_strided_slice %1 {offsets = [0, 0], sizes = [1, 192], strides = [1, 1]} : vector<3x192xf32> to vector<1x192xf32>
    %7 = vector.broadcast %5 : vector<128x1xf32> to vector<128x192xf32>
    %8 = vector.broadcast %6 : vector<1x192xf32> to vector<128x192xf32>
    %9 = arith.mulf %7, %8 : vector<128x192xf32>
    %c1 = arith.constant 1 : index
    %c0_8 = arith.constant 0 : index
    %c0_9 = arith.constant 0 : index
    %10 = vector.load %arg4[%c1, %c0_8, %c0_9] : memref<3x128x1xf32, #tpu.memory_space<vmem>>, vector<1x128x1xf32>
    %11 = vector.shape_cast %10 : vector<1x128x1xf32> to vector<128x1xf32>
    %12 = vector.extract_strided_slice %1 {offsets = [1, 0], sizes = [1, 192], strides = [1, 1]} : vector<3x192xf32> to vector<1x192xf32>
    %13 = vector.broadcast %11 : vector<128x1xf32> to vector<128x192xf32>
    %14 = vector.broadcast %12 : vector<1x192xf32> to vector<128x192xf32>
    %15 = arith.mulf %13, %14 : vector<128x192xf32>
    %16 = arith.addf %9, %15 : vector<128x192xf32>
    %c2 = arith.constant 2 : index
    %c0_10 = arith.constant 0 : index
    %c0_11 = arith.constant 0 : index
    %17 = vector.load %arg4[%c2, %c0_10, %c0_11] : memref<3x128x1xf32, #tpu.memory_space<vmem>>, vector<1x128x1xf32>
    %18 = vector.shape_cast %17 : vector<1x128x1xf32> to vector<128x1xf32>
    %19 = vector.extract_strided_slice %1 {offsets = [2, 0], sizes = [1, 192], strides = [1, 1]} : vector<3x192xf32> to vector<1x192xf32>
    %20 = vector.broadcast %18 : vector<128x1xf32> to vector<128x192xf32>
    %21 = vector.broadcast %19 : vector<1x192xf32> to vector<128x192xf32>
    %22 = arith.mulf %20, %21 : vector<128x192xf32>
    %23 = arith.addf %16, %22 : vector<128x192xf32>
    %c0_12 = arith.constant 0 : index
    %c0_13 = arith.constant 0 : index
    %c0_14 = arith.constant 0 : index
    %24 = vector.load %arg4[%c0_12, %c0_13, %c0_14] : memref<3x128x1xf32, #tpu.memory_space<vmem>>, vector<1x128x1xf32>
    %25 = vector.shape_cast %24 : vector<1x128x1xf32> to vector<128x1xf32>
    %26 = vector.extract_strided_slice %3 {offsets = [0, 0], sizes = [1, 48], strides = [1, 1]} : vector<3x48xf32> to vector<1x48xf32>
    %27 = vector.broadcast %25 : vector<128x1xf32> to vector<128x48xf32>
    %28 = vector.broadcast %26 : vector<1x48xf32> to vector<128x48xf32>
    %29 = arith.mulf %27, %28 : vector<128x48xf32>
    %c1_15 = arith.constant 1 : index
    %c0_16 = arith.constant 0 : index
    %c0_17 = arith.constant 0 : index
    %30 = vector.load %arg4[%c1_15, %c0_16, %c0_17] : memref<3x128x1xf32, #tpu.memory_space<vmem>>, vector<1x128x1xf32>
    %31 = vector.shape_cast %30 : vector<1x128x1xf32> to vector<128x1xf32>
    %32 = vector.extract_strided_slice %3 {offsets = [1, 0], sizes = [1, 48], strides = [1, 1]} : vector<3x48xf32> to vector<1x48xf32>
    %33 = vector.broadcast %31 : vector<128x1xf32> to vector<128x48xf32>
    %34 = vector.broadcast %32 : vector<1x48xf32> to vector<128x48xf32>
    %35 = arith.mulf %33, %34 : vector<128x48xf32>
    %36 = arith.addf %29, %35 : vector<128x48xf32>
    %c2_18 = arith.constant 2 : index
    %c0_19 = arith.constant 0 : index
    %c0_20 = arith.constant 0 : index
    %37 = vector.load %arg4[%c2_18, %c0_19, %c0_20] : memref<3x128x1xf32, #tpu.memory_space<vmem>>, vector<1x128x1xf32>
    %38 = vector.shape_cast %37 : vector<1x128x1xf32> to vector<128x1xf32>
    %39 = vector.extract_strided_slice %3 {offsets = [2, 0], sizes = [1, 48], strides = [1, 1]} : vector<3x48xf32> to vector<1x48xf32>
    %40 = vector.broadcast %38 : vector<128x1xf32> to vector<128x48xf32>
    %41 = vector.broadcast %39 : vector<1x48xf32> to vector<128x48xf32>
    %42 = arith.mulf %40, %41 : vector<128x48xf32>
    %43 = arith.addf %36, %42 : vector<128x48xf32>
    %c0_21 = arith.constant 0 : index
    %c0_22 = arith.constant 0 : index
    %44 = vector.load %arg5[%c0_21, %c0_22] : memref<384x128xf32, #tpu.memory_space<vmem>>, vector<384x128xf32>
    %45 = vector.extract_strided_slice %44 {offsets = [0, 0], sizes = [128, 128], strides = [1, 1]} : vector<384x128xf32> to vector<128x128xf32>
    %cst = arith.constant dense<0.000000e+00> : vector<128x48xf32>
    %46 = tpu.matmul %45, %43, %cst {dimension_numbers = #tpu.dot_dimension_numbers<[1], [0], [0], [1], [0, 0, 1, 1], [], []>} : vector<128x128xf32>, vector<128x48xf32>, vector<128x48xf32> -> vector<128x48xf32>
    %47 = vector.extract_strided_slice %44 {offsets = [128, 0], sizes = [256, 128], strides = [1, 1]} : vector<384x128xf32> to vector<256x128xf32>
    %cst_23 = arith.constant dense<0.000000e+00> : vector<256x192xf32>
    %48 = tpu.matmul %47, %23, %cst_23 {dimension_numbers = #tpu.dot_dimension_numbers<[1], [0], [0], [1], [0, 0, 1, 1], [], []>} : vector<256x128xf32>, vector<128x192xf32>, vector<256x192xf32> -> vector<256x192xf32>
    %49 = vector.extract_strided_slice %48 {offsets = [0, 0], sizes = [128, 192], strides = [1, 1]} : vector<256x192xf32> to vector<128x192xf32>
    %50 = vector.extract_strided_slice %48 {offsets = [128, 0], sizes = [128, 192], strides = [1, 1]} : vector<256x192xf32> to vector<128x192xf32>
    %c0_24 = arith.constant 0 : index
    %c0_25 = arith.constant 0 : index
    %c0_26 = arith.constant 0 : index
    %51 = vector.load %arg6[%c0_24, %c0_25, %c0_26] : memref<3x160x128xf32, #tpu.memory_space<vmem>>, vector<1x160x128xf32>
    %52 = vector.shape_cast %51 : vector<1x160x128xf32> to vector<160x128xf32>
    %cst_27 = arith.constant dense<0.000000e+00> : vector<160x48xf32>
    %53 = tpu.matmul %52, %46, %cst_27 {dimension_numbers = #tpu.dot_dimension_numbers<[1], [0], [0], [1], [0, 0, 1, 1], [], []>} : vector<160x128xf32>, vector<128x48xf32>, vector<160x48xf32> -> vector<160x48xf32>
    %c0_28 = arith.constant 0 : index
    %c0_29 = arith.constant 0 : index
    %c0_30 = arith.constant 0 : index
    %54 = vector.load %arg7[%c0_28, %c0_29, %c0_30] : memref<3x160x1xf32, #tpu.memory_space<vmem>>, vector<1x160x1xf32>
    %55 = vector.shape_cast %54 : vector<1x160x1xf32> to vector<160x1xf32>
    %56 = vector.broadcast %55 : vector<160x1xf32> to vector<160x48xf32>
    %57 = arith.addf %53, %56 : vector<160x48xf32>
    %58 = vector.extract_strided_slice %57 {offsets = [0, 0], sizes = [16, 48], strides = [1, 1]} : vector<160x48xf32> to vector<16x48xf32>
    %59 = vector.extract_strided_slice %57 {offsets = [16, 0], sizes = [16, 48], strides = [1, 1]} : vector<160x48xf32> to vector<16x48xf32>
    %60 = vector.extract_strided_slice %57 {offsets = [32, 0], sizes = [128, 48], strides = [1, 1]} : vector<160x48xf32> to vector<128x48xf32>
    %cst_31 = arith.constant dense<0.000000e+00> : vector<48x48xf32>
    %61 = tpu.matmul %58, %59, %cst_31 {dimension_numbers = #tpu.dot_dimension_numbers<[0], [0], [1], [1], [0, 1, 1, 1], [], []>} : vector<16x48xf32>, vector<16x48xf32>, vector<48x48xf32> -> vector<48x48xf32>
    %cst_32 = arith.constant dense<0xFF800000> : vector<48xf32>
    %62 = vector.multi_reduction <maximumf>, %61, %cst_32 [1] : vector<48x48xf32> to vector<48xf32>
    %63 = vector.shape_cast %62 : vector<48xf32> to vector<48x1xf32>
    %64 = vector.broadcast %63 : vector<48x1xf32> to vector<48x48xf32>
    %65 = arith.subf %61, %64 : vector<48x48xf32>
    %66 = math.exp %65 : vector<48x48xf32>
    %cst_33 = arith.constant dense<0.000000e+00> : vector<48xf32>
    %67 = vector.multi_reduction <add>, %66, %cst_33 [1] : vector<48x48xf32> to vector<48xf32>
    %68 = vector.shape_cast %67 : vector<48xf32> to vector<48x1xf32>
    %69 = vector.broadcast %68 : vector<48x1xf32> to vector<48x48xf32>
    %70 = arith.divf %66, %69 : vector<48x48xf32>
    %cst_34 = arith.constant dense<0.000000e+00> : vector<128x48xf32>
    %71 = tpu.matmul %60, %70, %cst_34 {dimension_numbers = #tpu.dot_dimension_numbers<[1], [1], [0], [0], [0, 0, 1, 0], [], []>} : vector<128x48xf32>, vector<48x48xf32>, vector<128x48xf32> -> vector<128x48xf32>
    %cst_35 = arith.constant dense<0.000000e+00> : vector<128x128xf32>
    %72 = tpu.matmul %46, %46, %cst_35 {dimension_numbers = #tpu.dot_dimension_numbers<[1], [1], [0], [0], [0, 0, 1, 0], [], []>} : vector<128x48xf32>, vector<128x48xf32>, vector<128x128xf32> -> vector<128x128xf32>
    %cst_36 = arith.constant dense<0xFF800000> : vector<128xf32>
    %73 = vector.multi_reduction <maximumf>, %72, %cst_36 [1] : vector<128x128xf32> to vector<128xf32>
    %74 = vector.shape_cast %73 : vector<128xf32> to vector<128x1xf32>
    %75 = vector.broadcast %74 : vector<128x1xf32> to vector<128x128xf32>
    %76 = arith.subf %75, %72 : vector<128x128xf32>
    %cst_37 = arith.constant dense<0xFF800000> : vector<128xf32>
    %77 = vector.multi_reduction <maximumf>, %76, %cst_37 [1] : vector<128x128xf32> to vector<128xf32>
    %78 = vector.shape_cast %77 : vector<128xf32> to vector<128x1xf32>
    %79 = vector.broadcast %78 : vector<128x1xf32> to vector<128x128xf32>
    %80 = arith.subf %76, %79 : vector<128x128xf32>
    %81 = math.exp %80 : vector<128x128xf32>
    %cst_38 = arith.constant dense<0.000000e+00> : vector<128xf32>
    %82 = vector.multi_reduction <add>, %81, %cst_38 [1] : vector<128x128xf32> to vector<128xf32>
    %83 = vector.shape_cast %82 : vector<128xf32> to vector<128x1xf32>
    %84 = vector.broadcast %83 : vector<128x1xf32> to vector<128x128xf32>
    %85 = arith.divf %81, %84 : vector<128x128xf32>
    %cst_39 = arith.constant dense<0.000000e+00> : vector<128x48xf32>
    %86 = tpu.matmul %85, %46, %cst_39 {dimension_numbers = #tpu.dot_dimension_numbers<[1], [0], [0], [1], [0, 0, 1, 1], [], []>} : vector<128x128xf32>, vector<128x48xf32>, vector<128x48xf32> -> vector<128x48xf32>
    %c0_40 = arith.constant 0 : index
    %c0_41 = arith.constant 0 : index
    %87 = memref.load %arg1[%c0_40, %c0_41] : memref<3x2xf32, #tpu.memory_space<smem>>
    %88 = vector.broadcast %87 : f32 to vector<128x48xf32>
    %89 = arith.mulf %88, %71 : vector<128x48xf32>
    %c0_42 = arith.constant 0 : index
    %c1_43 = arith.constant 1 : index
    %90 = memref.load %arg1[%c0_42, %c1_43] : memref<3x2xf32, #tpu.memory_space<smem>>
    %91 = vector.broadcast %90 : f32 to vector<128x48xf32>
    %92 = arith.mulf %91, %86 : vector<128x48xf32>
    %93 = arith.addf %89, %92 : vector<128x48xf32>
    %cst_44 = arith.constant 2.000000e+00 : f32
    %94 = vector.broadcast %cst_44 : f32 to vector<128x48xf32>
    %95 = arith.mulf %94, %46 : vector<128x48xf32>
    %96 = arith.addf %93, %95 : vector<128x48xf32>
    %cst_45 = arith.constant dense<0.000000e+00> : vector<128xf32>
    %97 = vector.multi_reduction <add>, %96, %cst_45 [1] : vector<128x48xf32> to vector<128xf32>
    %98 = vector.shape_cast %97 : vector<128xf32> to vector<128x1xf32>
    %cst_46 = arith.constant 4.800000e+01 : f32
    %99 = vector.broadcast %cst_46 : f32 to vector<128x1xf32>
    %100 = arith.divf %98, %99 : vector<128x1xf32>
    %c1_47 = arith.constant 1 : index
    %c0_48 = arith.constant 0 : index
    %c0_49 = arith.constant 0 : index
    %101 = vector.load %arg6[%c1_47, %c0_48, %c0_49] : memref<3x160x128xf32, #tpu.memory_space<vmem>>, vector<1x160x128xf32>
    %102 = vector.shape_cast %101 : vector<1x160x128xf32> to vector<160x128xf32>
    %cst_50 = arith.constant dense<0.000000e+00> : vector<160x192xf32>
    %103 = tpu.matmul %102, %49, %cst_50 {dimension_numbers = #tpu.dot_dimension_numbers<[1], [0], [0], [1], [0, 0, 1, 1], [], []>} : vector<160x128xf32>, vector<128x192xf32>, vector<160x192xf32> -> vector<160x192xf32>
    %c1_51 = arith.constant 1 : index
    %c0_52 = arith.constant 0 : index
    %c0_53 = arith.constant 0 : index
    %104 = vector.load %arg7[%c1_51, %c0_52, %c0_53] : memref<3x160x1xf32, #tpu.memory_space<vmem>>, vector<1x160x1xf32>
    %105 = vector.shape_cast %104 : vector<1x160x1xf32> to vector<160x1xf32>
    %106 = vector.broadcast %105 : vector<160x1xf32> to vector<160x192xf32>
    %107 = arith.addf %103, %106 : vector<160x192xf32>
    %108 = vector.extract_strided_slice %107 {offsets = [0, 0], sizes = [16, 192], strides = [1, 1]} : vector<160x192xf32> to vector<16x192xf32>
    %109 = vector.extract_strided_slice %107 {offsets = [16, 0], sizes = [16, 192], strides = [1, 1]} : vector<160x192xf32> to vector<16x192xf32>
    %110 = vector.extract_strided_slice %107 {offsets = [32, 0], sizes = [128, 192], strides = [1, 1]} : vector<160x192xf32> to vector<128x192xf32>
    %cst_54 = arith.constant dense<0.000000e+00> : vector<192x192xf32>
    %111 = tpu.matmul %108, %109, %cst_54 {dimension_numbers = #tpu.dot_dimension_numbers<[0], [0], [1], [1], [0, 1, 1, 1], [], []>} : vector<16x192xf32>, vector<16x192xf32>, vector<192x192xf32> -> vector<192x192xf32>
    %cst_55 = arith.constant dense<0xFF800000> : vector<192xf32>
    %112 = vector.multi_reduction <maximumf>, %111, %cst_55 [1] : vector<192x192xf32> to vector<192xf32>
    %113 = vector.shape_cast %112 : vector<192xf32> to vector<192x1xf32>
    %114 = vector.broadcast %113 : vector<192x1xf32> to vector<192x192xf32>
    %115 = arith.subf %111, %114 : vector<192x192xf32>
    %116 = math.exp %115 : vector<192x192xf32>
    %cst_56 = arith.constant dense<0.000000e+00> : vector<192xf32>
    %117 = vector.multi_reduction <add>, %116, %cst_56 [1] : vector<192x192xf32> to vector<192xf32>
    %118 = vector.shape_cast %117 : vector<192xf32> to vector<192x1xf32>
    %119 = vector.broadcast %118 : vector<192x1xf32> to vector<192x192xf32>
    %120 = arith.divf %116, %119 : vector<192x192xf32>
    %cst_57 = arith.constant dense<0.000000e+00> : vector<128x192xf32>
    %121 = tpu.matmul %110, %120, %cst_57 {dimension_numbers = #tpu.dot_dimension_numbers<[1], [1], [0], [0], [0, 0, 1, 0], [], []>} : vector<128x192xf32>, vector<192x192xf32>, vector<128x192xf32> -> vector<128x192xf32>
    %cst_58 = arith.constant dense<0.000000e+00> : vector<128x128xf32>
    %122 = tpu.matmul %49, %49, %cst_58 {dimension_numbers = #tpu.dot_dimension_numbers<[1], [1], [0], [0], [0, 0, 1, 0], [], []>} : vector<128x192xf32>, vector<128x192xf32>, vector<128x128xf32> -> vector<128x128xf32>
    %cst_59 = arith.constant dense<0xFF800000> : vector<128xf32>
    %123 = vector.multi_reduction <maximumf>, %122, %cst_59 [1] : vector<128x128xf32> to vector<128xf32>
    %124 = vector.shape_cast %123 : vector<128xf32> to vector<128x1xf32>
    %125 = vector.broadcast %124 : vector<128x1xf32> to vector<128x128xf32>
    %126 = arith.subf %125, %122 : vector<128x128xf32>
    %cst_60 = arith.constant dense<0xFF800000> : vector<128xf32>
    %127 = vector.multi_reduction <maximumf>, %126, %cst_60 [1] : vector<128x128xf32> to vector<128xf32>
    %128 = vector.shape_cast %127 : vector<128xf32> to vector<128x1xf32>
    %129 = vector.broadcast %128 : vector<128x1xf32> to vector<128x128xf32>
    %130 = arith.subf %126, %129 : vector<128x128xf32>
    %131 = math.exp %130 : vector<128x128xf32>
    %cst_61 = arith.constant dense<0.000000e+00> : vector<128xf32>
    %132 = vector.multi_reduction <add>, %131, %cst_61 [1] : vector<128x128xf32> to vector<128xf32>
    %133 = vector.shape_cast %132 : vector<128xf32> to vector<128x1xf32>
    %134 = vector.broadcast %133 : vector<128x1xf32> to vector<128x128xf32>
    %135 = arith.divf %131, %134 : vector<128x128xf32>
    %cst_62 = arith.constant dense<0.000000e+00> : vector<128x192xf32>
    %136 = tpu.matmul %135, %49, %cst_62 {dimension_numbers = #tpu.dot_dimension_numbers<[1], [0], [0], [1], [0, 0, 1, 1], [], []>} : vector<128x128xf32>, vector<128x192xf32>, vector<128x192xf32> -> vector<128x192xf32>
    %c1_63 = arith.constant 1 : index
    %c0_64 = arith.constant 0 : index
    %137 = memref.load %arg1[%c1_63, %c0_64] : memref<3x2xf32, #tpu.memory_space<smem>>
    %138 = vector.broadcast %137 : f32 to vector<128x192xf32>
    %139 = arith.mulf %138, %121 : vector<128x192xf32>
    %c1_65 = arith.constant 1 : index
    %c1_66 = arith.constant 1 : index
    %140 = memref.load %arg1[%c1_65, %c1_66] : memref<3x2xf32, #tpu.memory_space<smem>>
    %141 = vector.broadcast %140 : f32 to vector<128x192xf32>
    %142 = arith.mulf %141, %136 : vector<128x192xf32>
    %143 = arith.addf %139, %142 : vector<128x192xf32>
    %cst_67 = arith.constant 2.000000e+00 : f32
    %144 = vector.broadcast %cst_67 : f32 to vector<128x192xf32>
    %145 = arith.mulf %144, %49 : vector<128x192xf32>
    %146 = arith.addf %143, %145 : vector<128x192xf32>
    %cst_68 = arith.constant dense<0.000000e+00> : vector<128xf32>
    %147 = vector.multi_reduction <add>, %146, %cst_68 [1] : vector<128x192xf32> to vector<128xf32>
    %148 = vector.shape_cast %147 : vector<128xf32> to vector<128x1xf32>
    %cst_69 = arith.constant 1.920000e+02 : f32
    %149 = vector.broadcast %cst_69 : f32 to vector<128x1xf32>
    %150 = arith.divf %148, %149 : vector<128x1xf32>
    %c2_70 = arith.constant 2 : index
    %c0_71 = arith.constant 0 : index
    %c0_72 = arith.constant 0 : index
    %151 = vector.load %arg6[%c2_70, %c0_71, %c0_72] : memref<3x160x128xf32, #tpu.memory_space<vmem>>, vector<1x160x128xf32>
    %152 = vector.shape_cast %151 : vector<1x160x128xf32> to vector<160x128xf32>
    %cst_73 = arith.constant dense<0.000000e+00> : vector<160x192xf32>
    %153 = tpu.matmul %152, %50, %cst_73 {dimension_numbers = #tpu.dot_dimension_numbers<[1], [0], [0], [1], [0, 0, 1, 1], [], []>} : vector<160x128xf32>, vector<128x192xf32>, vector<160x192xf32> -> vector<160x192xf32>
    %c2_74 = arith.constant 2 : index
    %c0_75 = arith.constant 0 : index
    %c0_76 = arith.constant 0 : index
    %154 = vector.load %arg7[%c2_74, %c0_75, %c0_76] : memref<3x160x1xf32, #tpu.memory_space<vmem>>, vector<1x160x1xf32>
    %155 = vector.shape_cast %154 : vector<1x160x1xf32> to vector<160x1xf32>
    %156 = vector.broadcast %155 : vector<160x1xf32> to vector<160x192xf32>
    %157 = arith.addf %153, %156 : vector<160x192xf32>
    %158 = vector.extract_strided_slice %157 {offsets = [0, 0], sizes = [16, 192], strides = [1, 1]} : vector<160x192xf32> to vector<16x192xf32>
    %159 = vector.extract_strided_slice %157 {offsets = [16, 0], sizes = [16, 192], strides = [1, 1]} : vector<160x192xf32> to vector<16x192xf32>
    %160 = vector.extract_strided_slice %157 {offsets = [32, 0], sizes = [128, 192], strides = [1, 1]} : vector<160x192xf32> to vector<128x192xf32>
    %cst_77 = arith.constant dense<0.000000e+00> : vector<192x192xf32>
    %161 = tpu.matmul %158, %159, %cst_77 {dimension_numbers = #tpu.dot_dimension_numbers<[0], [0], [1], [1], [0, 1, 1, 1], [], []>} : vector<16x192xf32>, vector<16x192xf32>, vector<192x192xf32> -> vector<192x192xf32>
    %cst_78 = arith.constant dense<0xFF800000> : vector<192xf32>
    %162 = vector.multi_reduction <maximumf>, %161, %cst_78 [1] : vector<192x192xf32> to vector<192xf32>
    %163 = vector.shape_cast %162 : vector<192xf32> to vector<192x1xf32>
    %164 = vector.broadcast %163 : vector<192x1xf32> to vector<192x192xf32>
    %165 = arith.subf %161, %164 : vector<192x192xf32>
    %166 = math.exp %165 : vector<192x192xf32>
    %cst_79 = arith.constant dense<0.000000e+00> : vector<192xf32>
    %167 = vector.multi_reduction <add>, %166, %cst_79 [1] : vector<192x192xf32> to vector<192xf32>
    %168 = vector.shape_cast %167 : vector<192xf32> to vector<192x1xf32>
    %169 = vector.broadcast %168 : vector<192x1xf32> to vector<192x192xf32>
    %170 = arith.divf %166, %169 : vector<192x192xf32>
    %cst_80 = arith.constant dense<0.000000e+00> : vector<128x192xf32>
    %171 = tpu.matmul %160, %170, %cst_80 {dimension_numbers = #tpu.dot_dimension_numbers<[1], [1], [0], [0], [0, 0, 1, 0], [], []>} : vector<128x192xf32>, vector<192x192xf32>, vector<128x192xf32> -> vector<128x192xf32>
    %cst_81 = arith.constant dense<0.000000e+00> : vector<128x128xf32>
    %172 = tpu.matmul %50, %50, %cst_81 {dimension_numbers = #tpu.dot_dimension_numbers<[1], [1], [0], [0], [0, 0, 1, 0], [], []>} : vector<128x192xf32>, vector<128x192xf32>, vector<128x128xf32> -> vector<128x128xf32>
    %cst_82 = arith.constant dense<0xFF800000> : vector<128xf32>
    %173 = vector.multi_reduction <maximumf>, %172, %cst_82 [1] : vector<128x128xf32> to vector<128xf32>
    %174 = vector.shape_cast %173 : vector<128xf32> to vector<128x1xf32>
    %175 = vector.broadcast %174 : vector<128x1xf32> to vector<128x128xf32>
    %176 = arith.subf %175, %172 : vector<128x128xf32>
    %cst_83 = arith.constant dense<0xFF800000> : vector<128xf32>
    %177 = vector.multi_reduction <maximumf>, %176, %cst_83 [1] : vector<128x128xf32> to vector<128xf32>
    %178 = vector.shape_cast %177 : vector<128xf32> to vector<128x1xf32>
    %179 = vector.broadcast %178 : vector<128x1xf32> to vector<128x128xf32>
    %180 = arith.subf %176, %179 : vector<128x128xf32>
    %181 = math.exp %180 : vector<128x128xf32>
    %cst_84 = arith.constant dense<0.000000e+00> : vector<128xf32>
    %182 = vector.multi_reduction <add>, %181, %cst_84 [1] : vector<128x128xf32> to vector<128xf32>
    %183 = vector.shape_cast %182 : vector<128xf32> to vector<128x1xf32>
    %184 = vector.broadcast %183 : vector<128x1xf32> to vector<128x128xf32>
    %185 = arith.divf %181, %184 : vector<128x128xf32>
    %cst_85 = arith.constant dense<0.000000e+00> : vector<128x192xf32>
    %186 = tpu.matmul %185, %50, %cst_85 {dimension_numbers = #tpu.dot_dimension_numbers<[1], [0], [0], [1], [0, 0, 1, 1], [], []>} : vector<128x128xf32>, vector<128x192xf32>, vector<128x192xf32> -> vector<128x192xf32>
    %c2_86 = arith.constant 2 : index
    %c0_87 = arith.constant 0 : index
    %187 = memref.load %arg1[%c2_86, %c0_87] : memref<3x2xf32, #tpu.memory_space<smem>>
    %188 = vector.broadcast %187 : f32 to vector<128x192xf32>
    %189 = arith.mulf %188, %171 : vector<128x192xf32>
    %c2_88 = arith.constant 2 : index
    %c1_89 = arith.constant 1 : index
    %190 = memref.load %arg1[%c2_88, %c1_89] : memref<3x2xf32, #tpu.memory_space<smem>>
    %191 = vector.broadcast %190 : f32 to vector<128x192xf32>
    %192 = arith.mulf %191, %186 : vector<128x192xf32>
    %193 = arith.addf %189, %192 : vector<128x192xf32>
    %cst_90 = arith.constant 2.000000e+00 : f32
    %194 = vector.broadcast %cst_90 : f32 to vector<128x192xf32>
    %195 = arith.mulf %194, %50 : vector<128x192xf32>
    %196 = arith.addf %193, %195 : vector<128x192xf32>
    %cst_91 = arith.constant dense<0.000000e+00> : vector<128xf32>
    %197 = vector.multi_reduction <add>, %196, %cst_91 [1] : vector<128x192xf32> to vector<128xf32>
    %198 = vector.shape_cast %197 : vector<128xf32> to vector<128x1xf32>
    %cst_92 = arith.constant 1.920000e+02 : f32
    %199 = vector.broadcast %cst_92 : f32 to vector<128x1xf32>
    %200 = arith.divf %198, %199 : vector<128x1xf32>
    %201 = vector.extract_strided_slice %49 {offsets = [0, 0], sizes = [128, 96], strides = [1, 1]} : vector<128x192xf32> to vector<128x96xf32>
    %cst_93 = arith.constant dense<0.000000e+00> : vector<128xf32>
    %202 = vector.multi_reduction <add>, %201, %cst_93 [1] : vector<128x96xf32> to vector<128xf32>
    %203 = vector.shape_cast %202 : vector<128xf32> to vector<128x1xf32>
    %cst_94 = arith.constant 9.600000e+01 : f32
    %204 = vector.broadcast %cst_94 : f32 to vector<128x1xf32>
    %205 = arith.divf %203, %204 : vector<128x1xf32>
    %206 = vector.extract_strided_slice %49 {offsets = [0, 96], sizes = [128, 96], strides = [1, 1]} : vector<128x192xf32> to vector<128x96xf32>
    %cst_95 = arith.constant dense<0.000000e+00> : vector<128xf32>
    %207 = vector.multi_reduction <add>, %206, %cst_95 [1] : vector<128x96xf32> to vector<128xf32>
    %208 = vector.shape_cast %207 : vector<128xf32> to vector<128x1xf32>
    %cst_96 = arith.constant 9.600000e+01 : f32
    %209 = vector.broadcast %cst_96 : f32 to vector<128x1xf32>
    %210 = arith.divf %208, %209 : vector<128x1xf32>
    %211 = vector.extract_strided_slice %50 {offsets = [0, 0], sizes = [128, 64], strides = [1, 1]} : vector<128x192xf32> to vector<128x64xf32>
    %cst_97 = arith.constant dense<0.000000e+00> : vector<128xf32>
    %212 = vector.multi_reduction <add>, %211, %cst_97 [1] : vector<128x64xf32> to vector<128xf32>
    %213 = vector.shape_cast %212 : vector<128xf32> to vector<128x1xf32>
    %cst_98 = arith.constant 6.400000e+01 : f32
    %214 = vector.broadcast %cst_98 : f32 to vector<128x1xf32>
    %215 = arith.divf %213, %214 : vector<128x1xf32>
    %216 = vector.extract_strided_slice %50 {offsets = [0, 64], sizes = [128, 64], strides = [1, 1]} : vector<128x192xf32> to vector<128x64xf32>
    %cst_99 = arith.constant dense<0.000000e+00> : vector<128xf32>
    %217 = vector.multi_reduction <add>, %216, %cst_99 [1] : vector<128x64xf32> to vector<128xf32>
    %218 = vector.shape_cast %217 : vector<128xf32> to vector<128x1xf32>
    %cst_100 = arith.constant 6.400000e+01 : f32
    %219 = vector.broadcast %cst_100 : f32 to vector<128x1xf32>
    %220 = arith.divf %218, %219 : vector<128x1xf32>
    %221 = vector.extract_strided_slice %50 {offsets = [0, 128], sizes = [128, 64], strides = [1, 1]} : vector<128x192xf32> to vector<128x64xf32>
    %cst_101 = arith.constant dense<0.000000e+00> : vector<128xf32>
    %222 = vector.multi_reduction <add>, %221, %cst_101 [1] : vector<128x64xf32> to vector<128xf32>
    %223 = vector.shape_cast %222 : vector<128xf32> to vector<128x1xf32>
    %cst_102 = arith.constant 6.400000e+01 : f32
    %224 = vector.broadcast %cst_102 : f32 to vector<128x1xf32>
    %225 = arith.divf %223, %224 : vector<128x1xf32>
    %226 = tpu.concatenate %100, %150, %200, %205, %210, %215, %220, %225 in 1 : vector<128x1xf32>, vector<128x1xf32>, vector<128x1xf32>, vector<128x1xf32>, vector<128x1xf32>, vector<128x1xf32>, vector<128x1xf32>, vector<128x1xf32> -> vector<128x8xf32>
    %c0_103 = arith.constant 0 : index
    %c0_104 = arith.constant 0 : index
    %c0_105 = arith.constant 0 : index
    %227 = vector.load %arg8[%c0_103, %c0_104, %c0_105] : memref<1x128x8xf32, #tpu.memory_space<vmem>>, vector<1x128x8xf32>
    %228 = vector.shape_cast %227 : vector<1x128x8xf32> to vector<128x8xf32>
    %229 = vector.shape_cast %226 : vector<128x8xf32> to vector<1x128x8xf32>
    tpu.vector_store %arg8[%c0_103, %c0_104, %c0_105], %229 {strides = array<i32>} : memref<1x128x8xf32, #tpu.memory_space<vmem>>, vector<1x128x8xf32>,
    return
  }
  func.func @transform_0(%arg0: i32) -> (i32, i32) {
    %c0_i32 = arith.constant 0 : i32
    %c0_i32_0 = arith.constant 0 : i32
    %c0_i32_1 = arith.constant 0 : i32
    return %c0_i32, %c0_i32_0 : i32, i32
  }
  func.func @transform_1(%arg0: i32) -> (i32, i32, i32) {
    %c0_i32 = arith.constant 0 : i32
    %c0_i32_0 = arith.constant 0 : i32
    %c0_i32_1 = arith.constant 0 : i32
    return %arg0, %c0_i32, %c0_i32_0 : i32, i32, i32
  }
  func.func @transform_2(%arg0: i32) -> (i32, i32, i32) {
    %c0_i32 = arith.constant 0 : i32
    %c0_i32_0 = arith.constant 0 : i32
    %c0_i32_1 = arith.constant 0 : i32
    return %arg0, %c0_i32, %c0_i32_0 : i32, i32, i32
  }
  func.func @transform_3(%arg0: i32) -> (i32, i32, i32) {
    %c0_i32 = arith.constant 0 : i32
    %c0_i32_0 = arith.constant 0 : i32
    %c0_i32_1 = arith.constant 0 : i32
    %c0_i32_2 = arith.constant 0 : i32
    return %c0_i32, %c0_i32_0, %c0_i32_1 : i32, i32, i32
  }
  func.func @transform_4(%arg0: i32) -> (i32, i32) {
    %c0_i32 = arith.constant 0 : i32
    %c0_i32_0 = arith.constant 0 : i32
    %c0_i32_1 = arith.constant 0 : i32
    return %c0_i32, %c0_i32_0 : i32, i32
  }
  func.func @transform_5(%arg0: i32) -> (i32, i32, i32) {
    %c0_i32 = arith.constant 0 : i32
    %c0_i32_0 = arith.constant 0 : i32
    %c0_i32_1 = arith.constant 0 : i32
    %c0_i32_2 = arith.constant 0 : i32
    return %c0_i32, %c0_i32_0, %c0_i32_1 : i32, i32, i32
  }
  func.func @transform_6(%arg0: i32) -> (i32, i32, i32) {
    %c0_i32 = arith.constant 0 : i32
    %c0_i32_0 = arith.constant 0 : i32
    %c0_i32_1 = arith.constant 0 : i32
    %c0_i32_2 = arith.constant 0 : i32
    return %c0_i32, %c0_i32_0, %c0_i32_1 : i32, i32, i32
  }
  func.func @transform_7(%arg0: i32) -> (i32, i32, i32) {
    %c0_i32 = arith.constant 0 : i32
    %c0_i32_0 = arith.constant 0 : i32
    %c0_i32_1 = arith.constant 0 : i32
    return %arg0, %c0_i32, %c0_i32_0 : i32, i32, i32
  }
}

</mosaic_0001>

<llo_original>
// kernel: mgn_forward.3
$region0: #{mgn_forward.3}
  #allocation0 [shape = 'u32[]', space=smem, size = 0x4, offset = 0x4, fixed_abs, tag = 'smem constant byte address 0x4 - core index']
  #allocation1 [shape = 'u32[72,128]{1,0:T(1,128)}', space=vmem, size = 0x9000, scoped, tag = 'internal scratch']
  %s0 = inlined_call_operand.vmem [shape: f32[2,128,8], index: 0, kind: input, shape index: {}]
  %s1 = inlined_call_operand.vmem [shape: f32[8,128,32], index: 1, kind: input, shape index: {}]
  %s2 = inlined_call_operand.vmem [shape: f32[1,256], index: 2, kind: input, shape index: {}]
  %s3 = inlined_call_operand.vmem [shape: f32[1,256], index: 3, kind: input, shape index: {}]
  %s4 = inlined_call_operand.vmem [shape: f32[1,256], index: 4, kind: input, shape index: {}]
  %s5 = inlined_call_operand.vmem [shape: f32[1,256], index: 5, kind: input, shape index: {}]
  %s6 = inlined_call_operand.hbm [shape: f32[2,256], index: 6, kind: output, shape index: {}]
  %s7 = sld [smem:[#allocation0]]
  $region34: #{mgn_forward.3} parent=0
    _
  %s9 = ssub.s32 1, %s7
  %s10 = scalar_select 0, %s9, %s7
  $region1: #{mgn_forward.3} parent=0
    #allocation2 [shape = 'u8[2048]{0}', space=vmem, size = 0x800, scoped, tag = 'output window, operand 0, single buffered']
    #allocation3 [shape = 's32[1]{0}', space=sflag, size = 0x4, scoped, tag = 'scoped memory for mgn_forward.3']
    %11 = vsyncpa [#allocation3], 0
    // Predicated region
    $region2: #{mgn_forward.3} parent=1 // pred_check
      _
    $region3: #{mgn_forward.3} parent=1 // pred_check_branch
      %13 = sbr.rel (0) target = $region5
    $region4: #{mgn_forward.3} parent=1 // pred_region
      _
    $region5: #{mgn_forward.3} parent=1 // pred_fallthru
      _
    // Predicated region
    $region6: #{mgn_forward.3} parent=1 // pred_check
      _
    $region7: #{mgn_forward.3} parent=1 // pred_check_branch
      %15 = sbr.rel (0) target = $region9
    $region8: #{mgn_forward.3} parent=1 // pred_region
      _
    $region9: #{mgn_forward.3} parent=1 // pred_fallthru
      _
    // Predicated region
    $region10: #{mgn_forward.3} parent=1 // pred_check
      _
    $region11: #{mgn_forward.3} parent=1 // pred_check_branch
      %17 = sbr.rel (0) target = $region13
    $region12: #{mgn_forward.3} parent=1 // pred_region
      _
    $region13: #{mgn_forward.3} parent=1 // pred_fallthru
      _
    // Predicated region
    $region14: #{mgn_forward.3} parent=1 // pred_check
      _
    $region15: #{mgn_forward.3} parent=1 // pred_check_branch
      %19 = sbr.rel (0) target = $region17
    $region16: #{mgn_forward.3} parent=1 // pred_region
      _
    $region17: #{mgn_forward.3} parent=1 // pred_fallthru
      _
    // Predicated region
    $region18: #{mgn_forward.3} parent=1 // pred_check
      _
    $region19: #{mgn_forward.3} parent=1 // pred_check_branch
      %21 = sbr.rel (0) target = $region21
    $region20: #{mgn_forward.3} parent=1 // pred_region
      _
    $region21: #{mgn_forward.3} parent=1 // pred_fallthru
      _
    // Predicated region
    $region22: #{mgn_forward.3} parent=1 // pred_check
      _
    $region23: #{mgn_forward.3} parent=1 // pred_check_branch
      %23 = sbr.rel (0) target = $region25
    $region24: #{mgn_forward.3} parent=1 // pred_region
      _
    $region25: #{mgn_forward.3} parent=1 // pred_fallthru
      _
    %v24 = vld [vmem:[%s0] sm:$0xff]
    %v25 = vld [vmem:[%s0 + $0x8] sm:$0xff]
    %v26 = vld [vmem:[%s0 + $0x10] sm:$0xff]
    %v27 = vld [vmem:[%s0 + $0x18] sm:$0xff]
    %v28 = vld [vmem:[%s0 + $0x20] sm:$0xff]
    %v29 = vld [vmem:[%s0 + $0x28] sm:$0xff]
    %v30 = vld [vmem:[%s0 + $0x30] sm:$0xff]
    %v31 = vld [vmem:[%s0 + $0x38] sm:$0xff]
    %v32 = vld [vmem:[%s0 + $0x40] sm:$0xff]
    %v33 = vld [vmem:[%s0 + $0x48] sm:$0xff]
    %v34 = vld [vmem:[%s0 + $0x50] sm:$0xff]
    %v35 = vld [vmem:[%s0 + $0x58] sm:$0xff]
    %v36 = vld [vmem:[%s0 + $0x60] sm:$0xff]
    %v37 = vld [vmem:[%s0 + $0x68] sm:$0xff]
    %v38 = vld [vmem:[%s0 + $0x70] sm:$0xff]
    %v39 = vld [vmem:[%s0 + $0x78] sm:$0xff]
    %v40 = vld [vmem:[%s0 + $0x80] sm:$0xff]
    %v41 = vld [vmem:[%s0 + $0x88] sm:$0xff]
    %v42 = vld [vmem:[%s0 + $0x90] sm:$0xff]
    %v43 = vld [vmem:[%s0 + $0x98] sm:$0xff]
    %v44 = vld [vmem:[%s0 + $0xa0] sm:$0xff]
    %v45 = vld [vmem:[%s0 + $0xa8] sm:$0xff]
    %v46 = vld [vmem:[%s0 + $0xb0] sm:$0xff]
    %v47 = vld [vmem:[%s0 + $0xb8] sm:$0xff]
    %v48 = vld [vmem:[%s0 + $0xc0] sm:$0xff]
    %v49 = vld [vmem:[%s0 + $0xc8] sm:$0xff]
    %v50 = vld [vmem:[%s0 + $0xd0] sm:$0xff]
    %v51 = vld [vmem:[%s0 + $0xd8] sm:$0xff]
    %v52 = vld [vmem:[%s0 + $0xe0] sm:$0xff]
    %v53 = vld [vmem:[%s0 + $0xe8] sm:$0xff]
    %v54 = vld [vmem:[%s0 + $0xf0] sm:$0xff]
    %v55 = vld [vmem:[%s0 + $0xf8] sm:$0xff]
    %v56 = vld [vmem:[%s1] sm:$0xff]
    %v57 = vld [vmem:[%s1 + $0x8] sm:$0xff]
    %v58 = vld [vmem:[%s1 + $0x10] sm:$0xff]
    %v59 = vld [vmem:[%s1 + $0x18] sm:$0xff]
    %v60 = vld [vmem:[%s1 + $0x20] sm:$0xff]
    %v61 = vld [vmem:[%s1 + $0x28] sm:$0xff]
    %v62 = vld [vmem:[%s1 + $0x30] sm:$0xff]
    %v63 = vld [vmem:[%s1 + $0x38] sm:$0xff]
    %v64 = vld [vmem:[%s1 + $0x40] sm:$0xff]
    %v65 = vld [vmem:[%s1 + $0x48] sm:$0xff]
    %v66 = vld [vmem:[%s1 + $0x50] sm:$0xff]
    %v67 = vld [vmem:[%s1 + $0x58] sm:$0xff]
    %v68 = vld [vmem:[%s1 + $0x60] sm:$0xff]
    %v69 = vld [vmem:[%s1 + $0x68] sm:$0xff]
    %v70 = vld [vmem:[%s1 + $0x70] sm:$0xff]
    %v71 = vld [vmem:[%s1 + $0x78] sm:$0xff]
    %v72 = vld [vmem:[%s1 + $0x80] sm:$0xff]
    %v73 = vld [vmem:[%s1 + $0x88] sm:$0xff]
    %v74 = vld [vmem:[%s1 + $0x90] sm:$0xff]
    %v75 = vld [vmem:[%s1 + $0x98] sm:$0xff]
    %v76 = vld [vmem:[%s1 + $0xa0] sm:$0xff]
    %v77 = vld [vmem:[%s1 + $0xa8] sm:$0xff]
    %v78 = vld [vmem:[%s1 + $0xb0] sm:$0xff]
    %v79 = vld [vmem:[%s1 + $0xb8] sm:$0xff]
    %v80 = vld [vmem:[%s1 + $0xc0] sm:$0xff]
    %v81 = vld [vmem:[%s1 + $0xc8] sm:$0xff]
    %v82 = vld [vmem:[%s1 + $0xd0] sm:$0xff]
    %v83 = vld [vmem:[%s1 + $0xd8] sm:$0xff]
    %v84 = vld [vmem:[%s1 + $0xe0] sm:$0xff]
    %v85 = vld [vmem:[%s1 + $0xe8] sm:$0xff]
    %v86 = vld [vmem:[%s1 + $0xf0] sm:$0xff]
    %v87 = vld [vmem:[%s1 + $0xf8] sm:$0xff]
    %v88 = vld [vmem:[%s1 + $0x100] sm:$0xff]
    %v89 = vld [vmem:[%s1 + $0x108] sm:$0xff]
    %v90 = vld [vmem:[%s1 + $0x110] sm:$0xff]
    %v91 = vld [vmem:[%s1 + $0x118] sm:$0xff]
    %v92 = vld [vmem:[%s1 + $0x120] sm:$0xff]
    %v93 = vld [vmem:[%s1 + $0x128] sm:$0xff]
    %v94 = vld [vmem:[%s1 + $0x130] sm:$0xff]
    %v95 = vld [vmem:[%s1 + $0x138] sm:$0xff]
    %v96 = vld [vmem:[%s1 + $0x140] sm:$0xff]
    %v97 = vld [vmem:[%s1 + $0x148] sm:$0xff]
    %v98 = vld [vmem:[%s1 + $0x150] sm:$0xff]
    %v99 = vld [vmem:[%s1 + $0x158] sm:$0xff]
    %v100 = vld [vmem:[%s1 + $0x160] sm:$0xff]
    %v101 = vld [vmem:[%s1 + $0x168] sm:$0xff]
    %v102 = vld [vmem:[%s1 + $0x170] sm:$0xff]
    %v103 = vld [vmem:[%s1 + $0x178] sm:$0xff]
    %v104 = vld [vmem:[%s1 + $0x180] sm:$0xff]
    %v105 = vld [vmem:[%s1 + $0x188] sm:$0xff]
    %v106 = vld [vmem:[%s1 + $0x190] sm:$0xff]
    %v107 = vld [vmem:[%s1 + $0x198] sm:$0xff]
    %v108 = vld [vmem:[%s1 + $0x1a0] sm:$0xff]
    %v109 = vld [vmem:[%s1 + $0x1a8] sm:$0xff]
    %v110 = vld [vmem:[%s1 + $0x1b0] sm:$0xff]
    %v111 = vld [vmem:[%s1 + $0x1b8] sm:$0xff]
    %v112 = vld [vmem:[%s1 + $0x1c0] sm:$0xff]
    %v113 = vld [vmem:[%s1 + $0x1c8] sm:$0xff]
    %v114 = vld [vmem:[%s1 + $0x1d0] sm:$0xff]
    %v115 = vld [vmem:[%s1 + $0x1d8] sm:$0xff]
    %v116 = vld [vmem:[%s1 + $0x1e0] sm:$0xff]
    %v117 = vld [vmem:[%s1 + $0x1e8] sm:$0xff]
    %v118 = vld [vmem:[%s1 + $0x1f0] sm:$0xff]
    %v119 = vld [vmem:[%s1 + $0x1f8] sm:$0xff]
    %v120 = vld [vmem:[%s1 + $0x200] sm:$0xff]
    %v121 = vld [vmem:[%s1 + $0x208] sm:$0xff]
    %v122 = vld [vmem:[%s1 + $0x210] sm:$0xff]
    %v123 = vld [vmem:[%s1 + $0x218] sm:$0xff]
    %v124 = vld [vmem:[%s1 + $0x220] sm:$0xff]
    %v125 = vld [vmem:[%s1 + $0x228] sm:$0xff]
    %v126 = vld [vmem:[%s1 + $0x230] sm:$0xff]
    %v127 = vld [vmem:[%s1 + $0x238] sm:$0xff]
    %v128 = vld [vmem:[%s1 + $0x240] sm:$0xff]
    %v129 = vld [vmem:[%s1 + $0x248] sm:$0xff]
    %v130 = vld [vmem:[%s1 + $0x250] sm:$0xff]
    %v131 = vld [vmem:[%s1 + $0x258] sm:$0xff]
    %v132 = vld [vmem:[%s1 + $0x260] sm:$0xff]
    %v133 = vld [vmem:[%s1 + $0x268] sm:$0xff]
    %v134 = vld [vmem:[%s1 + $0x270] sm:$0xff]
    %v135 = vld [vmem:[%s1 + $0x278] sm:$0xff]
    %v136 = vld [vmem:[%s1 + $0x280] sm:$0xff]
    %v137 = vld [vmem:[%s1 + $0x288] sm:$0xff]
    %v138 = vld [vmem:[%s1 + $0x290] sm:$0xff]
    %v139 = vld [vmem:[%s1 + $0x298] sm:$0xff]
    %v140 = vld [vmem:[%s1 + $0x2a0] sm:$0xff]
    %v141 = vld [vmem:[%s1 + $0x2a8] sm:$0xff]
    %v142 = vld [vmem:[%s1 + $0x2b0] sm:$0xff]
    %v143 = vld [vmem:[%s1 + $0x2b8] sm:$0xff]
    %v144 = vld [vmem:[%s1 + $0x2c0] sm:$0xff]
    %v145 = vld [vmem:[%s1 + $0x2c8] sm:$0xff]
    %v146 = vld [vmem:[%s1 + $0x2d0] sm:$0xff]
    %v147 = vld [vmem:[%s1 + $0x2d8] sm:$0xff]
    %v148 = vld [vmem:[%s1 + $0x2e0] sm:$0xff]
    %v149 = vld [vmem:[%s1 + $0x2e8] sm:$0xff]
    %v150 = vld [vmem:[%s1 + $0x2f0] sm:$0xff]
    %v151 = vld [vmem:[%s1 + $0x2f8] sm:$0xff]
    %v152 = vld [vmem:[%s1 + $0x300] sm:$0xff]
    %v153 = vld [vmem:[%s1 + $0x308] sm:$0xff]
    %v154 = vld [vmem:[%s1 + $0x310] sm:$0xff]
    %v155 = vld [vmem:[%s1 + $0x318] sm:$0xff]
    %v156 = vld [vmem:[%s1 + $0x320] sm:$0xff]
    %v157 = vld [vmem:[%s1 + $0x328] sm:$0xff]
    %v158 = vld [vmem:[%s1 + $0x330] sm:$0xff]
    %v159 = vld [vmem:[%s1 + $0x338] sm:$0xff]
    %v160 = vld [vmem:[%s1 + $0x340] sm:$0xff]
    %v161 = vld [vmem:[%s1 + $0x348] sm:$0xff]
    %v162 = vld [vmem:[%s1 + $0x350] sm:$0xff]
    %v163 = vld [vmem:[%s1 + $0x358] sm:$0xff]
    %v164 = vld [vmem:[%s1 + $0x360] sm:$0xff]
    %v165 = vld [vmem:[%s1 + $0x368] sm:$0xff]
    %v166 = vld [vmem:[%s1 + $0x370] sm:$0xff]
    %v167 = vld [vmem:[%s1 + $0x378] sm:$0xff]
    %v168 = vld [vmem:[%s1 + $0x380] sm:$0xff]
    %v169 = vld [vmem:[%s1 + $0x388] sm:$0xff]
    %v170 = vld [vmem:[%s1 + $0x390] sm:$0xff]
    %v171 = vld [vmem:[%s1 + $0x398] sm:$0xff]
    %v172 = vld [vmem:[%s1 + $0x3a0] sm:$0xff]
    %v173 = vld [vmem:[%s1 + $0x3a8] sm:$0xff]
    %v174 = vld [vmem:[%s1 + $0x3b0] sm:$0xff]
    %v175 = vld [vmem:[%s1 + $0x3b8] sm:$0xff]
    %v176 = vld [vmem:[%s1 + $0x3c0] sm:$0xff]
    %v177 = vld [vmem:[%s1 + $0x3c8] sm:$0xff]
    %v178 = vld [vmem:[%s1 + $0x3d0] sm:$0xff]
    %v179 = vld [vmem:[%s1 + $0x3d8] sm:$0xff]
    %v180 = vld [vmem:[%s1 + $0x3e0] sm:$0xff]
    %v181 = vld [vmem:[%s1 + $0x3e8] sm:$0xff]
    %v182 = vld [vmem:[%s1 + $0x3f0] sm:$0xff]
    %v183 = vld [vmem:[%s1 + $0x3f8] sm:$0xff]
    %185 = vset.pattern.permute.xlu0 0
    %186 = vperm.xlu0 %185, %v24
    %v187 = vpop.permute.xlu0 %186
    %190 = vset.pattern.permute.xlu0 0
    %191 = vperm.xlu0 %190, %v25
    %v192 = vpop.permute.xlu0 %191
    %195 = vset.pattern.permute.xlu0 0
    %196 = vperm.xlu0 %195, %v26
    %v197 = vpop.permute.xlu0 %196
    %200 = vset.pattern.permute.xlu0 0
    %201 = vperm.xlu0 %200, %v27
    %v202 = vpop.permute.xlu0 %201
    %205 = vset.pattern.permute.xlu0 0
    %206 = vperm.xlu0 %205, %v28
    %v207 = vpop.permute.xlu0 %206
    %210 = vset.pattern.permute.xlu0 0
    %211 = vperm.xlu0 %210, %v29
    %v212 = vpop.permute.xlu0 %211
    %215 = vset.pattern.permute.xlu0 0
    %216 = vperm.xlu0 %215, %v30
    %v217 = vpop.permute.xlu0 %216
    %220 = vset.pattern.permute.xlu0 0
    %221 = vperm.xlu0 %220, %v31
    %v222 = vpop.permute.xlu0 %221
    %225 = vset.pattern.permute.xlu0 0
    %226 = vperm.xlu0 %225, %v32
    %v227 = vpop.permute.xlu0 %226
    %230 = vset.pattern.permute.xlu0 0
    %231 = vperm.xlu0 %230, %v33
    %v232 = vpop.permute.xlu0 %231
    %235 = vset.pattern.permute.xlu0 0
    %236 = vperm.xlu0 %235, %v34
    %v237 = vpop.permute.xlu0 %236
    %240 = vset.pattern.permute.xlu0 0
    %241 = vperm.xlu0 %240, %v35
    %v242 = vpop.permute.xlu0 %241
    %245 = vset.pattern.permute.xlu0 0
    %246 = vperm.xlu0 %245, %v36
    %v247 = vpop.permute.xlu0 %246
    %250 = vset.pattern.permute.xlu0 0
    %251 = vperm.xlu0 %250, %v37
    %v252 = vpop.permute.xlu0 %251
    %255 = vset.pattern.permute.xlu0 0
    %256 = vperm.xlu0 %255, %v38
    %v257 = vpop.permute.xlu0 %256
    %260 = vset.pattern.permute.xlu0 0
    %261 = vperm.xlu0 %260, %v39
    %v262 = vpop.permute.xlu0 %261
    %265 = vset.pattern.permute.xlu0 0
    %266 = vperm.xlu0 %265, %v40
    %v267 = vpop.permute.xlu0 %266
    %270 = vset.pattern.permute.xlu0 0
    %271 = vperm.xlu0 %270, %v41
    %v272 = vpop.permute.xlu0 %271
    %275 = vset.pattern.permute.xlu0 0
    %276 = vperm.xlu0 %275, %v42
    %v277 = vpop.permute.xlu0 %276
    %280 = vset.pattern.permute.xlu0 0
    %281 = vperm.xlu0 %280, %v43
    %v282 = vpop.permute.xlu0 %281
    %285 = vset.pattern.permute.xlu0 0
    %286 = vperm.xlu0 %285, %v44
    %v287 = vpop.permute.xlu0 %286
    %290 = vset.pattern.permute.xlu0 0
    %291 = vperm.xlu0 %290, %v45
    %v292 = vpop.permute.xlu0 %291
    %295 = vset.pattern.permute.xlu0 0
    %296 = vperm.xlu0 %295, %v46
    %v297 = vpop.permute.xlu0 %296
    %300 = vset.pattern.permute.xlu0 0
    %301 = vperm.xlu0 %300, %v47
    %v302 = vpop.permute.xlu0 %301
    %305 = vset.pattern.permute.xlu0 0
    %306 = vperm.xlu0 %305, %v48
    %v307 = vpop.permute.xlu0 %306
    %310 = vset.pattern.permute.xlu0 0
    %311 = vperm.xlu0 %310, %v49
    %v312 = vpop.permute.xlu0 %311
    %315 = vset.pattern.permute.xlu0 0
    %316 = vperm.xlu0 %315, %v50
    %v317 = vpop.permute.xlu0 %316
    %320 = vset.pattern.permute.xlu0 0
    %321 = vperm.xlu0 %320, %v51
    %v322 = vpop.permute.xlu0 %321
    %325 = vset.pattern.permute.xlu0 0
    %326 = vperm.xlu0 %325, %v52
    %v327 = vpop.permute.xlu0 %326
    %330 = vset.pattern.permute.xlu0 0
    %331 = vperm.xlu0 %330, %v53
    %v332 = vpop.permute.xlu0 %331
    %335 = vset.pattern.permute.xlu0 0
    %336 = vperm.xlu0 %335, %v54
    %v337 = vpop.permute.xlu0 %336
    %340 = vset.pattern.permute.xlu0 0
    %341 = vperm.xlu0 %340, %v55
    %v342 = vpop.permute.xlu0 %341
    %v344 = vmul.f32 %v187, %v56
    %v345 = vmul.f32 %v192, %v57
    %v346 = vmul.f32 %v197, %v58
    %v347 = vmul.f32 %v202, %v59
    %v348 = vmul.f32 %v207, %v60
    %v349 = vmul.f32 %v212, %v61
    %v350 = vmul.f32 %v217, %v62
    %v351 = vmul.f32 %v222, %v63
    %v352 = vmul.f32 %v227, %v64
    %v353 = vmul.f32 %v232, %v65
    %v354 = vmul.f32 %v237, %v66
    %v355 = vmul.f32 %v242, %v67
    %v356 = vmul.f32 %v247, %v68
    %v357 = vmul.f32 %v252, %v69
    %v358 = vmul.f32 %v257, %v70
    %v359 = vmul.f32 %v262, %v71
    %v360 = vmul.f32 %v267, %v56
    %v361 = vmul.f32 %v272, %v57
    %v362 = vmul.f32 %v277, %v58
    %v363 = vmul.f32 %v282, %v59
    %v364 = vmul.f32 %v287, %v60
    %v365 = vmul.f32 %v292, %v61
    %v366 = vmul.f32 %v297, %v62
    %v367 = vmul.f32 %v302, %v63
    %v368 = vmul.f32 %v307, %v64
    %v369 = vmul.f32 %v312, %v65
    %v370 = vmul.f32 %v317, %v66
    %v371 = vmul.f32 %v322, %v67
    %v372 = vmul.f32 %v327, %v68
    %v373 = vmul.f32 %v332, %v69
    %v374 = vmul.f32 %v337, %v70
    %v375 = vmul.f32 %v342, %v71
    %vm376 = vcmask 261120
    %v377 = vsel %vm376, %v344, 0.0
    %v378 = vsel %vm376, %v345, 0.0
    %v379 = vadd.f32 %v377, %v378
    %v380 = vsel %vm376, %v346, 0.0
    %v381 = vadd.f32 %v379, %v380
    %v382 = vsel %vm376, %v347, 0.0
    %v383 = vadd.f32 %v381, %v382
    %v384 = vsel %vm376, %v348, 0.0
    %v385 = vadd.f32 %v383, %v384
    %v386 = vsel %vm376, %v349, 0.0
    %v387 = vadd.f32 %v385, %v386
    %v388 = vsel %vm376, %v350, 0.0
    %v389 = vadd.f32 %v387, %v388
    %v390 = vsel %vm376, %v351, 0.0
    %v391 = vadd.f32 %v389, %v390
    %v392 = vsel %vm376, %v352, 0.0
    %v393 = vadd.f32 %v391, %v392
    %v394 = vsel %vm376, %v353, 0.0
    %v395 = vadd.f32 %v393, %v394
    %v396 = vsel %vm376, %v354, 0.0
    %v397 = vadd.f32 %v395, %v396
    %v398 = vsel %vm376, %v355, 0.0
    %v399 = vadd.f32 %v397, %v398
    %v400 = vsel %vm376, %v356, 0.0
    %v401 = vadd.f32 %v399, %v400
    %v402 = vsel %vm376, %v357, 0.0
    %v403 = vadd.f32 %v401, %v402
    %v404 = vsel %vm376, %v358, 0.0
    %v405 = vadd.f32 %v403, %v404
    %v406 = vsel %vm376, %v359, 0.0
    %v407 = vadd.f32 %v405, %v406
    %v408 = vrot.slane %v407, 4
    %v409 = vadd.f32 %v407, %v408
    %v410 = vrot.slane %v409, 2
    %v411 = vadd.f32 %v409, %v410
    %v412 = vrot.slane %v411, 1
    %v413 = vadd.f32 %v411, %v412
    %v414 = vsel %vm376, %v360, 0.0
    %v415 = vsel %vm376, %v361, 0.0
    %v416 = vadd.f32 %v414, %v415
    %v417 = vsel %vm376, %v362, 0.0
    %v418 = vadd.f32 %v416, %v417
    %v419 = vsel %vm376, %v363, 0.0
    %v420 = vadd.f32 %v418, %v419
    %v421 = vsel %vm376, %v364, 0.0
    %v422 = vadd.f32 %v420, %v421
    %v423 = vsel %vm376, %v365, 0.0
    %v424 = vadd.f32 %v422, %v423
    %v425 = vsel %vm376, %v366, 0.0
    %v426 = vadd.f32 %v424, %v425
    %v427 = vsel %vm376, %v367, 0.0
    %v428 = vadd.f32 %v426, %v427
    %v429 = vsel %vm376, %v368, 0.0
    %v430 = vadd.f32 %v428, %v429
    %v431 = vsel %vm376, %v369, 0.0
    %v432 = vadd.f32 %v430, %v431
    %v433 = vsel %vm376, %v370, 0.0
    %v434 = vadd.f32 %v432, %v433
    %v435 = vsel %vm376, %v371, 0.0
    %v436 = vadd.f32 %v434, %v435
    %v437 = vsel %vm376, %v372, 0.0
    %v438 = vadd.f32 %v436, %v437
    %v439 = vsel %vm376, %v373, 0.0
    %v440 = vadd.f32 %v438, %v439
    %v441 = vsel %vm376, %v374, 0.0
    %v442 = vadd.f32 %v440, %v441
    %v443 = vsel %vm376, %v375, 0.0
    %v444 = vadd.f32 %v442, %v443
    %v445 = vrot.slane %v444, 4
    %v446 = vadd.f32 %v444, %v445
    %v447 = vrot.slane %v446, 2
    %v448 = vadd.f32 %v446, %v447
    %v449 = vrot.slane %v448, 1
    %v450 = vadd.f32 %v448, %v449
    %451 = vset.pattern.permute.xlu0 1
    %452 = vperm.xlu0 %451, %v24
    %v453 = vpop.permute.xlu0 %452
    %455 = vset.pattern.permute.xlu0 1
    %456 = vperm.xlu0 %455, %v25
    %v457 = vpop.permute.xlu0 %456
    %459 = vset.pattern.permute.xlu0 1
    %460 = vperm.xlu0 %459, %v26
    %v461 = vpop.permute.xlu0 %460
    %463 = vset.pattern.permute.xlu0 1
    %464 = vperm.xlu0 %463, %v27
    %v465 = vpop.permute.xlu0 %464
    %467 = vset.pattern.permute.xlu0 1
    %468 = vperm.xlu0 %467, %v28
    %v469 = vpop.permute.xlu0 %468
    %471 = vset.pattern.permute.xlu0 1
    %472 = vperm.xlu0 %471, %v29
    %v473 = vpop.permute.xlu0 %472
    %475 = vset.pattern.permute.xlu0 1
    %476 = vperm.xlu0 %475, %v30
    %v477 = vpop.permute.xlu0 %476
    %479 = vset.pattern.permute.xlu0 1
    %480 = vperm.xlu0 %479, %v31
    %v481 = vpop.permute.xlu0 %480
    %483 = vset.pattern.permute.xlu0 1
    %484 = vperm.xlu0 %483, %v32
    %v485 = vpop.permute.xlu0 %484
    %487 = vset.pattern.permute.xlu0 1
    %488 = vperm.xlu0 %487, %v33
    %v489 = vpop.permute.xlu0 %488
    %491 = vset.pattern.permute.xlu0 1
    %492 = vperm.xlu0 %491, %v34
    %v493 = vpop.permute.xlu0 %492
    %495 = vset.pattern.permute.xlu0 1
    %496 = vperm.xlu0 %495, %v35
    %v497 = vpop.permute.xlu0 %496
    %499 = vset.pattern.permute.xlu0 1
    %500 = vperm.xlu0 %499, %v36
    %v501 = vpop.permute.xlu0 %500
    %503 = vset.pattern.permute.xlu0 1
    %504 = vperm.xlu0 %503, %v37
    %v505 = vpop.permute.xlu0 %504
    %507 = vset.pattern.permute.xlu0 1
    %508 = vperm.xlu0 %507, %v38
    %v509 = vpop.permute.xlu0 %508
    %511 = vset.pattern.permute.xlu0 1
    %512 = vperm.xlu0 %511, %v39
    %v513 = vpop.permute.xlu0 %512
    %515 = vset.pattern.permute.xlu0 1
    %516 = vperm.xlu0 %515, %v40
    %v517 = vpop.permute.xlu0 %516
    %519 = vset.pattern.permute.xlu0 1
    %520 = vperm.xlu0 %519, %v41
    %v521 = vpop.permute.xlu0 %520
    %523 = vset.pattern.permute.xlu0 1
    %524 = vperm.xlu0 %523, %v42
    %v525 = vpop.permute.xlu0 %524
    %527 = vset.pattern.permute.xlu0 1
    %528 = vperm.xlu0 %527, %v43
    %v529 = vpop.permute.xlu0 %528
    %531 = vset.pattern.permute.xlu0 1
    %532 = vperm.xlu0 %531, %v44
    %v533 = vpop.permute.xlu0 %532
    %535 = vset.pattern.permute.xlu0 1
    %536 = vperm.xlu0 %535, %v45
    %v537 = vpop.permute.xlu0 %536
    %539 = vset.pattern.permute.xlu0 1
    %540 = vperm.xlu0 %539, %v46
    %v541 = vpop.permute.xlu0 %540
    %543 = vset.pattern.permute.xlu0 1
    %544 = vperm.xlu0 %543, %v47
    %v545 = vpop.permute.xlu0 %544
    %547 = vset.pattern.permute.xlu0 1
    %548 = vperm.xlu0 %547, %v48
    %v549 = vpop.permute.xlu0 %548
    %551 = vset.pattern.permute.xlu0 1
    %552 = vperm.xlu0 %551, %v49
    %v553 = vpop.permute.xlu0 %552
    %555 = vset.pattern.permute.xlu0 1
    %556 = vperm.xlu0 %555, %v50
    %v557 = vpop.permute.xlu0 %556
    %559 = vset.pattern.permute.xlu0 1
    %560 = vperm.xlu0 %559, %v51
    %v561 = vpop.permute.xlu0 %560
    %563 = vset.pattern.permute.xlu0 1
    %564 = vperm.xlu0 %563, %v52
    %v565 = vpop.permute.xlu0 %564
    %567 = vset.pattern.permute.xlu0 1
    %568 = vperm.xlu0 %567, %v53
    %v569 = vpop.permute.xlu0 %568
    %571 = vset.pattern.permute.xlu0 1
    %572 = vperm.xlu0 %571, %v54
    %v573 = vpop.permute.xlu0 %572
    %575 = vset.pattern.permute.xlu0 1
    %576 = vperm.xlu0 %575, %v55
    %v577 = vpop.permute.xlu0 %576
    %v579 = vmul.f32 %v453, %v72
    %v580 = vmul.f32 %v457, %v73
    %v581 = vmul.f32 %v461, %v74
    %v582 = vmul.f32 %v465, %v75
    %v583 = vmul.f32 %v469, %v76
    %v584 = vmul.f32 %v473, %v77
    %v585 = vmul.f32 %v477, %v78
    %v586 = vmul.f32 %v481, %v79
    %v587 = vmul.f32 %v485, %v80
    %v588 = vmul.f32 %v489, %v81
    %v589 = vmul.f32 %v493, %v82
    %v590 = vmul.f32 %v497, %v83
    %v591 = vmul.f32 %v501, %v84
    %v592 = vmul.f32 %v505, %v85
    %v593 = vmul.f32 %v509, %v86
    %v594 = vmul.f32 %v513, %v87
    %v595 = vmul.f32 %v517, %v72
    %v596 = vmul.f32 %v521, %v73
    %v597 = vmul.f32 %v525, %v74
    %v598 = vmul.f32 %v529, %v75
    %v599 = vmul.f32 %v533, %v76
    %v600 = vmul.f32 %v537, %v77
    %v601 = vmul.f32 %v541, %v78
    %v602 = vmul.f32 %v545, %v79
    %v603 = vmul.f32 %v549, %v80
    %v604 = vmul.f32 %v553, %v81
    %v605 = vmul.f32 %v557, %v82
    %v606 = vmul.f32 %v561, %v83
    %v607 = vmul.f32 %v565, %v84
    %v608 = vmul.f32 %v569, %v85
    %v609 = vmul.f32 %v573, %v86
    %v610 = vmul.f32 %v577, %v87
    %v611 = vsel %vm376, %v579, 0.0
    %v612 = vsel %vm376, %v580, 0.0
    %v613 = vadd.f32 %v611, %v612
    %v614 = vsel %vm376, %v581, 0.0
    %v615 = vadd.f32 %v613, %v614
    %v616 = vsel %vm376, %v582, 0.0
    %v617 = vadd.f32 %v615, %v616
    %v618 = vsel %vm376, %v583, 0.0
    %v619 = vadd.f32 %v617, %v618
    %v620 = vsel %vm376, %v584, 0.0
    %v621 = vadd.f32 %v619, %v620
    %v622 = vsel %vm376, %v585, 0.0
    %v623 = vadd.f32 %v621, %v622
    %v624 = vsel %vm376, %v586, 0.0
    %v625 = vadd.f32 %v623, %v624
    %v626 = vsel %vm376, %v587, 0.0
    %v627 = vadd.f32 %v625, %v626
    %v628 = vsel %vm376, %v588, 0.0
    %v629 = vadd.f32 %v627, %v628
    %v630 = vsel %vm376, %v589, 0.0
    %v631 = vadd.f32 %v629, %v630
    %v632 = vsel %vm376, %v590, 0.0
    %v633 = vadd.f32 %v631, %v632
    %v634 = vsel %vm376, %v591, 0.0
    %v635 = vadd.f32 %v633, %v634
    %v636 = vsel %vm376, %v592, 0.0
    %v637 = vadd.f32 %v635, %v636
    %v638 = vsel %vm376, %v593, 0.0
    %v639 = vadd.f32 %v637, %v638
    %v640 = vsel %vm376, %v594, 0.0
    %v641 = vadd.f32 %v639, %v640
    %v642 = vrot.slane %v641, 4
    %v643 = vadd.f32 %v641, %v642
    %v644 = vrot.slane %v643, 2
    %v645 = vadd.f32 %v643, %v644
    %v646 = vrot.slane %v645, 1
    %v647 = vadd.f32 %v645, %v646
    %v648 = vsel %vm376, %v595, 0.0
    %v649 = vsel %vm376, %v596, 0.0
    %v650 = vadd.f32 %v648, %v649
    %v651 = vsel %vm376, %v597, 0.0
    %v652 = vadd.f32 %v650, %v651
    %v653 = vsel %vm376, %v598, 0.0
    %v654 = vadd.f32 %v652, %v653
    %v655 = vsel %vm376, %v599, 0.0
    %v656 = vadd.f32 %v654, %v655
    %v657 = vsel %vm376, %v600, 0.0
    %v658 = vadd.f32 %v656, %v657
    %v659 = vsel %vm376, %v601, 0.0
    %v660 = vadd.f32 %v658, %v659
    %v661 = vsel %vm376, %v602, 0.0
    %v662 = vadd.f32 %v660, %v661
    %v663 = vsel %vm376, %v603, 0.0
    %v664 = vadd.f32 %v662, %v663
    %v665 = vsel %vm376, %v604, 0.0
    %v666 = vadd.f32 %v664, %v665
    %v667 = vsel %vm376, %v605, 0.0
    %v668 = vadd.f32 %v666, %v667
    %v669 = vsel %vm376, %v606, 0.0
    %v670 = vadd.f32 %v668, %v669
    %v671 = vsel %vm376, %v607, 0.0
    %v672 = vadd.f32 %v670, %v671
    %v673 = vsel %vm376, %v608, 0.0
    %v674 = vadd.f32 %v672, %v673
    %v675 = vsel %vm376, %v609, 0.0
    %v676 = vadd.f32 %v674, %v675
    %v677 = vsel %vm376, %v610, 0.0
    %v678 = vadd.f32 %v676, %v677
    %v679 = vrot.slane %v678, 4
    %v680 = vadd.f32 %v678, %v679
    %v681 = vrot.slane %v680, 2
    %v682 = vadd.f32 %v680, %v681
    %v683 = vrot.slane %v682, 1
    %v684 = vadd.f32 %v682, %v683
    %685 = vset.pattern.permute.xlu0 2
    %686 = vperm.xlu0 %685, %v24
    %v687 = vpop.permute.xlu0 %686
    %689 = vset.pattern.permute.xlu0 2
    %690 = vperm.xlu0 %689, %v25
    %v691 = vpop.permute.xlu0 %690
    %693 = vset.pattern.permute.xlu0 2
    %694 = vperm.xlu0 %693, %v26
    %v695 = vpop.permute.xlu0 %694
    %697 = vset.pattern.permute.xlu0 2
    %698 = vperm.xlu0 %697, %v27
    %v699 = vpop.permute.xlu0 %698
    %701 = vset.pattern.permute.xlu0 2
    %702 = vperm.xlu0 %701, %v28
    %v703 = vpop.permute.xlu0 %702
    %705 = vset.pattern.permute.xlu0 2
    %706 = vperm.xlu0 %705, %v29
    %v707 = vpop.permute.xlu0 %706
    %709 = vset.pattern.permute.xlu0 2
    %710 = vperm.xlu0 %709, %v30
    %v711 = vpop.permute.xlu0 %710
    %713 = vset.pattern.permute.xlu0 2
    %714 = vperm.xlu0 %713, %v31
    %v715 = vpop.permute.xlu0 %714
    %717 = vset.pattern.permute.xlu0 2
    %718 = vperm.xlu0 %717, %v32
    %v719 = vpop.permute.xlu0 %718
    %721 = vset.pattern.permute.xlu0 2
    %722 = vperm.xlu0 %721, %v33
    %v723 = vpop.permute.xlu0 %722
    %725 = vset.pattern.permute.xlu0 2
    %726 = vperm.xlu0 %725, %v34
    %v727 = vpop.permute.xlu0 %726
    %729 = vset.pattern.permute.xlu0 2
    %730 = vperm.xlu0 %729, %v35
    %v731 = vpop.permute.xlu0 %730
    %733 = vset.pattern.permute.xlu0 2
    %734 = vperm.xlu0 %733, %v36
    %v735 = vpop.permute.xlu0 %734
    %737 = vset.pattern.permute.xlu0 2
    %738 = vperm.xlu0 %737, %v37
    %v739 = vpop.permute.xlu0 %738
    %741 = vset.pattern.permute.xlu0 2
    %742 = vperm.xlu0 %741, %v38
    %v743 = vpop.permute.xlu0 %742
    %745 = vset.pattern.permute.xlu0 2
    %746 = vperm.xlu0 %745, %v39
    %v747 = vpop.permute.xlu0 %746
    %749 = vset.pattern.permute.xlu0 2
    %750 = vperm.xlu0 %749, %v40
    %v751 = vpop.permute.xlu0 %750
    %753 = vset.pattern.permute.xlu0 2
    %754 = vperm.xlu0 %753, %v41
    %v755 = vpop.permute.xlu0 %754
    %757 = vset.pattern.permute.xlu0 2
    %758 = vperm.xlu0 %757, %v42
    %v759 = vpop.permute.xlu0 %758
    %761 = vset.pattern.permute.xlu0 2
    %762 = vperm.xlu0 %761, %v43
    %v763 = vpop.permute.xlu0 %762
    %765 = vset.pattern.permute.xlu0 2
    %766 = vperm.xlu0 %765, %v44
    %v767 = vpop.permute.xlu0 %766
    %769 = vset.pattern.permute.xlu0 2
    %770 = vperm.xlu0 %769, %v45
    %v771 = vpop.permute.xlu0 %770
    %773 = vset.pattern.permute.xlu0 2
    %774 = vperm.xlu0 %773, %v46
    %v775 = vpop.permute.xlu0 %774
    %777 = vset.pattern.permute.xlu0 2
    %778 = vperm.xlu0 %777, %v47
    %v779 = vpop.permute.xlu0 %778
    %781 = vset.pattern.permute.xlu0 2
    %782 = vperm.xlu0 %781, %v48
    %v783 = vpop.permute.xlu0 %782
    %785 = vset.pattern.permute.xlu0 2
    %786 = vperm.xlu0 %785, %v49
    %v787 = vpop.permute.xlu0 %786
    %789 = vset.pattern.permute.xlu0 2
    %790 = vperm.xlu0 %789, %v50
    %v791 = vpop.permute.xlu0 %790
    %793 = vset.pattern.permute.xlu0 2
    %794 = vperm.xlu0 %793, %v51
    %v795 = vpop.permute.xlu0 %794
    %797 = vset.pattern.permute.xlu0 2
    %798 = vperm.xlu0 %797, %v52
    %v799 = vpop.permute.xlu0 %798
    %801 = vset.pattern.permute.xlu0 2
    %802 = vperm.xlu0 %801, %v53
    %v803 = vpop.permute.xlu0 %802
    %805 = vset.pattern.permute.xlu0 2
    %806 = vperm.xlu0 %805, %v54
    %v807 = vpop.permute.xlu0 %806
    %809 = vset.pattern.permute.xlu0 2
    %810 = vperm.xlu0 %809, %v55
    %v811 = vpop.permute.xlu0 %810
    %v813 = vmul.f32 %v687, %v88
    %v814 = vmul.f32 %v691, %v89
    %v815 = vmul.f32 %v695, %v90
    %v816 = vmul.f32 %v699, %v91
    %v817 = vmul.f32 %v703, %v92
    %v818 = vmul.f32 %v707, %v93
    %v819 = vmul.f32 %v711, %v94
    %v820 = vmul.f32 %v715, %v95
    %v821 = vmul.f32 %v719, %v96
    %v822 = vmul.f32 %v723, %v97
    %v823 = vmul.f32 %v727, %v98
    %v824 = vmul.f32 %v731, %v99
    %v825 = vmul.f32 %v735, %v100
    %v826 = vmul.f32 %v739, %v101
    %v827 = vmul.f32 %v743, %v102
    %v828 = vmul.f32 %v747, %v103
    %v829 = vmul.f32 %v751, %v88
    %v830 = vmul.f32 %v755, %v89
    %v831 = vmul.f32 %v759, %v90
    %v832 = vmul.f32 %v763, %v91
    %v833 = vmul.f32 %v767, %v92
    %v834 = vmul.f32 %v771, %v93
    %v835 = vmul.f32 %v775, %v94
    %v836 = vmul.f32 %v779, %v95
    %v837 = vmul.f32 %v783, %v96
    %v838 = vmul.f32 %v787, %v97
    %v839 = vmul.f32 %v791, %v98
    %v840 = vmul.f32 %v795, %v99
    %v841 = vmul.f32 %v799, %v100
    %v842 = vmul.f32 %v803, %v101
    %v843 = vmul.f32 %v807, %v102
    %v844 = vmul.f32 %v811, %v103
    %v845 = vsel %vm376, %v813, 0.0
    %v846 = vsel %vm376, %v814, 0.0
    %v847 = vadd.f32 %v845, %v846
    %v848 = vsel %vm376, %v815, 0.0
    %v849 = vadd.f32 %v847, %v848
    %v850 = vsel %vm376, %v816, 0.0
    %v851 = vadd.f32 %v849, %v850
    %v852 = vsel %vm376, %v817, 0.0
    %v853 = vadd.f32 %v851, %v852
    %v854 = vsel %vm376, %v818, 0.0
    %v855 = vadd.f32 %v853, %v854
    %v856 = vsel %vm376, %v819, 0.0
    %v857 = vadd.f32 %v855, %v856
    %v858 = vsel %vm376, %v820, 0.0
    %v859 = vadd.f32 %v857, %v858
    %v860 = vsel %vm376, %v821, 0.0
    %v861 = vadd.f32 %v859, %v860
    %v862 = vsel %vm376, %v822, 0.0
    %v863 = vadd.f32 %v861, %v862
    %v864 = vsel %vm376, %v823, 0.0
    %v865 = vadd.f32 %v863, %v864
    %v866 = vsel %vm376, %v824, 0.0
    %v867 = vadd.f32 %v865, %v866
    %v868 = vsel %vm376, %v825, 0.0
    %v869 = vadd.f32 %v867, %v868
    %v870 = vsel %vm376, %v826, 0.0
    %v871 = vadd.f32 %v869, %v870
    %v872 = vsel %vm376, %v827, 0.0
    %v873 = vadd.f32 %v871, %v872
    %v874 = vsel %vm376, %v828, 0.0
    %v875 = vadd.f32 %v873, %v874
    %v876 = vrot.slane %v875, 4
    %v877 = vadd.f32 %v875, %v876
    %v878 = vrot.slane %v877, 2
    %v879 = vadd.f32 %v877, %v878
    %v880 = vrot.slane %v879, 1
    %v881 = vadd.f32 %v879, %v880
    %v882 = vsel %vm376, %v829, 0.0
    %v883 = vsel %vm376, %v830, 0.0
    %v884 = vadd.f32 %v882, %v883
    %v885 = vsel %vm376, %v831, 0.0
    %v886 = vadd.f32 %v884, %v885
    %v887 = vsel %vm376, %v832, 0.0
    %v888 = vadd.f32 %v886, %v887
    %v889 = vsel %vm376, %v833, 0.0
    %v890 = vadd.f32 %v888, %v889
    %v891 = vsel %vm376, %v834, 0.0
    %v892 = vadd.f32 %v890, %v891
    %v893 = vsel %vm376, %v835, 0.0
    %v894 = vadd.f32 %v892, %v893
    %v895 = vsel %vm376, %v836, 0.0
    %v896 = vadd.f32 %v894, %v895
    %v897 = vsel %vm376, %v837, 0.0
    %v898 = vadd.f32 %v896, %v897
    %v899 = vsel %vm376, %v838, 0.0
    %v900 = vadd.f32 %v898, %v899
    %v901 = vsel %vm376, %v839, 0.0
    %v902 = vadd.f32 %v900, %v901
    %v903 = vsel %vm376, %v840, 0.0
    %v904 = vadd.f32 %v902, %v903
    %v905 = vsel %vm376, %v841, 0.0
    %v906 = vadd.f32 %v904, %v905
    %v907 = vsel %vm376, %v842, 0.0
    %v908 = vadd.f32 %v906, %v907
    %v909 = vsel %vm376, %v843, 0.0
    %v910 = vadd.f32 %v908, %v909
    %v911 = vsel %vm376, %v844, 0.0
    %v912 = vadd.f32 %v910, %v911
    %v913 = vrot.slane %v912, 4
    %v914 = vadd.f32 %v912, %v913
    %v915 = vrot.slane %v914, 2
    %v916 = vadd.f32 %v914, %v915
    %v917 = vrot.slane %v916, 1
    %v918 = vadd.f32 %v916, %v917
    %919 = vset.pattern.permute.xlu0 3
    %920 = vperm.xlu0 %919, %v24
    %v921 = vpop.permute.xlu0 %920
    %923 = vset.pattern.permute.xlu0 3
    %924 = vperm.xlu0 %923, %v25
    %v925 = vpop.permute.xlu0 %924
    %927 = vset.pattern.permute.xlu0 3
    %928 = vperm.xlu0 %927, %v26
    %v929 = vpop.permute.xlu0 %928
    %931 = vset.pattern.permute.xlu0 3
    %932 = vperm.xlu0 %931, %v27
    %v933 = vpop.permute.xlu0 %932
    %935 = vset.pattern.permute.xlu0 3
    %936 = vperm.xlu0 %935, %v28
    %v937 = vpop.permute.xlu0 %936
    %939 = vset.pattern.permute.xlu0 3
    %940 = vperm.xlu0 %939, %v29
    %v941 = vpop.permute.xlu0 %940
    %943 = vset.pattern.permute.xlu0 3
    %944 = vperm.xlu0 %943, %v30
    %v945 = vpop.permute.xlu0 %944
    %947 = vset.pattern.permute.xlu0 3
    %948 = vperm.xlu0 %947, %v31
    %v949 = vpop.permute.xlu0 %948
    %951 = vset.pattern.permute.xlu0 3
    %952 = vperm.xlu0 %951, %v32
    %v953 = vpop.permute.xlu0 %952
    %955 = vset.pattern.permute.xlu0 3
    %956 = vperm.xlu0 %955, %v33
    %v957 = vpop.permute.xlu0 %956
    %959 = vset.pattern.permute.xlu0 3
    %960 = vperm.xlu0 %959, %v34
    %v961 = vpop.permute.xlu0 %960
    %963 = vset.pattern.permute.xlu0 3
    %964 = vperm.xlu0 %963, %v35
    %v965 = vpop.permute.xlu0 %964
    %967 = vset.pattern.permute.xlu0 3
    %968 = vperm.xlu0 %967, %v36
    %v969 = vpop.permute.xlu0 %968
    %971 = vset.pattern.permute.xlu0 3
    %972 = vperm.xlu0 %971, %v37
    %v973 = vpop.permute.xlu0 %972
    %975 = vset.pattern.permute.xlu0 3
    %976 = vperm.xlu0 %975, %v38
    %v977 = vpop.permute.xlu0 %976
    %979 = vset.pattern.permute.xlu0 3
    %980 = vperm.xlu0 %979, %v39
    %v981 = vpop.permute.xlu0 %980
    %983 = vset.pattern.permute.xlu0 3
    %984 = vperm.xlu0 %983, %v40
    %v985 = vpop.permute.xlu0 %984
    %987 = vset.pattern.permute.xlu0 3
    %988 = vperm.xlu0 %987, %v41
    %v989 = vpop.permute.xlu0 %988
    %991 = vset.pattern.permute.xlu0 3
    %992 = vperm.xlu0 %991, %v42
    %v993 = vpop.permute.xlu0 %992
    %995 = vset.pattern.permute.xlu0 3
    %996 = vperm.xlu0 %995, %v43
    %v997 = vpop.permute.xlu0 %996
    %999 = vset.pattern.permute.xlu0 3
    %1000 = vperm.xlu0 %999, %v44
    %v1001 = vpop.permute.xlu0 %1000
    %1003 = vset.pattern.permute.xlu0 3
    %1004 = vperm.xlu0 %1003, %v45
    %v1005 = vpop.permute.xlu0 %1004
    %1007 = vset.pattern.permute.xlu0 3
    %1008 = vperm.xlu0 %1007, %v46
    %v1009 = vpop.permute.xlu0 %1008
    %1011 = vset.pattern.permute.xlu0 3
    %1012 = vperm.xlu0 %1011, %v47
    %v1013 = vpop.permute.xlu0 %1012
    %1015 = vset.pattern.permute.xlu0 3
    %1016 = vperm.xlu0 %1015, %v48
    %v1017 = vpop.permute.xlu0 %1016
    %1019 = vset.pattern.permute.xlu0 3
    %1020 = vperm.xlu0 %1019, %v49
    %v1021 = vpop.permute.xlu0 %1020
    %1023 = vset.pattern.permute.xlu0 3
    %1024 = vperm.xlu0 %1023, %v50
    %v1025 = vpop.permute.xlu0 %1024
    %1027 = vset.pattern.permute.xlu0 3
    %1028 = vperm.xlu0 %1027, %v51
    %v1029 = vpop.permute.xlu0 %1028
    %1031 = vset.pattern.permute.xlu0 3
    %1032 = vperm.xlu0 %1031, %v52
    %v1033 = vpop.permute.xlu0 %1032
    %1035 = vset.pattern.permute.xlu0 3
    %1036 = vperm.xlu0 %1035, %v53
    %v1037 = vpop.permute.xlu0 %1036
    %1039 = vset.pattern.permute.xlu0 3
    %1040 = vperm.xlu0 %1039, %v54
    %v1041 = vpop.permute.xlu0 %1040
    %1043 = vset.pattern.permute.xlu0 3
    %1044 = vperm.xlu0 %1043, %v55
    %v1045 = vpop.permute.xlu0 %1044
    %v1047 = vmul.f32 %v921, %v104
    %v1048 = vmul.f32 %v925, %v105
    %v1049 = vmul.f32 %v929, %v106
    %v1050 = vmul.f32 %v933, %v107
    %v1051 = vmul.f32 %v937, %v108
    %v1052 = vmul.f32 %v941, %v109
    %v1053 = vmul.f32 %v945, %v110
    %v1054 = vmul.f32 %v949, %v111
    %v1055 = vmul.f32 %v953, %v112
    %v1056 = vmul.f32 %v957, %v113
    %v1057 = vmul.f32 %v961, %v114
    %v1058 = vmul.f32 %v965, %v115
    %v1059 = vmul.f32 %v969, %v116
    %v1060 = vmul.f32 %v973, %v117
    %v1061 = vmul.f32 %v977, %v118
    %v1062 = vmul.f32 %v981, %v119
    %v1063 = vmul.f32 %v985, %v104
    %v1064 = vmul.f32 %v989, %v105
    %v1065 = vmul.f32 %v993, %v106
    %v1066 = vmul.f32 %v997, %v107
    %v1067 = vmul.f32 %v1001, %v108
    %v1068 = vmul.f32 %v1005, %v109
    %v1069 = vmul.f32 %v1009, %v110
    %v1070 = vmul.f32 %v1013, %v111
    %v1071 = vmul.f32 %v1017, %v112
    %v1072 = vmul.f32 %v1021, %v113
    %v1073 = vmul.f32 %v1025, %v114
    %v1074 = vmul.f32 %v1029, %v115
    %v1075 = vmul.f32 %v1033, %v116
    %v1076 = vmul.f32 %v1037, %v117
    %v1077 = vmul.f32 %v1041, %v118
    %v1078 = vmul.f32 %v1045, %v119
    %v1079 = vsel %vm376, %v1047, 0.0
    %v1080 = vsel %vm376, %v1048, 0.0
    %v1081 = vadd.f32 %v1079, %v1080
    %v1082 = vsel %vm376, %v1049, 0.0
    %v1083 = vadd.f32 %v1081, %v1082
    %v1084 = vsel %vm376, %v1050, 0.0
    %v1085 = vadd.f32 %v1083, %v1084
    %v1086 = vsel %vm376, %v1051, 0.0
    %v1087 = vadd.f32 %v1085, %v1086
    %v1088 = vsel %vm376, %v1052, 0.0
    %v1089 = vadd.f32 %v1087, %v1088
    %v1090 = vsel %vm376, %v1053, 0.0
    %v1091 = vadd.f32 %v1089, %v1090
    %v1092 = vsel %vm376, %v1054, 0.0
    %v1093 = vadd.f32 %v1091, %v1092
    %v1094 = vsel %vm376, %v1055, 0.0
    %v1095 = vadd.f32 %v1093, %v1094
    %v1096 = vsel %vm376, %v1056, 0.0
    %v1097 = vadd.f32 %v1095, %v1096
    %v1098 = vsel %vm376, %v1057, 0.0
    %v1099 = vadd.f32 %v1097, %v1098
    %v1100 = vsel %vm376, %v1058, 0.0
    %v1101 = vadd.f32 %v1099, %v1100
    %v1102 = vsel %vm376, %v1059, 0.0
    %v1103 = vadd.f32 %v1101, %v1102
    %v1104 = vsel %vm376, %v1060, 0.0
    %v1105 = vadd.f32 %v1103, %v1104
    %v1106 = vsel %vm376, %v1061, 0.0
    %v1107 = vadd.f32 %v1105, %v1106
    %v1108 = vsel %vm376, %v1062, 0.0
    %v1109 = vadd.f32 %v1107, %v1108
    %v1110 = vrot.slane %v1109, 4
    %v1111 = vadd.f32 %v1109, %v1110
    %v1112 = vrot.slane %v1111, 2
    %v1113 = vadd.f32 %v1111, %v1112
    %v1114 = vrot.slane %v1113, 1
    %v1115 = vadd.f32 %v1113, %v1114
    %v1116 = vsel %vm376, %v1063, 0.0
    %v1117 = vsel %vm376, %v1064, 0.0
    %v1118 = vadd.f32 %v1116, %v1117
    %v1119 = vsel %vm376, %v1065, 0.0
    %v1120 = vadd.f32 %v1118, %v1119
    %v1121 = vsel %vm376, %v1066, 0.0
    %v1122 = vadd.f32 %v1120, %v1121
    %v1123 = vsel %vm376, %v1067, 0.0
    %v1124 = vadd.f32 %v1122, %v1123
    %v1125 = vsel %vm376, %v1068, 0.0
    %v1126 = vadd.f32 %v1124, %v1125
    %v1127 = vsel %vm376, %v1069, 0.0
    %v1128 = vadd.f32 %v1126, %v1127
    %v1129 = vsel %vm376, %v1070, 0.0
    %v1130 = vadd.f32 %v1128, %v1129
    %v1131 = vsel %vm376, %v1071, 0.0
    %v1132 = vadd.f32 %v1130, %v1131
    %v1133 = vsel %vm376, %v1072, 0.0
    %v1134 = vadd.f32 %v1132, %v1133
    %v1135 = vsel %vm376, %v1073, 0.0
    %v1136 = vadd.f32 %v1134, %v1135
    %v1137 = vsel %vm376, %v1074, 0.0
    %v1138 = vadd.f32 %v1136, %v1137
    %v1139 = vsel %vm376, %v1075, 0.0
    %v1140 = vadd.f32 %v1138, %v1139
    %v1141 = vsel %vm376, %v1076, 0.0
    %v1142 = vadd.f32 %v1140, %v1141
    %v1143 = vsel %vm376, %v1077, 0.0
    %v1144 = vadd.f32 %v1142, %v1143
    %v1145 = vsel %vm376, %v1078, 0.0
    %v1146 = vadd.f32 %v1144, %v1145
    %v1147 = vrot.slane %v1146, 4
    %v1148 = vadd.f32 %v1146, %v1147
    %v1149 = vrot.slane %v1148, 2
    %v1150 = vadd.f32 %v1148, %v1149
    %v1151 = vrot.slane %v1150, 1
    %v1152 = vadd.f32 %v1150, %v1151
    %1153 = vset.pattern.permute.xlu0 4
    %1154 = vperm.xlu0 %1153, %v24
    %v1155 = vpop.permute.xlu0 %1154
    %1157 = vset.pattern.permute.xlu0 4
    %1158 = vperm.xlu0 %1157, %v25
    %v1159 = vpop.permute.xlu0 %1158
    %1161 = vset.pattern.permute.xlu0 4
    %1162 = vperm.xlu0 %1161, %v26
    %v1163 = vpop.permute.xlu0 %1162
    %1165 = vset.pattern.permute.xlu0 4
    %1166 = vperm.xlu0 %1165, %v27
    %v1167 = vpop.permute.xlu0 %1166
    %1169 = vset.pattern.permute.xlu0 4
    %1170 = vperm.xlu0 %1169, %v28
    %v1171 = vpop.permute.xlu0 %1170
    %1173 = vset.pattern.permute.xlu0 4
    %1174 = vperm.xlu0 %1173, %v29
    %v1175 = vpop.permute.xlu0 %1174
    %1177 = vset.pattern.permute.xlu0 4
    %1178 = vperm.xlu0 %1177, %v30
    %v1179 = vpop.permute.xlu0 %1178
    %1181 = vset.pattern.permute.xlu0 4
    %1182 = vperm.xlu0 %1181, %v31
    %v1183 = vpop.permute.xlu0 %1182
    %1185 = vset.pattern.permute.xlu0 4
    %1186 = vperm.xlu0 %1185, %v32
    %v1187 = vpop.permute.xlu0 %1186
    %1189 = vset.pattern.permute.xlu0 4
    %1190 = vperm.xlu0 %1189, %v33
    %v1191 = vpop.permute.xlu0 %1190
    %1193 = vset.pattern.permute.xlu0 4
    %1194 = vperm.xlu0 %1193, %v34
    %v1195 = vpop.permute.xlu0 %1194
    %1197 = vset.pattern.permute.xlu0 4
    %1198 = vperm.xlu0 %1197, %v35
    %v1199 = vpop.permute.xlu0 %1198
    %1201 = vset.pattern.permute.xlu0 4
    %1202 = vperm.xlu0 %1201, %v36
    %v1203 = vpop.permute.xlu0 %1202
    %1205 = vset.pattern.permute.xlu0 4
    %1206 = vperm.xlu0 %1205, %v37
    %v1207 = vpop.permute.xlu0 %1206
    %1209 = vset.pattern.permute.xlu0 4
    %1210 = vperm.xlu0 %1209, %v38
    %v1211 = vpop.permute.xlu0 %1210
    %1213 = vset.pattern.permute.xlu0 4
    %1214 = vperm.xlu0 %1213, %v39
    %v1215 = vpop.permute.xlu0 %1214
    %1217 = vset.pattern.permute.xlu0 4
    %1218 = vperm.xlu0 %1217, %v40
    %v1219 = vpop.permute.xlu0 %1218
    %1221 = vset.pattern.permute.xlu0 4
    %1222 = vperm.xlu0 %1221, %v41
    %v1223 = vpop.permute.xlu0 %1222
    %1225 = vset.pattern.permute.xlu0 4
    %1226 = vperm.xlu0 %1225, %v42
    %v1227 = vpop.permute.xlu0 %1226
    %1229 = vset.pattern.permute.xlu0 4
    %1230 = vperm.xlu0 %1229, %v43
    %v1231 = vpop.permute.xlu0 %1230
    %1233 = vset.pattern.permute.xlu0 4
    %1234 = vperm.xlu0 %1233, %v44
    %v1235 = vpop.permute.xlu0 %1234
    %1237 = vset.pattern.permute.xlu0 4
    %1238 = vperm.xlu0 %1237, %v45
    %v1239 = vpop.permute.xlu0 %1238
    %1241 = vset.pattern.permute.xlu0 4
    %1242 = vperm.xlu0 %1241, %v46
    %v1243 = vpop.permute.xlu0 %1242
    %1245 = vset.pattern.permute.xlu0 4
    %1246 = vperm.xlu0 %1245, %v47
    %v1247 = vpop.permute.xlu0 %1246
    %1249 = vset.pattern.permute.xlu0 4
    %1250 = vperm.xlu0 %1249, %v48
    %v1251 = vpop.permute.xlu0 %1250
    %1253 = vset.pattern.permute.xlu0 4
    %1254 = vperm.xlu0 %1253, %v49
    %v1255 = vpop.permute.xlu0 %1254
    %1257 = vset.pattern.permute.xlu0 4
    %1258 = vperm.xlu0 %1257, %v50
    %v1259 = vpop.permute.xlu0 %1258
    %1261 = vset.pattern.permute.xlu0 4
    %1262 = vperm.xlu0 %1261, %v51
    %v1263 = vpop.permute.xlu0 %1262
    %1265 = vset.pattern.permute.xlu0 4
    %1266 = vperm.xlu0 %1265, %v52
    %v1267 = vpop.permute.xlu0 %1266
    %1269 = vset.pattern.permute.xlu0 4
    %1270 = vperm.xlu0 %1269, %v53
    %v1271 = vpop.permute.xlu0 %1270
    %1273 = vset.pattern.permute.xlu0 4
    %1274 = vperm.xlu0 %1273, %v54
    %v1275 = vpop.permute.xlu0 %1274
    %1277 = vset.pattern.permute.xlu0 4
    %1278 = vperm.xlu0 %1277, %v55
    %v1279 = vpop.permute.xlu0 %1278
    %v1281 = vmul.f32 %v1155, %v120
    %v1282 = vmul.f32 %v1159, %v121
    %v1283 = vmul.f32 %v1163, %v122
    %v1284 = vmul.f32 %v1167, %v123
    %v1285 = vmul.f32 %v1171, %v124
    %v1286 = vmul.f32 %v1175, %v125
    %v1287 = vmul.f32 %v1179, %v126
    %v1288 = vmul.f32 %v1183, %v127
    %v1289 = vmul.f32 %v1187, %v128
    %v1290 = vmul.f32 %v1191, %v129
    %v1291 = vmul.f32 %v1195, %v130
    %v1292 = vmul.f32 %v1199, %v131
    %v1293 = vmul.f32 %v1203, %v132
    %v1294 = vmul.f32 %v1207, %v133
    %v1295 = vmul.f32 %v1211, %v134
    %v1296 = vmul.f32 %v1215, %v135
    %v1297 = vmul.f32 %v1219, %v120
    %v1298 = vmul.f32 %v1223, %v121
    %v1299 = vmul.f32 %v1227, %v122
    %v1300 = vmul.f32 %v1231, %v123
    %v1301 = vmul.f32 %v1235, %v124
    %v1302 = vmul.f32 %v1239, %v125
    %v1303 = vmul.f32 %v1243, %v126
    %v1304 = vmul.f32 %v1247, %v127
    %v1305 = vmul.f32 %v1251, %v128
    %v1306 = vmul.f32 %v1255, %v129
    %v1307 = vmul.f32 %v1259, %v130
    %v1308 = vmul.f32 %v1263, %v131
    %v1309 = vmul.f32 %v1267, %v132
    %v1310 = vmul.f32 %v1271, %v133
    %v1311 = vmul.f32 %v1275, %v134
    %v1312 = vmul.f32 %v1279, %v135
    %v1313 = vsel %vm376, %v1281, 0.0
    %v1314 = vsel %vm376, %v1282, 0.0
    %v1315 = vadd.f32 %v1313, %v1314
    %v1316 = vsel %vm376, %v1283, 0.0
    %v1317 = vadd.f32 %v1315, %v1316
    %v1318 = vsel %vm376, %v1284, 0.0
    %v1319 = vadd.f32 %v1317, %v1318
    %v1320 = vsel %vm376, %v1285, 0.0
    %v1321 = vadd.f32 %v1319, %v1320
    %v1322 = vsel %vm376, %v1286, 0.0
    %v1323 = vadd.f32 %v1321, %v1322
    %v1324 = vsel %vm376, %v1287, 0.0
    %v1325 = vadd.f32 %v1323, %v1324
    %v1326 = vsel %vm376, %v1288, 0.0
    %v1327 = vadd.f32 %v1325, %v1326
    %v1328 = vsel %vm376, %v1289, 0.0
    %v1329 = vadd.f32 %v1327, %v1328
    %v1330 = vsel %vm376, %v1290, 0.0
    %v1331 = vadd.f32 %v1329, %v1330
    %v1332 = vsel %vm376, %v1291, 0.0
    %v1333 = vadd.f32 %v1331, %v1332
    %v1334 = vsel %vm376, %v1292, 0.0
    %v1335 = vadd.f32 %v1333, %v1334
    %v1336 = vsel %vm376, %v1293, 0.0
    %v1337 = vadd.f32 %v1335, %v1336
    %v1338 = vsel %vm376, %v1294, 0.0
    %v1339 = vadd.f32 %v1337, %v1338
    %v1340 = vsel %vm376, %v1295, 0.0
    %v1341 = vadd.f32 %v1339, %v1340
    %v1342 = vsel %vm376, %v1296, 0.0
    %v1343 = vadd.f32 %v1341, %v1342
    %v1344 = vrot.slane %v1343, 4
    %v1345 = vadd.f32 %v1343, %v1344
    %v1346 = vrot.slane %v1345, 2
    %v1347 = vadd.f32 %v1345, %v1346
    %v1348 = vrot.slane %v1347, 1
    %v1349 = vadd.f32 %v1347, %v1348
    %v1350 = vsel %vm376, %v1297, 0.0
    %v1351 = vsel %vm376, %v1298, 0.0
    %v1352 = vadd.f32 %v1350, %v1351
    %v1353 = vsel %vm376, %v1299, 0.0
    %v1354 = vadd.f32 %v1352, %v1353
    %v1355 = vsel %vm376, %v1300, 0.0
    %v1356 = vadd.f32 %v1354, %v1355
    %v1357 = vsel %vm376, %v1301, 0.0
    %v1358 = vadd.f32 %v1356, %v1357
    %v1359 = vsel %vm376, %v1302, 0.0
    %v1360 = vadd.f32 %v1358, %v1359
    %v1361 = vsel %vm376, %v1303, 0.0
    %v1362 = vadd.f32 %v1360, %v1361
    %v1363 = vsel %vm376, %v1304, 0.0
    %v1364 = vadd.f32 %v1362, %v1363
    %v1365 = vsel %vm376, %v1305, 0.0
    %v1366 = vadd.f32 %v1364, %v1365
    %v1367 = vsel %vm376, %v1306, 0.0
    %v1368 = vadd.f32 %v1366, %v1367
    %v1369 = vsel %vm376, %v1307, 0.0
    %v1370 = vadd.f32 %v1368, %v1369
    %v1371 = vsel %vm376, %v1308, 0.0
    %v1372 = vadd.f32 %v1370, %v1371
    %v1373 = vsel %vm376, %v1309, 0.0
    %v1374 = vadd.f32 %v1372, %v1373
    %v1375 = vsel %vm376, %v1310, 0.0
    %v1376 = vadd.f32 %v1374, %v1375
    %v1377 = vsel %vm376, %v1311, 0.0
    %v1378 = vadd.f32 %v1376, %v1377
    %v1379 = vsel %vm376, %v1312, 0.0
    %v1380 = vadd.f32 %v1378, %v1379
    %v1381 = vrot.slane %v1380, 4
    %v1382 = vadd.f32 %v1380, %v1381
    %v1383 = vrot.slane %v1382, 2
    %v1384 = vadd.f32 %v1382, %v1383
    %v1385 = vrot.slane %v1384, 1
    %v1386 = vadd.f32 %v1384, %v1385
    %1387 = vset.pattern.permute.xlu0 5
    %1388 = vperm.xlu0 %1387, %v24
    %v1389 = vpop.permute.xlu0 %1388
    %1391 = vset.pattern.permute.xlu0 5
    %1392 = vperm.xlu0 %1391, %v25
    %v1393 = vpop.permute.xlu0 %1392
    %1395 = vset.pattern.permute.xlu0 5
    %1396 = vperm.xlu0 %1395, %v26
    %v1397 = vpop.permute.xlu0 %1396
    %1399 = vset.pattern.permute.xlu0 5
    %1400 = vperm.xlu0 %1399, %v27
    %v1401 = vpop.permute.xlu0 %1400
    %1403 = vset.pattern.permute.xlu0 5
    %1404 = vperm.xlu0 %1403, %v28
    %v1405 = vpop.permute.xlu0 %1404
    %1407 = vset.pattern.permute.xlu0 5
    %1408 = vperm.xlu0 %1407, %v29
    %v1409 = vpop.permute.xlu0 %1408
    %1411 = vset.pattern.permute.xlu0 5
    %1412 = vperm.xlu0 %1411, %v30
    %v1413 = vpop.permute.xlu0 %1412
    %1415 = vset.pattern.permute.xlu0 5
    %1416 = vperm.xlu0 %1415, %v31
    %v1417 = vpop.permute.xlu0 %1416
    %1419 = vset.pattern.permute.xlu0 5
    %1420 = vperm.xlu0 %1419, %v32
    %v1421 = vpop.permute.xlu0 %1420
    %1423 = vset.pattern.permute.xlu0 5
    %1424 = vperm.xlu0 %1423, %v33
    %v1425 = vpop.permute.xlu0 %1424
    %1427 = vset.pattern.permute.xlu0 5
    %1428 = vperm.xlu0 %1427, %v34
    %v1429 = vpop.permute.xlu0 %1428
    %1431 = vset.pattern.permute.xlu0 5
    %1432 = vperm.xlu0 %1431, %v35
    %v1433 = vpop.permute.xlu0 %1432
    %1435 = vset.pattern.permute.xlu0 5
    %1436 = vperm.xlu0 %1435, %v36
    %v1437 = vpop.permute.xlu0 %1436
    %1439 = vset.pattern.permute.xlu0 5
    %1440 = vperm.xlu0 %1439, %v37
    %v1441 = vpop.permute.xlu0 %1440
    %1443 = vset.pattern.permute.xlu0 5
    %1444 = vperm.xlu0 %1443, %v38
    %v1445 = vpop.permute.xlu0 %1444
    %1447 = vset.pattern.permute.xlu0 5
    %1448 = vperm.xlu0 %1447, %v39
    %v1449 = vpop.permute.xlu0 %1448
    %1451 = vset.pattern.permute.xlu0 5
    %1452 = vperm.xlu0 %1451, %v40
    %v1453 = vpop.permute.xlu0 %1452
    %1455 = vset.pattern.permute.xlu0 5
    %1456 = vperm.xlu0 %1455, %v41
    %v1457 = vpop.permute.xlu0 %1456
    %1459 = vset.pattern.permute.xlu0 5
    %1460 = vperm.xlu0 %1459, %v42
    %v1461 = vpop.permute.xlu0 %1460
    %1463 = vset.pattern.permute.xlu0 5
    %1464 = vperm.xlu0 %1463, %v43
    %v1465 = vpop.permute.xlu0 %1464
    %1467 = vset.pattern.permute.xlu0 5
    %1468 = vperm.xlu0 %1467, %v44
    %v1469 = vpop.permute.xlu0 %1468
    %1471 = vset.pattern.permute.xlu0 5
    %1472 = vperm.xlu0 %1471, %v45
    %v1473 = vpop.permute.xlu0 %1472
    %1475 = vset.pattern.permute.xlu0 5
    %1476 = vperm.xlu0 %1475, %v46
    %v1477 = vpop.permute.xlu0 %1476
    %1479 = vset.pattern.permute.xlu0 5
    %1480 = vperm.xlu0 %1479, %v47
    %v1481 = vpop.permute.xlu0 %1480
    %1483 = vset.pattern.permute.xlu0 5
    %1484 = vperm.xlu0 %1483, %v48
    %v1485 = vpop.permute.xlu0 %1484
    %1487 = vset.pattern.permute.xlu0 5
    %1488 = vperm.xlu0 %1487, %v49
    %v1489 = vpop.permute.xlu0 %1488
    %1491 = vset.pattern.permute.xlu0 5
    %1492 = vperm.xlu0 %1491, %v50
    %v1493 = vpop.permute.xlu0 %1492
    %1495 = vset.pattern.permute.xlu0 5
    %1496 = vperm.xlu0 %1495, %v51
    %v1497 = vpop.permute.xlu0 %1496
    %1499 = vset.pattern.permute.xlu0 5
    %1500 = vperm.xlu0 %1499, %v52
    %v1501 = vpop.permute.xlu0 %1500
    %1503 = vset.pattern.permute.xlu0 5
    %1504 = vperm.xlu0 %1503, %v53
    %v1505 = vpop.permute.xlu0 %1504
    %1507 = vset.pattern.permute.xlu0 5
    %1508 = vperm.xlu0 %1507, %v54
    %v1509 = vpop.permute.xlu0 %1508
    %1511 = vset.pattern.permute.xlu0 5
    %1512 = vperm.xlu0 %1511, %v55
    %v1513 = vpop.permute.xlu0 %1512
    %v1515 = vmul.f32 %v1389, %v136
    %v1516 = vmul.f32 %v1393, %v137
    %v1517 = vmul.f32 %v1397, %v138
    %v1518 = vmul.f32 %v1401, %v139
    %v1519 = vmul.f32 %v1405, %v140
    %v1520 = vmul.f32 %v1409, %v141
    %v1521 = vmul.f32 %v1413, %v142
    %v1522 = vmul.f32 %v1417, %v143
    %v1523 = vmul.f32 %v1421, %v144
    %v1524 = vmul.f32 %v1425, %v145
    %v1525 = vmul.f32 %v1429, %v146
    %v1526 = vmul.f32 %v1433, %v147
    %v1527 = vmul.f32 %v1437, %v148
    %v1528 = vmul.f32 %v1441, %v149
    %v1529 = vmul.f32 %v1445, %v150
    %v1530 = vmul.f32 %v1449, %v151
    %v1531 = vmul.f32 %v1453, %v136
    %v1532 = vmul.f32 %v1457, %v137
    %v1533 = vmul.f32 %v1461, %v138
    %v1534 = vmul.f32 %v1465, %v139
    %v1535 = vmul.f32 %v1469, %v140
    %v1536 = vmul.f32 %v1473, %v141
    %v1537 = vmul.f32 %v1477, %v142
    %v1538 = vmul.f32 %v1481, %v143
    %v1539 = vmul.f32 %v1485, %v144
    %v1540 = vmul.f32 %v1489, %v145
    %v1541 = vmul.f32 %v1493, %v146
    %v1542 = vmul.f32 %v1497, %v147
    %v1543 = vmul.f32 %v1501, %v148
    %v1544 = vmul.f32 %v1505, %v149
    %v1545 = vmul.f32 %v1509, %v150
    %v1546 = vmul.f32 %v1513, %v151
    %v1547 = vsel %vm376, %v1515, 0.0
    %v1548 = vsel %vm376, %v1516, 0.0
    %v1549 = vadd.f32 %v1547, %v1548
    %v1550 = vsel %vm376, %v1517, 0.0
    %v1551 = vadd.f32 %v1549, %v1550
    %v1552 = vsel %vm376, %v1518, 0.0
    %v1553 = vadd.f32 %v1551, %v1552
    %v1554 = vsel %vm376, %v1519, 0.0
    %v1555 = vadd.f32 %v1553, %v1554
    %v1556 = vsel %vm376, %v1520, 0.0
    %v1557 = vadd.f32 %v1555, %v1556
    %v1558 = vsel %vm376, %v1521, 0.0
    %v1559 = vadd.f32 %v1557, %v1558
    %v1560 = vsel %vm376, %v1522, 0.0
    %v1561 = vadd.f32 %v1559, %v1560
    %v1562 = vsel %vm376, %v1523, 0.0
    %v1563 = vadd.f32 %v1561, %v1562
    %v1564 = vsel %vm376, %v1524, 0.0
    %v1565 = vadd.f32 %v1563, %v1564
    %v1566 = vsel %vm376, %v1525, 0.0
    %v1567 = vadd.f32 %v1565, %v1566
    %v1568 = vsel %vm376, %v1526, 0.0
    %v1569 = vadd.f32 %v1567, %v1568
    %v1570 = vsel %vm376, %v1527, 0.0
    %v1571 = vadd.f32 %v1569, %v1570
    %v1572 = vsel %vm376, %v1528, 0.0
    %v1573 = vadd.f32 %v1571, %v1572
    %v1574 = vsel %vm376, %v1529, 0.0
    %v1575 = vadd.f32 %v1573, %v1574
    %v1576 = vsel %vm376, %v1530, 0.0
    %v1577 = vadd.f32 %v1575, %v1576
    %v1578 = vrot.slane %v1577, 4
    %v1579 = vadd.f32 %v1577, %v1578
    %v1580 = vrot.slane %v1579, 2
    %v1581 = vadd.f32 %v1579, %v1580
    %v1582 = vrot.slane %v1581, 1
    %v1583 = vadd.f32 %v1581, %v1582
    %v1584 = vsel %vm376, %v1531, 0.0
    %v1585 = vsel %vm376, %v1532, 0.0
    %v1586 = vadd.f32 %v1584, %v1585
    %v1587 = vsel %vm376, %v1533, 0.0
    %v1588 = vadd.f32 %v1586, %v1587
    %v1589 = vsel %vm376, %v1534, 0.0
    %v1590 = vadd.f32 %v1588, %v1589
    %v1591 = vsel %vm376, %v1535, 0.0
    %v1592 = vadd.f32 %v1590, %v1591
    %v1593 = vsel %vm376, %v1536, 0.0
    %v1594 = vadd.f32 %v1592, %v1593
    %v1595 = vsel %vm376, %v1537, 0.0
    %v1596 = vadd.f32 %v1594, %v1595
    %v1597 = vsel %vm376, %v1538, 0.0
    %v1598 = vadd.f32 %v1596, %v1597
    %v1599 = vsel %vm376, %v1539, 0.0
    %v1600 = vadd.f32 %v1598, %v1599
    %v1601 = vsel %vm376, %v1540, 0.0
    %v1602 = vadd.f32 %v1600, %v1601
    %v1603 = vsel %vm376, %v1541, 0.0
    %v1604 = vadd.f32 %v1602, %v1603
    %v1605 = vsel %vm376, %v1542, 0.0
    %v1606 = vadd.f32 %v1604, %v1605
    %v1607 = vsel %vm376, %v1543, 0.0
    %v1608 = vadd.f32 %v1606, %v1607
    %v1609 = vsel %vm376, %v1544, 0.0
    %v1610 = vadd.f32 %v1608, %v1609
    %v1611 = vsel %vm376, %v1545, 0.0
    %v1612 = vadd.f32 %v1610, %v1611
    %v1613 = vsel %vm376, %v1546, 0.0
    %v1614 = vadd.f32 %v1612, %v1613
    %v1615 = vrot.slane %v1614, 4
    %v1616 = vadd.f32 %v1614, %v1615
    %v1617 = vrot.slane %v1616, 2
    %v1618 = vadd.f32 %v1616, %v1617
    %v1619 = vrot.slane %v1618, 1
    %v1620 = vadd.f32 %v1618, %v1619
    %1621 = vset.pattern.permute.xlu0 6
    %1622 = vperm.xlu0 %1621, %v24
    %v1623 = vpop.permute.xlu0 %1622
    %1625 = vset.pattern.permute.xlu0 6
    %1626 = vperm.xlu0 %1625, %v25
    %v1627 = vpop.permute.xlu0 %1626
    %1629 = vset.pattern.permute.xlu0 6
    %1630 = vperm.xlu0 %1629, %v26
    %v1631 = vpop.permute.xlu0 %1630
    %1633 = vset.pattern.permute.xlu0 6
    %1634 = vperm.xlu0 %1633, %v27
    %v1635 = vpop.permute.xlu0 %1634
    %1637 = vset.pattern.permute.xlu0 6
    %1638 = vperm.xlu0 %1637, %v28
    %v1639 = vpop.permute.xlu0 %1638
    %1641 = vset.pattern.permute.xlu0 6
    %1642 = vperm.xlu0 %1641, %v29
    %v1643 = vpop.permute.xlu0 %1642
    %1645 = vset.pattern.permute.xlu0 6
    %1646 = vperm.xlu0 %1645, %v30
    %v1647 = vpop.permute.xlu0 %1646
    %1649 = vset.pattern.permute.xlu0 6
    %1650 = vperm.xlu0 %1649, %v31
    %v1651 = vpop.permute.xlu0 %1650
    %1653 = vset.pattern.permute.xlu0 6
    %1654 = vperm.xlu0 %1653, %v32
    %v1655 = vpop.permute.xlu0 %1654
    %1657 = vset.pattern.permute.xlu0 6
    %1658 = vperm.xlu0 %1657, %v33
    %v1659 = vpop.permute.xlu0 %1658
    %1661 = vset.pattern.permute.xlu0 6
    %1662 = vperm.xlu0 %1661, %v34
    %v1663 = vpop.permute.xlu0 %1662
    %1665 = vset.pattern.permute.xlu0 6
    %1666 = vperm.xlu0 %1665, %v35
    %v1667 = vpop.permute.xlu0 %1666
    %1669 = vset.pattern.permute.xlu0 6
    %1670 = vperm.xlu0 %1669, %v36
    %v1671 = vpop.permute.xlu0 %1670
    %1673 = vset.pattern.permute.xlu0 6
    %1674 = vperm.xlu0 %1673, %v37
    %v1675 = vpop.permute.xlu0 %1674
    %1677 = vset.pattern.permute.xlu0 6
    %1678 = vperm.xlu0 %1677, %v38
    %v1679 = vpop.permute.xlu0 %1678
    %1681 = vset.pattern.permute.xlu0 6
    %1682 = vperm.xlu0 %1681, %v39
    %v1683 = vpop.permute.xlu0 %1682
    %1685 = vset.pattern.permute.xlu0 6
    %1686 = vperm.xlu0 %1685, %v40
    %v1687 = vpop.permute.xlu0 %1686
    %1689 = vset.pattern.permute.xlu0 6
    %1690 = vperm.xlu0 %1689, %v41
    %v1691 = vpop.permute.xlu0 %1690
    %1693 = vset.pattern.permute.xlu0 6
    %1694 = vperm.xlu0 %1693, %v42
    %v1695 = vpop.permute.xlu0 %1694
    %1697 = vset.pattern.permute.xlu0 6
    %1698 = vperm.xlu0 %1697, %v43
    %v1699 = vpop.permute.xlu0 %1698
    %1701 = vset.pattern.permute.xlu0 6
    %1702 = vperm.xlu0 %1701, %v44
    %v1703 = vpop.permute.xlu0 %1702
    %1705 = vset.pattern.permute.xlu0 6
    %1706 = vperm.xlu0 %1705, %v45
    %v1707 = vpop.permute.xlu0 %1706
    %1709 = vset.pattern.permute.xlu0 6
    %1710 = vperm.xlu0 %1709, %v46
    %v1711 = vpop.permute.xlu0 %1710
    %1713 = vset.pattern.permute.xlu0 6
    %1714 = vperm.xlu0 %1713, %v47
    %v1715 = vpop.permute.xlu0 %1714
    %1717 = vset.pattern.permute.xlu0 6
    %1718 = vperm.xlu0 %1717, %v48
    %v1719 = vpop.permute.xlu0 %1718
    %1721 = vset.pattern.permute.xlu0 6
    %1722 = vperm.xlu0 %1721, %v49
    %v1723 = vpop.permute.xlu0 %1722
    %1725 = vset.pattern.permute.xlu0 6
    %1726 = vperm.xlu0 %1725, %v50
    %v1727 = vpop.permute.xlu0 %1726
    %1729 = vset.pattern.permute.xlu0 6
    %1730 = vperm.xlu0 %1729, %v51
    %v1731 = vpop.permute.xlu0 %1730
    %1733 = vset.pattern.permute.xlu0 6
    %1734 = vperm.xlu0 %1733, %v52
    %v1735 = vpop.permute.xlu0 %1734
    %1737 = vset.pattern.permute.xlu0 6
    %1738 = vperm.xlu0 %1737, %v53
    %v1739 = vpop.permute.xlu0 %1738
    %1741 = vset.pattern.permute.xlu0 6
    %1742 = vperm.xlu0 %1741, %v54
    %v1743 = vpop.permute.xlu0 %1742
    %1745 = vset.pattern.permute.xlu0 6
    %1746 = vperm.xlu0 %1745, %v55
    %v1747 = vpop.permute.xlu0 %1746
    %v1749 = vmul.f32 %v1623, %v152
    %v1750 = vmul.f32 %v1627, %v153
    %v1751 = vmul.f32 %v1631, %v154
    %v1752 = vmul.f32 %v1635, %v155
    %v1753 = vmul.f32 %v1639, %v156
    %v1754 = vmul.f32 %v1643, %v157
    %v1755 = vmul.f32 %v1647, %v158
    %v1756 = vmul.f32 %v1651, %v159
    %v1757 = vmul.f32 %v1655, %v160
    %v1758 = vmul.f32 %v1659, %v161
    %v1759 = vmul.f32 %v1663, %v162
    %v1760 = vmul.f32 %v1667, %v163
    %v1761 = vmul.f32 %v1671, %v164
    %v1762 = vmul.f32 %v1675, %v165
    %v1763 = vmul.f32 %v1679, %v166
    %v1764 = vmul.f32 %v1683, %v167
    %v1765 = vmul.f32 %v1687, %v152
    %v1766 = vmul.f32 %v1691, %v153
    %v1767 = vmul.f32 %v1695, %v154
    %v1768 = vmul.f32 %v1699, %v155
    %v1769 = vmul.f32 %v1703, %v156
    %v1770 = vmul.f32 %v1707, %v157
    %v1771 = vmul.f32 %v1711, %v158
    %v1772 = vmul.f32 %v1715, %v159
    %v1773 = vmul.f32 %v1719, %v160
    %v1774 = vmul.f32 %v1723, %v161
    %v1775 = vmul.f32 %v1727, %v162
    %v1776 = vmul.f32 %v1731, %v163
    %v1777 = vmul.f32 %v1735, %v164
    %v1778 = vmul.f32 %v1739, %v165
    %v1779 = vmul.f32 %v1743, %v166
    %v1780 = vmul.f32 %v1747, %v167
    %v1781 = vsel %vm376, %v1749, 0.0
    %v1782 = vsel %vm376, %v1750, 0.0
    %v1783 = vadd.f32 %v1781, %v1782
    %v1784 = vsel %vm376, %v1751, 0.0
    %v1785 = vadd.f32 %v1783, %v1784
    %v1786 = vsel %vm376, %v1752, 0.0
    %v1787 = vadd.f32 %v1785, %v1786
    %v1788 = vsel %vm376, %v1753, 0.0
    %v1789 = vadd.f32 %v1787, %v1788
    %v1790 = vsel %vm376, %v1754, 0.0
    %v1791 = vadd.f32 %v1789, %v1790
    %v1792 = vsel %vm376, %v1755, 0.0
    %v1793 = vadd.f32 %v1791, %v1792
    %v1794 = vsel %vm376, %v1756, 0.0
    %v1795 = vadd.f32 %v1793, %v1794
    %v1796 = vsel %vm376, %v1757, 0.0
    %v1797 = vadd.f32 %v1795, %v1796
    %v1798 = vsel %vm376, %v1758, 0.0
    %v1799 = vadd.f32 %v1797, %v1798
    %v1800 = vsel %vm376, %v1759, 0.0
    %v1801 = vadd.f32 %v1799, %v1800
    %v1802 = vsel %vm376, %v1760, 0.0
    %v1803 = vadd.f32 %v1801, %v1802
    %v1804 = vsel %vm376, %v1761, 0.0
    %v1805 = vadd.f32 %v1803, %v1804
    %v1806 = vsel %vm376, %v1762, 0.0
    %v1807 = vadd.f32 %v1805, %v1806
    %v1808 = vsel %vm376, %v1763, 0.0
    %v1809 = vadd.f32 %v1807, %v1808
    %v1810 = vsel %vm376, %v1764, 0.0
    %v1811 = vadd.f32 %v1809, %v1810
    %v1812 = vrot.slane %v1811, 4
    %v1813 = vadd.f32 %v1811, %v1812
    %v1814 = vrot.slane %v1813, 2
    %v1815 = vadd.f32 %v1813, %v1814
    %v1816 = vrot.slane %v1815, 1
    %v1817 = vadd.f32 %v1815, %v1816
    %v1818 = vsel %vm376, %v1765, 0.0
    %v1819 = vsel %vm376, %v1766, 0.0
    %v1820 = vadd.f32 %v1818, %v1819
    %v1821 = vsel %vm376, %v1767, 0.0
    %v1822 = vadd.f32 %v1820, %v1821
    %v1823 = vsel %vm376, %v1768, 0.0
    %v1824 = vadd.f32 %v1822, %v1823
    %v1825 = vsel %vm376, %v1769, 0.0
    %v1826 = vadd.f32 %v1824, %v1825
    %v1827 = vsel %vm376, %v1770, 0.0
    %v1828 = vadd.f32 %v1826, %v1827
    %v1829 = vsel %vm376, %v1771, 0.0
    %v1830 = vadd.f32 %v1828, %v1829
    %v1831 = vsel %vm376, %v1772, 0.0
    %v1832 = vadd.f32 %v1830, %v1831
    %v1833 = vsel %vm376, %v1773, 0.0
    %v1834 = vadd.f32 %v1832, %v1833
    %v1835 = vsel %vm376, %v1774, 0.0
    %v1836 = vadd.f32 %v1834, %v1835
    %v1837 = vsel %vm376, %v1775, 0.0
    %v1838 = vadd.f32 %v1836, %v1837
    %v1839 = vsel %vm376, %v1776, 0.0
    %v1840 = vadd.f32 %v1838, %v1839
    %v1841 = vsel %vm376, %v1777, 0.0
    %v1842 = vadd.f32 %v1840, %v1841
    %v1843 = vsel %vm376, %v1778, 0.0
    %v1844 = vadd.f32 %v1842, %v1843
    %v1845 = vsel %vm376, %v1779, 0.0
    %v1846 = vadd.f32 %v1844, %v1845
    %v1847 = vsel %vm376, %v1780, 0.0
    %v1848 = vadd.f32 %v1846, %v1847
    %v1849 = vrot.slane %v1848, 4
    %v1850 = vadd.f32 %v1848, %v1849
    %v1851 = vrot.slane %v1850, 2
    %v1852 = vadd.f32 %v1850, %v1851
    %v1853 = vrot.slane %v1852, 1
    %v1854 = vadd.f32 %v1852, %v1853
    %1855 = vset.pattern.permute.xlu0 7
    %1856 = vperm.xlu0 %1855, %v24
    %v1857 = vpop.permute.xlu0 %1856
    %1859 = vset.pattern.permute.xlu0 7
    %1860 = vperm.xlu0 %1859, %v25
    %v1861 = vpop.permute.xlu0 %1860
    %1863 = vset.pattern.permute.xlu0 7
    %1864 = vperm.xlu0 %1863, %v26
    %v1865 = vpop.permute.xlu0 %1864
    %1867 = vset.pattern.permute.xlu0 7
    %1868 = vperm.xlu0 %1867, %v27
    %v1869 = vpop.permute.xlu0 %1868
    %1871 = vset.pattern.permute.xlu0 7
    %1872 = vperm.xlu0 %1871, %v28
    %v1873 = vpop.permute.xlu0 %1872
    %1875 = vset.pattern.permute.xlu0 7
    %1876 = vperm.xlu0 %1875, %v29
    %v1877 = vpop.permute.xlu0 %1876
    %1879 = vset.pattern.permute.xlu0 7
    %1880 = vperm.xlu0 %1879, %v30
    %v1881 = vpop.permute.xlu0 %1880
    %1883 = vset.pattern.permute.xlu0 7
    %1884 = vperm.xlu0 %1883, %v31
    %v1885 = vpop.permute.xlu0 %1884
    %1887 = vset.pattern.permute.xlu0 7
    %1888 = vperm.xlu0 %1887, %v32
    %v1889 = vpop.permute.xlu0 %1888
    %1891 = vset.pattern.permute.xlu0 7
    %1892 = vperm.xlu0 %1891, %v33
    %v1893 = vpop.permute.xlu0 %1892
    %1895 = vset.pattern.permute.xlu0 7
    %1896 = vperm.xlu0 %1895, %v34
    %v1897 = vpop.permute.xlu0 %1896
    %1899 = vset.pattern.permute.xlu0 7
    %1900 = vperm.xlu0 %1899, %v35
    %v1901 = vpop.permute.xlu0 %1900
    %1903 = vset.pattern.permute.xlu0 7
    %1904 = vperm.xlu0 %1903, %v36
    %v1905 = vpop.permute.xlu0 %1904
    %1907 = vset.pattern.permute.xlu0 7
    %1908 = vperm.xlu0 %1907, %v37
    %v1909 = vpop.permute.xlu0 %1908
    %1911 = vset.pattern.permute.xlu0 7
    %1912 = vperm.xlu0 %1911, %v38
    %v1913 = vpop.permute.xlu0 %1912
    %1915 = vset.pattern.permute.xlu0 7
    %1916 = vperm.xlu0 %1915, %v39
    %v1917 = vpop.permute.xlu0 %1916
    %1919 = vset.pattern.permute.xlu0 7
    %1920 = vperm.xlu0 %1919, %v40
    %v1921 = vpop.permute.xlu0 %1920
    %1923 = vset.pattern.permute.xlu0 7
    %1924 = vperm.xlu0 %1923, %v41
    %v1925 = vpop.permute.xlu0 %1924
    %1927 = vset.pattern.permute.xlu0 7
    %1928 = vperm.xlu0 %1927, %v42
    %v1929 = vpop.permute.xlu0 %1928
    %1931 = vset.pattern.permute.xlu0 7
    %1932 = vperm.xlu0 %1931, %v43
    %v1933 = vpop.permute.xlu0 %1932
    %1935 = vset.pattern.permute.xlu0 7
    %1936 = vperm.xlu0 %1935, %v44
    %v1937 = vpop.permute.xlu0 %1936
    %1939 = vset.pattern.permute.xlu0 7
    %1940 = vperm.xlu0 %1939, %v45
    %v1941 = vpop.permute.xlu0 %1940
    %1943 = vset.pattern.permute.xlu0 7
    %1944 = vperm.xlu0 %1943, %v46
    %v1945 = vpop.permute.xlu0 %1944
    %1947 = vset.pattern.permute.xlu0 7
    %1948 = vperm.xlu0 %1947, %v47
    %v1949 = vpop.permute.xlu0 %1948
    %1951 = vset.pattern.permute.xlu0 7
    %1952 = vperm.xlu0 %1951, %v48
    %v1953 = vpop.permute.xlu0 %1952
    %1955 = vset.pattern.permute.xlu0 7
    %1956 = vperm.xlu0 %1955, %v49
    %v1957 = vpop.permute.xlu0 %1956
    %1959 = vset.pattern.permute.xlu0 7
    %1960 = vperm.xlu0 %1959, %v50
    %v1961 = vpop.permute.xlu0 %1960
    %1963 = vset.pattern.permute.xlu0 7
    %1964 = vperm.xlu0 %1963, %v51
    %v1965 = vpop.permute.xlu0 %1964
    %1967 = vset.pattern.permute.xlu0 7
    %1968 = vperm.xlu0 %1967, %v52
    %v1969 = vpop.permute.xlu0 %1968
    %1971 = vset.pattern.permute.xlu0 7
    %1972 = vperm.xlu0 %1971, %v53
    %v1973 = vpop.permute.xlu0 %1972
    %1975 = vset.pattern.permute.xlu0 7
    %1976 = vperm.xlu0 %1975, %v54
    %v1977 = vpop.permute.xlu0 %1976
    %1979 = vset.pattern.permute.xlu0 7
    %1980 = vperm.xlu0 %1979, %v55
    %v1981 = vpop.permute.xlu0 %1980
    %v1983 = vmul.f32 %v1857, %v168
    %v1984 = vmul.f32 %v1861, %v169
    %v1985 = vmul.f32 %v1865, %v170
    %v1986 = vmul.f32 %v1869, %v171
    %v1987 = vmul.f32 %v1873, %v172
    %v1988 = vmul.f32 %v1877, %v173
    %v1989 = vmul.f32 %v1881, %v174
    %v1990 = vmul.f32 %v1885, %v175
    %v1991 = vmul.f32 %v1889, %v176
    %v1992 = vmul.f32 %v1893, %v177
    %v1993 = vmul.f32 %v1897, %v178
    %v1994 = vmul.f32 %v1901, %v179
    %v1995 = vmul.f32 %v1905, %v180
    %v1996 = vmul.f32 %v1909, %v181
    %v1997 = vmul.f32 %v1913, %v182
    %v1998 = vmul.f32 %v1917, %v183
    %v1999 = vmul.f32 %v1921, %v168
    %v2000 = vmul.f32 %v1925, %v169
    %v2001 = vmul.f32 %v1929, %v170
    %v2002 = vmul.f32 %v1933, %v171
    %v2003 = vmul.f32 %v1937, %v172
    %v2004 = vmul.f32 %v1941, %v173
    %v2005 = vmul.f32 %v1945, %v174
    %v2006 = vmul.f32 %v1949, %v175
    %v2007 = vmul.f32 %v1953, %v176
    %v2008 = vmul.f32 %v1957, %v177
    %v2009 = vmul.f32 %v1961, %v178
    %v2010 = vmul.f32 %v1965, %v179
    %v2011 = vmul.f32 %v1969, %v180
    %v2012 = vmul.f32 %v1973, %v181
    %v2013 = vmul.f32 %v1977, %v182
    %v2014 = vmul.f32 %v1981, %v183
    %v2015 = vsel %vm376, %v1983, 0.0
    %v2016 = vsel %vm376, %v1984, 0.0
    %v2017 = vadd.f32 %v2015, %v2016
    %v2018 = vsel %vm376, %v1985, 0.0
    %v2019 = vadd.f32 %v2017, %v2018
    %v2020 = vsel %vm376, %v1986, 0.0
    %v2021 = vadd.f32 %v2019, %v2020
    %v2022 = vsel %vm376, %v1987, 0.0
    %v2023 = vadd.f32 %v2021, %v2022
    %v2024 = vsel %vm376, %v1988, 0.0
    %v2025 = vadd.f32 %v2023, %v2024
    %v2026 = vsel %vm376, %v1989, 0.0
    %v2027 = vadd.f32 %v2025, %v2026
    %v2028 = vsel %vm376, %v1990, 0.0
    %v2029 = vadd.f32 %v2027, %v2028
    %v2030 = vsel %vm376, %v1991, 0.0
    %v2031 = vadd.f32 %v2029, %v2030
    %v2032 = vsel %vm376, %v1992, 0.0
    %v2033 = vadd.f32 %v2031, %v2032
    %v2034 = vsel %vm376, %v1993, 0.0
    %v2035 = vadd.f32 %v2033, %v2034
    %v2036 = vsel %vm376, %v1994, 0.0
    %v2037 = vadd.f32 %v2035, %v2036
    %v2038 = vsel %vm376, %v1995, 0.0
    %v2039 = vadd.f32 %v2037, %v2038
    %v2040 = vsel %vm376, %v1996, 0.0
    %v2041 = vadd.f32 %v2039, %v2040
    %v2042 = vsel %vm376, %v1997, 0.0
    %v2043 = vadd.f32 %v2041, %v2042
    %v2044 = vsel %vm376, %v1998, 0.0
    %v2045 = vadd.f32 %v2043, %v2044
    %v2046 = vrot.slane %v2045, 4
    %v2047 = vadd.f32 %v2045, %v2046
    %v2048 = vrot.slane %v2047, 2
    %v2049 = vadd.f32 %v2047, %v2048
    %v2050 = vrot.slane %v2049, 1
    %v2051 = vadd.f32 %v2049, %v2050
    %v2052 = vsel %vm376, %v1999, 0.0
    %v2053 = vsel %vm376, %v2000, 0.0
    %v2054 = vadd.f32 %v2052, %v2053
    %v2055 = vsel %vm376, %v2001, 0.0
    %v2056 = vadd.f32 %v2054, %v2055
    %v2057 = vsel %vm376, %v2002, 0.0
    %v2058 = vadd.f32 %v2056, %v2057
    %v2059 = vsel %vm376, %v2003, 0.0
    %v2060 = vadd.f32 %v2058, %v2059
    %v2061 = vsel %vm376, %v2004, 0.0
    %v2062 = vadd.f32 %v2060, %v2061
    %v2063 = vsel %vm376, %v2005, 0.0
    %v2064 = vadd.f32 %v2062, %v2063
    %v2065 = vsel %vm376, %v2006, 0.0
    %v2066 = vadd.f32 %v2064, %v2065
    %v2067 = vsel %vm376, %v2007, 0.0
    %v2068 = vadd.f32 %v2066, %v2067
    %v2069 = vsel %vm376, %v2008, 0.0
    %v2070 = vadd.f32 %v2068, %v2069
    %v2071 = vsel %vm376, %v2009, 0.0
    %v2072 = vadd.f32 %v2070, %v2071
    %v2073 = vsel %vm376, %v2010, 0.0
    %v2074 = vadd.f32 %v2072, %v2073
    %v2075 = vsel %vm376, %v2011, 0.0
    %v2076 = vadd.f32 %v2074, %v2075
    %v2077 = vsel %vm376, %v2012, 0.0
    %v2078 = vadd.f32 %v2076, %v2077
    %v2079 = vsel %vm376, %v2013, 0.0
    %v2080 = vadd.f32 %v2078, %v2079
    %v2081 = vsel %vm376, %v2014, 0.0
    %v2082 = vadd.f32 %v2080, %v2081
    %v2083 = vrot.slane %v2082, 4
    %v2084 = vadd.f32 %v2082, %v2083
    %v2085 = vrot.slane %v2084, 2
    %v2086 = vadd.f32 %v2084, %v2085
    %v2087 = vrot.slane %v2086, 1
    %v2088 = vadd.f32 %v2086, %v2087
    %vm2091 = vcmask 1041409
    %v2092 = vsel %vm2091, %v450, %v413
    %v2096 = vsel %vm2091, %v684, %v647
    %2097 = vrot.lane.b32.xlu0 %v2096, 32
    %v2098 = vpop.permute.xlu0 %2097
    %v2102 = vsel %vm2091, %v918, %v881
    %2103 = vrot.lane.b32.xlu0 %v2102, 64
    %v2104 = vpop.permute.xlu0 %2103
    %v2108 = vsel %vm2091, %v1152, %v1115
    %2109 = vrot.lane.b32.xlu0 %v2108, 96
    %v2110 = vpop.permute.xlu0 %2109
    %v2114 = vsel %vm2091, %v1386, %v1349
    %v2118 = vsel %vm2091, %v1620, %v1583
    %2119 = vrot.lane.b32.xlu0 %v2118, 32
    %v2120 = vpop.permute.xlu0 %2119
    %v2124 = vsel %vm2091, %v1854, %v1817
    %2125 = vrot.lane.b32.xlu0 %v2124, 64
    %v2126 = vpop.permute.xlu0 %2125
    %v2130 = vsel %vm2091, %v2088, %v2051
    %2131 = vrot.lane.b32.xlu0 %v2130, 96
    %v2132 = vpop.permute.xlu0 %2131
    %v2134 = vsel %vm376, %v2092, %v2098
    %vm2135 = vcmask 523264
    %v2136 = vsel %vm2135, %v2134, %v2104
    %vm2137 = vcmask 785408
    %v2138 = vsel %vm2137, %v2136, %v2110
    %v2139 = vsel %vm376, %v2114, %v2120
    %v2140 = vsel %vm2135, %v2139, %v2126
    %v2141 = vsel %vm2137, %v2140, %v2132
    %v2142 = vld [vmem:[%s2] sm:$0x3]
    %v2144 = vperm.slane %v2142, 0
    %v2145 = vperm.slane %v2142, 1
    %v2148 = vmul.f32 %v2138, %v2144
    %v2149 = vmul.f32 %v2141, %v2145
    %v2150 = vld [vmem:[%s3] sm:$0x3]
    %v2152 = vperm.slane %v2150, 0
    %v2153 = vperm.slane %v2150, 1
    %v2156 = vadd.f32 %v2148, %v2152
    %v2157 = vadd.f32 %v2149, %v2153
    %v2158 = vmax.f32 %v2156, 0.0
    %v2159 = vmax.f32 %v2157, 0.0
    %v2160 = vld [vmem:[%s4] sm:$0x3]
    %v2162 = vperm.slane %v2160, 0
    %v2163 = vperm.slane %v2160, 1
    %v2166 = vmul.f32 %v2158, %v2162
    %v2167 = vmul.f32 %v2159, %v2163
    %v2168 = vld [vmem:[%s5] sm:$0x3]
    %v2170 = vperm.slane %v2168, 0
    %v2171 = vperm.slane %v2168, 1
    %v2174 = vadd.f32 %v2166, %v2170
    %v2175 = vadd.f32 %v2167, %v2171
    %v2178 = vrot.slane %v2175, 6
    %vm2179 = vcmask 1041408
    %v2180 = vsel %vm2179, %v2174, %v2178
    %2182 = vst [vmem:[#allocation2] sm:$0xf] %v2180
    // Predicated region
    $region26: #{mgn_forward.3} parent=1 // pred_check
      _
    $region27: #{mgn_forward.3} parent=1 // pred_check_branch
      %2184 = sbr.rel (0) target = $region29
    $region28: #{mgn_forward.3} parent=1 // pred_region
      %2186 = vsyncadd [#allocation3], 0
      %s2188 = sshll.u32 [#allocation2], 4
      %s2189 = int_to_ptr.vmem [resolvable:$true] %s2188
      %s2190 = sshll.u32 %s6, 4
      %s2191 = int_to_ptr.hbm [resolvable:$true] %s2190
      %2193 = dma.vmem_to_hbm [thread:$0]  %s2189, 64, %s2191, [#allocation3]
    $region29: #{mgn_forward.3} parent=1 // pred_fallthru
      _
    // Predicated region
    $region30: #{mgn_forward.3} parent=1 // pred_check
      _
    $region31: #{mgn_forward.3} parent=1 // pred_check_branch
      %2195 = sbr.rel (0) target = $region33
    $region32: #{mgn_forward.3} parent=1 // pred_region
      %2197 = dma.done [#allocation3], 64
    $region33: #{mgn_forward.3} parent=1 // pred_fallthru
      _
    %2198 = vsyncpa [#allocation3], 1

// kernel: mgn_forward.2
$region0: #{mgn_forward.2}
  #allocation0 [shape = 'u32[]', space=smem, size = 0x4, offset = 0x4, fixed_abs, tag = 'smem constant byte address 0x4 - core index']
  #allocation1 [shape = 'u32[72,128]{1,0:T(1,128)}', space=vmem, size = 0x9000, scoped, tag = 'internal scratch']
  %s0 = inlined_call_operand.vmem [shape: f32[3,2], index: 0, kind: input, shape index: {}]
  %s1 = inlined_call_operand.vmem [shape: f32[2,3,192], index: 1, kind: input, shape index: {}]
  %s2 = inlined_call_operand.vmem [shape: f32[2,3,48], index: 2, kind: input, shape index: {}]
  %s3 = inlined_call_operand.vmem [shape: f32[3,128,1], index: 3, kind: input, shape index: {}]
  %s4 = inlined_call_operand.vmem [shape: f32[384,128], index: 4, kind: input, shape index: {}]
  %s5 = inlined_call_operand.vmem [shape: f32[3,160,128], index: 5, kind: input, shape index: {}]
  %s6 = inlined_call_operand.vmem [shape: f32[3,160,1], index: 6, kind: input, shape index: {}]
  %s7 = inlined_call_operand.vmem [shape: f32[2,128,8], index: 7, kind: output, shape index: {}]
  %s8 = sld [smem:[#allocation0]]
  $region65: #{mgn_forward.2} parent=0
    _
  %s10 = ssub.s32 1, %s8
  %s11 = scalar_select 0, %s10, %s8
  $region1: #{mgn_forward.2} parent=0
    #allocation2 [shape = 'u8[2048]{0}', space=smem, size = 0x800, scoped, tag = 'input window, operand 0, single buffered']
    #allocation3 [shape = 's32[2]{0}', space=sflag, size = 0x8, scoped, tag = 'scoped memory for mgn_forward.2']
    %12 = vsyncpa [#allocation3], 0
    loop: start=0, step=1, limit=4
    $region2: #{mgn_forward.2} parent=1 // loop_pre_header
      _
    $region3: #{mgn_forward.2} parent=1 // loop_header
      %s14 = sphi 0, %s18
      %p15 = scmp.ge.s32.totalorder %s14, 4
      %s22 = sphi 0, %s22
      %s24 = sphi 0, %s22
      %s25 = sphi 0, %s24
      %s39 = sphi 0, %s25
      %s45 = sphi 0, %s47
      %s48 = sphi 0, %s45
      %s49 = sphi 0, %s48
      %s65 = sphi 0, %s49
      %s71 = sphi 0, %s73
      %s74 = sphi 0, %s71
      %s75 = sphi 0, %s74
      %s91 = sphi 0, %s75
      %s95 = sphi 0, %s95
      %s97 = sphi 0, %s95
      %s98 = sphi 0, %s97
      %s112 = sphi 0, %s98
      %s116 = sphi 0, %s116
      %s118 = sphi 0, %s116
      %s119 = sphi 0, %s118
      %s133 = sphi 0, %s119
      %s137 = sphi 0, %s137
      %s139 = sphi 0, %s137
      %s140 = sphi 0, %s139
      %s154 = sphi 0, %s140
      %s158 = sphi 0, %s158
      %s160 = sphi 0, %s158
      %s161 = sphi 0, %s160
      %s175 = sphi 0, %s161
      %s181 = sphi 0, %s183
      %s184 = sphi 0, %s181
      %s185 = sphi 0, %s184
      %s201 = sphi 0, %s185
    $region4: #{mgn_forward.2} parent=1 // loop_header_branch
      %17 = sbr.rel (%p15) target = $region8
    $region5: #{mgn_forward.2} parent=1 // loop_body
      %s19 = ssub.s32 %s14, 1
      %s20 = ssub.s32 %s14, 2
      %s21 = sadd.s32 %s14, 1
      %s23 = sadd.s32 %s22, 1
      %p26 = scmp.eq.s32.totalorder %s14, 1
      %p27 = scmp.ne.s32.totalorder %s22, %s24
      %p28 = scmp.eq.s32.totalorder %s14, 0
      %p29 = por %p27, %p28
      %p30 = scmp.ne.s32.totalorder %s22, %s24
      %p31 = scmp.eq.s32.totalorder %s19, 1
      %p32 = por %p30, %p31
      %p33 = scmp.ne.s32.totalorder %s24, %s25
      %p34 = scmp.eq.s32.totalorder %s19, 0
      %p35 = por %p33, %p34
      %p36 = scmp.ne.s32.totalorder %s24, %s25
      %p37 = scmp.eq.s32.totalorder %s20, 1
      %p38 = por %p36, %p37
      %p40 = scmp.ne.s32.totalorder %s25, %s39
      %p41 = scmp.eq.s32.totalorder %s20, 0
      %p42 = por %p40, %p41
      %s43 = ssub.s32 %s14, %s21
      %p44 = scmp.eq.s32.totalorder %s43, 0
      %s46 = sadd.s32 %s45, 1
      %s47 = scalar_select %p44, %s45, %s46
      %p50 = pneg %p44
      %p51 = scmp.eq.s32.totalorder %s14, 1
      %p52 = por %p50, %p51
      %p53 = scmp.ne.s32.totalorder %s45, %s48
      %p54 = scmp.eq.s32.totalorder %s14, 0
      %p55 = por %p53, %p54
      %p56 = scmp.ne.s32.totalorder %s45, %s48
      %p57 = scmp.eq.s32.totalorder %s19, 1
      %p58 = por %p56, %p57
      %p59 = scmp.ne.s32.totalorder %s48, %s49
      %p60 = scmp.eq.s32.totalorder %s19, 0
      %p61 = por %p59, %p60
      %p62 = scmp.ne.s32.totalorder %s48, %s49
      %p63 = scmp.eq.s32.totalorder %s20, 1
      %p64 = por %p62, %p63
      %p66 = scmp.ne.s32.totalorder %s49, %s65
      %p67 = scmp.eq.s32.totalorder %s20, 0
      %p68 = por %p66, %p67
      %s69 = ssub.s32 %s14, %s21
      %p70 = scmp.eq.s32.totalorder %s69, 0
      %s72 = sadd.s32 %s71, 1
      %s73 = scalar_select %p70, %s71, %s72
      %p76 = pneg %p70
      %p77 = scmp.eq.s32.totalorder %s14, 1
      %p78 = por %p76, %p77
      %p79 = scmp.ne.s32.totalorder %s71, %s74
      %p80 = scmp.eq.s32.totalorder %s14, 0
      %p81 = por %p79, %p80
      %p82 = scmp.ne.s32.totalorder %s71, %s74
      %p83 = scmp.eq.s32.totalorder %s19, 1
      %p84 = por %p82, %p83
      %p85 = scmp.ne.s32.totalorder %s74, %s75
      %p86 = scmp.eq.s32.totalorder %s19, 0
      %p87 = por %p85, %p86
      %p88 = scmp.ne.s32.totalorder %s74, %s75
      %p89 = scmp.eq.s32.totalorder %s20, 1
      %p90 = por %p88, %p89
      %p92 = scmp.ne.s32.totalorder %s75, %s91
      %p93 = scmp.eq.s32.totalorder %s20, 0
      %p94 = por %p92, %p93
      %s96 = sadd.s32 %s95, 1
      %p99 = scmp.eq.s32.totalorder %s14, 1
      %p100 = scmp.ne.s32.totalorder %s95, %s97
      %p101 = scmp.eq.s32.totalorder %s14, 0
      %p102 = por %p100, %p101
      %p103 = scmp.ne.s32.totalorder %s95, %s97
      %p104 = scmp.eq.s32.totalorder %s19, 1
      %p105 = por %p103, %p104
      %p106 = scmp.ne.s32.totalorder %s97, %s98
      %p107 = scmp.eq.s32.totalorder %s19, 0
      %p108 = por %p106, %p107
      %p109 = scmp.ne.s32.totalorder %s97, %s98
      %p110 = scmp.eq.s32.totalorder %s20, 1
      %p111 = por %p109, %p110
      %p113 = scmp.ne.s32.totalorder %s98, %s112
      %p114 = scmp.eq.s32.totalorder %s20, 0
      %p115 = por %p113, %p114
      %s117 = sadd.s32 %s116, 1
      %p120 = scmp.eq.s32.totalorder %s14, 1
      %p121 = scmp.ne.s32.totalorder %s116, %s118
      %p122 = scmp.eq.s32.totalorder %s14, 0
      %p123 = por %p121, %p122
      %p124 = scmp.ne.s32.totalorder %s116, %s118
      %p125 = scmp.eq.s32.totalorder %s19, 1
      %p126 = por %p124, %p125
      %p127 = scmp.ne.s32.totalorder %s118, %s119
      %p128 = scmp.eq.s32.totalorder %s19, 0
      %p129 = por %p127, %p128
      %p130 = scmp.ne.s32.totalorder %s118, %s119
      %p131 = scmp.eq.s32.totalorder %s20, 1
      %p132 = por %p130, %p131
      %p134 = scmp.ne.s32.totalorder %s119, %s133
      %p135 = scmp.eq.s32.totalorder %s20, 0
      %p136 = por %p134, %p135
      %s138 = sadd.s32 %s137, 1
      %p141 = scmp.eq.s32.totalorder %s14, 1
      %p142 = scmp.ne.s32.totalorder %s137, %s139
      %p143 = scmp.eq.s32.totalorder %s14, 0
      %p144 = por %p142, %p143
      %p145 = scmp.ne.s32.totalorder %s137, %s139
      %p146 = scmp.eq.s32.totalorder %s19, 1
      %p147 = por %p145, %p146
      %p148 = scmp.ne.s32.totalorder %s139, %s140
      %p149 = scmp.eq.s32.totalorder %s19, 0
      %p150 = por %p148, %p149
      %p151 = scmp.ne.s32.totalorder %s139, %s140
      %p152 = scmp.eq.s32.totalorder %s20, 1
      %p153 = por %p151, %p152
      %p155 = scmp.ne.s32.totalorder %s140, %s154
      %p156 = scmp.eq.s32.totalorder %s20, 0
      %p157 = por %p155, %p156
      %s159 = sadd.s32 %s158, 1
      %p162 = scmp.eq.s32.totalorder %s14, 1
      %p163 = scmp.ne.s32.totalorder %s158, %s160
      %p164 = scmp.eq.s32.totalorder %s14, 0
      %p165 = por %p163, %p164
      %p166 = scmp.ne.s32.totalorder %s158, %s160
      %p167 = scmp.eq.s32.totalorder %s19, 1
      %p168 = por %p166, %p167
      %p169 = scmp.ne.s32.totalorder %s160, %s161
      %p170 = scmp.eq.s32.totalorder %s19, 0
      %p171 = por %p169, %p170
      %p172 = scmp.ne.s32.totalorder %s160, %s161
      %p173 = scmp.eq.s32.totalorder %s20, 1
      %p174 = por %p172, %p173
      %p176 = scmp.ne.s32.totalorder %s161, %s175
      %p177 = scmp.eq.s32.totalorder %s20, 0
      %p178 = por %p176, %p177
      %s179 = ssub.s32 %s14, %s21
      %p180 = scmp.eq.s32.totalorder %s179, 0
      %s182 = sadd.s32 %s181, 1
      %s183 = scalar_select %p180, %s181, %s182
      %p186 = pneg %p180
      %p187 = scmp.eq.s32.totalorder %s14, 1
      %p188 = por %p186, %p187
      %p189 = scmp.ne.s32.totalorder %s181, %s184
      %p190 = scmp.eq.s32.totalorder %s14, 0
      %p191 = por %p189, %p190
      %p192 = scmp.ne.s32.totalorder %s181, %s184
      %p193 = scmp.eq.s32.totalorder %s19, 1
      %p194 = por %p192, %p193
      %p195 = scmp.ne.s32.totalorder %s184, %s185
      %p196 = scmp.eq.s32.totalorder %s19, 0
      %p197 = por %p195, %p196
      %p198 = scmp.ne.s32.totalorder %s184, %s185
      %p199 = scmp.eq.s32.totalorder %s20, 1
      %p200 = por %p198, %p199
      %p202 = scmp.ne.s32.totalorder %s185, %s201
      %p203 = scmp.eq.s32.totalorder %s20, 0
      %p204 = por %p202, %p203
      %p205 = scmp.le.s32.totalorder 1, %s14
      %p206 = scmp.lt.s32.totalorder %s14, 3
      %p207 = pnand %p205, %p206
      %p208 = pneg %p207
      // Predicated region
      $region9: #{mgn_forward.2} parent=5 // pred_check
        _
      $region10: #{mgn_forward.2} parent=5 // pred_check_branch
        %210 = sbr.rel (%p207) target = $region12
      $region11: #{mgn_forward.2} parent=5 // pred_region
        %s211 = ssub.s32 %s14, 1
        // Predicated region
        $region13: #{mgn_forward.2} parent=11 // pred_check
          %p212 = pneg %p35
        $region14: #{mgn_forward.2} parent=11 // pred_check_branch
          %214 = sbr.rel (%p212) target = $region16
        $region15: #{mgn_forward.2} parent=11 // pred_region
          %216 = vsyncadd [#allocation3], 0
          %s218 = sshll.u32 %s0, 4
          %s219 = int_to_ptr.vmem [resolvable:$true] %s218
          %221 = dma.vmem_to_smem %s219, 64, [#allocation2], [#allocation3]
        $region16: #{mgn_forward.2} parent=11 // pred_fallthru
          _
        // Predicated region
        $region17: #{mgn_forward.2} parent=11 // pred_check
          %p222 = pneg %p108
        $region18: #{mgn_forward.2} parent=11 // pred_check_branch
          %224 = sbr.rel (%p222) target = $region20
        $region19: #{mgn_forward.2} parent=11 // pred_region
          _
        $region20: #{mgn_forward.2} parent=11 // pred_fallthru
          _
        // Predicated region
        $region21: #{mgn_forward.2} parent=11 // pred_check
          %p225 = pneg %p129
        $region22: #{mgn_forward.2} parent=11 // pred_check_branch
          %227 = sbr.rel (%p225) target = $region24
        $region23: #{mgn_forward.2} parent=11 // pred_region
          _
        $region24: #{mgn_forward.2} parent=11 // pred_fallthru
          _
        // Predicated region
        $region25: #{mgn_forward.2} parent=11 // pred_check
          %p228 = pneg %p150
        $region26: #{mgn_forward.2} parent=11 // pred_check_branch
          %230 = sbr.rel (%p228) target = $region28
        $region27: #{mgn_forward.2} parent=11 // pred_region
          _
        $region28: #{mgn_forward.2} parent=11 // pred_fallthru
          _
        // Predicated region
        $region29: #{mgn_forward.2} parent=11 // pred_check
          %p231 = pneg %p171
        $region30: #{mgn_forward.2} parent=11 // pred_check_branch
          %233 = sbr.rel (%p231) target = $region32
        $region31: #{mgn_forward.2} parent=11 // pred_region
          _
        $region32: #{mgn_forward.2} parent=11 // pred_fallthru
          _
      $region12: #{mgn_forward.2} parent=5 // pred_fallthru
        _
      %p234 = scmp.lt.s32.totalorder %s14, 2
      // Predicated region
      $region33: #{mgn_forward.2} parent=5 // pred_check
        %p235 = pneg %p234
      $region34: #{mgn_forward.2} parent=5 // pred_check_branch
        %237 = sbr.rel (%p235) target = $region36
      $region35: #{mgn_forward.2} parent=5 // pred_region
        // Predicated region
        $region37: #{mgn_forward.2} parent=35 // pred_check
          %p238 = pneg %p55
        $region38: #{mgn_forward.2} parent=35 // pred_check_branch
          %240 = sbr.rel (%p238) target = $region40
        $region39: #{mgn_forward.2} parent=35 // pred_region
          %p241 = scmp.lt.s32.totalorder %s14, 1
          %s242 = scalar_select %p241, %s14, 1
          %s243 = smul.addr %s242, 2
          %s244 = smul.addr %s243, 4
          %s245 = scalar_lea.vmem %s1, %s244
        $region40: #{mgn_forward.2} parent=35 // pred_fallthru
          _
        // Predicated region
        $region41: #{mgn_forward.2} parent=35 // pred_check
          %p246 = pneg %p81
        $region42: #{mgn_forward.2} parent=35 // pred_check_branch
          %248 = sbr.rel (%p246) target = $region44
        $region43: #{mgn_forward.2} parent=35 // pred_region
          %p249 = scmp.lt.s32.totalorder %s14, 1
          %s250 = scalar_select %p249, %s14, 1
          %s251 = smul.addr %s250, 4
          %s252 = scalar_lea.vmem %s2, %s251
        $region44: #{mgn_forward.2} parent=35 // pred_fallthru
          _
      $region36: #{mgn_forward.2} parent=5 // pred_fallthru
        _
      %p253 = scmp.le.s32.totalorder 1, %s14
      %p254 = scmp.lt.s32.totalorder %s14, 3
      %p255 = pnand %p253, %p254
      %p256 = pneg %p255
      // Predicated region
      $region45: #{mgn_forward.2} parent=5 // pred_check
        _
      $region46: #{mgn_forward.2} parent=5 // pred_check_branch
        %258 = sbr.rel (%p255) target = $region48
      $region47: #{mgn_forward.2} parent=5 // pred_region
        %s259 = ssub.s32 %s14, 1
        // Predicated region
        $region49: #{mgn_forward.2} parent=47 // pred_check
          %p260 = pneg %p35
        $region50: #{mgn_forward.2} parent=47 // pred_check_branch
          %262 = sbr.rel (%p260) target = $region52
        $region51: #{mgn_forward.2} parent=47 // pred_region
          %264 = dma.done [#allocation3], 64
        $region52: #{mgn_forward.2} parent=47 // pred_fallthru
          _
        %265 = sfence
        %p266 = pneg %p35
        %p267 = pneg %p32
        %p268 = scmp.lt.s32.totalorder %s19, 1
        %s269 = scalar_select %p268, %s19, 1
        %s270 = smul.addr %s269, 2
        %s271 = smul.addr %s270, 4
        %s272 = scalar_lea.vmem %s1, %s271
        %p273 = pneg %p61
        %p274 = pneg %p58
        %p275 = scmp.lt.s32.totalorder %s19, 1
        %s276 = scalar_select %p275, %s19, 1
        %s277 = smul.addr %s276, 4
        %s278 = scalar_lea.vmem %s2, %s277
        %p279 = pneg %p87
        %p280 = pneg %p84
        %p281 = pneg %p108
        %p282 = pneg %p105
        %p283 = pneg %p129
        %p284 = pneg %p126
        %p285 = pneg %p150
        %p286 = pneg %p147
        %p287 = pneg %p171
        %p288 = pneg %p168
        %p289 = pneg %p197
        %p290 = pneg %p194
        %p291 = scmp.lt.s32.totalorder %s19, 1
        %s292 = scalar_select %p291, %s19, 1
        %s293 = smul.addr %s292, 16
        %s294 = smul.addr %s293, 8
        %s295 = scalar_lea.vmem %s7, %s294
        %p296 = scmp.lt.s32.totalorder %s19, 1
        %s297 = scalar_select %p296, %s19, 1
        %s298 = smul.addr %s297, 2
        %s299 = smul.addr %s298, 4
        %s300 = scalar_lea.vmem %s1, %s299
        %p301 = scmp.lt.s32.totalorder %s19, 1
        %s302 = scalar_select %p301, %s19, 1
        %s303 = smul.addr %s302, 4
        %s304 = scalar_lea.vmem %s2, %s303
        %p305 = scmp.lt.s32.totalorder %s19, 1
        %s306 = scalar_select %p305, %s19, 1
        %s307 = smul.addr %s306, 16
        %s308 = smul.addr %s307, 8
        %s309 = scalar_lea.vmem %s7, %s308
        %v310 = vld [vmem:[%s300] sm:$0x77]
        %v311 = vld [vmem:[%s304] sm:$0x7]
        %v312 = vld [vmem:[%s3] sm:$0xff]
        %v313 = vld [vmem:[%s3 + $0x8] sm:$0xff]
        %v314 = vld [vmem:[%s3 + $0x10] sm:$0xff]
        %v315 = vld [vmem:[%s3 + $0x18] sm:$0xff]
        %v316 = vld [vmem:[%s3 + $0x20] sm:$0xff]
        %v317 = vld [vmem:[%s3 + $0x28] sm:$0xff]
        %v318 = vld [vmem:[%s3 + $0x30] sm:$0xff]
        %v319 = vld [vmem:[%s3 + $0x38] sm:$0xff]
        %v320 = vld [vmem:[%s3 + $0x40] sm:$0xff]
        %v321 = vld [vmem:[%s3 + $0x48] sm:$0xff]
        %v322 = vld [vmem:[%s3 + $0x50] sm:$0xff]
        %v323 = vld [vmem:[%s3 + $0x58] sm:$0xff]
        %v324 = vld [vmem:[%s3 + $0x60] sm:$0xff]
        %v325 = vld [vmem:[%s3 + $0x68] sm:$0xff]
        %v326 = vld [vmem:[%s3 + $0x70] sm:$0xff]
        %v327 = vld [vmem:[%s3 + $0x78] sm:$0xff]
        %329 = vset.pattern.permute.xlu0 0
        %330 = vperm.xlu0 %329, %v312
        %v331 = vpop.permute.xlu0 %330
        %334 = vset.pattern.permute.xlu0 0
        %335 = vperm.xlu0 %334, %v313
        %v336 = vpop.permute.xlu0 %335
        %339 = vset.pattern.permute.xlu0 0
        %340 = vperm.xlu0 %339, %v314
        %v341 = vpop.permute.xlu0 %340
        %344 = vset.pattern.permute.xlu0 0
        %345 = vperm.xlu0 %344, %v315
        %v346 = vpop.permute.xlu0 %345
        %349 = vset.pattern.permute.xlu0 0
        %350 = vperm.xlu0 %349, %v316
        %v351 = vpop.permute.xlu0 %350
        %354 = vset.pattern.permute.xlu0 0
        %355 = vperm.xlu0 %354, %v317
        %v356 = vpop.permute.xlu0 %355
        %359 = vset.pattern.permute.xlu0 0
        %360 = vperm.xlu0 %359, %v318
        %v361 = vpop.permute.xlu0 %360
        %364 = vset.pattern.permute.xlu0 0
        %365 = vperm.xlu0 %364, %v319
        %v366 = vpop.permute.xlu0 %365
        %369 = vset.pattern.permute.xlu0 0
        %370 = vperm.xlu0 %369, %v320
        %v371 = vpop.permute.xlu0 %370
        %374 = vset.pattern.permute.xlu0 0
        %375 = vperm.xlu0 %374, %v321
        %v376 = vpop.permute.xlu0 %375
        %379 = vset.pattern.permute.xlu0 0
        %380 = vperm.xlu0 %379, %v322
        %v381 = vpop.permute.xlu0 %380
        %384 = vset.pattern.permute.xlu0 0
        %385 = vperm.xlu0 %384, %v323
        %v386 = vpop.permute.xlu0 %385
        %389 = vset.pattern.permute.xlu0 0
        %390 = vperm.xlu0 %389, %v324
        %v391 = vpop.permute.xlu0 %390
        %394 = vset.pattern.permute.xlu0 0
        %395 = vperm.xlu0 %394, %v325
        %v396 = vpop.permute.xlu0 %395
        %399 = vset.pattern.permute.xlu0 0
        %400 = vperm.xlu0 %399, %v326
        %v401 = vpop.permute.xlu0 %400
        %404 = vset.pattern.permute.xlu0 0
        %405 = vperm.xlu0 %404, %v327
        %v406 = vpop.permute.xlu0 %405
        %v409 = vperm.slane %v310, 0
        %v410 = vperm.slane %v310, 4
        %v413 = vperm.slane %v409, 0
        %v414 = vperm.slane %v410, 0
        %v415 = vmul.f32 %v331, %v413
        %v416 = vmul.f32 %v331, %v414
        %v417 = vmul.f32 %v336, %v413
        %v418 = vmul.f32 %v336, %v414
        %v419 = vmul.f32 %v341, %v413
        %v420 = vmul.f32 %v341, %v414
        %v421 = vmul.f32 %v346, %v413
        %v422 = vmul.f32 %v346, %v414
        %v423 = vmul.f32 %v351, %v413
        %v424 = vmul.f32 %v351, %v414
        %v425 = vmul.f32 %v356, %v413
        %v426 = vmul.f32 %v356, %v414
        %v427 = vmul.f32 %v361, %v413
        %v428 = vmul.f32 %v361, %v414
        %v429 = vmul.f32 %v366, %v413
        %v430 = vmul.f32 %v366, %v414
        %v431 = vmul.f32 %v371, %v413
        %v432 = vmul.f32 %v371, %v414
        %v433 = vmul.f32 %v376, %v413
        %v434 = vmul.f32 %v376, %v414
        %v435 = vmul.f32 %v381, %v413
        %v436 = vmul.f32 %v381, %v414
        %v437 = vmul.f32 %v386, %v413
        %v438 = vmul.f32 %v386, %v414
        %v439 = vmul.f32 %v391, %v413
        %v440 = vmul.f32 %v391, %v414
        %v441 = vmul.f32 %v396, %v413
        %v442 = vmul.f32 %v396, %v414
        %v443 = vmul.f32 %v401, %v413
        %v444 = vmul.f32 %v401, %v414
        %v445 = vmul.f32 %v406, %v413
        %v446 = vmul.f32 %v406, %v414
        %s447 = scalar_lea.vmem %s3, 128
        %v448 = vld [vmem:[%s447] sm:$0xff]
        %v449 = vld [vmem:[%s447 + $0x8] sm:$0xff]
        %v450 = vld [vmem:[%s447 + $0x10] sm:$0xff]
        %v451 = vld [vmem:[%s447 + $0x18] sm:$0xff]
        %v452 = vld [vmem:[%s447 + $0x20] sm:$0xff]
        %v453 = vld [vmem:[%s447 + $0x28] sm:$0xff]
        %v454 = vld [vmem:[%s447 + $0x30] sm:$0xff]
        %v455 = vld [vmem:[%s447 + $0x38] sm:$0xff]
        %v456 = vld [vmem:[%s447 + $0x40] sm:$0xff]
        %v457 = vld [vmem:[%s447 + $0x48] sm:$0xff]
        %v458 = vld [vmem:[%s447 + $0x50] sm:$0xff]
        %v459 = vld [vmem:[%s447 + $0x58] sm:$0xff]
        %v460 = vld [vmem:[%s447 + $0x60] sm:$0xff]
        %v461 = vld [vmem:[%s447 + $0x68] sm:$0xff]
        %v462 = vld [vmem:[%s447 + $0x70] sm:$0xff]
        %v463 = vld [vmem:[%s447 + $0x78] sm:$0xff]
        %465 = vset.pattern.permute.xlu0 0
        %466 = vperm.xlu0 %465, %v448
        %v467 = vpop.permute.xlu0 %466
        %470 = vset.pattern.permute.xlu0 0
        %471 = vperm.xlu0 %470, %v449
        %v472 = vpop.permute.xlu0 %471
        %475 = vset.pattern.permute.xlu0 0
        %476 = vperm.xlu0 %475, %v450
        %v477 = vpop.permute.xlu0 %476
        %480 = vset.pattern.permute.xlu0 0
        %481 = vperm.xlu0 %480, %v451
        %v482 = vpop.permute.xlu0 %481
        %485 = vset.pattern.permute.xlu0 0
        %486 = vperm.xlu0 %485, %v452
        %v487 = vpop.permute.xlu0 %486
        %490 = vset.pattern.permute.xlu0 0
        %491 = vperm.xlu0 %490, %v453
        %v492 = vpop.permute.xlu0 %491
        %495 = vset.pattern.permute.xlu0 0
        %496 = vperm.xlu0 %495, %v454
        %v497 = vpop.permute.xlu0 %496
        %500 = vset.pattern.permute.xlu0 0
        %501 = vperm.xlu0 %500, %v455
        %v502 = vpop.permute.xlu0 %501
        %505 = vset.pattern.permute.xlu0 0
        %506 = vperm.xlu0 %505, %v456
        %v507 = vpop.permute.xlu0 %506
        %510 = vset.pattern.permute.xlu0 0
        %511 = vperm.xlu0 %510, %v457
        %v512 = vpop.permute.xlu0 %511
        %515 = vset.pattern.permute.xlu0 0
        %516 = vperm.xlu0 %515, %v458
        %v517 = vpop.permute.xlu0 %516
        %520 = vset.pattern.permute.xlu0 0
        %521 = vperm.xlu0 %520, %v459
        %v522 = vpop.permute.xlu0 %521
        %525 = vset.pattern.permute.xlu0 0
        %526 = vperm.xlu0 %525, %v460
        %v527 = vpop.permute.xlu0 %526
        %530 = vset.pattern.permute.xlu0 0
        %531 = vperm.xlu0 %530, %v461
        %v532 = vpop.permute.xlu0 %531
        %535 = vset.pattern.permute.xlu0 0
        %536 = vperm.xlu0 %535, %v462
        %v537 = vpop.permute.xlu0 %536
        %540 = vset.pattern.permute.xlu0 0
        %541 = vperm.xlu0 %540, %v463
        %v542 = vpop.permute.xlu0 %541
        %v544 = vperm.slane %v310, 1
        %v545 = vperm.slane %v310, 5
        %v548 = vperm.slane %v544, 1
        %v549 = vperm.slane %v545, 1
        %v550 = vmul.f32 %v467, %v548
        %v551 = vmul.f32 %v467, %v549
        %v552 = vmul.f32 %v472, %v548
        %v553 = vmul.f32 %v472, %v549
        %v554 = vmul.f32 %v477, %v548
        %v555 = vmul.f32 %v477, %v549
        %v556 = vmul.f32 %v482, %v548
        %v557 = vmul.f32 %v482, %v549
        %v558 = vmul.f32 %v487, %v548
        %v559 = vmul.f32 %v487, %v549
        %v560 = vmul.f32 %v492, %v548
        %v561 = vmul.f32 %v492, %v549
        %v562 = vmul.f32 %v497, %v548
        %v563 = vmul.f32 %v497, %v549
        %v564 = vmul.f32 %v502, %v548
        %v565 = vmul.f32 %v502, %v549
        %v566 = vmul.f32 %v507, %v548
        %v567 = vmul.f32 %v507, %v549
        %v568 = vmul.f32 %v512, %v548
        %v569 = vmul.f32 %v512, %v549
        %v570 = vmul.f32 %v517, %v548
        %v571 = vmul.f32 %v517, %v549
        %v572 = vmul.f32 %v522, %v548
        %v573 = vmul.f32 %v522, %v549
        %v574 = vmul.f32 %v527, %v548
        %v575 = vmul.f32 %v527, %v549
        %v576 = vmul.f32 %v532, %v548
        %v577 = vmul.f32 %v532, %v549
        %v578 = vmul.f32 %v537, %v548
        %v579 = vmul.f32 %v537, %v549
        %v580 = vmul.f32 %v542, %v548
        %v581 = vmul.f32 %v542, %v549
        %v582 = vadd.f32 %v415, %v550
        %v583 = vadd.f32 %v416, %v551
        %v584 = vadd.f32 %v417, %v552
        %v585 = vadd.f32 %v418, %v553
        %v586 = vadd.f32 %v419, %v554
        %v587 = vadd.f32 %v420, %v555
        %v588 = vadd.f32 %v421, %v556
        %v589 = vadd.f32 %v422, %v557
        %v590 = vadd.f32 %v423, %v558
        %v591 = vadd.f32 %v424, %v559
        %v592 = vadd.f32 %v425, %v560
        %v593 = vadd.f32 %v426, %v561
        %v594 = vadd.f32 %v427, %v562
        %v595 = vadd.f32 %v428, %v563
        %v596 = vadd.f32 %v429, %v564
        %v597 = vadd.f32 %v430, %v565
        %v598 = vadd.f32 %v431, %v566
        %v599 = vadd.f32 %v432, %v567
        %v600 = vadd.f32 %v433, %v568
        %v601 = vadd.f32 %v434, %v569
        %v602 = vadd.f32 %v435, %v570
        %v603 = vadd.f32 %v436, %v571
        %v604 = vadd.f32 %v437, %v572
        %v605 = vadd.f32 %v438, %v573
        %v606 = vadd.f32 %v439, %v574
        %v607 = vadd.f32 %v440, %v575
        %v608 = vadd.f32 %v441, %v576
        %v609 = vadd.f32 %v442, %v577
        %v610 = vadd.f32 %v443, %v578
        %v611 = vadd.f32 %v444, %v579
        %v612 = vadd.f32 %v445, %v580
        %v613 = vadd.f32 %v446, %v581
        %s614 = scalar_lea.vmem %s3, 256
        %v615 = vld [vmem:[%s614] sm:$0xff]
        %v616 = vld [vmem:[%s614 + $0x8] sm:$0xff]
        %v617 = vld [vmem:[%s614 + $0x10] sm:$0xff]
        %v618 = vld [vmem:[%s614 + $0x18] sm:$0xff]
        %v619 = vld [vmem:[%s614 + $0x20] sm:$0xff]
        %v620 = vld [vmem:[%s614 + $0x28] sm:$0xff]
        %v621 = vld [vmem:[%s614 + $0x30] sm:$0xff]
        %v622 = vld [vmem:[%s614 + $0x38] sm:$0xff]
        %v623 = vld [vmem:[%s614 + $0x40] sm:$0xff]
        %v624 = vld [vmem:[%s614 + $0x48] sm:$0xff]
        %v625 = vld [vmem:[%s614 + $0x50] sm:$0xff]
        %v626 = vld [vmem:[%s614 + $0x58] sm:$0xff]
        %v627 = vld [vmem:[%s614 + $0x60] sm:$0xff]
        %v628 = vld [vmem:[%s614 + $0x68] sm:$0xff]
        %v629 = vld [vmem:[%s614 + $0x70] sm:$0xff]
        %v630 = vld [vmem:[%s614 + $0x78] sm:$0xff]
        %632 = vset.pattern.permute.xlu0 0
        %633 = vperm.xlu0 %632, %v615
        %v634 = vpop.permute.xlu0 %633
        %637 = vset.pattern.permute.xlu0 0
        %638 = vperm.xlu0 %637, %v616
        %v639 = vpop.permute.xlu0 %638
        %642 = vset.pattern.permute.xlu0 0
        %643 = vperm.xlu0 %642, %v617
        %v644 = vpop.permute.xlu0 %643
        %647 = vset.pattern.permute.xlu0 0
        %648 = vperm.xlu0 %647, %v618
        %v649 = vpop.permute.xlu0 %648
        %652 = vset.pattern.permute.xlu0 0
        %653 = vperm.xlu0 %652, %v619
        %v654 = vpop.permute.xlu0 %653
        %657 = vset.pattern.permute.xlu0 0
        %658 = vperm.xlu0 %657, %v620
        %v659 = vpop.permute.xlu0 %658
        %662 = vset.pattern.permute.xlu0 0
        %663 = vperm.xlu0 %662, %v621
        %v664 = vpop.permute.xlu0 %663
        %667 = vset.pattern.permute.xlu0 0
        %668 = vperm.xlu0 %667, %v622
        %v669 = vpop.permute.xlu0 %668
        %672 = vset.pattern.permute.xlu0 0
        %673 = vperm.xlu0 %672, %v623
        %v674 = vpop.permute.xlu0 %673
        %677 = vset.pattern.permute.xlu0 0
        %678 = vperm.xlu0 %677, %v624
        %v679 = vpop.permute.xlu0 %678
        %682 = vset.pattern.permute.xlu0 0
        %683 = vperm.xlu0 %682, %v625
        %v684 = vpop.permute.xlu0 %683
        %687 = vset.pattern.permute.xlu0 0
        %688 = vperm.xlu0 %687, %v626
        %v689 = vpop.permute.xlu0 %688
        %692 = vset.pattern.permute.xlu0 0
        %693 = vperm.xlu0 %692, %v627
        %v694 = vpop.permute.xlu0 %693
        %697 = vset.pattern.permute.xlu0 0
        %698 = vperm.xlu0 %697, %v628
        %v699 = vpop.permute.xlu0 %698
        %702 = vset.pattern.permute.xlu0 0
        %703 = vperm.xlu0 %702, %v629
        %v704 = vpop.permute.xlu0 %703
        %707 = vset.pattern.permute.xlu0 0
        %708 = vperm.xlu0 %707, %v630
        %v709 = vpop.permute.xlu0 %708
        %v711 = vperm.slane %v310, 2
        %v712 = vperm.slane %v310, 6
        %v715 = vperm.slane %v711, 2
        %v716 = vperm.slane %v712, 2
        %v717 = vmul.f32 %v634, %v715
        %v718 = vmul.f32 %v634, %v716
        %v719 = vmul.f32 %v639, %v715
        %v720 = vmul.f32 %v639, %v716
        %v721 = vmul.f32 %v644, %v715
        %v722 = vmul.f32 %v644, %v716
        %v723 = vmul.f32 %v649, %v715
        %v724 = vmul.f32 %v649, %v716
        %v725 = vmul.f32 %v654, %v715
        %v726 = vmul.f32 %v654, %v716
        %v727 = vmul.f32 %v659, %v715
        %v728 = vmul.f32 %v659, %v716
        %v729 = vmul.f32 %v664, %v715
        %v730 = vmul.f32 %v664, %v716
        %v731 = vmul.f32 %v669, %v715
        %v732 = vmul.f32 %v669, %v716
        %v733 = vmul.f32 %v674, %v715
        %v734 = vmul.f32 %v674, %v716
        %v735 = vmul.f32 %v679, %v715
        %v736 = vmul.f32 %v679, %v716
        %v737 = vmul.f32 %v684, %v715
        %v738 = vmul.f32 %v684, %v716
        %v739 = vmul.f32 %v689, %v715
        %v740 = vmul.f32 %v689, %v716
        %v741 = vmul.f32 %v694, %v715
        %v742 = vmul.f32 %v694, %v716
        %v743 = vmul.f32 %v699, %v715
        %v744 = vmul.f32 %v699, %v716
        %v745 = vmul.f32 %v704, %v715
        %v746 = vmul.f32 %v704, %v716
        %v747 = vmul.f32 %v709, %v715
        %v748 = vmul.f32 %v709, %v716
        %v749 = vadd.f32 %v582, %v717
        %v750 = vadd.f32 %v583, %v718
        %v751 = vadd.f32 %v584, %v719
        %v752 = vadd.f32 %v585, %v720
        %v753 = vadd.f32 %v586, %v721
        %v754 = vadd.f32 %v587, %v722
        %v755 = vadd.f32 %v588, %v723
        %v756 = vadd.f32 %v589, %v724
        %v757 = vadd.f32 %v590, %v725
        %v758 = vadd.f32 %v591, %v726
        %v759 = vadd.f32 %v592, %v727
        %v760 = vadd.f32 %v593, %v728
        %v761 = vadd.f32 %v594, %v729
        %v762 = vadd.f32 %v595, %v730
        %v763 = vadd.f32 %v596, %v731
        %v764 = vadd.f32 %v597, %v732
        %v765 = vadd.f32 %v598, %v733
        %v766 = vadd.f32 %v599, %v734
        %v767 = vadd.f32 %v600, %v735
        %v768 = vadd.f32 %v601, %v736
        %v769 = vadd.f32 %v602, %v737
        %v770 = vadd.f32 %v603, %v738
        %v771 = vadd.f32 %v604, %v739
        %v772 = vadd.f32 %v605, %v740
        %v773 = vadd.f32 %v606, %v741
        %v774 = vadd.f32 %v607, %v742
        %v775 = vadd.f32 %v608, %v743
        %v776 = vadd.f32 %v609, %v744
        %v777 = vadd.f32 %v610, %v745
        %v778 = vadd.f32 %v611, %v746
        %v779 = vadd.f32 %v612, %v747
        %v780 = vadd.f32 %v613, %v748
        %v781 = vperm.slane %v311, 0
        %v782 = vmul.f32 %v331, %v781
        %v783 = vmul.f32 %v336, %v781
        %v784 = vmul.f32 %v341, %v781
        %v785 = vmul.f32 %v346, %v781
        %v786 = vmul.f32 %v351, %v781
        %v787 = vmul.f32 %v356, %v781
        %v788 = vmul.f32 %v361, %v781
        %v789 = vmul.f32 %v366, %v781
        %v790 = vmul.f32 %v371, %v781
        %v791 = vmul.f32 %v376, %v781
        %v792 = vmul.f32 %v381, %v781
        %v793 = vmul.f32 %v386, %v781
        %v794 = vmul.f32 %v391, %v781
        %v795 = vmul.f32 %v396, %v781
        %v796 = vmul.f32 %v401, %v781
        %v797 = vmul.f32 %v406, %v781
        %v798 = vperm.slane %v311, 1
        %v799 = vmul.f32 %v467, %v798
        %v800 = vmul.f32 %v472, %v798
        %v801 = vmul.f32 %v477, %v798
        %v802 = vmul.f32 %v482, %v798
        %v803 = vmul.f32 %v487, %v798
        %v804 = vmul.f32 %v492, %v798
        %v805 = vmul.f32 %v497, %v798
        %v806 = vmul.f32 %v502, %v798
        %v807 = vmul.f32 %v507, %v798
        %v808 = vmul.f32 %v512, %v798
        %v809 = vmul.f32 %v517, %v798
        %v810 = vmul.f32 %v522, %v798
        %v811 = vmul.f32 %v527, %v798
        %v812 = vmul.f32 %v532, %v798
        %v813 = vmul.f32 %v537, %v798
        %v814 = vmul.f32 %v542, %v798
        %v815 = vadd.f32 %v782, %v799
        %v816 = vadd.f32 %v783, %v800
        %v817 = vadd.f32 %v784, %v801
        %v818 = vadd.f32 %v785, %v802
        %v819 = vadd.f32 %v786, %v803
        %v820 = vadd.f32 %v787, %v804
        %v821 = vadd.f32 %v788, %v805
        %v822 = vadd.f32 %v789, %v806
        %v823 = vadd.f32 %v790, %v807
        %v824 = vadd.f32 %v791, %v808
        %v825 = vadd.f32 %v792, %v809
        %v826 = vadd.f32 %v793, %v810
        %v827 = vadd.f32 %v794, %v811
        %v828 = vadd.f32 %v795, %v812
        %v829 = vadd.f32 %v796, %v813
        %v830 = vadd.f32 %v797, %v814
        %v831 = vperm.slane %v311, 2
        %v832 = vmul.f32 %v634, %v831
        %v833 = vmul.f32 %v639, %v831
        %v834 = vmul.f32 %v644, %v831
        %v835 = vmul.f32 %v649, %v831
        %v836 = vmul.f32 %v654, %v831
        %v837 = vmul.f32 %v659, %v831
        %v838 = vmul.f32 %v664, %v831
        %v839 = vmul.f32 %v669, %v831
        %v840 = vmul.f32 %v674, %v831
        %v841 = vmul.f32 %v679, %v831
        %v842 = vmul.f32 %v684, %v831
        %v843 = vmul.f32 %v689, %v831
        %v844 = vmul.f32 %v694, %v831
        %v845 = vmul.f32 %v699, %v831
        %v846 = vmul.f32 %v704, %v831
        %v847 = vmul.f32 %v709, %v831
        %v848 = vadd.f32 %v815, %v832
        %v849 = vadd.f32 %v816, %v833
        %v850 = vadd.f32 %v817, %v834
        %v851 = vadd.f32 %v818, %v835
        %v852 = vadd.f32 %v819, %v836
        %v853 = vadd.f32 %v820, %v837
        %v854 = vadd.f32 %v821, %v838
        %v855 = vadd.f32 %v822, %v839
        %v856 = vadd.f32 %v823, %v840
        %v857 = vadd.f32 %v824, %v841
        %v858 = vadd.f32 %v825, %v842
        %v859 = vadd.f32 %v826, %v843
        %v860 = vadd.f32 %v827, %v844
        %v861 = vadd.f32 %v828, %v845
        %v862 = vadd.f32 %v829, %v846
        %v863 = vadd.f32 %v830, %v847
        %v864 = vld [vmem:[%s4] sm:$0xff]
        %v865 = vld [vmem:[%s4 + $0x8] sm:$0xff]
        %v866 = vld [vmem:[%s4 + $0x10] sm:$0xff]
        %v867 = vld [vmem:[%s4 + $0x18] sm:$0xff]
        %v868 = vld [vmem:[%s4 + $0x20] sm:$0xff]
        %v869 = vld [vmem:[%s4 + $0x28] sm:$0xff]
        %v870 = vld [vmem:[%s4 + $0x30] sm:$0xff]
        %v871 = vld [vmem:[%s4 + $0x38] sm:$0xff]
        %v872 = vld [vmem:[%s4 + $0x40] sm:$0xff]
        %v873 = vld [vmem:[%s4 + $0x48] sm:$0xff]
        %v874 = vld [vmem:[%s4 + $0x50] sm:$0xff]
        %v875 = vld [vmem:[%s4 + $0x58] sm:$0xff]
        %v876 = vld [vmem:[%s4 + $0x60] sm:$0xff]
        %v877 = vld [vmem:[%s4 + $0x68] sm:$0xff]
        %v878 = vld [vmem:[%s4 + $0x70] sm:$0xff]
        %v879 = vld [vmem:[%s4 + $0x78] sm:$0xff]
        %v880 = vld [vmem:[%s4 + $0x80] sm:$0xff]
        %v881 = vld [vmem:[%s4 + $0x88] sm:$0xff]
        %v882 = vld [vmem:[%s4 + $0x90] sm:$0xff]
        %v883 = vld [vmem:[%s4 + $0x98] sm:$0xff]
        %v884 = vld [vmem:[%s4 + $0xa0] sm:$0xff]
        %v885 = vld [vmem:[%s4 + $0xa8] sm:$0xff]
        %v886 = vld [vmem:[%s4 + $0xb0] sm:$0xff]
        %v887 = vld [vmem:[%s4 + $0xb8] sm:$0xff]
        %v888 = vld [vmem:[%s4 + $0xc0] sm:$0xff]
        %v889 = vld [vmem:[%s4 + $0xc8] sm:$0xff]
        %v890 = vld [vmem:[%s4 + $0xd0] sm:$0xff]
        %v891 = vld [vmem:[%s4 + $0xd8] sm:$0xff]
        %v892 = vld [vmem:[%s4 + $0xe0] sm:$0xff]
        %v893 = vld [vmem:[%s4 + $0xe8] sm:$0xff]
        %v894 = vld [vmem:[%s4 + $0xf0] sm:$0xff]
        %v895 = vld [vmem:[%s4 + $0xf8] sm:$0xff]
        %v896 = vld [vmem:[%s4 + $0x100] sm:$0xff]
        %v897 = vld [vmem:[%s4 + $0x108] sm:$0xff]
        %v898 = vld [vmem:[%s4 + $0x110] sm:$0xff]
        %v899 = vld [vmem:[%s4 + $0x118] sm:$0xff]
        %v900 = vld [vmem:[%s4 + $0x120] sm:$0xff]
        %v901 = vld [vmem:[%s4 + $0x128] sm:$0xff]
        %v902 = vld [vmem:[%s4 + $0x130] sm:$0xff]
        %v903 = vld [vmem:[%s4 + $0x138] sm:$0xff]
        %v904 = vld [vmem:[%s4 + $0x140] sm:$0xff]
        %v905 = vld [vmem:[%s4 + $0x148] sm:$0xff]
        %v906 = vld [vmem:[%s4 + $0x150] sm:$0xff]
        %v907 = vld [vmem:[%s4 + $0x158] sm:$0xff]
        %v908 = vld [vmem:[%s4 + $0x160] sm:$0xff]
        %v909 = vld [vmem:[%s4 + $0x168] sm:$0xff]
        %v910 = vld [vmem:[%s4 + $0x170] sm:$0xff]
        %v911 = vld [vmem:[%s4 + $0x178] sm:$0xff]
        %912 = vmatpush.msra.mxu0 %v863
        %913 = vmatpush.msra.mxu0 %v862
        %914 = vmatpush.msra.mxu0 %v861
        %915 = vmatpush.msra.mxu0 %v860
        %916 = vmatpush.msra.mxu0 %v859
        %917 = vmatpush.msra.mxu0 %v858
        %918 = vmatpush.msra.mxu0 %v857
        %919 = vmatpush.msra.mxu0 %v856
        %920 = vmatpush.msra.mxu0 %v855
        %921 = vmatpush.msra.mxu0 %v854
        %922 = vmatpush.msra.mxu0 %v853
        %923 = vmatpush.msra.mxu0 %v852
        %924 = vmatpush.msra.mxu0 %v851
        %925 = vmatpush.msra.mxu0 %v850
        %926 = vmatpush.msra.mxu0 %v849
        %927 = vmatpush.msra.mxu0 %v848
        %928 = vmatmul.f32.gmra.mxu0 %v864
        %v929 = vpop.f32.mrf.mxu0
        %v930 = vadd.f32 0.0, %v929
        %931 = vmatmul.f32.gmra.mxu0 %v865
        %v932 = vpop.f32.mrf.mxu0
        %v933 = vadd.f32 0.0, %v932
        %934 = vmatmul.f32.gmra.mxu0 %v866
        %v935 = vpop.f32.mrf.mxu0
        %v936 = vadd.f32 0.0, %v935
        %937 = vmatmul.f32.gmra.mxu0 %v867
        %v938 = vpop.f32.mrf.mxu0
        %v939 = vadd.f32 0.0, %v938
        %940 = vmatmul.f32.gmra.mxu0 %v868
        %v941 = vpop.f32.mrf.mxu0
        %v942 = vadd.f32 0.0, %v941
        %943 = vmatmul.f32.gmra.mxu0 %v869
        %v944 = vpop.f32.mrf.mxu0
        %v945 = vadd.f32 0.0, %v944
        %946 = vmatmul.f32.gmra.mxu0 %v870
        %v947 = vpop.f32.mrf.mxu0
        %v948 = vadd.f32 0.0, %v947
        %949 = vmatmul.f32.gmra.mxu0 %v871
        %v950 = vpop.f32.mrf.mxu0
        %v951 = vadd.f32 0.0, %v950
        %952 = vmatmul.f32.gmra.mxu0 %v872
        %v953 = vpop.f32.mrf.mxu0
        %v954 = vadd.f32 0.0, %v953
        %955 = vmatmul.f32.gmra.mxu0 %v873
        %v956 = vpop.f32.mrf.mxu0
        %v957 = vadd.f32 0.0, %v956
        %958 = vmatmul.f32.gmra.mxu0 %v874
        %v959 = vpop.f32.mrf.mxu0
        %v960 = vadd.f32 0.0, %v959
        %961 = vmatmul.f32.gmra.mxu0 %v875
        %v962 = vpop.f32.mrf.mxu0
        %v963 = vadd.f32 0.0, %v962
        %964 = vmatmul.f32.gmra.mxu0 %v876
        %v965 = vpop.f32.mrf.mxu0
        %v966 = vadd.f32 0.0, %v965
        %967 = vmatmul.f32.gmra.mxu0 %v877
        %v968 = vpop.f32.mrf.mxu0
        %v969 = vadd.f32 0.0, %v968
        %970 = vmatmul.f32.gmra.mxu0 %v878
        %v971 = vpop.f32.mrf.mxu0
        %v972 = vadd.f32 0.0, %v971
        %973 = vmatmul.f32.gmra.mxu0 %v879
        %v974 = vpop.f32.mrf.mxu0
        %v975 = vadd.f32 0.0, %v974
        %976 = vdwg.mxu0
        %977 = vmatpush.msra.mxu0 %v779
        %978 = vmatpush.msra.mxu0 %v777
        %979 = vmatpush.msra.mxu0 %v775
        %980 = vmatpush.msra.mxu0 %v773
        %981 = vmatpush.msra.mxu0 %v771
        %982 = vmatpush.msra.mxu0 %v769
        %983 = vmatpush.msra.mxu0 %v767
        %984 = vmatpush.msra.mxu0 %v765
        %985 = vmatpush.msra.mxu0 %v763
        %986 = vmatpush.msra.mxu0 %v761
        %987 = vmatpush.msra.mxu0 %v759
        %988 = vmatpush.msra.mxu0 %v757
        %989 = vmatpush.msra.mxu0 %v755
        %990 = vmatpush.msra.mxu0 %v753
        %991 = vmatpush.msra.mxu0 %v751
        %992 = vmatpush.msra.mxu0 %v749
        %993 = vmatmul.f32.gmra.mxu0 %v880
        %v994 = vpop.f32.mrf.mxu0
        %v995 = vadd.f32 0.0, %v994
        %996 = vmatmul.f32.gmra.mxu0 %v881
        %v997 = vpop.f32.mrf.mxu0
        %v998 = vadd.f32 0.0, %v997
        %999 = vmatmul.f32.gmra.mxu0 %v882
        %v1000 = vpop.f32.mrf.mxu0
        %v1001 = vadd.f32 0.0, %v1000
        %1002 = vmatmul.f32.gmra.mxu0 %v883
        %v1003 = vpop.f32.mrf.mxu0
        %v1004 = vadd.f32 0.0, %v1003
        %1005 = vmatmul.f32.gmra.mxu0 %v884
        %v1006 = vpop.f32.mrf.mxu0
        %v1007 = vadd.f32 0.0, %v1006
        %1008 = vmatmul.f32.gmra.mxu0 %v885
        %v1009 = vpop.f32.mrf.mxu0
        %v1010 = vadd.f32 0.0, %v1009
        %1011 = vmatmul.f32.gmra.mxu0 %v886
        %v1012 = vpop.f32.mrf.mxu0
        %v1013 = vadd.f32 0.0, %v1012
        %1014 = vmatmul.f32.gmra.mxu0 %v887
        %v1015 = vpop.f32.mrf.mxu0
        %v1016 = vadd.f32 0.0, %v1015
        %1017 = vmatmul.f32.gmra.mxu0 %v888
        %v1018 = vpop.f32.mrf.mxu0
        %v1019 = vadd.f32 0.0, %v1018
        %1020 = vmatmul.f32.gmra.mxu0 %v889
        %v1021 = vpop.f32.mrf.mxu0
        %v1022 = vadd.f32 0.0, %v1021
        %1023 = vmatmul.f32.gmra.mxu0 %v890
        %v1024 = vpop.f32.mrf.mxu0
        %v1025 = vadd.f32 0.0, %v1024
        %1026 = vmatmul.f32.gmra.mxu0 %v891
        %v1027 = vpop.f32.mrf.mxu0
        %v1028 = vadd.f32 0.0, %v1027
        %1029 = vmatmul.f32.gmra.mxu0 %v892
        %v1030 = vpop.f32.mrf.mxu0
        %v1031 = vadd.f32 0.0, %v1030
        %1032 = vmatmul.f32.gmra.mxu0 %v893
        %v1033 = vpop.f32.mrf.mxu0
        %v1034 = vadd.f32 0.0, %v1033
        %1035 = vmatmul.f32.gmra.mxu0 %v894
        %v1036 = vpop.f32.mrf.mxu0
        %v1037 = vadd.f32 0.0, %v1036
        %1038 = vmatmul.f32.gmra.mxu0 %v895
        %v1039 = vpop.f32.mrf.mxu0
        %v1040 = vadd.f32 0.0, %v1039
        %1041 = vmatmul.f32.gmra.mxu0 %v896
        %v1042 = vpop.f32.mrf.mxu0
        %v1043 = vadd.f32 0.0, %v1042
        %1044 = vmatmul.f32.gmra.mxu0 %v897
        %v1045 = vpop.f32.mrf.mxu0
        %v1046 = vadd.f32 0.0, %v1045
        %1047 = vmatmul.f32.gmra.mxu0 %v898
        %v1048 = vpop.f32.mrf.mxu0
        %v1049 = vadd.f32 0.0, %v1048
        %1050 = vmatmul.f32.gmra.mxu0 %v899
        %v1051 = vpop.f32.mrf.mxu0
        %v1052 = vadd.f32 0.0, %v1051
        %1053 = vmatmul.f32.gmra.mxu0 %v900
        %v1054 = vpop.f32.mrf.mxu0
        %v1055 = vadd.f32 0.0, %v1054
        %1056 = vmatmul.f32.gmra.mxu0 %v901
        %v1057 = vpop.f32.mrf.mxu0
        %v1058 = vadd.f32 0.0, %v1057
        %1059 = vmatmul.f32.gmra.mxu0 %v902
        %v1060 = vpop.f32.mrf.mxu0
        %v1061 = vadd.f32 0.0, %v1060
        %1062 = vmatmul.f32.gmra.mxu0 %v903
        %v1063 = vpop.f32.mrf.mxu0
        %v1064 = vadd.f32 0.0, %v1063
        %1065 = vmatmul.f32.gmra.mxu0 %v904
        %v1066 = vpop.f32.mrf.mxu0
        %v1067 = vadd.f32 0.0, %v1066
        %1068 = vmatmul.f32.gmra.mxu0 %v905
        %v1069 = vpop.f32.mrf.mxu0
        %v1070 = vadd.f32 0.0, %v1069
        %1071 = vmatmul.f32.gmra.mxu0 %v906
        %v1072 = vpop.f32.mrf.mxu0
        %v1073 = vadd.f32 0.0, %v1072
        %1074 = vmatmul.f32.gmra.mxu0 %v907
        %v1075 = vpop.f32.mrf.mxu0
        %v1076 = vadd.f32 0.0, %v1075
        %1077 = vmatmul.f32.gmra.mxu0 %v908
        %v1078 = vpop.f32.mrf.mxu0
        %v1079 = vadd.f32 0.0, %v1078
        %1080 = vmatmul.f32.gmra.mxu0 %v909
        %v1081 = vpop.f32.mrf.mxu0
        %v1082 = vadd.f32 0.0, %v1081
        %1083 = vmatmul.f32.gmra.mxu0 %v910
        %v1084 = vpop.f32.mrf.mxu0
        %v1085 = vadd.f32 0.0, %v1084
        %1086 = vmatmul.f32.gmra.mxu0 %v911
        %v1087 = vpop.f32.mrf.mxu0
        %v1088 = vadd.f32 0.0, %v1087
        %1089 = vdwg.mxu0
        %1090 = vmatpush.msra.mxu0 %v780
        %1091 = vmatpush.msra.mxu0 %v778
        %1092 = vmatpush.msra.mxu0 %v776
        %1093 = vmatpush.msra.mxu0 %v774
        %1094 = vmatpush.msra.mxu0 %v772
        %1095 = vmatpush.msra.mxu0 %v770
        %1096 = vmatpush.msra.mxu0 %v768
        %1097 = vmatpush.msra.mxu0 %v766
        %1098 = vmatpush.msra.mxu0 %v764
        %1099 = vmatpush.msra.mxu0 %v762
        %1100 = vmatpush.msra.mxu0 %v760
        %1101 = vmatpush.msra.mxu0 %v758
        %1102 = vmatpush.msra.mxu0 %v756
        %1103 = vmatpush.msra.mxu0 %v754
        %1104 = vmatpush.msra.mxu0 %v752
        %1105 = vmatpush.msra.mxu0 %v750
        %1106 = vmatmul.f32.gmra.mxu0 %v880
        %v1107 = vpop.f32.mrf.mxu0
        %v1108 = vadd.f32 0.0, %v1107
        %1109 = vmatmul.f32.gmra.mxu0 %v881
        %v1110 = vpop.f32.mrf.mxu0
        %v1111 = vadd.f32 0.0, %v1110
        %1112 = vmatmul.f32.gmra.mxu0 %v882
        %v1113 = vpop.f32.mrf.mxu0
        %v1114 = vadd.f32 0.0, %v1113
        %1115 = vmatmul.f32.gmra.mxu0 %v883
        %v1116 = vpop.f32.mrf.mxu0
        %v1117 = vadd.f32 0.0, %v1116
        %1118 = vmatmul.f32.gmra.mxu0 %v884
        %v1119 = vpop.f32.mrf.mxu0
        %v1120 = vadd.f32 0.0, %v1119
        %1121 = vmatmul.f32.gmra.mxu0 %v885
        %v1122 = vpop.f32.mrf.mxu0
        %v1123 = vadd.f32 0.0, %v1122
        %1124 = vmatmul.f32.gmra.mxu0 %v886
        %v1125 = vpop.f32.mrf.mxu0
        %v1126 = vadd.f32 0.0, %v1125
        %1127 = vmatmul.f32.gmra.mxu0 %v887
        %v1128 = vpop.f32.mrf.mxu0
        %v1129 = vadd.f32 0.0, %v1128
        %1130 = vmatmul.f32.gmra.mxu0 %v888
        %v1131 = vpop.f32.mrf.mxu0
        %v1132 = vadd.f32 0.0, %v1131
        %1133 = vmatmul.f32.gmra.mxu0 %v889
        %v1134 = vpop.f32.mrf.mxu0
        %v1135 = vadd.f32 0.0, %v1134
        %1136 = vmatmul.f32.gmra.mxu0 %v890
        %v1137 = vpop.f32.mrf.mxu0
        %v1138 = vadd.f32 0.0, %v1137
        %1139 = vmatmul.f32.gmra.mxu0 %v891
        %v1140 = vpop.f32.mrf.mxu0
        %v1141 = vadd.f32 0.0, %v1140
        %1142 = vmatmul.f32.gmra.mxu0 %v892
        %v1143 = vpop.f32.mrf.mxu0
        %v1144 = vadd.f32 0.0, %v1143
        %1145 = vmatmul.f32.gmra.mxu0 %v893
        %v1146 = vpop.f32.mrf.mxu0
        %v1147 = vadd.f32 0.0, %v1146
        %1148 = vmatmul.f32.gmra.mxu0 %v894
        %v1149 = vpop.f32.mrf.mxu0
        %v1150 = vadd.f32 0.0, %v1149
        %1151 = vmatmul.f32.gmra.mxu0 %v895
        %v1152 = vpop.f32.mrf.mxu0
        %v1153 = vadd.f32 0.0, %v1152
        %1154 = vmatmul.f32.gmra.mxu0 %v896
        %v1155 = vpop.f32.mrf.mxu0
        %v1156 = vadd.f32 0.0, %v1155
        %1157 = vmatmul.f32.gmra.mxu0 %v897
        %v1158 = vpop.f32.mrf.mxu0
        %v1159 = vadd.f32 0.0, %v1158
        %1160 = vmatmul.f32.gmra.mxu0 %v898
        %v1161 = vpop.f32.mrf.mxu0
        %v1162 = vadd.f32 0.0, %v1161
        %1163 = vmatmul.f32.gmra.mxu0 %v899
        %v1164 = vpop.f32.mrf.mxu0
        %v1165 = vadd.f32 0.0, %v1164
        %1166 = vmatmul.f32.gmra.mxu0 %v900
        %v1167 = vpop.f32.mrf.mxu0
        %v1168 = vadd.f32 0.0, %v1167
        %1169 = vmatmul.f32.gmra.mxu0 %v901
        %v1170 = vpop.f32.mrf.mxu0
        %v1171 = vadd.f32 0.0, %v1170
        %1172 = vmatmul.f32.gmra.mxu0 %v902
        %v1173 = vpop.f32.mrf.mxu0
        %v1174 = vadd.f32 0.0, %v1173
        %1175 = vmatmul.f32.gmra.mxu0 %v903
        %v1176 = vpop.f32.mrf.mxu0
        %v1177 = vadd.f32 0.0, %v1176
        %1178 = vmatmul.f32.gmra.mxu0 %v904
        %v1179 = vpop.f32.mrf.mxu0
        %v1180 = vadd.f32 0.0, %v1179
        %1181 = vmatmul.f32.gmra.mxu0 %v905
        %v1182 = vpop.f32.mrf.mxu0
        %v1183 = vadd.f32 0.0, %v1182
        %1184 = vmatmul.f32.gmra.mxu0 %v906
        %v1185 = vpop.f32.mrf.mxu0
        %v1186 = vadd.f32 0.0, %v1185
        %1187 = vmatmul.f32.gmra.mxu0 %v907
        %v1188 = vpop.f32.mrf.mxu0
        %v1189 = vadd.f32 0.0, %v1188
        %1190 = vmatmul.f32.gmra.mxu0 %v908
        %v1191 = vpop.f32.mrf.mxu0
        %v1192 = vadd.f32 0.0, %v1191
        %1193 = vmatmul.f32.gmra.mxu0 %v909
        %v1194 = vpop.f32.mrf.mxu0
        %v1195 = vadd.f32 0.0, %v1194
        %1196 = vmatmul.f32.gmra.mxu0 %v910
        %v1197 = vpop.f32.mrf.mxu0
        %v1198 = vadd.f32 0.0, %v1197
        %1199 = vmatmul.f32.gmra.mxu0 %v911
        %v1200 = vpop.f32.mrf.mxu0
        %v1201 = vadd.f32 0.0, %v1200
        %1202 = vdwg.mxu0
        %v1203 = vld [vmem:[%s5] sm:$0xff]
        %v1204 = vld [vmem:[%s5 + $0x8] sm:$0xff]
        %v1205 = vld [vmem:[%s5 + $0x10] sm:$0xff]
        %v1206 = vld [vmem:[%s5 + $0x18] sm:$0xff]
        %v1207 = vld [vmem:[%s5 + $0x20] sm:$0xff]
        %v1208 = vld [vmem:[%s5 + $0x28] sm:$0xff]
        %v1209 = vld [vmem:[%s5 + $0x30] sm:$0xff]
        %v1210 = vld [vmem:[%s5 + $0x38] sm:$0xff]
        %v1211 = vld [vmem:[%s5 + $0x40] sm:$0xff]
        %v1212 = vld [vmem:[%s5 + $0x48] sm:$0xff]
        %v1213 = vld [vmem:[%s5 + $0x50] sm:$0xff]
        %v1214 = vld [vmem:[%s5 + $0x58] sm:$0xff]
        %v1215 = vld [vmem:[%s5 + $0x60] sm:$0xff]
        %v1216 = vld [vmem:[%s5 + $0x68] sm:$0xff]
        %v1217 = vld [vmem:[%s5 + $0x70] sm:$0xff]
        %v1218 = vld [vmem:[%s5 + $0x78] sm:$0xff]
        %v1219 = vld [vmem:[%s5 + $0x80] sm:$0xff]
        %v1220 = vld [vmem:[%s5 + $0x88] sm:$0xff]
        %v1221 = vld [vmem:[%s5 + $0x90] sm:$0xff]
        %v1222 = vld [vmem:[%s5 + $0x98] sm:$0xff]
        %v1223 = vld [vmem:[%s6] sm:$0xff]
        %v1224 = vld [vmem:[%s6 + $0x8] sm:$0xff]
        %v1225 = vld [vmem:[%s6 + $0x10] sm:$0xff]
        %v1226 = vld [vmem:[%s6 + $0x18] sm:$0xff]
        %v1227 = vld [vmem:[%s6 + $0x20] sm:$0xff]
        %v1228 = vld [vmem:[%s6 + $0x28] sm:$0xff]
        %v1229 = vld [vmem:[%s6 + $0x30] sm:$0xff]
        %v1230 = vld [vmem:[%s6 + $0x38] sm:$0xff]
        %v1231 = vld [vmem:[%s6 + $0x40] sm:$0xff]
        %v1232 = vld [vmem:[%s6 + $0x48] sm:$0xff]
        %v1233 = vld [vmem:[%s6 + $0x50] sm:$0xff]
        %v1234 = vld [vmem:[%s6 + $0x58] sm:$0xff]
        %v1235 = vld [vmem:[%s6 + $0x60] sm:$0xff]
        %v1236 = vld [vmem:[%s6 + $0x68] sm:$0xff]
        %v1237 = vld [vmem:[%s6 + $0x70] sm:$0xff]
        %v1238 = vld [vmem:[%s6 + $0x78] sm:$0xff]
        %v1239 = vld [vmem:[%s6 + $0x80] sm:$0xff]
        %v1240 = vld [vmem:[%s6 + $0x88] sm:$0xff]
        %v1241 = vld [vmem:[%s6 + $0x90] sm:$0xff]
        %v1242 = vld [vmem:[%s6 + $0x98] sm:$0xff]
        %1244 = vset.pattern.permute.xlu0 0
        %1245 = vperm.xlu0 %1244, %v1223
        %v1246 = vpop.permute.xlu0 %1245
        %1249 = vset.pattern.permute.xlu0 0
        %1250 = vperm.xlu0 %1249, %v1224
        %v1251 = vpop.permute.xlu0 %1250
        %1254 = vset.pattern.permute.xlu0 0
        %1255 = vperm.xlu0 %1254, %v1225
        %v1256 = vpop.permute.xlu0 %1255
        %1259 = vset.pattern.permute.xlu0 0
        %1260 = vperm.xlu0 %1259, %v1226
        %v1261 = vpop.permute.xlu0 %1260
        %1264 = vset.pattern.permute.xlu0 0
        %1265 = vperm.xlu0 %1264, %v1227
        %v1266 = vpop.permute.xlu0 %1265
        %1269 = vset.pattern.permute.xlu0 0
        %1270 = vperm.xlu0 %1269, %v1228
        %v1271 = vpop.permute.xlu0 %1270
        %1274 = vset.pattern.permute.xlu0 0
        %1275 = vperm.xlu0 %1274, %v1229
        %v1276 = vpop.permute.xlu0 %1275
        %1279 = vset.pattern.permute.xlu0 0
        %1280 = vperm.xlu0 %1279, %v1230
        %v1281 = vpop.permute.xlu0 %1280
        %1284 = vset.pattern.permute.xlu0 0
        %1285 = vperm.xlu0 %1284, %v1231
        %v1286 = vpop.permute.xlu0 %1285
        %1289 = vset.pattern.permute.xlu0 0
        %1290 = vperm.xlu0 %1289, %v1232
        %v1291 = vpop.permute.xlu0 %1290
        %1294 = vset.pattern.permute.xlu0 0
        %1295 = vperm.xlu0 %1294, %v1233
        %v1296 = vpop.permute.xlu0 %1295
        %1299 = vset.pattern.permute.xlu0 0
        %1300 = vperm.xlu0 %1299, %v1234
        %v1301 = vpop.permute.xlu0 %1300
        %1304 = vset.pattern.permute.xlu0 0
        %1305 = vperm.xlu0 %1304, %v1235
        %v1306 = vpop.permute.xlu0 %1305
        %1309 = vset.pattern.permute.xlu0 0
        %1310 = vperm.xlu0 %1309, %v1236
        %v1311 = vpop.permute.xlu0 %1310
        %1314 = vset.pattern.permute.xlu0 0
        %1315 = vperm.xlu0 %1314, %v1237
        %v1316 = vpop.permute.xlu0 %1315
        %1319 = vset.pattern.permute.xlu0 0
        %1320 = vperm.xlu0 %1319, %v1238
        %v1321 = vpop.permute.xlu0 %1320
        %1324 = vset.pattern.permute.xlu0 0
        %1325 = vperm.xlu0 %1324, %v1239
        %v1326 = vpop.permute.xlu0 %1325
        %1329 = vset.pattern.permute.xlu0 0
        %1330 = vperm.xlu0 %1329, %v1240
        %v1331 = vpop.permute.xlu0 %1330
        %1334 = vset.pattern.permute.xlu0 0
        %1335 = vperm.xlu0 %1334, %v1241
        %v1336 = vpop.permute.xlu0 %1335
        %1339 = vset.pattern.permute.xlu0 0
        %1340 = vperm.xlu0 %1339, %v1242
        %v1341 = vpop.permute.xlu0 %1340
        %1343 = vmatpush.msra.mxu0 %v975
        %1344 = vmatpush.msra.mxu0 %v972
        %1345 = vmatpush.msra.mxu0 %v969
        %1346 = vmatpush.msra.mxu0 %v966
        %1347 = vmatpush.msra.mxu0 %v963
        %1348 = vmatpush.msra.mxu0 %v960
        %1349 = vmatpush.msra.mxu0 %v957
        %1350 = vmatpush.msra.mxu0 %v954
        %1351 = vmatpush.msra.mxu0 %v951
        %1352 = vmatpush.msra.mxu0 %v948
        %1353 = vmatpush.msra.mxu0 %v945
        %1354 = vmatpush.msra.mxu0 %v942
        %1355 = vmatpush.msra.mxu0 %v939
        %1356 = vmatpush.msra.mxu0 %v936
        %1357 = vmatpush.msra.mxu0 %v933
        %1358 = vmatpush.msra.mxu0 %v930
        %1359 = vmatmul.f32.gmra.mxu0 %v1203
        %v1360 = vpop.f32.mrf.mxu0
        %v1361 = vadd.f32 %v1246, %v1360
        %1362 = vmatmul.f32.gmra.mxu0 %v1204
        %v1363 = vpop.f32.mrf.mxu0
        %v1364 = vadd.f32 %v1251, %v1363
        %1365 = vmatmul.f32.gmra.mxu0 %v1205
        %v1366 = vpop.f32.mrf.mxu0
        %v1367 = vadd.f32 %v1256, %v1366
        %1368 = vmatmul.f32.gmra.mxu0 %v1206
        %v1369 = vpop.f32.mrf.mxu0
        %v1370 = vadd.f32 %v1261, %v1369
        %1371 = vmatmul.f32.gmra.mxu0 %v1207
        %v1372 = vpop.f32.mrf.mxu0
        %v1373 = vadd.f32 %v1266, %v1372
        %1374 = vmatmul.f32.gmra.mxu0 %v1208
        %v1375 = vpop.f32.mrf.mxu0
        %v1376 = vadd.f32 %v1271, %v1375
        %1377 = vmatmul.f32.gmra.mxu0 %v1209
        %v1378 = vpop.f32.mrf.mxu0
        %v1379 = vadd.f32 %v1276, %v1378
        %1380 = vmatmul.f32.gmra.mxu0 %v1210
        %v1381 = vpop.f32.mrf.mxu0
        %v1382 = vadd.f32 %v1281, %v1381
        %1383 = vmatmul.f32.gmra.mxu0 %v1211
        %v1384 = vpop.f32.mrf.mxu0
        %v1385 = vadd.f32 %v1286, %v1384
        %1386 = vmatmul.f32.gmra.mxu0 %v1212
        %v1387 = vpop.f32.mrf.mxu0
        %v1388 = vadd.f32 %v1291, %v1387
        %1389 = vmatmul.f32.gmra.mxu0 %v1213
        %v1390 = vpop.f32.mrf.mxu0
        %v1391 = vadd.f32 %v1296, %v1390
        %1392 = vmatmul.f32.gmra.mxu0 %v1214
        %v1393 = vpop.f32.mrf.mxu0
        %v1394 = vadd.f32 %v1301, %v1393
        %1395 = vmatmul.f32.gmra.mxu0 %v1215
        %v1396 = vpop.f32.mrf.mxu0
        %v1397 = vadd.f32 %v1306, %v1396
        %1398 = vmatmul.f32.gmra.mxu0 %v1216
        %v1399 = vpop.f32.mrf.mxu0
        %v1400 = vadd.f32 %v1311, %v1399
        %1401 = vmatmul.f32.gmra.mxu0 %v1217
        %v1402 = vpop.f32.mrf.mxu0
        %v1403 = vadd.f32 %v1316, %v1402
        %1404 = vmatmul.f32.gmra.mxu0 %v1218
        %v1405 = vpop.f32.mrf.mxu0
        %v1406 = vadd.f32 %v1321, %v1405
        %1407 = vmatmul.f32.gmra.mxu0 %v1219
        %v1408 = vpop.f32.mrf.mxu0
        %v1409 = vadd.f32 %v1326, %v1408
        %1410 = vmatmul.f32.gmra.mxu0 %v1220
        %v1411 = vpop.f32.mrf.mxu0
        %v1412 = vadd.f32 %v1331, %v1411
        %1413 = vmatmul.f32.gmra.mxu0 %v1221
        %v1414 = vpop.f32.mrf.mxu0
        %v1415 = vadd.f32 %v1336, %v1414
        %1416 = vmatmul.f32.gmra.mxu0 %v1222
        %v1417 = vpop.f32.mrf.mxu0
        %v1418 = vadd.f32 %v1341, %v1417
        %1419 = vdwg.mxu0
        %1420 = vxpose.xlu0.b32.start [1/16] %v1361, 128
        %1421 = vxpose.xlu0.b32.cont [2/16] %v1364, 128
        %1422 = vxpose.xlu0.b32.cont [3/16] 0.0, 128
        %1423 = vxpose.xlu0.b32.cont [4/16] 0.0, 128
        %1424 = vxpose.xlu0.b32.cont [5/16] 0.0, 128
        %1425 = vxpose.xlu0.b32.cont [6/16] 0.0, 128
        %1426 = vxpose.xlu0.b32.cont [7/16] 0.0, 128
        %1427 = vxpose.xlu0.b32.cont [8/16] 0.0, 128
        %1428 = vxpose.xlu0.b32.cont [9/16] 0.0, 128
        %1429 = vxpose.xlu0.b32.cont [10/16] 0.0, 128
        %1430 = vxpose.xlu0.b32.cont [11/16] 0.0, 128
        %1431 = vxpose.xlu0.b32.cont [12/16] 0.0, 128
        %1432 = vxpose.xlu0.b32.cont [13/16] 0.0, 128
        %1433 = vxpose.xlu0.b32.cont [14/16] 0.0, 128
        %1434 = vxpose.xlu0.b32.cont [15/16] 0.0, 128
        %1435 = vxpose.xlu0.b32.end [16/16] 0.0, 128
        %v1436 = vpop.trf.xlu0
        %v1437 = vpop.trf.xlu0
        %v1438 = vpop.trf.xlu0
        %v1439 = vpop.trf.xlu0
        %v1440 = vpop.trf.xlu0
        %v1441 = vpop.trf.xlu0
        %v1442 = vpop.trf.xlu0
        %v1443 = vpop.trf.xlu0
        %v1444 = vpop.trf.xlu0
        %v1445 = vpop.trf.xlu0
        %v1446 = vpop.trf.xlu0
        %v1447 = vpop.trf.xlu0
        %v1448 = vpop.trf.xlu0
        %v1449 = vpop.trf.xlu0
        %v1450 = vpop.trf.xlu0
        %v1451 = vpop.trf.xlu0
        %vm1452 = vcmask 130048
        %v1454 = vsel %vm1452, %v1436, 0
        %v1457 = vsel %vm1452, %v1437, 0
        %v1460 = vsel %vm1452, %v1438, 0
        %v1463 = vsel %vm1452, %v1439, 0
        %v1466 = vsel %vm1452, %v1440, 0
        %v1469 = vsel %vm1452, %v1441, 0
        %1471 = vmatpush.msra.mxu0 0.0
        %1472 = vmatpush.msra.mxu0 0.0
        %1473 = vmatpush.msra.mxu0 0.0
        %1474 = vmatpush.msra.mxu0 0.0
        %1475 = vmatpush.msra.mxu0 0.0
        %1476 = vmatpush.msra.mxu0 0.0
        %1477 = vmatpush.msra.mxu0 0.0
        %1478 = vmatpush.msra.mxu0 0.0
        %1479 = vmatpush.msra.mxu0 0.0
        %1480 = vmatpush.msra.mxu0 0.0
        %1481 = vmatpush.msra.mxu0 0.0
        %1482 = vmatpush.msra.mxu0 0.0
        %1483 = vmatpush.msra.mxu0 0.0
        %1484 = vmatpush.msra.mxu0 0.0
        %1485 = vmatpush.msra.mxu0 %v1370
        %1486 = vmatpush.msra.mxu0 %v1367
        %1487 = vmatmul.f32.gmra.mxu0 %v1454
        %v1488 = vpop.f32.mrf.mxu0
        %v1489 = vadd.f32 0.0, %v1488
        %1490 = vmatmul.f32.gmra.mxu0 %v1457
        %v1491 = vpop.f32.mrf.mxu0
        %v1492 = vadd.f32 0.0, %v1491
        %1493 = vmatmul.f32.gmra.mxu0 %v1460
        %v1494 = vpop.f32.mrf.mxu0
        %v1495 = vadd.f32 0.0, %v1494
        %1496 = vmatmul.f32.gmra.mxu0 %v1463
        %v1497 = vpop.f32.mrf.mxu0
        %v1498 = vadd.f32 0.0, %v1497
        %1499 = vmatmul.f32.gmra.mxu0 %v1466
        %v1500 = vpop.f32.mrf.mxu0
        %v1501 = vadd.f32 0.0, %v1500
        %1502 = vmatmul.f32.gmra.mxu0 %v1469
        %v1503 = vpop.f32.mrf.mxu0
        %v1504 = vadd.f32 0.0, %v1503
        %1505 = vdwg.mxu0
        %vm1506 = vcmask 392192
        %v1507 = vsel %vm1506, %v1489, -inf
        %1508 = vmax.xlane.f32.xlu0 %v1507
        %v1509 = vpop.xlane.xlu0 %1508
        %v1510 = vsel %vm1506, %v1492, -inf
        %1511 = vmax.xlane.f32.xlu0 %v1510
        %v1512 = vpop.xlane.xlu0 %1511
        %v1513 = vsel %vm1506, %v1495, -inf
        %1514 = vmax.xlane.f32.xlu0 %v1513
        %v1515 = vpop.xlane.xlu0 %1514
        %v1516 = vsel %vm1506, %v1498, -inf
        %1517 = vmax.xlane.f32.xlu0 %v1516
        %v1518 = vpop.xlane.xlu0 %1517
        %v1519 = vsel %vm1506, %v1501, -inf
        %1520 = vmax.xlane.f32.xlu0 %v1519
        %v1521 = vpop.xlane.xlu0 %1520
        %v1522 = vsel %vm1506, %v1504, -inf
        %1523 = vmax.xlane.f32.xlu0 %v1522
        %v1524 = vpop.xlane.xlu0 %1523
        %v1525 = vsub.f32 %v1489, %v1509
        %v1526 = vsub.f32 %v1492, %v1512
        %v1527 = vsub.f32 %v1495, %v1515
        %v1528 = vsub.f32 %v1498, %v1518
        %v1529 = vsub.f32 %v1501, %v1521
        %v1530 = vsub.f32 %v1504, %v1524
        %v1531 = vmul.f32 %v1525, 1.442695
        %v1532 = vpow.pop %v1531
        %v1533 = vmul.f32 %v1526, 1.442695
        %v1534 = vpow.pop %v1533
        %v1535 = vmul.f32 %v1527, 1.442695
        %v1536 = vpow.pop %v1535
        %v1537 = vmul.f32 %v1528, 1.442695
        %v1538 = vpow.pop %v1537
        %v1539 = vmul.f32 %v1529, 1.442695
        %v1540 = vpow.pop %v1539
        %v1541 = vmul.f32 %v1530, 1.442695
        %v1542 = vpow.pop %v1541
        %v1543 = vsel %vm1506, %v1532, 0.0
        %1544 = vadd.xlane.f32.xlu0 %v1543
        %v1545 = vpop.xlane.xlu0 %1544
        %v1546 = vsel %vm1506, %v1534, 0.0
        %1547 = vadd.xlane.f32.xlu0 %v1546
        %v1548 = vpop.xlane.xlu0 %1547
        %v1549 = vsel %vm1506, %v1536, 0.0
        %1550 = vadd.xlane.f32.xlu0 %v1549
        %v1551 = vpop.xlane.xlu0 %1550
        %v1552 = vsel %vm1506, %v1538, 0.0
        %1553 = vadd.xlane.f32.xlu0 %v1552
        %v1554 = vpop.xlane.xlu0 %1553
        %v1555 = vsel %vm1506, %v1540, 0.0
        %1556 = vadd.xlane.f32.xlu0 %v1555
        %v1557 = vpop.xlane.xlu0 %1556
        %v1558 = vsel %vm1506, %v1542, 0.0
        %1559 = vadd.xlane.f32.xlu0 %v1558
        %v1560 = vpop.xlane.xlu0 %1559
        %v1561 = vrcp.pop %v1545
        %v1562 = vmul.f32 %v1545, %v1561
        %v1563 = vsub.f32 1.0, %v1562
        %v1564 = vmul.f32 %v1561, %v1563
        %v1565 = vadd.f32 %v1561, %v1564
        %vm1566 = vweird.f32 %v1545
        %vm1567 = vweird.f32 %v1561
        %vm1568 = vmor %vm1566, %vm1567
        %v1569 = vsel %vm1568, %v1561, %v1565
        %v1570 = vand.u32 2147483647, %v1545
        %vm1571 = vcmp.eq.f32.partialorder %v1570, 8.507059e+37
        %v1572 = vand.u32 %v1545, 2147483648
        %v1573 = vor.u32 1.1754944e-38, %v1572
        %v1574 = vsel %vm1571, %v1573, %v1569
        %v1575 = vmul.f32 %v1532, %v1574
        %v1576 = vrcp.pop %v1548
        %v1577 = vmul.f32 %v1548, %v1576
        %v1578 = vsub.f32 1.0, %v1577
        %v1579 = vmul.f32 %v1576, %v1578
        %v1580 = vadd.f32 %v1576, %v1579
        %vm1581 = vweird.f32 %v1548
        %vm1582 = vweird.f32 %v1576
        %vm1583 = vmor %vm1581, %vm1582
        %v1584 = vsel %vm1583, %v1576, %v1580
        %v1585 = vand.u32 2147483647, %v1548
        %vm1586 = vcmp.eq.f32.partialorder %v1585, 8.507059e+37
        %v1587 = vand.u32 %v1548, 2147483648
        %v1588 = vor.u32 1.1754944e-38, %v1587
        %v1589 = vsel %vm1586, %v1588, %v1584
        %v1590 = vmul.f32 %v1534, %v1589
        %v1591 = vrcp.pop %v1551
        %v1592 = vmul.f32 %v1551, %v1591
        %v1593 = vsub.f32 1.0, %v1592
        %v1594 = vmul.f32 %v1591, %v1593
        %v1595 = vadd.f32 %v1591, %v1594
        %vm1596 = vweird.f32 %v1551
        %vm1597 = vweird.f32 %v1591
        %vm1598 = vmor %vm1596, %vm1597
        %v1599 = vsel %vm1598, %v1591, %v1595
        %v1600 = vand.u32 2147483647, %v1551
        %vm1601 = vcmp.eq.f32.partialorder %v1600, 8.507059e+37
        %v1602 = vand.u32 %v1551, 2147483648
        %v1603 = vor.u32 1.1754944e-38, %v1602
        %v1604 = vsel %vm1601, %v1603, %v1599
        %v1605 = vmul.f32 %v1536, %v1604
        %v1606 = vrcp.pop %v1554
        %v1607 = vmul.f32 %v1554, %v1606
        %v1608 = vsub.f32 1.0, %v1607
        %v1609 = vmul.f32 %v1606, %v1608
        %v1610 = vadd.f32 %v1606, %v1609
        %vm1611 = vweird.f32 %v1554
        %vm1612 = vweird.f32 %v1606
        %vm1613 = vmor %vm1611, %vm1612
        %v1614 = vsel %vm1613, %v1606, %v1610
        %v1615 = vand.u32 2147483647, %v1554
        %vm1616 = vcmp.eq.f32.partialorder %v1615, 8.507059e+37
        %v1617 = vand.u32 %v1554, 2147483648
        %v1618 = vor.u32 1.1754944e-38, %v1617
        %v1619 = vsel %vm1616, %v1618, %v1614
        %v1620 = vmul.f32 %v1538, %v1619
        %v1621 = vrcp.pop %v1557
        %v1622 = vmul.f32 %v1557, %v1621
        %v1623 = vsub.f32 1.0, %v1622
        %v1624 = vmul.f32 %v1621, %v1623
        %v1625 = vadd.f32 %v1621, %v1624
        %vm1626 = vweird.f32 %v1557
        %vm1627 = vweird.f32 %v1621
        %vm1628 = vmor %vm1626, %vm1627
        %v1629 = vsel %vm1628, %v1621, %v1625
        %v1630 = vand.u32 2147483647, %v1557
        %vm1631 = vcmp.eq.f32.partialorder %v1630, 8.507059e+37
        %v1632 = vand.u32 %v1557, 2147483648
        %v1633 = vor.u32 1.1754944e-38, %v1632
        %v1634 = vsel %vm1631, %v1633, %v1629
        %v1635 = vmul.f32 %v1540, %v1634
        %v1636 = vrcp.pop %v1560
        %v1637 = vmul.f32 %v1560, %v1636
        %v1638 = vsub.f32 1.0, %v1637
        %v1639 = vmul.f32 %v1636, %v1638
        %v1640 = vadd.f32 %v1636, %v1639
        %vm1641 = vweird.f32 %v1560
        %vm1642 = vweird.f32 %v1636
        %vm1643 = vmor %vm1641, %vm1642
        %v1644 = vsel %vm1643, %v1636, %v1640
        %v1645 = vand.u32 2147483647, %v1560
        %vm1646 = vcmp.eq.f32.partialorder %v1645, 8.507059e+37
        %v1647 = vand.u32 %v1560, 2147483648
        %v1648 = vor.u32 1.1754944e-38, %v1647
        %v1649 = vsel %vm1646, %v1648, %v1644
        %v1650 = vmul.f32 %v1542, %v1649
        %v1652 = vsel %vm1506, %v1373, 0
        %v1655 = vsel %vm1506, %v1376, 0
        %v1658 = vsel %vm1506, %v1379, 0
        %v1661 = vsel %vm1506, %v1382, 0
        %v1664 = vsel %vm1506, %v1385, 0
        %v1667 = vsel %vm1506, %v1388, 0
        %v1670 = vsel %vm1506, %v1391, 0
        %v1673 = vsel %vm1506, %v1394, 0
        %v1676 = vsel %vm1506, %v1397, 0
        %v1679 = vsel %vm1506, %v1400, 0
        %v1682 = vsel %vm1506, %v1403, 0
        %v1685 = vsel %vm1506, %v1406, 0
        %v1688 = vsel %vm1506, %v1409, 0
        %v1691 = vsel %vm1506, %v1412, 0
        %v1694 = vsel %vm1506, %v1415, 0
        %v1697 = vsel %vm1506, %v1418, 0
        %v1700 = vsel %vm1506, %v1575, 0
        %v1703 = vsel %vm1506, %v1590, 0
        %v1706 = vsel %vm1506, %v1605, 0
        %v1709 = vsel %vm1506, %v1620, 0
        %v1712 = vsel %vm1506, %v1635, 0
        %v1715 = vsel %vm1506, %v1650, 0
        %1717 = vmatpush.xpose.msra.mxu0 0.0
        %1718 = vmatpush.xpose.msra.mxu0 0.0
        %1719 = vmatpush.xpose.msra.mxu0 0.0
        %1720 = vmatpush.xpose.msra.mxu0 0.0
        %1721 = vmatpush.xpose.msra.mxu0 0.0
        %1722 = vmatpush.xpose.msra.mxu0 0.0
        %1723 = vmatpush.xpose.msra.mxu0 0.0
        %1724 = vmatpush.xpose.msra.mxu0 0.0
        %1725 = vmatpush.xpose.msra.mxu0 0.0
        %1726 = vmatpush.xpose.msra.mxu0 0.0
        %1727 = vmatpush.xpose.msra.mxu0 %v1715
        %1728 = vmatpush.xpose.msra.mxu0 %v1712
        %1729 = vmatpush.xpose.msra.mxu0 %v1709
        %1730 = vmatpush.xpose.msra.mxu0 %v1706
        %1731 = vmatpush.xpose.msra.mxu0 %v1703
        %1732 = vmatpush.xpose.msra.mxu0 %v1700
        %1733 = vmatmul.f32.gmra.mxu0 %v1652
        %v1734 = vpop.f32.mrf.mxu0
        %v1735 = vadd.f32 0.0, %v1734
        %1736 = vmatmul.f32.gmra.mxu0 %v1655
        %v1737 = vpop.f32.mrf.mxu0
        %v1738 = vadd.f32 0.0, %v1737
        %1739 = vmatmul.f32.gmra.mxu0 %v1658
        %v1740 = vpop.f32.mrf.mxu0
        %v1741 = vadd.f32 0.0, %v1740
        %1742 = vmatmul.f32.gmra.mxu0 %v1661
        %v1743 = vpop.f32.mrf.mxu0
        %v1744 = vadd.f32 0.0, %v1743
        %1745 = vmatmul.f32.gmra.mxu0 %v1664
        %v1746 = vpop.f32.mrf.mxu0
        %v1747 = vadd.f32 0.0, %v1746
        %1748 = vmatmul.f32.gmra.mxu0 %v1667
        %v1749 = vpop.f32.mrf.mxu0
        %v1750 = vadd.f32 0.0, %v1749
        %1751 = vmatmul.f32.gmra.mxu0 %v1670
        %v1752 = vpop.f32.mrf.mxu0
        %v1753 = vadd.f32 0.0, %v1752
        %1754 = vmatmul.f32.gmra.mxu0 %v1673
        %v1755 = vpop.f32.mrf.mxu0
        %v1756 = vadd.f32 0.0, %v1755
        %1757 = vmatmul.f32.gmra.mxu0 %v1676
        %v1758 = vpop.f32.mrf.mxu0
        %v1759 = vadd.f32 0.0, %v1758
        %1760 = vmatmul.f32.gmra.mxu0 %v1679
        %v1761 = vpop.f32.mrf.mxu0
        %v1762 = vadd.f32 0.0, %v1761
        %1763 = vmatmul.f32.gmra.mxu0 %v1682
        %v1764 = vpop.f32.mrf.mxu0
        %v1765 = vadd.f32 0.0, %v1764
        %1766 = vmatmul.f32.gmra.mxu0 %v1685
        %v1767 = vpop.f32.mrf.mxu0
        %v1768 = vadd.f32 0.0, %v1767
        %1769 = vmatmul.f32.gmra.mxu0 %v1688
        %v1770 = vpop.f32.mrf.mxu0
        %v1771 = vadd.f32 0.0, %v1770
        %1772 = vmatmul.f32.gmra.mxu0 %v1691
        %v1773 = vpop.f32.mrf.mxu0
        %v1774 = vadd.f32 0.0, %v1773
        %1775 = vmatmul.f32.gmra.mxu0 %v1694
        %v1776 = vpop.f32.mrf.mxu0
        %v1777 = vadd.f32 0.0, %v1776
        %1778 = vmatmul.f32.gmra.mxu0 %v1697
        %v1779 = vpop.f32.mrf.mxu0
        %v1780 = vadd.f32 0.0, %v1779
        %1781 = vdwg.mxu0
        %v1783 = vsel %vm1506, %v930, 0
        %v1786 = vsel %vm1506, %v933, 0
        %v1789 = vsel %vm1506, %v936, 0
        %v1792 = vsel %vm1506, %v939, 0
        %v1795 = vsel %vm1506, %v942, 0
        %v1798 = vsel %vm1506, %v945, 0
        %v1801 = vsel %vm1506, %v948, 0
        %v1804 = vsel %vm1506, %v951, 0
        %v1807 = vsel %vm1506, %v954, 0
        %v1810 = vsel %vm1506, %v957, 0
        %v1813 = vsel %vm1506, %v960, 0
        %v1816 = vsel %vm1506, %v963, 0
        %v1819 = vsel %vm1506, %v966, 0
        %v1822 = vsel %vm1506, %v969, 0
        %v1825 = vsel %vm1506, %v972, 0
        %v1828 = vsel %vm1506, %v975, 0
        %1830 = vmatpush.xpose.msra.mxu0 %v1828
        %1831 = vmatpush.xpose.msra.mxu0 %v1825
        %1832 = vmatpush.xpose.msra.mxu0 %v1822
        %1833 = vmatpush.xpose.msra.mxu0 %v1819
        %1834 = vmatpush.xpose.msra.mxu0 %v1816
        %1835 = vmatpush.xpose.msra.mxu0 %v1813
        %1836 = vmatpush.xpose.msra.mxu0 %v1810
        %1837 = vmatpush.xpose.msra.mxu0 %v1807
        %1838 = vmatpush.xpose.msra.mxu0 %v1804
        %1839 = vmatpush.xpose.msra.mxu0 %v1801
        %1840 = vmatpush.xpose.msra.mxu0 %v1798
        %1841 = vmatpush.xpose.msra.mxu0 %v1795
        %1842 = vmatpush.xpose.msra.mxu0 %v1792
        %1843 = vmatpush.xpose.msra.mxu0 %v1789
        %1844 = vmatpush.xpose.msra.mxu0 %v1786
        %1845 = vmatpush.xpose.msra.mxu0 %v1783
        %1846 = vmatmul.f32.gmra.mxu0 %v1783
        %v1847 = vpop.f32.mrf.mxu0
        %v1848 = vadd.f32 0.0, %v1847
        %1849 = vmatmul.f32.gmra.mxu0 %v1786
        %v1850 = vpop.f32.mrf.mxu0
        %v1851 = vadd.f32 0.0, %v1850
        %1852 = vmatmul.f32.gmra.mxu0 %v1789
        %v1853 = vpop.f32.mrf.mxu0
        %v1854 = vadd.f32 0.0, %v1853
        %1855 = vmatmul.f32.gmra.mxu0 %v1792
        %v1856 = vpop.f32.mrf.mxu0
        %v1857 = vadd.f32 0.0, %v1856
        %1858 = vmatmul.f32.gmra.mxu0 %v1795
        %v1859 = vpop.f32.mrf.mxu0
        %v1860 = vadd.f32 0.0, %v1859
        %1861 = vmatmul.f32.gmra.mxu0 %v1798
        %v1862 = vpop.f32.mrf.mxu0
        %v1863 = vadd.f32 0.0, %v1862
        %1864 = vmatmul.f32.gmra.mxu0 %v1801
        %v1865 = vpop.f32.mrf.mxu0
        %v1866 = vadd.f32 0.0, %v1865
        %1867 = vmatmul.f32.gmra.mxu0 %v1804
        %v1868 = vpop.f32.mrf.mxu0
        %v1869 = vadd.f32 0.0, %v1868
        %1870 = vmatmul.f32.gmra.mxu0 %v1807
        %v1871 = vpop.f32.mrf.mxu0
        %v1872 = vadd.f32 0.0, %v1871
        %1873 = vmatmul.f32.gmra.mxu0 %v1810
        %v1874 = vpop.f32.mrf.mxu0
        %v1875 = vadd.f32 0.0, %v1874
        %1876 = vmatmul.f32.gmra.mxu0 %v1813
        %v1877 = vpop.f32.mrf.mxu0
        %v1878 = vadd.f32 0.0, %v1877
        %1879 = vmatmul.f32.gmra.mxu0 %v1816
        %v1880 = vpop.f32.mrf.mxu0
        %v1881 = vadd.f32 0.0, %v1880
        %1882 = vmatmul.f32.gmra.mxu0 %v1819
        %v1883 = vpop.f32.mrf.mxu0
        %v1884 = vadd.f32 0.0, %v1883
        %1885 = vmatmul.f32.gmra.mxu0 %v1822
        %v1886 = vpop.f32.mrf.mxu0
        %v1887 = vadd.f32 0.0, %v1886
        %1888 = vmatmul.f32.gmra.mxu0 %v1825
        %v1889 = vpop.f32.mrf.mxu0
        %v1890 = vadd.f32 0.0, %v1889
        %1891 = vmatmul.f32.gmra.mxu0 %v1828
        %v1892 = vpop.f32.mrf.mxu0
        %v1893 = vadd.f32 0.0, %v1892
        %1894 = vdwg.mxu0
        %1895 = vmax.xlane.f32.xlu0 %v1848
        %v1896 = vpop.xlane.xlu0 %1895
        %1897 = vmax.xlane.f32.xlu0 %v1851
        %v1898 = vpop.xlane.xlu0 %1897
        %1899 = vmax.xlane.f32.xlu0 %v1854
        %v1900 = vpop.xlane.xlu0 %1899
        %1901 = vmax.xlane.f32.xlu0 %v1857
        %v1902 = vpop.xlane.xlu0 %1901
        %1903 = vmax.xlane.f32.xlu0 %v1860
        %v1904 = vpop.xlane.xlu0 %1903
        %1905 = vmax.xlane.f32.xlu0 %v1863
        %v1906 = vpop.xlane.xlu0 %1905
        %1907 = vmax.xlane.f32.xlu0 %v1866
        %v1908 = vpop.xlane.xlu0 %1907
        %1909 = vmax.xlane.f32.xlu0 %v1869
        %v1910 = vpop.xlane.xlu0 %1909
        %1911 = vmax.xlane.f32.xlu0 %v1872
        %v1912 = vpop.xlane.xlu0 %1911
        %1913 = vmax.xlane.f32.xlu0 %v1875
        %v1914 = vpop.xlane.xlu0 %1913
        %1915 = vmax.xlane.f32.xlu0 %v1878
        %v1916 = vpop.xlane.xlu0 %1915
        %1917 = vmax.xlane.f32.xlu0 %v1881
        %v1918 = vpop.xlane.xlu0 %1917
        %1919 = vmax.xlane.f32.xlu0 %v1884
        %v1920 = vpop.xlane.xlu0 %1919
        %1921 = vmax.xlane.f32.xlu0 %v1887
        %v1922 = vpop.xlane.xlu0 %1921
        %1923 = vmax.xlane.f32.xlu0 %v1890
        %v1924 = vpop.xlane.xlu0 %1923
        %1925 = vmax.xlane.f32.xlu0 %v1893
        %v1926 = vpop.xlane.xlu0 %1925
        %v1927 = vsub.f32 %v1896, %v1848
        %v1928 = vsub.f32 %v1898, %v1851
        %v1929 = vsub.f32 %v1900, %v1854
        %v1930 = vsub.f32 %v1902, %v1857
        %v1931 = vsub.f32 %v1904, %v1860
        %v1932 = vsub.f32 %v1906, %v1863
        %v1933 = vsub.f32 %v1908, %v1866
        %v1934 = vsub.f32 %v1910, %v1869
        %v1935 = vsub.f32 %v1912, %v1872
        %v1936 = vsub.f32 %v1914, %v1875
        %v1937 = vsub.f32 %v1916, %v1878
        %v1938 = vsub.f32 %v1918, %v1881
        %v1939 = vsub.f32 %v1920, %v1884
        %v1940 = vsub.f32 %v1922, %v1887
        %v1941 = vsub.f32 %v1924, %v1890
        %v1942 = vsub.f32 %v1926, %v1893
        %1943 = vmax.xlane.f32.xlu0 %v1927
        %v1944 = vpop.xlane.xlu0 %1943
        %1945 = vmax.xlane.f32.xlu0 %v1928
        %v1946 = vpop.xlane.xlu0 %1945
        %1947 = vmax.xlane.f32.xlu0 %v1929
        %v1948 = vpop.xlane.xlu0 %1947
        %1949 = vmax.xlane.f32.xlu0 %v1930
        %v1950 = vpop.xlane.xlu0 %1949
        %1951 = vmax.xlane.f32.xlu0 %v1931
        %v1952 = vpop.xlane.xlu0 %1951
        %1953 = vmax.xlane.f32.xlu0 %v1932
        %v1954 = vpop.xlane.xlu0 %1953
        %1955 = vmax.xlane.f32.xlu0 %v1933
        %v1956 = vpop.xlane.xlu0 %1955
        %1957 = vmax.xlane.f32.xlu0 %v1934
        %v1958 = vpop.xlane.xlu0 %1957
        %1959 = vmax.xlane.f32.xlu0 %v1935
        %v1960 = vpop.xlane.xlu0 %1959
        %1961 = vmax.xlane.f32.xlu0 %v1936
        %v1962 = vpop.xlane.xlu0 %1961
        %1963 = vmax.xlane.f32.xlu0 %v1937
        %v1964 = vpop.xlane.xlu0 %1963
        %1965 = vmax.xlane.f32.xlu0 %v1938
        %v1966 = vpop.xlane.xlu0 %1965
        %1967 = vmax.xlane.f32.xlu0 %v1939
        %v1968 = vpop.xlane.xlu0 %1967
        %1969 = vmax.xlane.f32.xlu0 %v1940
        %v1970 = vpop.xlane.xlu0 %1969
        %1971 = vmax.xlane.f32.xlu0 %v1941
        %v1972 = vpop.xlane.xlu0 %1971
        %1973 = vmax.xlane.f32.xlu0 %v1942
        %v1974 = vpop.xlane.xlu0 %1973
        %v1975 = vsub.f32 %v1927, %v1944
        %v1976 = vsub.f32 %v1928, %v1946
        %v1977 = vsub.f32 %v1929, %v1948
        %v1978 = vsub.f32 %v1930, %v1950
        %v1979 = vsub.f32 %v1931, %v1952
        %v1980 = vsub.f32 %v1932, %v1954
        %v1981 = vsub.f32 %v1933, %v1956
        %v1982 = vsub.f32 %v1934, %v1958
        %v1983 = vsub.f32 %v1935, %v1960
        %v1984 = vsub.f32 %v1936, %v1962
        %v1985 = vsub.f32 %v1937, %v1964
        %v1986 = vsub.f32 %v1938, %v1966
        %v1987 = vsub.f32 %v1939, %v1968
        %v1988 = vsub.f32 %v1940, %v1970
        %v1989 = vsub.f32 %v1941, %v1972
        %v1990 = vsub.f32 %v1942, %v1974
        %v1991 = vmul.f32 %v1975, 1.442695
        %v1992 = vpow.pop %v1991
        %v1993 = vmul.f32 %v1976, 1.442695
        %v1994 = vpow.pop %v1993
        %v1995 = vmul.f32 %v1977, 1.442695
        %v1996 = vpow.pop %v1995
        %v1997 = vmul.f32 %v1978, 1.442695
        %v1998 = vpow.pop %v1997
        %v1999 = vmul.f32 %v1979, 1.442695
        %v2000 = vpow.pop %v1999
        %v2001 = vmul.f32 %v1980, 1.442695
        %v2002 = vpow.pop %v2001
        %v2003 = vmul.f32 %v1981, 1.442695
        %v2004 = vpow.pop %v2003
        %v2005 = vmul.f32 %v1982, 1.442695
        %v2006 = vpow.pop %v2005
        %v2007 = vmul.f32 %v1983, 1.442695
        %v2008 = vpow.pop %v2007
        %v2009 = vmul.f32 %v1984, 1.442695
        %v2010 = vpow.pop %v2009
        %v2011 = vmul.f32 %v1985, 1.442695
        %v2012 = vpow.pop %v2011
        %v2013 = vmul.f32 %v1986, 1.442695
        %v2014 = vpow.pop %v2013
        %v2015 = vmul.f32 %v1987, 1.442695
        %v2016 = vpow.pop %v2015
        %v2017 = vmul.f32 %v1988, 1.442695
        %v2018 = vpow.pop %v2017
        %v2019 = vmul.f32 %v1989, 1.442695
        %v2020 = vpow.pop %v2019
        %v2021 = vmul.f32 %v1990, 1.442695
        %v2022 = vpow.pop %v2021
        %2023 = vadd.xlane.f32.xlu0 %v1992
        %v2024 = vpop.xlane.xlu0 %2023
        %2025 = vadd.xlane.f32.xlu0 %v1994
        %v2026 = vpop.xlane.xlu0 %2025
        %2027 = vadd.xlane.f32.xlu0 %v1996
        %v2028 = vpop.xlane.xlu0 %2027
        %2029 = vadd.xlane.f32.xlu0 %v1998
        %v2030 = vpop.xlane.xlu0 %2029
        %2031 = vadd.xlane.f32.xlu0 %v2000
        %v2032 = vpop.xlane.xlu0 %2031
        %2033 = vadd.xlane.f32.xlu0 %v2002
        %v2034 = vpop.xlane.xlu0 %2033
        %2035 = vadd.xlane.f32.xlu0 %v2004
        %v2036 = vpop.xlane.xlu0 %2035
        %2037 = vadd.xlane.f32.xlu0 %v2006
        %v2038 = vpop.xlane.xlu0 %2037
        %2039 = vadd.xlane.f32.xlu0 %v2008
        %v2040 = vpop.xlane.xlu0 %2039
        %2041 = vadd.xlane.f32.xlu0 %v2010
        %v2042 = vpop.xlane.xlu0 %2041
        %2043 = vadd.xlane.f32.xlu0 %v2012
        %v2044 = vpop.xlane.xlu0 %2043
        %2045 = vadd.xlane.f32.xlu0 %v2014
        %v2046 = vpop.xlane.xlu0 %2045
        %2047 = vadd.xlane.f32.xlu0 %v2016
        %v2048 = vpop.xlane.xlu0 %2047
        %2049 = vadd.xlane.f32.xlu0 %v2018
        %v2050 = vpop.xlane.xlu0 %2049
        %2051 = vadd.xlane.f32.xlu0 %v2020
        %v2052 = vpop.xlane.xlu0 %2051
        %2053 = vadd.xlane.f32.xlu0 %v2022
        %v2054 = vpop.xlane.xlu0 %2053
        %v2055 = vrcp.pop %v2024
        %v2056 = vmul.f32 %v2024, %v2055
        %v2057 = vsub.f32 1.0, %v2056
        %v2058 = vmul.f32 %v2055, %v2057
        %v2059 = vadd.f32 %v2055, %v2058
        %vm2060 = vweird.f32 %v2024
        %vm2061 = vweird.f32 %v2055
        %vm2062 = vmor %vm2060, %vm2061
        %v2063 = vsel %vm2062, %v2055, %v2059
        %v2064 = vand.u32 2147483647, %v2024
        %vm2065 = vcmp.eq.f32.partialorder %v2064, 8.507059e+37
        %v2066 = vand.u32 %v2024, 2147483648
        %v2067 = vor.u32 1.1754944e-38, %v2066
        %v2068 = vsel %vm2065, %v2067, %v2063
        %v2069 = vmul.f32 %v1992, %v2068
        %v2070 = vrcp.pop %v2026
        %v2071 = vmul.f32 %v2026, %v2070
        %v2072 = vsub.f32 1.0, %v2071
        %v2073 = vmul.f32 %v2070, %v2072
        %v2074 = vadd.f32 %v2070, %v2073
        %vm2075 = vweird.f32 %v2026
        %vm2076 = vweird.f32 %v2070
        %vm2077 = vmor %vm2075, %vm2076
        %v2078 = vsel %vm2077, %v2070, %v2074
        %v2079 = vand.u32 2147483647, %v2026
        %vm2080 = vcmp.eq.f32.partialorder %v2079, 8.507059e+37
        %v2081 = vand.u32 %v2026, 2147483648
        %v2082 = vor.u32 1.1754944e-38, %v2081
        %v2083 = vsel %vm2080, %v2082, %v2078
        %v2084 = vmul.f32 %v1994, %v2083
        %v2085 = vrcp.pop %v2028
        %v2086 = vmul.f32 %v2028, %v2085
        %v2087 = vsub.f32 1.0, %v2086
        %v2088 = vmul.f32 %v2085, %v2087
        %v2089 = vadd.f32 %v2085, %v2088
        %vm2090 = vweird.f32 %v2028
        %vm2091 = vweird.f32 %v2085
        %vm2092 = vmor %vm2090, %vm2091
        %v2093 = vsel %vm2092, %v2085, %v2089
        %v2094 = vand.u32 2147483647, %v2028
        %vm2095 = vcmp.eq.f32.partialorder %v2094, 8.507059e+37
        %v2096 = vand.u32 %v2028, 2147483648
        %v2097 = vor.u32 1.1754944e-38, %v2096
        %v2098 = vsel %vm2095, %v2097, %v2093
        %v2099 = vmul.f32 %v1996, %v2098
        %v2100 = vrcp.pop %v2030
        %v2101 = vmul.f32 %v2030, %v2100
        %v2102 = vsub.f32 1.0, %v2101
        %v2103 = vmul.f32 %v2100, %v2102
        %v2104 = vadd.f32 %v2100, %v2103
        %vm2105 = vweird.f32 %v2030
        %vm2106 = vweird.f32 %v2100
        %vm2107 = vmor %vm2105, %vm2106
        %v2108 = vsel %vm2107, %v2100, %v2104
        %v2109 = vand.u32 2147483647, %v2030
        %vm2110 = vcmp.eq.f32.partialorder %v2109, 8.507059e+37
        %v2111 = vand.u32 %v2030, 2147483648
        %v2112 = vor.u32 1.1754944e-38, %v2111
        %v2113 = vsel %vm2110, %v2112, %v2108
        %v2114 = vmul.f32 %v1998, %v2113
        %v2115 = vrcp.pop %v2032
        %v2116 = vmul.f32 %v2032, %v2115
        %v2117 = vsub.f32 1.0, %v2116
        %v2118 = vmul.f32 %v2115, %v2117
        %v2119 = vadd.f32 %v2115, %v2118
        %vm2120 = vweird.f32 %v2032
        %vm2121 = vweird.f32 %v2115
        %vm2122 = vmor %vm2120, %vm2121
        %v2123 = vsel %vm2122, %v2115, %v2119
        %v2124 = vand.u32 2147483647, %v2032
        %vm2125 = vcmp.eq.f32.partialorder %v2124, 8.507059e+37
        %v2126 = vand.u32 %v2032, 2147483648
        %v2127 = vor.u32 1.1754944e-38, %v2126
        %v2128 = vsel %vm2125, %v2127, %v2123
        %v2129 = vmul.f32 %v2000, %v2128
        %v2130 = vrcp.pop %v2034
        %v2131 = vmul.f32 %v2034, %v2130
        %v2132 = vsub.f32 1.0, %v2131
        %v2133 = vmul.f32 %v2130, %v2132
        %v2134 = vadd.f32 %v2130, %v2133
        %vm2135 = vweird.f32 %v2034
        %vm2136 = vweird.f32 %v2130
        %vm2137 = vmor %vm2135, %vm2136
        %v2138 = vsel %vm2137, %v2130, %v2134
        %v2139 = vand.u32 2147483647, %v2034
        %vm2140 = vcmp.eq.f32.partialorder %v2139, 8.507059e+37
        %v2141 = vand.u32 %v2034, 2147483648
        %v2142 = vor.u32 1.1754944e-38, %v2141
        %v2143 = vsel %vm2140, %v2142, %v2138
        %v2144 = vmul.f32 %v2002, %v2143
        %v2145 = vrcp.pop %v2036
        %v2146 = vmul.f32 %v2036, %v2145
        %v2147 = vsub.f32 1.0, %v2146
        %v2148 = vmul.f32 %v2145, %v2147
        %v2149 = vadd.f32 %v2145, %v2148
        %vm2150 = vweird.f32 %v2036
        %vm2151 = vweird.f32 %v2145
        %vm2152 = vmor %vm2150, %vm2151
        %v2153 = vsel %vm2152, %v2145, %v2149
        %v2154 = vand.u32 2147483647, %v2036
        %vm2155 = vcmp.eq.f32.partialorder %v2154, 8.507059e+37
        %v2156 = vand.u32 %v2036, 2147483648
        %v2157 = vor.u32 1.1754944e-38, %v2156
        %v2158 = vsel %vm2155, %v2157, %v2153
        %v2159 = vmul.f32 %v2004, %v2158
        %v2160 = vrcp.pop %v2038
        %v2161 = vmul.f32 %v2038, %v2160
        %v2162 = vsub.f32 1.0, %v2161
        %v2163 = vmul.f32 %v2160, %v2162
        %v2164 = vadd.f32 %v2160, %v2163
        %vm2165 = vweird.f32 %v2038
        %vm2166 = vweird.f32 %v2160
        %vm2167 = vmor %vm2165, %vm2166
        %v2168 = vsel %vm2167, %v2160, %v2164
        %v2169 = vand.u32 2147483647, %v2038
        %vm2170 = vcmp.eq.f32.partialorder %v2169, 8.507059e+37
        %v2171 = vand.u32 %v2038, 2147483648
        %v2172 = vor.u32 1.1754944e-38, %v2171
        %v2173 = vsel %vm2170, %v2172, %v2168
        %v2174 = vmul.f32 %v2006, %v2173
        %v2175 = vrcp.pop %v2040
        %v2176 = vmul.f32 %v2040, %v2175
        %v2177 = vsub.f32 1.0, %v2176
        %v2178 = vmul.f32 %v2175, %v2177
        %v2179 = vadd.f32 %v2175, %v2178
        %vm2180 = vweird.f32 %v2040
        %vm2181 = vweird.f32 %v2175
        %vm2182 = vmor %vm2180, %vm2181
        %v2183 = vsel %vm2182, %v2175, %v2179
        %v2184 = vand.u32 2147483647, %v2040
        %vm2185 = vcmp.eq.f32.partialorder %v2184, 8.507059e+37
        %v2186 = vand.u32 %v2040, 2147483648
        %v2187 = vor.u32 1.1754944e-38, %v2186
        %v2188 = vsel %vm2185, %v2187, %v2183
        %v2189 = vmul.f32 %v2008, %v2188
        %v2190 = vrcp.pop %v2042
        %v2191 = vmul.f32 %v2042, %v2190
        %v2192 = vsub.f32 1.0, %v2191
        %v2193 = vmul.f32 %v2190, %v2192
        %v2194 = vadd.f32 %v2190, %v2193
        %vm2195 = vweird.f32 %v2042
        %vm2196 = vweird.f32 %v2190
        %vm2197 = vmor %vm2195, %vm2196
        %v2198 = vsel %vm2197, %v2190, %v2194
        %v2199 = vand.u32 2147483647, %v2042
        %vm2200 = vcmp.eq.f32.partialorder %v2199, 8.507059e+37
        %v2201 = vand.u32 %v2042, 2147483648
        %v2202 = vor.u32 1.1754944e-38, %v2201
        %v2203 = vsel %vm2200, %v2202, %v2198
        %v2204 = vmul.f32 %v2010, %v2203
        %v2205 = vrcp.pop %v2044
        %v2206 = vmul.f32 %v2044, %v2205
        %v2207 = vsub.f32 1.0, %v2206
        %v2208 = vmul.f32 %v2205, %v2207
        %v2209 = vadd.f32 %v2205, %v2208
        %vm2210 = vweird.f32 %v2044
        %vm2211 = vweird.f32 %v2205
        %vm2212 = vmor %vm2210, %vm2211
        %v2213 = vsel %vm2212, %v2205, %v2209
        %v2214 = vand.u32 2147483647, %v2044
        %vm2215 = vcmp.eq.f32.partialorder %v2214, 8.507059e+37
        %v2216 = vand.u32 %v2044, 2147483648
        %v2217 = vor.u32 1.1754944e-38, %v2216
        %v2218 = vsel %vm2215, %v2217, %v2213
        %v2219 = vmul.f32 %v2012, %v2218
        %v2220 = vrcp.pop %v2046
        %v2221 = vmul.f32 %v2046, %v2220
        %v2222 = vsub.f32 1.0, %v2221
        %v2223 = vmul.f32 %v2220, %v2222
        %v2224 = vadd.f32 %v2220, %v2223
        %vm2225 = vweird.f32 %v2046
        %vm2226 = vweird.f32 %v2220
        %vm2227 = vmor %vm2225, %vm2226
        %v2228 = vsel %vm2227, %v2220, %v2224
        %v2229 = vand.u32 2147483647, %v2046
        %vm2230 = vcmp.eq.f32.partialorder %v2229, 8.507059e+37
        %v2231 = vand.u32 %v2046, 2147483648
        %v2232 = vor.u32 1.1754944e-38, %v2231
        %v2233 = vsel %vm2230, %v2232, %v2228
        %v2234 = vmul.f32 %v2014, %v2233
        %v2235 = vrcp.pop %v2048
        %v2236 = vmul.f32 %v2048, %v2235
        %v2237 = vsub.f32 1.0, %v2236
        %v2238 = vmul.f32 %v2235, %v2237
        %v2239 = vadd.f32 %v2235, %v2238
        %vm2240 = vweird.f32 %v2048
        %vm2241 = vweird.f32 %v2235
        %vm2242 = vmor %vm2240, %vm2241
        %v2243 = vsel %vm2242, %v2235, %v2239
        %v2244 = vand.u32 2147483647, %v2048
        %vm2245 = vcmp.eq.f32.partialorder %v2244, 8.507059e+37
        %v2246 = vand.u32 %v2048, 2147483648
        %v2247 = vor.u32 1.1754944e-38, %v2246
        %v2248 = vsel %vm2245, %v2247, %v2243
        %v2249 = vmul.f32 %v2016, %v2248
        %v2250 = vrcp.pop %v2050
        %v2251 = vmul.f32 %v2050, %v2250
        %v2252 = vsub.f32 1.0, %v2251
        %v2253 = vmul.f32 %v2250, %v2252
        %v2254 = vadd.f32 %v2250, %v2253
        %vm2255 = vweird.f32 %v2050
        %vm2256 = vweird.f32 %v2250
        %vm2257 = vmor %vm2255, %vm2256
        %v2258 = vsel %vm2257, %v2250, %v2254
        %v2259 = vand.u32 2147483647, %v2050
        %vm2260 = vcmp.eq.f32.partialorder %v2259, 8.507059e+37
        %v2261 = vand.u32 %v2050, 2147483648
        %v2262 = vor.u32 1.1754944e-38, %v2261
        %v2263 = vsel %vm2260, %v2262, %v2258
        %v2264 = vmul.f32 %v2018, %v2263
        %v2265 = vrcp.pop %v2052
        %v2266 = vmul.f32 %v2052, %v2265
        %v2267 = vsub.f32 1.0, %v2266
        %v2268 = vmul.f32 %v2265, %v2267
        %v2269 = vadd.f32 %v2265, %v2268
        %vm2270 = vweird.f32 %v2052
        %vm2271 = vweird.f32 %v2265
        %vm2272 = vmor %vm2270, %vm2271
        %v2273 = vsel %vm2272, %v2265, %v2269
        %v2274 = vand.u32 2147483647, %v2052
        %vm2275 = vcmp.eq.f32.partialorder %v2274, 8.507059e+37
        %v2276 = vand.u32 %v2052, 2147483648
        %v2277 = vor.u32 1.1754944e-38, %v2276
        %v2278 = vsel %vm2275, %v2277, %v2273
        %v2279 = vmul.f32 %v2020, %v2278
        %v2280 = vrcp.pop %v2054
        %v2281 = vmul.f32 %v2054, %v2280
        %v2282 = vsub.f32 1.0, %v2281
        %v2283 = vmul.f32 %v2280, %v2282
        %v2284 = vadd.f32 %v2280, %v2283
        %vm2285 = vweird.f32 %v2054
        %vm2286 = vweird.f32 %v2280
        %vm2287 = vmor %vm2285, %vm2286
        %v2288 = vsel %vm2287, %v2280, %v2284
        %v2289 = vand.u32 2147483647, %v2054
        %vm2290 = vcmp.eq.f32.partialorder %v2289, 8.507059e+37
        %v2291 = vand.u32 %v2054, 2147483648
        %v2292 = vor.u32 1.1754944e-38, %v2291
        %v2293 = vsel %vm2290, %v2292, %v2288
        %v2294 = vmul.f32 %v2022, %v2293
        %2295 = vmatpush.msra.mxu0 %v975
        %2296 = vmatpush.msra.mxu0 %v972
        %2297 = vmatpush.msra.mxu0 %v969
        %2298 = vmatpush.msra.mxu0 %v966
        %2299 = vmatpush.msra.mxu0 %v963
        %2300 = vmatpush.msra.mxu0 %v960
        %2301 = vmatpush.msra.mxu0 %v957
        %2302 = vmatpush.msra.mxu0 %v954
        %2303 = vmatpush.msra.mxu0 %v951
        %2304 = vmatpush.msra.mxu0 %v948
        %2305 = vmatpush.msra.mxu0 %v945
        %2306 = vmatpush.msra.mxu0 %v942
        %2307 = vmatpush.msra.mxu0 %v939
        %2308 = vmatpush.msra.mxu0 %v936
        %2309 = vmatpush.msra.mxu0 %v933
        %2310 = vmatpush.msra.mxu0 %v930
        %2311 = vmatmul.f32.gmra.mxu0 %v2069
        %v2312 = vpop.f32.mrf.mxu0
        %v2313 = vadd.f32 0.0, %v2312
        %2314 = vmatmul.f32.gmra.mxu0 %v2084
        %v2315 = vpop.f32.mrf.mxu0
        %v2316 = vadd.f32 0.0, %v2315
        %2317 = vmatmul.f32.gmra.mxu0 %v2099
        %v2318 = vpop.f32.mrf.mxu0
        %v2319 = vadd.f32 0.0, %v2318
        %2320 = vmatmul.f32.gmra.mxu0 %v2114
        %v2321 = vpop.f32.mrf.mxu0
        %v2322 = vadd.f32 0.0, %v2321
        %2323 = vmatmul.f32.gmra.mxu0 %v2129
        %v2324 = vpop.f32.mrf.mxu0
        %v2325 = vadd.f32 0.0, %v2324
        %2326 = vmatmul.f32.gmra.mxu0 %v2144
        %v2327 = vpop.f32.mrf.mxu0
        %v2328 = vadd.f32 0.0, %v2327
        %2329 = vmatmul.f32.gmra.mxu0 %v2159
        %v2330 = vpop.f32.mrf.mxu0
        %v2331 = vadd.f32 0.0, %v2330
        %2332 = vmatmul.f32.gmra.mxu0 %v2174
        %v2333 = vpop.f32.mrf.mxu0
        %v2334 = vadd.f32 0.0, %v2333
        %2335 = vmatmul.f32.gmra.mxu0 %v2189
        %v2336 = vpop.f32.mrf.mxu0
        %v2337 = vadd.f32 0.0, %v2336
        %2338 = vmatmul.f32.gmra.mxu0 %v2204
        %v2339 = vpop.f32.mrf.mxu0
        %v2340 = vadd.f32 0.0, %v2339
        %2341 = vmatmul.f32.gmra.mxu0 %v2219
        %v2342 = vpop.f32.mrf.mxu0
        %v2343 = vadd.f32 0.0, %v2342
        %2344 = vmatmul.f32.gmra.mxu0 %v2234
        %v2345 = vpop.f32.mrf.mxu0
        %v2346 = vadd.f32 0.0, %v2345
        %2347 = vmatmul.f32.gmra.mxu0 %v2249
        %v2348 = vpop.f32.mrf.mxu0
        %v2349 = vadd.f32 0.0, %v2348
        %2350 = vmatmul.f32.gmra.mxu0 %v2264
        %v2351 = vpop.f32.mrf.mxu0
        %v2352 = vadd.f32 0.0, %v2351
        %2353 = vmatmul.f32.gmra.mxu0 %v2279
        %v2354 = vpop.f32.mrf.mxu0
        %v2355 = vadd.f32 0.0, %v2354
        %2356 = vmatmul.f32.gmra.mxu0 %v2294
        %v2357 = vpop.f32.mrf.mxu0
        %v2358 = vadd.f32 0.0, %v2357
        %2359 = vdwg.mxu0
        %s2360 = sld [smem:[#allocation2]]
        %v2361 = vstv %s2360
        %v2362 = vmul.f32 %v2361, %v1735
        %v2363 = vmul.f32 %v2361, %v1738
        %v2364 = vmul.f32 %v2361, %v1741
        %v2365 = vmul.f32 %v2361, %v1744
        %v2366 = vmul.f32 %v2361, %v1747
        %v2367 = vmul.f32 %v2361, %v1750
        %v2368 = vmul.f32 %v2361, %v1753
        %v2369 = vmul.f32 %v2361, %v1756
        %v2370 = vmul.f32 %v2361, %v1759
        %v2371 = vmul.f32 %v2361, %v1762
        %v2372 = vmul.f32 %v2361, %v1765
        %v2373 = vmul.f32 %v2361, %v1768
        %v2374 = vmul.f32 %v2361, %v1771
        %v2375 = vmul.f32 %v2361, %v1774
        %v2376 = vmul.f32 %v2361, %v1777
        %v2377 = vmul.f32 %v2361, %v1780
        %s2378 = sld [smem:[#allocation2 + $0x1]]
        %v2379 = vstv %s2378
        %v2380 = vmul.f32 %v2379, %v2313
        %v2381 = vmul.f32 %v2379, %v2316
        %v2382 = vmul.f32 %v2379, %v2319
        %v2383 = vmul.f32 %v2379, %v2322
        %v2384 = vmul.f32 %v2379, %v2325
        %v2385 = vmul.f32 %v2379, %v2328
        %v2386 = vmul.f32 %v2379, %v2331
        %v2387 = vmul.f32 %v2379, %v2334
        %v2388 = vmul.f32 %v2379, %v2337
        %v2389 = vmul.f32 %v2379, %v2340
        %v2390 = vmul.f32 %v2379, %v2343
        %v2391 = vmul.f32 %v2379, %v2346
        %v2392 = vmul.f32 %v2379, %v2349
        %v2393 = vmul.f32 %v2379, %v2352
        %v2394 = vmul.f32 %v2379, %v2355
        %v2395 = vmul.f32 %v2379, %v2358
        %v2396 = vadd.f32 %v2362, %v2380
        %v2397 = vadd.f32 %v2363, %v2381
        %v2398 = vadd.f32 %v2364, %v2382
        %v2399 = vadd.f32 %v2365, %v2383
        %v2400 = vadd.f32 %v2366, %v2384
        %v2401 = vadd.f32 %v2367, %v2385
        %v2402 = vadd.f32 %v2368, %v2386
        %v2403 = vadd.f32 %v2369, %v2387
        %v2404 = vadd.f32 %v2370, %v2388
        %v2405 = vadd.f32 %v2371, %v2389
        %v2406 = vadd.f32 %v2372, %v2390
        %v2407 = vadd.f32 %v2373, %v2391
        %v2408 = vadd.f32 %v2374, %v2392
        %v2409 = vadd.f32 %v2375, %v2393
        %v2410 = vadd.f32 %v2376, %v2394
        %v2411 = vadd.f32 %v2377, %v2395
        %v2412 = vmul.f32 %v930, 2.0
        %v2413 = vmul.f32 %v933, 2.0
        %v2414 = vmul.f32 %v936, 2.0
        %v2415 = vmul.f32 %v939, 2.0
        %v2416 = vmul.f32 %v942, 2.0
        %v2417 = vmul.f32 %v945, 2.0
        %v2418 = vmul.f32 %v948, 2.0
        %v2419 = vmul.f32 %v951, 2.0
        %v2420 = vmul.f32 %v954, 2.0
        %v2421 = vmul.f32 %v957, 2.0
        %v2422 = vmul.f32 %v960, 2.0
        %v2423 = vmul.f32 %v963, 2.0
        %v2424 = vmul.f32 %v966, 2.0
        %v2425 = vmul.f32 %v969, 2.0
        %v2426 = vmul.f32 %v972, 2.0
        %v2427 = vmul.f32 %v975, 2.0
        %v2428 = vadd.f32 %v2396, %v2412
        %v2429 = vadd.f32 %v2397, %v2413
        %v2430 = vadd.f32 %v2398, %v2414
        %v2431 = vadd.f32 %v2399, %v2415
        %v2432 = vadd.f32 %v2400, %v2416
        %v2433 = vadd.f32 %v2401, %v2417
        %v2434 = vadd.f32 %v2402, %v2418
        %v2435 = vadd.f32 %v2403, %v2419
        %v2436 = vadd.f32 %v2404, %v2420
        %v2437 = vadd.f32 %v2405, %v2421
        %v2438 = vadd.f32 %v2406, %v2422
        %v2439 = vadd.f32 %v2407, %v2423
        %v2440 = vadd.f32 %v2408, %v2424
        %v2441 = vadd.f32 %v2409, %v2425
        %v2442 = vadd.f32 %v2410, %v2426
        %v2443 = vadd.f32 %v2411, %v2427
        %v2444 = vsel %vm1506, %v2428, 0.0
        %2445 = vadd.xlane.f32.xlu0 %v2444
        %v2446 = vpop.xlane.xlu0 %2445
        %v2447 = vsel %vm1506, %v2429, 0.0
        %2448 = vadd.xlane.f32.xlu0 %v2447
        %v2449 = vpop.xlane.xlu0 %2448
        %v2450 = vsel %vm1506, %v2430, 0.0
        %2451 = vadd.xlane.f32.xlu0 %v2450
        %v2452 = vpop.xlane.xlu0 %2451
        %v2453 = vsel %vm1506, %v2431, 0.0
        %2454 = vadd.xlane.f32.xlu0 %v2453
        %v2455 = vpop.xlane.xlu0 %2454
        %v2456 = vsel %vm1506, %v2432, 0.0
        %2457 = vadd.xlane.f32.xlu0 %v2456
        %v2458 = vpop.xlane.xlu0 %2457
        %v2459 = vsel %vm1506, %v2433, 0.0
        %2460 = vadd.xlane.f32.xlu0 %v2459
        %v2461 = vpop.xlane.xlu0 %2460
        %v2462 = vsel %vm1506, %v2434, 0.0
        %2463 = vadd.xlane.f32.xlu0 %v2462
        %v2464 = vpop.xlane.xlu0 %2463
        %v2465 = vsel %vm1506, %v2435, 0.0
        %2466 = vadd.xlane.f32.xlu0 %v2465
        %v2467 = vpop.xlane.xlu0 %2466
        %v2468 = vsel %vm1506, %v2436, 0.0
        %2469 = vadd.xlane.f32.xlu0 %v2468
        %v2470 = vpop.xlane.xlu0 %2469
        %v2471 = vsel %vm1506, %v2437, 0.0
        %2472 = vadd.xlane.f32.xlu0 %v2471
        %v2473 = vpop.xlane.xlu0 %2472
        %v2474 = vsel %vm1506, %v2438, 0.0
        %2475 = vadd.xlane.f32.xlu0 %v2474
        %v2476 = vpop.xlane.xlu0 %2475
        %v2477 = vsel %vm1506, %v2439, 0.0
        %2478 = vadd.xlane.f32.xlu0 %v2477
        %v2479 = vpop.xlane.xlu0 %2478
        %v2480 = vsel %vm1506, %v2440, 0.0
        %2481 = vadd.xlane.f32.xlu0 %v2480
        %v2482 = vpop.xlane.xlu0 %2481
        %v2483 = vsel %vm1506, %v2441, 0.0
        %2484 = vadd.xlane.f32.xlu0 %v2483
        %v2485 = vpop.xlane.xlu0 %2484
        %v2486 = vsel %vm1506, %v2442, 0.0
        %2487 = vadd.xlane.f32.xlu0 %v2486
        %v2488 = vpop.xlane.xlu0 %2487
        %v2489 = vsel %vm1506, %v2443, 0.0
        %2490 = vadd.xlane.f32.xlu0 %v2489
        %v2491 = vpop.xlane.xlu0 %2490
        %v2492 = vrcp.pop 48.0
        %v2493 = vmul.f32 48.0, %v2492
        %v2494 = vsub.f32 1.0, %v2493
        %v2495 = vmul.f32 %v2492, %v2494
        %v2496 = vadd.f32 %v2492, %v2495
        %vm2497 = vweird.f32 %v2492
        %v2498 = vsel %vm2497, %v2492, %v2496
        %v2499 = vmul.f32 %v2446, %v2498
        %v2500 = vmul.f32 %v2449, %v2498
        %v2501 = vmul.f32 %v2452, %v2498
        %v2502 = vmul.f32 %v2455, %v2498
        %v2503 = vmul.f32 %v2458, %v2498
        %v2504 = vmul.f32 %v2461, %v2498
        %v2505 = vmul.f32 %v2464, %v2498
        %v2506 = vmul.f32 %v2467, %v2498
        %v2507 = vmul.f32 %v2470, %v2498
        %v2508 = vmul.f32 %v2473, %v2498
        %v2509 = vmul.f32 %v2476, %v2498
        %v2510 = vmul.f32 %v2479, %v2498
        %v2511 = vmul.f32 %v2482, %v2498
        %v2512 = vmul.f32 %v2485, %v2498
        %v2513 = vmul.f32 %v2488, %v2498
        %v2514 = vmul.f32 %v2491, %v2498
        %s2515 = scalar_lea.vmem %s5, 160
        %v2516 = vld [vmem:[%s2515] sm:$0xff]
        %v2517 = vld [vmem:[%s2515 + $0x8] sm:$0xff]
        %v2518 = vld [vmem:[%s2515 + $0x10] sm:$0xff]
        %v2519 = vld [vmem:[%s2515 + $0x18] sm:$0xff]
        %v2520 = vld [vmem:[%s2515 + $0x20] sm:$0xff]
        %v2521 = vld [vmem:[%s2515 + $0x28] sm:$0xff]
        %v2522 = vld [vmem:[%s2515 + $0x30] sm:$0xff]
        %v2523 = vld [vmem:[%s2515 + $0x38] sm:$0xff]
        %v2524 = vld [vmem:[%s2515 + $0x40] sm:$0xff]
        %v2525 = vld [vmem:[%s2515 + $0x48] sm:$0xff]
        %v2526 = vld [vmem:[%s2515 + $0x50] sm:$0xff]
        %v2527 = vld [vmem:[%s2515 + $0x58] sm:$0xff]
        %v2528 = vld [vmem:[%s2515 + $0x60] sm:$0xff]
        %v2529 = vld [vmem:[%s2515 + $0x68] sm:$0xff]
        %v2530 = vld [vmem:[%s2515 + $0x70] sm:$0xff]
        %v2531 = vld [vmem:[%s2515 + $0x78] sm:$0xff]
        %v2532 = vld [vmem:[%s2515 + $0x80] sm:$0xff]
        %v2533 = vld [vmem:[%s2515 + $0x88] sm:$0xff]
        %v2534 = vld [vmem:[%s2515 + $0x90] sm:$0xff]
        %v2535 = vld [vmem:[%s2515 + $0x98] sm:$0xff]
        %s2536 = scalar_lea.vmem %s6, 160
        %v2537 = vld [vmem:[%s2536] sm:$0xff]
        %v2538 = vld [vmem:[%s2536 + $0x8] sm:$0xff]
        %v2539 = vld [vmem:[%s2536 + $0x10] sm:$0xff]
        %v2540 = vld [vmem:[%s2536 + $0x18] sm:$0xff]
        %v2541 = vld [vmem:[%s2536 + $0x20] sm:$0xff]
        %v2542 = vld [vmem:[%s2536 + $0x28] sm:$0xff]
        %v2543 = vld [vmem:[%s2536 + $0x30] sm:$0xff]
        %v2544 = vld [vmem:[%s2536 + $0x38] sm:$0xff]
        %v2545 = vld [vmem:[%s2536 + $0x40] sm:$0xff]
        %v2546 = vld [vmem:[%s2536 + $0x48] sm:$0xff]
        %v2547 = vld [vmem:[%s2536 + $0x50] sm:$0xff]
        %v2548 = vld [vmem:[%s2536 + $0x58] sm:$0xff]
        %v2549 = vld [vmem:[%s2536 + $0x60] sm:$0xff]
        %v2550 = vld [vmem:[%s2536 + $0x68] sm:$0xff]
        %v2551 = vld [vmem:[%s2536 + $0x70] sm:$0xff]
        %v2552 = vld [vmem:[%s2536 + $0x78] sm:$0xff]
        %v2553 = vld [vmem:[%s2536 + $0x80] sm:$0xff]
        %v2554 = vld [vmem:[%s2536 + $0x88] sm:$0xff]
        %v2555 = vld [vmem:[%s2536 + $0x90] sm:$0xff]
        %v2556 = vld [vmem:[%s2536 + $0x98] sm:$0xff]
        %2558 = vset.pattern.permute.xlu0 0
        %2559 = vperm.xlu0 %2558, %v2537
        %v2560 = vpop.permute.xlu0 %2559
        %2563 = vset.pattern.permute.xlu0 0
        %2564 = vperm.xlu0 %2563, %v2538
        %v2565 = vpop.permute.xlu0 %2564
        %2568 = vset.pattern.permute.xlu0 0
        %2569 = vperm.xlu0 %2568, %v2539
        %v2570 = vpop.permute.xlu0 %2569
        %2573 = vset.pattern.permute.xlu0 0
        %2574 = vperm.xlu0 %2573, %v2540
        %v2575 = vpop.permute.xlu0 %2574
        %2578 = vset.pattern.permute.xlu0 0
        %2579 = vperm.xlu0 %2578, %v2541
        %v2580 = vpop.permute.xlu0 %2579
        %2583 = vset.pattern.permute.xlu0 0
        %2584 = vperm.xlu0 %2583, %v2542
        %v2585 = vpop.permute.xlu0 %2584
        %2588 = vset.pattern.permute.xlu0 0
        %2589 = vperm.xlu0 %2588, %v2543
        %v2590 = vpop.permute.xlu0 %2589
        %2593 = vset.pattern.permute.xlu0 0
        %2594 = vperm.xlu0 %2593, %v2544
        %v2595 = vpop.permute.xlu0 %2594
        %2598 = vset.pattern.permute.xlu0 0
        %2599 = vperm.xlu0 %2598, %v2545
        %v2600 = vpop.permute.xlu0 %2599
        %2603 = vset.pattern.permute.xlu0 0
        %2604 = vperm.xlu0 %2603, %v2546
        %v2605 = vpop.permute.xlu0 %2604
        %2608 = vset.pattern.permute.xlu0 0
        %2609 = vperm.xlu0 %2608, %v2547
        %v2610 = vpop.permute.xlu0 %2609
        %2613 = vset.pattern.permute.xlu0 0
        %2614 = vperm.xlu0 %2613, %v2548
        %v2615 = vpop.permute.xlu0 %2614
        %2618 = vset.pattern.permute.xlu0 0
        %2619 = vperm.xlu0 %2618, %v2549
        %v2620 = vpop.permute.xlu0 %2619
        %2623 = vset.pattern.permute.xlu0 0
        %2624 = vperm.xlu0 %2623, %v2550
        %v2625 = vpop.permute.xlu0 %2624
        %2628 = vset.pattern.permute.xlu0 0
        %2629 = vperm.xlu0 %2628, %v2551
        %v2630 = vpop.permute.xlu0 %2629
        %2633 = vset.pattern.permute.xlu0 0
        %2634 = vperm.xlu0 %2633, %v2552
        %v2635 = vpop.permute.xlu0 %2634
        %2638 = vset.pattern.permute.xlu0 0
        %2639 = vperm.xlu0 %2638, %v2553
        %v2640 = vpop.permute.xlu0 %2639
        %2643 = vset.pattern.permute.xlu0 0
        %2644 = vperm.xlu0 %2643, %v2554
        %v2645 = vpop.permute.xlu0 %2644
        %2648 = vset.pattern.permute.xlu0 0
        %2649 = vperm.xlu0 %2648, %v2555
        %v2650 = vpop.permute.xlu0 %2649
        %2653 = vset.pattern.permute.xlu0 0
        %2654 = vperm.xlu0 %2653, %v2556
        %v2655 = vpop.permute.xlu0 %2654
        %2657 = vmatpush.msra.mxu0 %v1040
        %2658 = vmatpush.msra.mxu0 %v1037
        %2659 = vmatpush.msra.mxu0 %v1034
        %2660 = vmatpush.msra.mxu0 %v1031
        %2661 = vmatpush.msra.mxu0 %v1028
        %2662 = vmatpush.msra.mxu0 %v1025
        %2663 = vmatpush.msra.mxu0 %v1022
        %2664 = vmatpush.msra.mxu0 %v1019
        %2665 = vmatpush.msra.mxu0 %v1016
        %2666 = vmatpush.msra.mxu0 %v1013
        %2667 = vmatpush.msra.mxu0 %v1010
        %2668 = vmatpush.msra.mxu0 %v1007
        %2669 = vmatpush.msra.mxu0 %v1004
        %2670 = vmatpush.msra.mxu0 %v1001
        %2671 = vmatpush.msra.mxu0 %v998
        %2672 = vmatpush.msra.mxu0 %v995
        %2673 = vmatmul.f32.gmra.mxu0 %v2516
        %v2674 = vpop.f32.mrf.mxu0
        %v2675 = vadd.f32 %v2560, %v2674
        %2676 = vmatmul.f32.gmra.mxu0 %v2517
        %v2677 = vpop.f32.mrf.mxu0
        %v2678 = vadd.f32 %v2565, %v2677
        %2679 = vmatmul.f32.gmra.mxu0 %v2518
        %v2680 = vpop.f32.mrf.mxu0
        %v2681 = vadd.f32 %v2570, %v2680
        %2682 = vmatmul.f32.gmra.mxu0 %v2519
        %v2683 = vpop.f32.mrf.mxu0
        %v2684 = vadd.f32 %v2575, %v2683
        %2685 = vmatmul.f32.gmra.mxu0 %v2520
        %v2686 = vpop.f32.mrf.mxu0
        %v2687 = vadd.f32 %v2580, %v2686
        %2688 = vmatmul.f32.gmra.mxu0 %v2521
        %v2689 = vpop.f32.mrf.mxu0
        %v2690 = vadd.f32 %v2585, %v2689
        %2691 = vmatmul.f32.gmra.mxu0 %v2522
        %v2692 = vpop.f32.mrf.mxu0
        %v2693 = vadd.f32 %v2590, %v2692
        %2694 = vmatmul.f32.gmra.mxu0 %v2523
        %v2695 = vpop.f32.mrf.mxu0
        %v2696 = vadd.f32 %v2595, %v2695
        %2697 = vmatmul.f32.gmra.mxu0 %v2524
        %v2698 = vpop.f32.mrf.mxu0
        %v2699 = vadd.f32 %v2600, %v2698
        %2700 = vmatmul.f32.gmra.mxu0 %v2525
        %v2701 = vpop.f32.mrf.mxu0
        %v2702 = vadd.f32 %v2605, %v2701
        %2703 = vmatmul.f32.gmra.mxu0 %v2526
        %v2704 = vpop.f32.mrf.mxu0
        %v2705 = vadd.f32 %v2610, %v2704
        %2706 = vmatmul.f32.gmra.mxu0 %v2527
        %v2707 = vpop.f32.mrf.mxu0
        %v2708 = vadd.f32 %v2615, %v2707
        %2709 = vmatmul.f32.gmra.mxu0 %v2528
        %v2710 = vpop.f32.mrf.mxu0
        %v2711 = vadd.f32 %v2620, %v2710
        %2712 = vmatmul.f32.gmra.mxu0 %v2529
        %v2713 = vpop.f32.mrf.mxu0
        %v2714 = vadd.f32 %v2625, %v2713
        %2715 = vmatmul.f32.gmra.mxu0 %v2530
        %v2716 = vpop.f32.mrf.mxu0
        %v2717 = vadd.f32 %v2630, %v2716
        %2718 = vmatmul.f32.gmra.mxu0 %v2531
        %v2719 = vpop.f32.mrf.mxu0
        %v2720 = vadd.f32 %v2635, %v2719
        %2721 = vmatmul.f32.gmra.mxu0 %v2532
        %v2722 = vpop.f32.mrf.mxu0
        %v2723 = vadd.f32 %v2640, %v2722
        %2724 = vmatmul.f32.gmra.mxu0 %v2533
        %v2725 = vpop.f32.mrf.mxu0
        %v2726 = vadd.f32 %v2645, %v2725
        %2727 = vmatmul.f32.gmra.mxu0 %v2534
        %v2728 = vpop.f32.mrf.mxu0
        %v2729 = vadd.f32 %v2650, %v2728
        %2730 = vmatmul.f32.gmra.mxu0 %v2535
        %v2731 = vpop.f32.mrf.mxu0
        %v2732 = vadd.f32 %v2655, %v2731
        %2733 = vdwg.mxu0
        %2734 = vmatpush.msra.mxu0 %v1153
        %2735 = vmatpush.msra.mxu0 %v1150
        %2736 = vmatpush.msra.mxu0 %v1147
        %2737 = vmatpush.msra.mxu0 %v1144
        %2738 = vmatpush.msra.mxu0 %v1141
        %2739 = vmatpush.msra.mxu0 %v1138
        %2740 = vmatpush.msra.mxu0 %v1135
        %2741 = vmatpush.msra.mxu0 %v1132
        %2742 = vmatpush.msra.mxu0 %v1129
        %2743 = vmatpush.msra.mxu0 %v1126
        %2744 = vmatpush.msra.mxu0 %v1123
        %2745 = vmatpush.msra.mxu0 %v1120
        %2746 = vmatpush.msra.mxu0 %v1117
        %2747 = vmatpush.msra.mxu0 %v1114
        %2748 = vmatpush.msra.mxu0 %v1111
        %2749 = vmatpush.msra.mxu0 %v1108
        %2750 = vmatmul.f32.gmra.mxu0 %v2516
        %v2751 = vpop.f32.mrf.mxu0
        %v2752 = vadd.f32 %v2560, %v2751
        %2753 = vmatmul.f32.gmra.mxu0 %v2517
        %v2754 = vpop.f32.mrf.mxu0
        %v2755 = vadd.f32 %v2565, %v2754
        %2756 = vmatmul.f32.gmra.mxu0 %v2518
        %v2757 = vpop.f32.mrf.mxu0
        %v2758 = vadd.f32 %v2570, %v2757
        %2759 = vmatmul.f32.gmra.mxu0 %v2519
        %v2760 = vpop.f32.mrf.mxu0
        %v2761 = vadd.f32 %v2575, %v2760
        %2762 = vmatmul.f32.gmra.mxu0 %v2520
        %v2763 = vpop.f32.mrf.mxu0
        %v2764 = vadd.f32 %v2580, %v2763
        %2765 = vmatmul.f32.gmra.mxu0 %v2521
        %v2766 = vpop.f32.mrf.mxu0
        %v2767 = vadd.f32 %v2585, %v2766
        %2768 = vmatmul.f32.gmra.mxu0 %v2522
        %v2769 = vpop.f32.mrf.mxu0
        %v2770 = vadd.f32 %v2590, %v2769
        %2771 = vmatmul.f32.gmra.mxu0 %v2523
        %v2772 = vpop.f32.mrf.mxu0
        %v2773 = vadd.f32 %v2595, %v2772
        %2774 = vmatmul.f32.gmra.mxu0 %v2524
        %v2775 = vpop.f32.mrf.mxu0
        %v2776 = vadd.f32 %v2600, %v2775
        %2777 = vmatmul.f32.gmra.mxu0 %v2525
        %v2778 = vpop.f32.mrf.mxu0
        %v2779 = vadd.f32 %v2605, %v2778
        %2780 = vmatmul.f32.gmra.mxu0 %v2526
        %v2781 = vpop.f32.mrf.mxu0
        %v2782 = vadd.f32 %v2610, %v2781
        %2783 = vmatmul.f32.gmra.mxu0 %v2527
        %v2784 = vpop.f32.mrf.mxu0
        %v2785 = vadd.f32 %v2615, %v2784
        %2786 = vmatmul.f32.gmra.mxu0 %v2528
        %v2787 = vpop.f32.mrf.mxu0
        %v2788 = vadd.f32 %v2620, %v2787
        %2789 = vmatmul.f32.gmra.mxu0 %v2529
        %v2790 = vpop.f32.mrf.mxu0
        %v2791 = vadd.f32 %v2625, %v2790
        %2792 = vmatmul.f32.gmra.mxu0 %v2530
        %v2793 = vpop.f32.mrf.mxu0
        %v2794 = vadd.f32 %v2630, %v2793
        %2795 = vmatmul.f32.gmra.mxu0 %v2531
        %v2796 = vpop.f32.mrf.mxu0
        %v2797 = vadd.f32 %v2635, %v2796
        %2798 = vmatmul.f32.gmra.mxu0 %v2532
        %v2799 = vpop.f32.mrf.mxu0
        %v2800 = vadd.f32 %v2640, %v2799
        %2801 = vmatmul.f32.gmra.mxu0 %v2533
        %v2802 = vpop.f32.mrf.mxu0
        %v2803 = vadd.f32 %v2645, %v2802
        %2804 = vmatmul.f32.gmra.mxu0 %v2534
        %v2805 = vpop.f32.mrf.mxu0
        %v2806 = vadd.f32 %v2650, %v2805
        %2807 = vmatmul.f32.gmra.mxu0 %v2535
        %v2808 = vpop.f32.mrf.mxu0
        %v2809 = vadd.f32 %v2655, %v2808
        %2810 = vdwg.mxu0
        %2811 = vxpose.xlu0.b32.start [1/16] %v2675, 128
        %2812 = vxpose.xlu0.b32.cont [2/16] %v2678, 128
        %2813 = vxpose.xlu0.b32.cont [3/16] 0.0, 128
        %2814 = vxpose.xlu0.b32.cont [4/16] 0.0, 128
        %2815 = vxpose.xlu0.b32.cont [5/16] 0.0, 128
        %2816 = vxpose.xlu0.b32.cont [6/16] 0.0, 128
        %2817 = vxpose.xlu0.b32.cont [7/16] 0.0, 128
        %2818 = vxpose.xlu0.b32.cont [8/16] 0.0, 128
        %2819 = vxpose.xlu0.b32.cont [9/16] 0.0, 128
        %2820 = vxpose.xlu0.b32.cont [10/16] 0.0, 128
        %2821 = vxpose.xlu0.b32.cont [11/16] 0.0, 128
        %2822 = vxpose.xlu0.b32.cont [12/16] 0.0, 128
        %2823 = vxpose.xlu0.b32.cont [13/16] 0.0, 128
        %2824 = vxpose.xlu0.b32.cont [14/16] 0.0, 128
        %2825 = vxpose.xlu0.b32.cont [15/16] 0.0, 128
        %2826 = vxpose.xlu0.b32.end [16/16] 0.0, 128
        %v2827 = vpop.trf.xlu0
        %v2828 = vpop.trf.xlu0
        %v2829 = vpop.trf.xlu0
        %v2830 = vpop.trf.xlu0
        %v2831 = vpop.trf.xlu0
        %v2832 = vpop.trf.xlu0
        %v2833 = vpop.trf.xlu0
        %v2834 = vpop.trf.xlu0
        %v2835 = vpop.trf.xlu0
        %v2836 = vpop.trf.xlu0
        %v2837 = vpop.trf.xlu0
        %v2838 = vpop.trf.xlu0
        %v2839 = vpop.trf.xlu0
        %v2840 = vpop.trf.xlu0
        %v2841 = vpop.trf.xlu0
        %v2842 = vpop.trf.xlu0
        %2843 = vxpose.xlu0.b32.start [1/16] %v2752, 128
        %2844 = vxpose.xlu0.b32.cont [2/16] %v2755, 128
        %2845 = vxpose.xlu0.b32.cont [3/16] 0.0, 128
        %2846 = vxpose.xlu0.b32.cont [4/16] 0.0, 128
        %2847 = vxpose.xlu0.b32.cont [5/16] 0.0, 128
        %2848 = vxpose.xlu0.b32.cont [6/16] 0.0, 128
        %2849 = vxpose.xlu0.b32.cont [7/16] 0.0, 128
        %2850 = vxpose.xlu0.b32.cont [8/16] 0.0, 128
        %2851 = vxpose.xlu0.b32.cont [9/16] 0.0, 128
        %2852 = vxpose.xlu0.b32.cont [10/16] 0.0, 128
        %2853 = vxpose.xlu0.b32.cont [11/16] 0.0, 128
        %2854 = vxpose.xlu0.b32.cont [12/16] 0.0, 128
        %2855 = vxpose.xlu0.b32.cont [13/16] 0.0, 128
        %2856 = vxpose.xlu0.b32.cont [14/16] 0.0, 128
        %2857 = vxpose.xlu0.b32.cont [15/16] 0.0, 128
        %2858 = vxpose.xlu0.b32.end [16/16] 0.0, 128
        %v2859 = vpop.trf.xlu0
        %v2860 = vpop.trf.xlu0
        %v2861 = vpop.trf.xlu0
        %v2862 = vpop.trf.xlu0
        %v2863 = vpop.trf.xlu0
        %v2864 = vpop.trf.xlu0
        %v2865 = vpop.trf.xlu0
        %v2866 = vpop.trf.xlu0
        %v2867 = vpop.trf.xlu0
        %v2868 = vpop.trf.xlu0
        %v2869 = vpop.trf.xlu0
        %v2870 = vpop.trf.xlu0
        %v2871 = vpop.trf.xlu0
        %v2872 = vpop.trf.xlu0
        %v2873 = vpop.trf.xlu0
        %v2874 = vpop.trf.xlu0
        %v2876 = vsel %vm1452, %v2827, 0
        %v2879 = vsel %vm1452, %v2828, 0
        %v2882 = vsel %vm1452, %v2829, 0
        %v2885 = vsel %vm1452, %v2830, 0
        %v2888 = vsel %vm1452, %v2831, 0
        %v2891 = vsel %vm1452, %v2832, 0
        %v2894 = vsel %vm1452, %v2833, 0
        %v2897 = vsel %vm1452, %v2834, 0
        %v2900 = vsel %vm1452, %v2835, 0
        %v2903 = vsel %vm1452, %v2836, 0
        %v2906 = vsel %vm1452, %v2837, 0
        %v2909 = vsel %vm1452, %v2838, 0
        %v2912 = vsel %vm1452, %v2839, 0
        %v2915 = vsel %vm1452, %v2840, 0
        %v2918 = vsel %vm1452, %v2841, 0
        %v2921 = vsel %vm1452, %v2842, 0
        %v2924 = vsel %vm1452, %v2859, 0
        %v2927 = vsel %vm1452, %v2860, 0
        %v2930 = vsel %vm1452, %v2861, 0
        %v2933 = vsel %vm1452, %v2862, 0
        %v2936 = vsel %vm1452, %v2863, 0
        %v2939 = vsel %vm1452, %v2864, 0
        %v2942 = vsel %vm1452, %v2865, 0
        %v2945 = vsel %vm1452, %v2866, 0
        %2947 = vmatpush.msra.mxu0 0.0
        %2948 = vmatpush.msra.mxu0 0.0
        %2949 = vmatpush.msra.mxu0 0.0
        %2950 = vmatpush.msra.mxu0 0.0
        %2951 = vmatpush.msra.mxu0 0.0
        %2952 = vmatpush.msra.mxu0 0.0
        %2953 = vmatpush.msra.mxu0 0.0
        %2954 = vmatpush.msra.mxu0 0.0
        %2955 = vmatpush.msra.mxu0 0.0
        %2956 = vmatpush.msra.mxu0 0.0
        %2957 = vmatpush.msra.mxu0 0.0
        %2958 = vmatpush.msra.mxu0 0.0
        %2959 = vmatpush.msra.mxu0 0.0
        %2960 = vmatpush.msra.mxu0 0.0
        %2961 = vmatpush.msra.mxu0 %v2684
        %2962 = vmatpush.msra.mxu0 %v2681
        %2963 = vmatmul.f32.gmra.mxu0 %v2876
        %v2964 = vpop.f32.mrf.mxu0
        %v2965 = vadd.f32 0.0, %v2964
        %2966 = vmatmul.f32.gmra.mxu0 %v2879
        %v2967 = vpop.f32.mrf.mxu0
        %v2968 = vadd.f32 0.0, %v2967
        %2969 = vmatmul.f32.gmra.mxu0 %v2882
        %v2970 = vpop.f32.mrf.mxu0
        %v2971 = vadd.f32 0.0, %v2970
        %2972 = vmatmul.f32.gmra.mxu0 %v2885
        %v2973 = vpop.f32.mrf.mxu0
        %v2974 = vadd.f32 0.0, %v2973
        %2975 = vmatmul.f32.gmra.mxu0 %v2888
        %v2976 = vpop.f32.mrf.mxu0
        %v2977 = vadd.f32 0.0, %v2976
        %2978 = vmatmul.f32.gmra.mxu0 %v2891
        %v2979 = vpop.f32.mrf.mxu0
        %v2980 = vadd.f32 0.0, %v2979
        %2981 = vmatmul.f32.gmra.mxu0 %v2894
        %v2982 = vpop.f32.mrf.mxu0
        %v2983 = vadd.f32 0.0, %v2982
        %2984 = vmatmul.f32.gmra.mxu0 %v2897
        %v2985 = vpop.f32.mrf.mxu0
        %v2986 = vadd.f32 0.0, %v2985
        %2987 = vmatmul.f32.gmra.mxu0 %v2900
        %v2988 = vpop.f32.mrf.mxu0
        %v2989 = vadd.f32 0.0, %v2988
        %2990 = vmatmul.f32.gmra.mxu0 %v2903
        %v2991 = vpop.f32.mrf.mxu0
        %v2992 = vadd.f32 0.0, %v2991
        %2993 = vmatmul.f32.gmra.mxu0 %v2906
        %v2994 = vpop.f32.mrf.mxu0
        %v2995 = vadd.f32 0.0, %v2994
        %2996 = vmatmul.f32.gmra.mxu0 %v2909
        %v2997 = vpop.f32.mrf.mxu0
        %v2998 = vadd.f32 0.0, %v2997
        %2999 = vmatmul.f32.gmra.mxu0 %v2912
        %v3000 = vpop.f32.mrf.mxu0
        %v3001 = vadd.f32 0.0, %v3000
        %3002 = vmatmul.f32.gmra.mxu0 %v2915
        %v3003 = vpop.f32.mrf.mxu0
        %v3004 = vadd.f32 0.0, %v3003
        %3005 = vmatmul.f32.gmra.mxu0 %v2918
        %v3006 = vpop.f32.mrf.mxu0
        %v3007 = vadd.f32 0.0, %v3006
        %3008 = vmatmul.f32.gmra.mxu0 %v2921
        %v3009 = vpop.f32.mrf.mxu0
        %v3010 = vadd.f32 0.0, %v3009
        %3011 = vmatmul.f32.gmra.mxu0 %v2924
        %v3012 = vpop.f32.mrf.mxu0
        %v3013 = vadd.f32 0.0, %v3012
        %3014 = vmatmul.f32.gmra.mxu0 %v2927
        %v3015 = vpop.f32.mrf.mxu0
        %v3016 = vadd.f32 0.0, %v3015
        %3017 = vmatmul.f32.gmra.mxu0 %v2930
        %v3018 = vpop.f32.mrf.mxu0
        %v3019 = vadd.f32 0.0, %v3018
        %3020 = vmatmul.f32.gmra.mxu0 %v2933
        %v3021 = vpop.f32.mrf.mxu0
        %v3022 = vadd.f32 0.0, %v3021
        %3023 = vmatmul.f32.gmra.mxu0 %v2936
        %v3024 = vpop.f32.mrf.mxu0
        %v3025 = vadd.f32 0.0, %v3024
        %3026 = vmatmul.f32.gmra.mxu0 %v2939
        %v3027 = vpop.f32.mrf.mxu0
        %v3028 = vadd.f32 0.0, %v3027
        %3029 = vmatmul.f32.gmra.mxu0 %v2942
        %v3030 = vpop.f32.mrf.mxu0
        %v3031 = vadd.f32 0.0, %v3030
        %3032 = vmatmul.f32.gmra.mxu0 %v2945
        %v3033 = vpop.f32.mrf.mxu0
        %v3034 = vadd.f32 0.0, %v3033
        %3035 = vdwg.mxu0
        %3036 = vmatpush.msra.mxu0 0.0
        %3037 = vmatpush.msra.mxu0 0.0
        %3038 = vmatpush.msra.mxu0 0.0
        %3039 = vmatpush.msra.mxu0 0.0
        %3040 = vmatpush.msra.mxu0 0.0
        %3041 = vmatpush.msra.mxu0 0.0
        %3042 = vmatpush.msra.mxu0 0.0
        %3043 = vmatpush.msra.mxu0 0.0
        %3044 = vmatpush.msra.mxu0 0.0
        %3045 = vmatpush.msra.mxu0 0.0
        %3046 = vmatpush.msra.mxu0 0.0
        %3047 = vmatpush.msra.mxu0 0.0
        %3048 = vmatpush.msra.mxu0 0.0
        %3049 = vmatpush.msra.mxu0 0.0
        %3050 = vmatpush.msra.mxu0 %v2761
        %3051 = vmatpush.msra.mxu0 %v2758
        %3052 = vmatmul.f32.gmra.mxu0 %v2876
        %v3053 = vpop.f32.mrf.mxu0
        %v3054 = vadd.f32 0.0, %v3053
        %3055 = vmatmul.f32.gmra.mxu0 %v2879
        %v3056 = vpop.f32.mrf.mxu0
        %v3057 = vadd.f32 0.0, %v3056
        %3058 = vmatmul.f32.gmra.mxu0 %v2882
        %v3059 = vpop.f32.mrf.mxu0
        %v3060 = vadd.f32 0.0, %v3059
        %3061 = vmatmul.f32.gmra.mxu0 %v2885
        %v3062 = vpop.f32.mrf.mxu0
        %v3063 = vadd.f32 0.0, %v3062
        %3064 = vmatmul.f32.gmra.mxu0 %v2888
        %v3065 = vpop.f32.mrf.mxu0
        %v3066 = vadd.f32 0.0, %v3065
        %3067 = vmatmul.f32.gmra.mxu0 %v2891
        %v3068 = vpop.f32.mrf.mxu0
        %v3069 = vadd.f32 0.0, %v3068
        %3070 = vmatmul.f32.gmra.mxu0 %v2894
        %v3071 = vpop.f32.mrf.mxu0
        %v3072 = vadd.f32 0.0, %v3071
        %3073 = vmatmul.f32.gmra.mxu0 %v2897
        %v3074 = vpop.f32.mrf.mxu0
        %v3075 = vadd.f32 0.0, %v3074
        %3076 = vmatmul.f32.gmra.mxu0 %v2900
        %v3077 = vpop.f32.mrf.mxu0
        %v3078 = vadd.f32 0.0, %v3077
        %3079 = vmatmul.f32.gmra.mxu0 %v2903
        %v3080 = vpop.f32.mrf.mxu0
        %v3081 = vadd.f32 0.0, %v3080
        %3082 = vmatmul.f32.gmra.mxu0 %v2906
        %v3083 = vpop.f32.mrf.mxu0
        %v3084 = vadd.f32 0.0, %v3083
        %3085 = vmatmul.f32.gmra.mxu0 %v2909
        %v3086 = vpop.f32.mrf.mxu0
        %v3087 = vadd.f32 0.0, %v3086
        %3088 = vmatmul.f32.gmra.mxu0 %v2912
        %v3089 = vpop.f32.mrf.mxu0
        %v3090 = vadd.f32 0.0, %v3089
        %3091 = vmatmul.f32.gmra.mxu0 %v2915
        %v3092 = vpop.f32.mrf.mxu0
        %v3093 = vadd.f32 0.0, %v3092
        %3094 = vmatmul.f32.gmra.mxu0 %v2918
        %v3095 = vpop.f32.mrf.mxu0
        %v3096 = vadd.f32 0.0, %v3095
        %3097 = vmatmul.f32.gmra.mxu0 %v2921
        %v3098 = vpop.f32.mrf.mxu0
        %v3099 = vadd.f32 0.0, %v3098
        %3100 = vmatmul.f32.gmra.mxu0 %v2924
        %v3101 = vpop.f32.mrf.mxu0
        %v3102 = vadd.f32 0.0, %v3101
        %3103 = vmatmul.f32.gmra.mxu0 %v2927
        %v3104 = vpop.f32.mrf.mxu0
        %v3105 = vadd.f32 0.0, %v3104
        %3106 = vmatmul.f32.gmra.mxu0 %v2930
        %v3107 = vpop.f32.mrf.mxu0
        %v3108 = vadd.f32 0.0, %v3107
        %3109 = vmatmul.f32.gmra.mxu0 %v2933
        %v3110 = vpop.f32.mrf.mxu0
        %v3111 = vadd.f32 0.0, %v3110
        %3112 = vmatmul.f32.gmra.mxu0 %v2936
        %v3113 = vpop.f32.mrf.mxu0
        %v3114 = vadd.f32 0.0, %v3113
        %3115 = vmatmul.f32.gmra.mxu0 %v2939
        %v3116 = vpop.f32.mrf.mxu0
        %v3117 = vadd.f32 0.0, %v3116
        %3118 = vmatmul.f32.gmra.mxu0 %v2942
        %v3119 = vpop.f32.mrf.mxu0
        %v3120 = vadd.f32 0.0, %v3119
        %3121 = vmatmul.f32.gmra.mxu0 %v2945
        %v3122 = vpop.f32.mrf.mxu0
        %v3123 = vadd.f32 0.0, %v3122
        %3124 = vdwg.mxu0
        %vm3125 = vcmask 523264
        %v3126 = vsel %vm3125, %v3054, -inf
        %v3127 = vmax.f32 %v2965, %v3126
        %3128 = vmax.xlane.f32.xlu0 %v3127
        %v3129 = vpop.xlane.xlu0 %3128
        %v3130 = vsel %vm3125, %v3057, -inf
        %v3131 = vmax.f32 %v2968, %v3130
        %3132 = vmax.xlane.f32.xlu0 %v3131
        %v3133 = vpop.xlane.xlu0 %3132
        %v3134 = vsel %vm3125, %v3060, -inf
        %v3135 = vmax.f32 %v2971, %v3134
        %3136 = vmax.xlane.f32.xlu0 %v3135
        %v3137 = vpop.xlane.xlu0 %3136
        %v3138 = vsel %vm3125, %v3063, -inf
        %v3139 = vmax.f32 %v2974, %v3138
        %3140 = vmax.xlane.f32.xlu0 %v3139
        %v3141 = vpop.xlane.xlu0 %3140
        %v3142 = vsel %vm3125, %v3066, -inf
        %v3143 = vmax.f32 %v2977, %v3142
        %3144 = vmax.xlane.f32.xlu0 %v3143
        %v3145 = vpop.xlane.xlu0 %3144
        %v3146 = vsel %vm3125, %v3069, -inf
        %v3147 = vmax.f32 %v2980, %v3146
        %3148 = vmax.xlane.f32.xlu0 %v3147
        %v3149 = vpop.xlane.xlu0 %3148
        %v3150 = vsel %vm3125, %v3072, -inf
        %v3151 = vmax.f32 %v2983, %v3150
        %3152 = vmax.xlane.f32.xlu0 %v3151
        %v3153 = vpop.xlane.xlu0 %3152
        %v3154 = vsel %vm3125, %v3075, -inf
        %v3155 = vmax.f32 %v2986, %v3154
        %3156 = vmax.xlane.f32.xlu0 %v3155
        %v3157 = vpop.xlane.xlu0 %3156
        %v3158 = vsel %vm3125, %v3078, -inf
        %v3159 = vmax.f32 %v2989, %v3158
        %3160 = vmax.xlane.f32.xlu0 %v3159
        %v3161 = vpop.xlane.xlu0 %3160
        %v3162 = vsel %vm3125, %v3081, -inf
        %v3163 = vmax.f32 %v2992, %v3162
        %3164 = vmax.xlane.f32.xlu0 %v3163
        %v3165 = vpop.xlane.xlu0 %3164
        %v3166 = vsel %vm3125, %v3084, -inf
        %v3167 = vmax.f32 %v2995, %v3166
        %3168 = vmax.xlane.f32.xlu0 %v3167
        %v3169 = vpop.xlane.xlu0 %3168
        %v3170 = vsel %vm3125, %v3087, -inf
        %v3171 = vmax.f32 %v2998, %v3170
        %3172 = vmax.xlane.f32.xlu0 %v3171
        %v3173 = vpop.xlane.xlu0 %3172
        %v3174 = vsel %vm3125, %v3090, -inf
        %v3175 = vmax.f32 %v3001, %v3174
        %3176 = vmax.xlane.f32.xlu0 %v3175
        %v3177 = vpop.xlane.xlu0 %3176
        %v3178 = vsel %vm3125, %v3093, -inf
        %v3179 = vmax.f32 %v3004, %v3178
        %3180 = vmax.xlane.f32.xlu0 %v3179
        %v3181 = vpop.xlane.xlu0 %3180
        %v3182 = vsel %vm3125, %v3096, -inf
        %v3183 = vmax.f32 %v3007, %v3182
        %3184 = vmax.xlane.f32.xlu0 %v3183
        %v3185 = vpop.xlane.xlu0 %3184
        %v3186 = vsel %vm3125, %v3099, -inf
        %v3187 = vmax.f32 %v3010, %v3186
        %3188 = vmax.xlane.f32.xlu0 %v3187
        %v3189 = vpop.xlane.xlu0 %3188
        %v3190 = vsel %vm3125, %v3102, -inf
        %v3191 = vmax.f32 %v3013, %v3190
        %3192 = vmax.xlane.f32.xlu0 %v3191
        %v3193 = vpop.xlane.xlu0 %3192
        %v3194 = vsel %vm3125, %v3105, -inf
        %v3195 = vmax.f32 %v3016, %v3194
        %3196 = vmax.xlane.f32.xlu0 %v3195
        %v3197 = vpop.xlane.xlu0 %3196
        %v3198 = vsel %vm3125, %v3108, -inf
        %v3199 = vmax.f32 %v3019, %v3198
        %3200 = vmax.xlane.f32.xlu0 %v3199
        %v3201 = vpop.xlane.xlu0 %3200
        %v3202 = vsel %vm3125, %v3111, -inf
        %v3203 = vmax.f32 %v3022, %v3202
        %3204 = vmax.xlane.f32.xlu0 %v3203
        %v3205 = vpop.xlane.xlu0 %3204
        %v3206 = vsel %vm3125, %v3114, -inf
        %v3207 = vmax.f32 %v3025, %v3206
        %3208 = vmax.xlane.f32.xlu0 %v3207
        %v3209 = vpop.xlane.xlu0 %3208
        %v3210 = vsel %vm3125, %v3117, -inf
        %v3211 = vmax.f32 %v3028, %v3210
        %3212 = vmax.xlane.f32.xlu0 %v3211
        %v3213 = vpop.xlane.xlu0 %3212
        %v3214 = vsel %vm3125, %v3120, -inf
        %v3215 = vmax.f32 %v3031, %v3214
        %3216 = vmax.xlane.f32.xlu0 %v3215
        %v3217 = vpop.xlane.xlu0 %3216
        %v3218 = vsel %vm3125, %v3123, -inf
        %v3219 = vmax.f32 %v3034, %v3218
        %3220 = vmax.xlane.f32.xlu0 %v3219
        %v3221 = vpop.xlane.xlu0 %3220
        %v3222 = vsub.f32 %v2965, %v3129
        %v3223 = vsub.f32 %v3054, %v3129
        %v3224 = vsub.f32 %v2968, %v3133
        %v3225 = vsub.f32 %v3057, %v3133
        %v3226 = vsub.f32 %v2971, %v3137
        %v3227 = vsub.f32 %v3060, %v3137
        %v3228 = vsub.f32 %v2974, %v3141
        %v3229 = vsub.f32 %v3063, %v3141
        %v3230 = vsub.f32 %v2977, %v3145
        %v3231 = vsub.f32 %v3066, %v3145
        %v3232 = vsub.f32 %v2980, %v3149
        %v3233 = vsub.f32 %v3069, %v3149
        %v3234 = vsub.f32 %v2983, %v3153
        %v3235 = vsub.f32 %v3072, %v3153
        %v3236 = vsub.f32 %v2986, %v3157
        %v3237 = vsub.f32 %v3075, %v3157
        %v3238 = vsub.f32 %v2989, %v3161
        %v3239 = vsub.f32 %v3078, %v3161
        %v3240 = vsub.f32 %v2992, %v3165
        %v3241 = vsub.f32 %v3081, %v3165
        %v3242 = vsub.f32 %v2995, %v3169
        %v3243 = vsub.f32 %v3084, %v3169
        %v3244 = vsub.f32 %v2998, %v3173
        %v3245 = vsub.f32 %v3087, %v3173
        %v3246 = vsub.f32 %v3001, %v3177
        %v3247 = vsub.f32 %v3090, %v3177
        %v3248 = vsub.f32 %v3004, %v3181
        %v3249 = vsub.f32 %v3093, %v3181
        %v3250 = vsub.f32 %v3007, %v3185
        %v3251 = vsub.f32 %v3096, %v3185
        %v3252 = vsub.f32 %v3010, %v3189
        %v3253 = vsub.f32 %v3099, %v3189
        %v3254 = vsub.f32 %v3013, %v3193
        %v3255 = vsub.f32 %v3102, %v3193
        %v3256 = vsub.f32 %v3016, %v3197
        %v3257 = vsub.f32 %v3105, %v3197
        %v3258 = vsub.f32 %v3019, %v3201
        %v3259 = vsub.f32 %v3108, %v3201
        %v3260 = vsub.f32 %v3022, %v3205
        %v3261 = vsub.f32 %v3111, %v3205
        %v3262 = vsub.f32 %v3025, %v3209
        %v3263 = vsub.f32 %v3114, %v3209
        %v3264 = vsub.f32 %v3028, %v3213
        %v3265 = vsub.f32 %v3117, %v3213
        %v3266 = vsub.f32 %v3031, %v3217
        %v3267 = vsub.f32 %v3120, %v3217
        %v3268 = vsub.f32 %v3034, %v3221
        %v3269 = vsub.f32 %v3123, %v3221
        %v3270 = vmul.f32 %v3222, 1.442695
        %v3271 = vpow.pop %v3270
        %v3272 = vmul.f32 %v3223, 1.442695
        %v3273 = vpow.pop %v3272
        %v3274 = vmul.f32 %v3224, 1.442695
        %v3275 = vpow.pop %v3274
        %v3276 = vmul.f32 %v3225, 1.442695
        %v3277 = vpow.pop %v3276
        %v3278 = vmul.f32 %v3226, 1.442695
        %v3279 = vpow.pop %v3278
        %v3280 = vmul.f32 %v3227, 1.442695
        %v3281 = vpow.pop %v3280
        %v3282 = vmul.f32 %v3228, 1.442695
        %v3283 = vpow.pop %v3282
        %v3284 = vmul.f32 %v3229, 1.442695
        %v3285 = vpow.pop %v3284
        %v3286 = vmul.f32 %v3230, 1.442695
        %v3287 = vpow.pop %v3286
        %v3288 = vmul.f32 %v3231, 1.442695
        %v3289 = vpow.pop %v3288
        %v3290 = vmul.f32 %v3232, 1.442695
        %v3291 = vpow.pop %v3290
        %v3292 = vmul.f32 %v3233, 1.442695
        %v3293 = vpow.pop %v3292
        %v3294 = vmul.f32 %v3234, 1.442695
        %v3295 = vpow.pop %v3294
        %v3296 = vmul.f32 %v3235, 1.442695
        %v3297 = vpow.pop %v3296
        %v3298 = vmul.f32 %v3236, 1.442695
        %v3299 = vpow.pop %v3298
        %v3300 = vmul.f32 %v3237, 1.442695
        %v3301 = vpow.pop %v3300
        %v3302 = vmul.f32 %v3238, 1.442695
        %v3303 = vpow.pop %v3302
        %v3304 = vmul.f32 %v3239, 1.442695
        %v3305 = vpow.pop %v3304
        %v3306 = vmul.f32 %v3240, 1.442695
        %v3307 = vpow.pop %v3306
        %v3308 = vmul.f32 %v3241, 1.442695
        %v3309 = vpow.pop %v3308
        %v3310 = vmul.f32 %v3242, 1.442695
        %v3311 = vpow.pop %v3310
        %v3312 = vmul.f32 %v3243, 1.442695
        %v3313 = vpow.pop %v3312
        %v3314 = vmul.f32 %v3244, 1.442695
        %v3315 = vpow.pop %v3314
        %v3316 = vmul.f32 %v3245, 1.442695
        %v3317 = vpow.pop %v3316
        %v3318 = vmul.f32 %v3246, 1.442695
        %v3319 = vpow.pop %v3318
        %v3320 = vmul.f32 %v3247, 1.442695
        %v3321 = vpow.pop %v3320
        %v3322 = vmul.f32 %v3248, 1.442695
        %v3323 = vpow.pop %v3322
        %v3324 = vmul.f32 %v3249, 1.442695
        %v3325 = vpow.pop %v3324
        %v3326 = vmul.f32 %v3250, 1.442695
        %v3327 = vpow.pop %v3326
        %v3328 = vmul.f32 %v3251, 1.442695
        %v3329 = vpow.pop %v3328
        %v3330 = vmul.f32 %v3252, 1.442695
        %v3331 = vpow.pop %v3330
        %v3332 = vmul.f32 %v3253, 1.442695
        %v3333 = vpow.pop %v3332
        %v3334 = vmul.f32 %v3254, 1.442695
        %v3335 = vpow.pop %v3334
        %v3336 = vmul.f32 %v3255, 1.442695
        %v3337 = vpow.pop %v3336
        %v3338 = vmul.f32 %v3256, 1.442695
        %v3339 = vpow.pop %v3338
        %v3340 = vmul.f32 %v3257, 1.442695
        %v3341 = vpow.pop %v3340
        %v3342 = vmul.f32 %v3258, 1.442695
        %v3343 = vpow.pop %v3342
        %v3344 = vmul.f32 %v3259, 1.442695
        %v3345 = vpow.pop %v3344
        %v3346 = vmul.f32 %v3260, 1.442695
        %v3347 = vpow.pop %v3346
        %v3348 = vmul.f32 %v3261, 1.442695
        %v3349 = vpow.pop %v3348
        %v3350 = vmul.f32 %v3262, 1.442695
        %v3351 = vpow.pop %v3350
        %v3352 = vmul.f32 %v3263, 1.442695
        %v3353 = vpow.pop %v3352
        %v3354 = vmul.f32 %v3264, 1.442695
        %v3355 = vpow.pop %v3354
        %v3356 = vmul.f32 %v3265, 1.442695
        %v3357 = vpow.pop %v3356
        %v3358 = vmul.f32 %v3266, 1.442695
        %v3359 = vpow.pop %v3358
        %v3360 = vmul.f32 %v3267, 1.442695
        %v3361 = vpow.pop %v3360
        %v3362 = vmul.f32 %v3268, 1.442695
        %v3363 = vpow.pop %v3362
        %v3364 = vmul.f32 %v3269, 1.442695
        %v3365 = vpow.pop %v3364
        %v3366 = vsel %vm3125, %v3273, 0.0
        %v3367 = vadd.f32 %v3271, %v3366
        %3368 = vadd.xlane.f32.xlu0 %v3367
        %v3369 = vpop.xlane.xlu0 %3368
        %v3370 = vsel %vm3125, %v3277, 0.0
        %v3371 = vadd.f32 %v3275, %v3370
        %3372 = vadd.xlane.f32.xlu0 %v3371
        %v3373 = vpop.xlane.xlu0 %3372
        %v3374 = vsel %vm3125, %v3281, 0.0
        %v3375 = vadd.f32 %v3279, %v3374
        %3376 = vadd.xlane.f32.xlu0 %v3375
        %v3377 = vpop.xlane.xlu0 %3376
        %v3378 = vsel %vm3125, %v3285, 0.0
        %v3379 = vadd.f32 %v3283, %v3378
        %3380 = vadd.xlane.f32.xlu0 %v3379
        %v3381 = vpop.xlane.xlu0 %3380
        %v3382 = vsel %vm3125, %v3289, 0.0
        %v3383 = vadd.f32 %v3287, %v3382
        %3384 = vadd.xlane.f32.xlu0 %v3383
        %v3385 = vpop.xlane.xlu0 %3384
        %v3386 = vsel %vm3125, %v3293, 0.0
        %v3387 = vadd.f32 %v3291, %v3386
        %3388 = vadd.xlane.f32.xlu0 %v3387
        %v3389 = vpop.xlane.xlu0 %3388
        %v3390 = vsel %vm3125, %v3297, 0.0
        %v3391 = vadd.f32 %v3295, %v3390
        %3392 = vadd.xlane.f32.xlu0 %v3391
        %v3393 = vpop.xlane.xlu0 %3392
        %v3394 = vsel %vm3125, %v3301, 0.0
        %v3395 = vadd.f32 %v3299, %v3394
        %3396 = vadd.xlane.f32.xlu0 %v3395
        %v3397 = vpop.xlane.xlu0 %3396
        %v3398 = vsel %vm3125, %v3305, 0.0
        %v3399 = vadd.f32 %v3303, %v3398
        %3400 = vadd.xlane.f32.xlu0 %v3399
        %v3401 = vpop.xlane.xlu0 %3400
        %v3402 = vsel %vm3125, %v3309, 0.0
        %v3403 = vadd.f32 %v3307, %v3402
        %3404 = vadd.xlane.f32.xlu0 %v3403
        %v3405 = vpop.xlane.xlu0 %3404
        %v3406 = vsel %vm3125, %v3313, 0.0
        %v3407 = vadd.f32 %v3311, %v3406
        %3408 = vadd.xlane.f32.xlu0 %v3407
        %v3409 = vpop.xlane.xlu0 %3408
        %v3410 = vsel %vm3125, %v3317, 0.0
        %v3411 = vadd.f32 %v3315, %v3410
        %3412 = vadd.xlane.f32.xlu0 %v3411
        %v3413 = vpop.xlane.xlu0 %3412
        %v3414 = vsel %vm3125, %v3321, 0.0
        %v3415 = vadd.f32 %v3319, %v3414
        %3416 = vadd.xlane.f32.xlu0 %v3415
        %v3417 = vpop.xlane.xlu0 %3416
        %v3418 = vsel %vm3125, %v3325, 0.0
        %v3419 = vadd.f32 %v3323, %v3418
        %3420 = vadd.xlane.f32.xlu0 %v3419
        %v3421 = vpop.xlane.xlu0 %3420
        %v3422 = vsel %vm3125, %v3329, 0.0
        %v3423 = vadd.f32 %v3327, %v3422
        %3424 = vadd.xlane.f32.xlu0 %v3423
        %v3425 = vpop.xlane.xlu0 %3424
        %v3426 = vsel %vm3125, %v3333, 0.0
        %v3427 = vadd.f32 %v3331, %v3426
        %3428 = vadd.xlane.f32.xlu0 %v3427
        %v3429 = vpop.xlane.xlu0 %3428
        %v3430 = vsel %vm3125, %v3337, 0.0
        %v3431 = vadd.f32 %v3335, %v3430
        %3432 = vadd.xlane.f32.xlu0 %v3431
        %v3433 = vpop.xlane.xlu0 %3432
        %v3434 = vsel %vm3125, %v3341, 0.0
        %v3435 = vadd.f32 %v3339, %v3434
        %3436 = vadd.xlane.f32.xlu0 %v3435
        %v3437 = vpop.xlane.xlu0 %3436
        %v3438 = vsel %vm3125, %v3345, 0.0
        %v3439 = vadd.f32 %v3343, %v3438
        %3440 = vadd.xlane.f32.xlu0 %v3439
        %v3441 = vpop.xlane.xlu0 %3440
        %v3442 = vsel %vm3125, %v3349, 0.0
        %v3443 = vadd.f32 %v3347, %v3442
        %3444 = vadd.xlane.f32.xlu0 %v3443
        %v3445 = vpop.xlane.xlu0 %3444
        %v3446 = vsel %vm3125, %v3353, 0.0
        %v3447 = vadd.f32 %v3351, %v3446
        %3448 = vadd.xlane.f32.xlu0 %v3447
        %v3449 = vpop.xlane.xlu0 %3448
        %v3450 = vsel %vm3125, %v3357, 0.0
        %v3451 = vadd.f32 %v3355, %v3450
        %3452 = vadd.xlane.f32.xlu0 %v3451
        %v3453 = vpop.xlane.xlu0 %3452
        %v3454 = vsel %vm3125, %v3361, 0.0
        %v3455 = vadd.f32 %v3359, %v3454
        %3456 = vadd.xlane.f32.xlu0 %v3455
        %v3457 = vpop.xlane.xlu0 %3456
        %v3458 = vsel %vm3125, %v3365, 0.0
        %v3459 = vadd.f32 %v3363, %v3458
        %3460 = vadd.xlane.f32.xlu0 %v3459
        %v3461 = vpop.xlane.xlu0 %3460
        %v3462 = vrcp.pop %v3369
        %v3463 = vmul.f32 %v3369, %v3462
        %v3464 = vsub.f32 1.0, %v3463
        %v3465 = vmul.f32 %v3462, %v3464
        %v3466 = vadd.f32 %v3462, %v3465
        %vm3467 = vweird.f32 %v3369
        %vm3468 = vweird.f32 %v3462
        %vm3469 = vmor %vm3467, %vm3468
        %v3470 = vsel %vm3469, %v3462, %v3466
        %v3471 = vand.u32 2147483647, %v3369
        %vm3472 = vcmp.eq.f32.partialorder %v3471, 8.507059e+37
        %v3473 = vand.u32 %v3369, 2147483648
        %v3474 = vor.u32 1.1754944e-38, %v3473
        %v3475 = vsel %vm3472, %v3474, %v3470
        %v3476 = vmul.f32 %v3271, %v3475
        %v3477 = vmul.f32 %v3273, %v3475
        %v3478 = vrcp.pop %v3373
        %v3479 = vmul.f32 %v3373, %v3478
        %v3480 = vsub.f32 1.0, %v3479
        %v3481 = vmul.f32 %v3478, %v3480
        %v3482 = vadd.f32 %v3478, %v3481
        %vm3483 = vweird.f32 %v3373
        %vm3484 = vweird.f32 %v3478
        %vm3485 = vmor %vm3483, %vm3484
        %v3486 = vsel %vm3485, %v3478, %v3482
        %v3487 = vand.u32 2147483647, %v3373
        %vm3488 = vcmp.eq.f32.partialorder %v3487, 8.507059e+37
        %v3489 = vand.u32 %v3373, 2147483648
        %v3490 = vor.u32 1.1754944e-38, %v3489
        %v3491 = vsel %vm3488, %v3490, %v3486
        %v3492 = vmul.f32 %v3275, %v3491
        %v3493 = vmul.f32 %v3277, %v3491
        %v3494 = vrcp.pop %v3377
        %v3495 = vmul.f32 %v3377, %v3494
        %v3496 = vsub.f32 1.0, %v3495
        %v3497 = vmul.f32 %v3494, %v3496
        %v3498 = vadd.f32 %v3494, %v3497
        %vm3499 = vweird.f32 %v3377
        %vm3500 = vweird.f32 %v3494
        %vm3501 = vmor %vm3499, %vm3500
        %v3502 = vsel %vm3501, %v3494, %v3498
        %v3503 = vand.u32 2147483647, %v3377
        %vm3504 = vcmp.eq.f32.partialorder %v3503, 8.507059e+37
        %v3505 = vand.u32 %v3377, 2147483648
        %v3506 = vor.u32 1.1754944e-38, %v3505
        %v3507 = vsel %vm3504, %v3506, %v3502
        %v3508 = vmul.f32 %v3279, %v3507
        %v3509 = vmul.f32 %v3281, %v3507
        %v3510 = vrcp.pop %v3381
        %v3511 = vmul.f32 %v3381, %v3510
        %v3512 = vsub.f32 1.0, %v3511
        %v3513 = vmul.f32 %v3510, %v3512
        %v3514 = vadd.f32 %v3510, %v3513
        %vm3515 = vweird.f32 %v3381
        %vm3516 = vweird.f32 %v3510
        %vm3517 = vmor %vm3515, %vm3516
        %v3518 = vsel %vm3517, %v3510, %v3514
        %v3519 = vand.u32 2147483647, %v3381
        %vm3520 = vcmp.eq.f32.partialorder %v3519, 8.507059e+37
        %v3521 = vand.u32 %v3381, 2147483648
        %v3522 = vor.u32 1.1754944e-38, %v3521
        %v3523 = vsel %vm3520, %v3522, %v3518
        %v3524 = vmul.f32 %v3283, %v3523
        %v3525 = vmul.f32 %v3285, %v3523
        %v3526 = vrcp.pop %v3385
        %v3527 = vmul.f32 %v3385, %v3526
        %v3528 = vsub.f32 1.0, %v3527
        %v3529 = vmul.f32 %v3526, %v3528
        %v3530 = vadd.f32 %v3526, %v3529
        %vm3531 = vweird.f32 %v3385
        %vm3532 = vweird.f32 %v3526
        %vm3533 = vmor %vm3531, %vm3532
        %v3534 = vsel %vm3533, %v3526, %v3530
        %v3535 = vand.u32 2147483647, %v3385
        %vm3536 = vcmp.eq.f32.partialorder %v3535, 8.507059e+37
        %v3537 = vand.u32 %v3385, 2147483648
        %v3538 = vor.u32 1.1754944e-38, %v3537
        %v3539 = vsel %vm3536, %v3538, %v3534
        %v3540 = vmul.f32 %v3287, %v3539
        %v3541 = vmul.f32 %v3289, %v3539
        %v3542 = vrcp.pop %v3389
        %v3543 = vmul.f32 %v3389, %v3542
        %v3544 = vsub.f32 1.0, %v3543
        %v3545 = vmul.f32 %v3542, %v3544
        %v3546 = vadd.f32 %v3542, %v3545
        %vm3547 = vweird.f32 %v3389
        %vm3548 = vweird.f32 %v3542
        %vm3549 = vmor %vm3547, %vm3548
        %v3550 = vsel %vm3549, %v3542, %v3546
        %v3551 = vand.u32 2147483647, %v3389
        %vm3552 = vcmp.eq.f32.partialorder %v3551, 8.507059e+37
        %v3553 = vand.u32 %v3389, 2147483648
        %v3554 = vor.u32 1.1754944e-38, %v3553
        %v3555 = vsel %vm3552, %v3554, %v3550
        %v3556 = vmul.f32 %v3291, %v3555
        %v3557 = vmul.f32 %v3293, %v3555
        %v3558 = vrcp.pop %v3393
        %v3559 = vmul.f32 %v3393, %v3558
        %v3560 = vsub.f32 1.0, %v3559
        %v3561 = vmul.f32 %v3558, %v3560
        %v3562 = vadd.f32 %v3558, %v3561
        %vm3563 = vweird.f32 %v3393
        %vm3564 = vweird.f32 %v3558
        %vm3565 = vmor %vm3563, %vm3564
        %v3566 = vsel %vm3565, %v3558, %v3562
        %v3567 = vand.u32 2147483647, %v3393
        %vm3568 = vcmp.eq.f32.partialorder %v3567, 8.507059e+37
        %v3569 = vand.u32 %v3393, 2147483648
        %v3570 = vor.u32 1.1754944e-38, %v3569
        %v3571 = vsel %vm3568, %v3570, %v3566
        %v3572 = vmul.f32 %v3295, %v3571
        %v3573 = vmul.f32 %v3297, %v3571
        %v3574 = vrcp.pop %v3397
        %v3575 = vmul.f32 %v3397, %v3574
        %v3576 = vsub.f32 1.0, %v3575
        %v3577 = vmul.f32 %v3574, %v3576
        %v3578 = vadd.f32 %v3574, %v3577
        %vm3579 = vweird.f32 %v3397
        %vm3580 = vweird.f32 %v3574
        %vm3581 = vmor %vm3579, %vm3580
        %v3582 = vsel %vm3581, %v3574, %v3578
        %v3583 = vand.u32 2147483647, %v3397
        %vm3584 = vcmp.eq.f32.partialorder %v3583, 8.507059e+37
        %v3585 = vand.u32 %v3397, 2147483648
        %v3586 = vor.u32 1.1754944e-38, %v3585
        %v3587 = vsel %vm3584, %v3586, %v3582
        %v3588 = vmul.f32 %v3299, %v3587
        %v3589 = vmul.f32 %v3301, %v3587
        %v3590 = vrcp.pop %v3401
        %v3591 = vmul.f32 %v3401, %v3590
        %v3592 = vsub.f32 1.0, %v3591
        %v3593 = vmul.f32 %v3590, %v3592
        %v3594 = vadd.f32 %v3590, %v3593
        %vm3595 = vweird.f32 %v3401
        %vm3596 = vweird.f32 %v3590
        %vm3597 = vmor %vm3595, %vm3596
        %v3598 = vsel %vm3597, %v3590, %v3594
        %v3599 = vand.u32 2147483647, %v3401
        %vm3600 = vcmp.eq.f32.partialorder %v3599, 8.507059e+37
        %v3601 = vand.u32 %v3401, 2147483648
        %v3602 = vor.u32 1.1754944e-38, %v3601
        %v3603 = vsel %vm3600, %v3602, %v3598
        %v3604 = vmul.f32 %v3303, %v3603
        %v3605 = vmul.f32 %v3305, %v3603
        %v3606 = vrcp.pop %v3405
        %v3607 = vmul.f32 %v3405, %v3606
        %v3608 = vsub.f32 1.0, %v3607
        %v3609 = vmul.f32 %v3606, %v3608
        %v3610 = vadd.f32 %v3606, %v3609
        %vm3611 = vweird.f32 %v3405
        %vm3612 = vweird.f32 %v3606
        %vm3613 = vmor %vm3611, %vm3612
        %v3614 = vsel %vm3613, %v3606, %v3610
        %v3615 = vand.u32 2147483647, %v3405
        %vm3616 = vcmp.eq.f32.partialorder %v3615, 8.507059e+37
        %v3617 = vand.u32 %v3405, 2147483648
        %v3618 = vor.u32 1.1754944e-38, %v3617
        %v3619 = vsel %vm3616, %v3618, %v3614
        %v3620 = vmul.f32 %v3307, %v3619
        %v3621 = vmul.f32 %v3309, %v3619
        %v3622 = vrcp.pop %v3409
        %v3623 = vmul.f32 %v3409, %v3622
        %v3624 = vsub.f32 1.0, %v3623
        %v3625 = vmul.f32 %v3622, %v3624
        %v3626 = vadd.f32 %v3622, %v3625
        %vm3627 = vweird.f32 %v3409
        %vm3628 = vweird.f32 %v3622
        %vm3629 = vmor %vm3627, %vm3628
        %v3630 = vsel %vm3629, %v3622, %v3626
        %v3631 = vand.u32 2147483647, %v3409
        %vm3632 = vcmp.eq.f32.partialorder %v3631, 8.507059e+37
        %v3633 = vand.u32 %v3409, 2147483648
        %v3634 = vor.u32 1.1754944e-38, %v3633
        %v3635 = vsel %vm3632, %v3634, %v3630
        %v3636 = vmul.f32 %v3311, %v3635
        %v3637 = vmul.f32 %v3313, %v3635
        %v3638 = vrcp.pop %v3413
        %v3639 = vmul.f32 %v3413, %v3638
        %v3640 = vsub.f32 1.0, %v3639
        %v3641 = vmul.f32 %v3638, %v3640
        %v3642 = vadd.f32 %v3638, %v3641
        %vm3643 = vweird.f32 %v3413
        %vm3644 = vweird.f32 %v3638
        %vm3645 = vmor %vm3643, %vm3644
        %v3646 = vsel %vm3645, %v3638, %v3642
        %v3647 = vand.u32 2147483647, %v3413
        %vm3648 = vcmp.eq.f32.partialorder %v3647, 8.507059e+37
        %v3649 = vand.u32 %v3413, 2147483648
        %v3650 = vor.u32 1.1754944e-38, %v3649
        %v3651 = vsel %vm3648, %v3650, %v3646
        %v3652 = vmul.f32 %v3315, %v3651
        %v3653 = vmul.f32 %v3317, %v3651
        %v3654 = vrcp.pop %v3417
        %v3655 = vmul.f32 %v3417, %v3654
        %v3656 = vsub.f32 1.0, %v3655
        %v3657 = vmul.f32 %v3654, %v3656
        %v3658 = vadd.f32 %v3654, %v3657
        %vm3659 = vweird.f32 %v3417
        %vm3660 = vweird.f32 %v3654
        %vm3661 = vmor %vm3659, %vm3660
        %v3662 = vsel %vm3661, %v3654, %v3658
        %v3663 = vand.u32 2147483647, %v3417
        %vm3664 = vcmp.eq.f32.partialorder %v3663, 8.507059e+37
        %v3665 = vand.u32 %v3417, 2147483648
        %v3666 = vor.u32 1.1754944e-38, %v3665
        %v3667 = vsel %vm3664, %v3666, %v3662
        %v3668 = vmul.f32 %v3319, %v3667
        %v3669 = vmul.f32 %v3321, %v3667
        %v3670 = vrcp.pop %v3421
        %v3671 = vmul.f32 %v3421, %v3670
        %v3672 = vsub.f32 1.0, %v3671
        %v3673 = vmul.f32 %v3670, %v3672
        %v3674 = vadd.f32 %v3670, %v3673
        %vm3675 = vweird.f32 %v3421
        %vm3676 = vweird.f32 %v3670
        %vm3677 = vmor %vm3675, %vm3676
        %v3678 = vsel %vm3677, %v3670, %v3674
        %v3679 = vand.u32 2147483647, %v3421
        %vm3680 = vcmp.eq.f32.partialorder %v3679, 8.507059e+37
        %v3681 = vand.u32 %v3421, 2147483648
        %v3682 = vor.u32 1.1754944e-38, %v3681
        %v3683 = vsel %vm3680, %v3682, %v3678
        %v3684 = vmul.f32 %v3323, %v3683
        %v3685 = vmul.f32 %v3325, %v3683
        %v3686 = vrcp.pop %v3425
        %v3687 = vmul.f32 %v3425, %v3686
        %v3688 = vsub.f32 1.0, %v3687
        %v3689 = vmul.f32 %v3686, %v3688
        %v3690 = vadd.f32 %v3686, %v3689
        %vm3691 = vweird.f32 %v3425
        %vm3692 = vweird.f32 %v3686
        %vm3693 = vmor %vm3691, %vm3692
        %v3694 = vsel %vm3693, %v3686, %v3690
        %v3695 = vand.u32 2147483647, %v3425
        %vm3696 = vcmp.eq.f32.partialorder %v3695, 8.507059e+37
        %v3697 = vand.u32 %v3425, 2147483648
        %v3698 = vor.u32 1.1754944e-38, %v3697
        %v3699 = vsel %vm3696, %v3698, %v3694
        %v3700 = vmul.f32 %v3327, %v3699
        %v3701 = vmul.f32 %v3329, %v3699
        %v3702 = vrcp.pop %v3429
        %v3703 = vmul.f32 %v3429, %v3702
        %v3704 = vsub.f32 1.0, %v3703
        %v3705 = vmul.f32 %v3702, %v3704
        %v3706 = vadd.f32 %v3702, %v3705
        %vm3707 = vweird.f32 %v3429
        %vm3708 = vweird.f32 %v3702
        %vm3709 = vmor %vm3707, %vm3708
        %v3710 = vsel %vm3709, %v3702, %v3706
        %v3711 = vand.u32 2147483647, %v3429
        %vm3712 = vcmp.eq.f32.partialorder %v3711, 8.507059e+37
        %v3713 = vand.u32 %v3429, 2147483648
        %v3714 = vor.u32 1.1754944e-38, %v3713
        %v3715 = vsel %vm3712, %v3714, %v3710
        %v3716 = vmul.f32 %v3331, %v3715
        %v3717 = vmul.f32 %v3333, %v3715
        %v3718 = vrcp.pop %v3433
        %v3719 = vmul.f32 %v3433, %v3718
        %v3720 = vsub.f32 1.0, %v3719
        %v3721 = vmul.f32 %v3718, %v3720
        %v3722 = vadd.f32 %v3718, %v3721
        %vm3723 = vweird.f32 %v3433
        %vm3724 = vweird.f32 %v3718
        %vm3725 = vmor %vm3723, %vm3724
        %v3726 = vsel %vm3725, %v3718, %v3722
        %v3727 = vand.u32 2147483647, %v3433
        %vm3728 = vcmp.eq.f32.partialorder %v3727, 8.507059e+37
        %v3729 = vand.u32 %v3433, 2147483648
        %v3730 = vor.u32 1.1754944e-38, %v3729
        %v3731 = vsel %vm3728, %v3730, %v3726
        %v3732 = vmul.f32 %v3335, %v3731
        %v3733 = vmul.f32 %v3337, %v3731
        %v3734 = vrcp.pop %v3437
        %v3735 = vmul.f32 %v3437, %v3734
        %v3736 = vsub.f32 1.0, %v3735
        %v3737 = vmul.f32 %v3734, %v3736
        %v3738 = vadd.f32 %v3734, %v3737
        %vm3739 = vweird.f32 %v3437
        %vm3740 = vweird.f32 %v3734
        %vm3741 = vmor %vm3739, %vm3740
        %v3742 = vsel %vm3741, %v3734, %v3738
        %v3743 = vand.u32 2147483647, %v3437
        %vm3744 = vcmp.eq.f32.partialorder %v3743, 8.507059e+37
        %v3745 = vand.u32 %v3437, 2147483648
        %v3746 = vor.u32 1.1754944e-38, %v3745
        %v3747 = vsel %vm3744, %v3746, %v3742
        %v3748 = vmul.f32 %v3339, %v3747
        %v3749 = vmul.f32 %v3341, %v3747
        %v3750 = vrcp.pop %v3441
        %v3751 = vmul.f32 %v3441, %v3750
        %v3752 = vsub.f32 1.0, %v3751
        %v3753 = vmul.f32 %v3750, %v3752
        %v3754 = vadd.f32 %v3750, %v3753
        %vm3755 = vweird.f32 %v3441
        %vm3756 = vweird.f32 %v3750
        %vm3757 = vmor %vm3755, %vm3756
        %v3758 = vsel %vm3757, %v3750, %v3754
        %v3759 = vand.u32 2147483647, %v3441
        %vm3760 = vcmp.eq.f32.partialorder %v3759, 8.507059e+37
        %v3761 = vand.u32 %v3441, 2147483648
        %v3762 = vor.u32 1.1754944e-38, %v3761
        %v3763 = vsel %vm3760, %v3762, %v3758
        %v3764 = vmul.f32 %v3343, %v3763
        %v3765 = vmul.f32 %v3345, %v3763
        %v3766 = vrcp.pop %v3445
        %v3767 = vmul.f32 %v3445, %v3766
        %v3768 = vsub.f32 1.0, %v3767
        %v3769 = vmul.f32 %v3766, %v3768
        %v3770 = vadd.f32 %v3766, %v3769
        %vm3771 = vweird.f32 %v3445
        %vm3772 = vweird.f32 %v3766
        %vm3773 = vmor %vm3771, %vm3772
        %v3774 = vsel %vm3773, %v3766, %v3770
        %v3775 = vand.u32 2147483647, %v3445
        %vm3776 = vcmp.eq.f32.partialorder %v3775, 8.507059e+37
        %v3777 = vand.u32 %v3445, 2147483648
        %v3778 = vor.u32 1.1754944e-38, %v3777
        %v3779 = vsel %vm3776, %v3778, %v3774
        %v3780 = vmul.f32 %v3347, %v3779
        %v3781 = vmul.f32 %v3349, %v3779
        %v3782 = vrcp.pop %v3449
        %v3783 = vmul.f32 %v3449, %v3782
        %v3784 = vsub.f32 1.0, %v3783
        %v3785 = vmul.f32 %v3782, %v3784
        %v3786 = vadd.f32 %v3782, %v3785
        %vm3787 = vweird.f32 %v3449
        %vm3788 = vweird.f32 %v3782
        %vm3789 = vmor %vm3787, %vm3788
        %v3790 = vsel %vm3789, %v3782, %v3786
        %v3791 = vand.u32 2147483647, %v3449
        %vm3792 = vcmp.eq.f32.partialorder %v3791, 8.507059e+37
        %v3793 = vand.u32 %v3449, 2147483648
        %v3794 = vor.u32 1.1754944e-38, %v3793
        %v3795 = vsel %vm3792, %v3794, %v3790
        %v3796 = vmul.f32 %v3351, %v3795
        %v3797 = vmul.f32 %v3353, %v3795
        %v3798 = vrcp.pop %v3453
        %v3799 = vmul.f32 %v3453, %v3798
        %v3800 = vsub.f32 1.0, %v3799
        %v3801 = vmul.f32 %v3798, %v3800
        %v3802 = vadd.f32 %v3798, %v3801
        %vm3803 = vweird.f32 %v3453
        %vm3804 = vweird.f32 %v3798
        %vm3805 = vmor %vm3803, %vm3804
        %v3806 = vsel %vm3805, %v3798, %v3802
        %v3807 = vand.u32 2147483647, %v3453
        %vm3808 = vcmp.eq.f32.partialorder %v3807, 8.507059e+37
        %v3809 = vand.u32 %v3453, 2147483648
        %v3810 = vor.u32 1.1754944e-38, %v3809
        %v3811 = vsel %vm3808, %v3810, %v3806
        %v3812 = vmul.f32 %v3355, %v3811
        %v3813 = vmul.f32 %v3357, %v3811
        %v3814 = vrcp.pop %v3457
        %v3815 = vmul.f32 %v3457, %v3814
        %v3816 = vsub.f32 1.0, %v3815
        %v3817 = vmul.f32 %v3814, %v3816
        %v3818 = vadd.f32 %v3814, %v3817
        %vm3819 = vweird.f32 %v3457
        %vm3820 = vweird.f32 %v3814
        %vm3821 = vmor %vm3819, %vm3820
        %v3822 = vsel %vm3821, %v3814, %v3818
        %v3823 = vand.u32 2147483647, %v3457
        %vm3824 = vcmp.eq.f32.partialorder %v3823, 8.507059e+37
        %v3825 = vand.u32 %v3457, 2147483648
        %v3826 = vor.u32 1.1754944e-38, %v3825
        %v3827 = vsel %vm3824, %v3826, %v3822
        %v3828 = vmul.f32 %v3359, %v3827
        %v3829 = vmul.f32 %v3361, %v3827
        %v3830 = vrcp.pop %v3461
        %v3831 = vmul.f32 %v3461, %v3830
        %v3832 = vsub.f32 1.0, %v3831
        %v3833 = vmul.f32 %v3830, %v3832
        %v3834 = vadd.f32 %v3830, %v3833
        %vm3835 = vweird.f32 %v3461
        %vm3836 = vweird.f32 %v3830
        %vm3837 = vmor %vm3835, %vm3836
        %v3838 = vsel %vm3837, %v3830, %v3834
        %v3839 = vand.u32 2147483647, %v3461
        %vm3840 = vcmp.eq.f32.partialorder %v3839, 8.507059e+37
        %v3841 = vand.u32 %v3461, 2147483648
        %v3842 = vor.u32 1.1754944e-38, %v3841
        %v3843 = vsel %vm3840, %v3842, %v3838
        %v3844 = vmul.f32 %v3363, %v3843
        %v3845 = vmul.f32 %v3365, %v3843
        %v3847 = vsel %vm3125, %v2764, 0
        %v3850 = vsel %vm3125, %v2767, 0
        %v3853 = vsel %vm3125, %v2770, 0
        %v3856 = vsel %vm3125, %v2773, 0
        %v3859 = vsel %vm3125, %v2776, 0
        %v3862 = vsel %vm3125, %v2779, 0
        %v3865 = vsel %vm3125, %v2782, 0
        %v3868 = vsel %vm3125, %v2785, 0
        %v3871 = vsel %vm3125, %v2788, 0
        %v3874 = vsel %vm3125, %v2791, 0
        %v3877 = vsel %vm3125, %v2794, 0
        %v3880 = vsel %vm3125, %v2797, 0
        %v3883 = vsel %vm3125, %v2800, 0
        %v3886 = vsel %vm3125, %v2803, 0
        %v3889 = vsel %vm3125, %v2806, 0
        %v3892 = vsel %vm3125, %v2809, 0
        %v3895 = vsel %vm3125, %v3477, 0
        %v3898 = vsel %vm3125, %v3493, 0
        %v3901 = vsel %vm3125, %v3509, 0
        %v3904 = vsel %vm3125, %v3525, 0
        %v3907 = vsel %vm3125, %v3541, 0
        %v3910 = vsel %vm3125, %v3557, 0
        %v3913 = vsel %vm3125, %v3573, 0
        %v3916 = vsel %vm3125, %v3589, 0
        %v3919 = vsel %vm3125, %v3605, 0
        %v3922 = vsel %vm3125, %v3621, 0
        %v3925 = vsel %vm3125, %v3637, 0
        %v3928 = vsel %vm3125, %v3653, 0
        %v3931 = vsel %vm3125, %v3669, 0
        %v3934 = vsel %vm3125, %v3685, 0
        %v3937 = vsel %vm3125, %v3701, 0
        %v3940 = vsel %vm3125, %v3717, 0
        %v3943 = vsel %vm3125, %v3733, 0
        %v3946 = vsel %vm3125, %v3749, 0
        %v3949 = vsel %vm3125, %v3765, 0
        %v3952 = vsel %vm3125, %v3781, 0
        %v3955 = vsel %vm3125, %v3797, 0
        %v3958 = vsel %vm3125, %v3813, 0
        %v3961 = vsel %vm3125, %v3829, 0
        %v3964 = vsel %vm3125, %v3845, 0
        %3966 = vmatpush.xpose.msra.mxu0 %v3716
        %3967 = vmatpush.xpose.msra.mxu0 %v3700
        %3968 = vmatpush.xpose.msra.mxu0 %v3684
        %3969 = vmatpush.xpose.msra.mxu0 %v3668
        %3970 = vmatpush.xpose.msra.mxu0 %v3652
        %3971 = vmatpush.xpose.msra.mxu0 %v3636
        %3972 = vmatpush.xpose.msra.mxu0 %v3620
        %3973 = vmatpush.xpose.msra.mxu0 %v3604
        %3974 = vmatpush.xpose.msra.mxu0 %v3588
        %3975 = vmatpush.xpose.msra.mxu0 %v3572
        %3976 = vmatpush.xpose.msra.mxu0 %v3556
        %3977 = vmatpush.xpose.msra.mxu0 %v3540
        %3978 = vmatpush.xpose.msra.mxu0 %v3524
        %3979 = vmatpush.xpose.msra.mxu0 %v3508
        %3980 = vmatpush.xpose.msra.mxu0 %v3492
        %3981 = vmatpush.xpose.msra.mxu0 %v3476
        %3982 = vmatmul.f32.gmra.mxu0 %v2687
        %v3983 = vpop.f32.mrf.mxu0
        %v3984 = vadd.f32 0.0, %v3983
        %3985 = vmatmul.f32.gmra.mxu0 %v2690
        %v3986 = vpop.f32.mrf.mxu0
        %v3987 = vadd.f32 0.0, %v3986
        %3988 = vmatmul.f32.gmra.mxu0 %v2693
        %v3989 = vpop.f32.mrf.mxu0
        %v3990 = vadd.f32 0.0, %v3989
        %3991 = vmatmul.f32.gmra.mxu0 %v2696
        %v3992 = vpop.f32.mrf.mxu0
        %v3993 = vadd.f32 0.0, %v3992
        %3994 = vmatmul.f32.gmra.mxu0 %v2699
        %v3995 = vpop.f32.mrf.mxu0
        %v3996 = vadd.f32 0.0, %v3995
        %3997 = vmatmul.f32.gmra.mxu0 %v2702
        %v3998 = vpop.f32.mrf.mxu0
        %v3999 = vadd.f32 0.0, %v3998
        %4000 = vmatmul.f32.gmra.mxu0 %v2705
        %v4001 = vpop.f32.mrf.mxu0
        %v4002 = vadd.f32 0.0, %v4001
        %4003 = vmatmul.f32.gmra.mxu0 %v2708
        %v4004 = vpop.f32.mrf.mxu0
        %v4005 = vadd.f32 0.0, %v4004
        %4006 = vmatmul.f32.gmra.mxu0 %v2711
        %v4007 = vpop.f32.mrf.mxu0
        %v4008 = vadd.f32 0.0, %v4007
        %4009 = vmatmul.f32.gmra.mxu0 %v2714
        %v4010 = vpop.f32.mrf.mxu0
        %v4011 = vadd.f32 0.0, %v4010
        %4012 = vmatmul.f32.gmra.mxu0 %v2717
        %v4013 = vpop.f32.mrf.mxu0
        %v4014 = vadd.f32 0.0, %v4013
        %4015 = vmatmul.f32.gmra.mxu0 %v2720
        %v4016 = vpop.f32.mrf.mxu0
        %v4017 = vadd.f32 0.0, %v4016
        %4018 = vmatmul.f32.gmra.mxu0 %v2723
        %v4019 = vpop.f32.mrf.mxu0
        %v4020 = vadd.f32 0.0, %v4019
        %4021 = vmatmul.f32.gmra.mxu0 %v2726
        %v4022 = vpop.f32.mrf.mxu0
        %v4023 = vadd.f32 0.0, %v4022
        %4024 = vmatmul.f32.gmra.mxu0 %v2729
        %v4025 = vpop.f32.mrf.mxu0
        %v4026 = vadd.f32 0.0, %v4025
        %4027 = vmatmul.f32.gmra.mxu0 %v2732
        %v4028 = vpop.f32.mrf.mxu0
        %v4029 = vadd.f32 0.0, %v4028
        %4030 = vdwg.mxu0
        %4031 = vmatpush.xpose.msra.mxu0 %v3940
        %4032 = vmatpush.xpose.msra.mxu0 %v3937
        %4033 = vmatpush.xpose.msra.mxu0 %v3934
        %4034 = vmatpush.xpose.msra.mxu0 %v3931
        %4035 = vmatpush.xpose.msra.mxu0 %v3928
        %4036 = vmatpush.xpose.msra.mxu0 %v3925
        %4037 = vmatpush.xpose.msra.mxu0 %v3922
        %4038 = vmatpush.xpose.msra.mxu0 %v3919
        %4039 = vmatpush.xpose.msra.mxu0 %v3916
        %4040 = vmatpush.xpose.msra.mxu0 %v3913
        %4041 = vmatpush.xpose.msra.mxu0 %v3910
        %4042 = vmatpush.xpose.msra.mxu0 %v3907
        %4043 = vmatpush.xpose.msra.mxu0 %v3904
        %4044 = vmatpush.xpose.msra.mxu0 %v3901
        %4045 = vmatpush.xpose.msra.mxu0 %v3898
        %4046 = vmatpush.xpose.msra.mxu0 %v3895
        %4047 = vmatmul.f32.gmra.mxu0 %v3847
        %v4048 = vpop.f32.mrf.mxu0
        %v4049 = vadd.f32 %v3984, %v4048
        %4050 = vmatmul.f32.gmra.mxu0 %v3850
        %v4051 = vpop.f32.mrf.mxu0
        %v4052 = vadd.f32 %v3987, %v4051
        %4053 = vmatmul.f32.gmra.mxu0 %v3853
        %v4054 = vpop.f32.mrf.mxu0
        %v4055 = vadd.f32 %v3990, %v4054
        %4056 = vmatmul.f32.gmra.mxu0 %v3856
        %v4057 = vpop.f32.mrf.mxu0
        %v4058 = vadd.f32 %v3993, %v4057
        %4059 = vmatmul.f32.gmra.mxu0 %v3859
        %v4060 = vpop.f32.mrf.mxu0
        %v4061 = vadd.f32 %v3996, %v4060
        %4062 = vmatmul.f32.gmra.mxu0 %v3862
        %v4063 = vpop.f32.mrf.mxu0
        %v4064 = vadd.f32 %v3999, %v4063
        %4065 = vmatmul.f32.gmra.mxu0 %v3865
        %v4066 = vpop.f32.mrf.mxu0
        %v4067 = vadd.f32 %v4002, %v4066
        %4068 = vmatmul.f32.gmra.mxu0 %v3868
        %v4069 = vpop.f32.mrf.mxu0
        %v4070 = vadd.f32 %v4005, %v4069
        %4071 = vmatmul.f32.gmra.mxu0 %v3871
        %v4072 = vpop.f32.mrf.mxu0
        %v4073 = vadd.f32 %v4008, %v4072
        %4074 = vmatmul.f32.gmra.mxu0 %v3874
        %v4075 = vpop.f32.mrf.mxu0
        %v4076 = vadd.f32 %v4011, %v4075
        %4077 = vmatmul.f32.gmra.mxu0 %v3877
        %v4078 = vpop.f32.mrf.mxu0
        %v4079 = vadd.f32 %v4014, %v4078
        %4080 = vmatmul.f32.gmra.mxu0 %v3880
        %v4081 = vpop.f32.mrf.mxu0
        %v4082 = vadd.f32 %v4017, %v4081
        %4083 = vmatmul.f32.gmra.mxu0 %v3883
        %v4084 = vpop.f32.mrf.mxu0
        %v4085 = vadd.f32 %v4020, %v4084
        %4086 = vmatmul.f32.gmra.mxu0 %v3886
        %v4087 = vpop.f32.mrf.mxu0
        %v4088 = vadd.f32 %v4023, %v4087
        %4089 = vmatmul.f32.gmra.mxu0 %v3889
        %v4090 = vpop.f32.mrf.mxu0
        %v4091 = vadd.f32 %v4026, %v4090
        %4092 = vmatmul.f32.gmra.mxu0 %v3892
        %v4093 = vpop.f32.mrf.mxu0
        %v4094 = vadd.f32 %v4029, %v4093
        %4095 = vdwg.mxu0
        %4096 = vmatpush.xpose.msra.mxu0 0.0
        %4097 = vmatpush.xpose.msra.mxu0 0.0
        %4098 = vmatpush.xpose.msra.mxu0 0.0
        %4099 = vmatpush.xpose.msra.mxu0 0.0
        %4100 = vmatpush.xpose.msra.mxu0 0.0
        %4101 = vmatpush.xpose.msra.mxu0 0.0
        %4102 = vmatpush.xpose.msra.mxu0 0.0
        %4103 = vmatpush.xpose.msra.mxu0 0.0
        %4104 = vmatpush.xpose.msra.mxu0 %v3844
        %4105 = vmatpush.xpose.msra.mxu0 %v3828
        %4106 = vmatpush.xpose.msra.mxu0 %v3812
        %4107 = vmatpush.xpose.msra.mxu0 %v3796
        %4108 = vmatpush.xpose.msra.mxu0 %v3780
        %4109 = vmatpush.xpose.msra.mxu0 %v3764
        %4110 = vmatpush.xpose.msra.mxu0 %v3748
        %4111 = vmatpush.xpose.msra.mxu0 %v3732
        %4112 = vmatmul.f32.gmra.mxu0 %v2687
        %v4113 = vpop.f32.mrf.mxu0
        %v4114 = vadd.f32 0.0, %v4113
        %4115 = vmatmul.f32.gmra.mxu0 %v2690
        %v4116 = vpop.f32.mrf.mxu0
        %v4117 = vadd.f32 0.0, %v4116
        %4118 = vmatmul.f32.gmra.mxu0 %v2693
        %v4119 = vpop.f32.mrf.mxu0
        %v4120 = vadd.f32 0.0, %v4119
        %4121 = vmatmul.f32.gmra.mxu0 %v2696
        %v4122 = vpop.f32.mrf.mxu0
        %v4123 = vadd.f32 0.0, %v4122
        %4124 = vmatmul.f32.gmra.mxu0 %v2699
        %v4125 = vpop.f32.mrf.mxu0
        %v4126 = vadd.f32 0.0, %v4125
        %4127 = vmatmul.f32.gmra.mxu0 %v2702
        %v4128 = vpop.f32.mrf.mxu0
        %v4129 = vadd.f32 0.0, %v4128
        %4130 = vmatmul.f32.gmra.mxu0 %v2705
        %v4131 = vpop.f32.mrf.mxu0
        %v4132 = vadd.f32 0.0, %v4131
        %4133 = vmatmul.f32.gmra.mxu0 %v2708
        %v4134 = vpop.f32.mrf.mxu0
        %v4135 = vadd.f32 0.0, %v4134
        %4136 = vmatmul.f32.gmra.mxu0 %v2711
        %v4137 = vpop.f32.mrf.mxu0
        %v4138 = vadd.f32 0.0, %v4137
        %4139 = vmatmul.f32.gmra.mxu0 %v2714
        %v4140 = vpop.f32.mrf.mxu0
        %v4141 = vadd.f32 0.0, %v4140
        %4142 = vmatmul.f32.gmra.mxu0 %v2717
        %v4143 = vpop.f32.mrf.mxu0
        %v4144 = vadd.f32 0.0, %v4143
        %4145 = vmatmul.f32.gmra.mxu0 %v2720
        %v4146 = vpop.f32.mrf.mxu0
        %v4147 = vadd.f32 0.0, %v4146
        %4148 = vmatmul.f32.gmra.mxu0 %v2723
        %v4149 = vpop.f32.mrf.mxu0
        %v4150 = vadd.f32 0.0, %v4149
        %4151 = vmatmul.f32.gmra.mxu0 %v2726
        %v4152 = vpop.f32.mrf.mxu0
        %v4153 = vadd.f32 0.0, %v4152
        %4154 = vmatmul.f32.gmra.mxu0 %v2729
        %v4155 = vpop.f32.mrf.mxu0
        %v4156 = vadd.f32 0.0, %v4155
        %4157 = vmatmul.f32.gmra.mxu0 %v2732
        %v4158 = vpop.f32.mrf.mxu0
        %v4159 = vadd.f32 0.0, %v4158
        %4160 = vdwg.mxu0
        %4161 = vmatpush.xpose.msra.mxu0 0.0
        %4162 = vmatpush.xpose.msra.mxu0 0.0
        %4163 = vmatpush.xpose.msra.mxu0 0.0
        %4164 = vmatpush.xpose.msra.mxu0 0.0
        %4165 = vmatpush.xpose.msra.mxu0 0.0
        %4166 = vmatpush.xpose.msra.mxu0 0.0
        %4167 = vmatpush.xpose.msra.mxu0 0.0
        %4168 = vmatpush.xpose.msra.mxu0 0.0
        %4169 = vmatpush.xpose.msra.mxu0 %v3964
        %4170 = vmatpush.xpose.msra.mxu0 %v3961
        %4171 = vmatpush.xpose.msra.mxu0 %v3958
        %4172 = vmatpush.xpose.msra.mxu0 %v3955
        %4173 = vmatpush.xpose.msra.mxu0 %v3952
        %4174 = vmatpush.xpose.msra.mxu0 %v3949
        %4175 = vmatpush.xpose.msra.mxu0 %v3946
        %4176 = vmatpush.xpose.msra.mxu0 %v3943
        %4177 = vmatmul.f32.gmra.mxu0 %v3847
        %v4178 = vpop.f32.mrf.mxu0
        %v4179 = vadd.f32 %v4114, %v4178
        %4180 = vmatmul.f32.gmra.mxu0 %v3850
        %v4181 = vpop.f32.mrf.mxu0
        %v4182 = vadd.f32 %v4117, %v4181
        %4183 = vmatmul.f32.gmra.mxu0 %v3853
        %v4184 = vpop.f32.mrf.mxu0
        %v4185 = vadd.f32 %v4120, %v4184
        %4186 = vmatmul.f32.gmra.mxu0 %v3856
        %v4187 = vpop.f32.mrf.mxu0
        %v4188 = vadd.f32 %v4123, %v4187
        %4189 = vmatmul.f32.gmra.mxu0 %v3859
        %v4190 = vpop.f32.mrf.mxu0
        %v4191 = vadd.f32 %v4126, %v4190
        %4192 = vmatmul.f32.gmra.mxu0 %v3862
        %v4193 = vpop.f32.mrf.mxu0
        %v4194 = vadd.f32 %v4129, %v4193
        %4195 = vmatmul.f32.gmra.mxu0 %v3865
        %v4196 = vpop.f32.mrf.mxu0
        %v4197 = vadd.f32 %v4132, %v4196
        %4198 = vmatmul.f32.gmra.mxu0 %v3868
        %v4199 = vpop.f32.mrf.mxu0
        %v4200 = vadd.f32 %v4135, %v4199
        %4201 = vmatmul.f32.gmra.mxu0 %v3871
        %v4202 = vpop.f32.mrf.mxu0
        %v4203 = vadd.f32 %v4138, %v4202
        %4204 = vmatmul.f32.gmra.mxu0 %v3874
        %v4205 = vpop.f32.mrf.mxu0
        %v4206 = vadd.f32 %v4141, %v4205
        %4207 = vmatmul.f32.gmra.mxu0 %v3877
        %v4208 = vpop.f32.mrf.mxu0
        %v4209 = vadd.f32 %v4144, %v4208
        %4210 = vmatmul.f32.gmra.mxu0 %v3880
        %v4211 = vpop.f32.mrf.mxu0
        %v4212 = vadd.f32 %v4147, %v4211
        %4213 = vmatmul.f32.gmra.mxu0 %v3883
        %v4214 = vpop.f32.mrf.mxu0
        %v4215 = vadd.f32 %v4150, %v4214
        %4216 = vmatmul.f32.gmra.mxu0 %v3886
        %v4217 = vpop.f32.mrf.mxu0
        %v4218 = vadd.f32 %v4153, %v4217
        %4219 = vmatmul.f32.gmra.mxu0 %v3889
        %v4220 = vpop.f32.mrf.mxu0
        %v4221 = vadd.f32 %v4156, %v4220
        %4222 = vmatmul.f32.gmra.mxu0 %v3892
        %v4223 = vpop.f32.mrf.mxu0
        %v4224 = vadd.f32 %v4159, %v4223
        %4225 = vdwg.mxu0
        %v4227 = vsel %vm3125, %v1108, 0
        %v4230 = vsel %vm3125, %v1111, 0
        %v4233 = vsel %vm3125, %v1114, 0
        %v4236 = vsel %vm3125, %v1117, 0
        %v4239 = vsel %vm3125, %v1120, 0
        %v4242 = vsel %vm3125, %v1123, 0
        %v4245 = vsel %vm3125, %v1126, 0
        %v4248 = vsel %vm3125, %v1129, 0
        %v4251 = vsel %vm3125, %v1132, 0
        %v4254 = vsel %vm3125, %v1135, 0
        %v4257 = vsel %vm3125, %v1138, 0
        %v4260 = vsel %vm3125, %v1141, 0
        %v4263 = vsel %vm3125, %v1144, 0
        %v4266 = vsel %vm3125, %v1147, 0
        %v4269 = vsel %vm3125, %v1150, 0
        %v4272 = vsel %vm3125, %v1153, 0
        %4274 = vmatpush.xpose.msra.mxu0 %v1040
        %4275 = vmatpush.xpose.msra.mxu0 %v1037
        %4276 = vmatpush.xpose.msra.mxu0 %v1034
        %4277 = vmatpush.xpose.msra.mxu0 %v1031
        %4278 = vmatpush.xpose.msra.mxu0 %v1028
        %4279 = vmatpush.xpose.msra.mxu0 %v1025
        %4280 = vmatpush.xpose.msra.mxu0 %v1022
        %4281 = vmatpush.xpose.msra.mxu0 %v1019
        %4282 = vmatpush.xpose.msra.mxu0 %v1016
        %4283 = vmatpush.xpose.msra.mxu0 %v1013
        %4284 = vmatpush.xpose.msra.mxu0 %v1010
        %4285 = vmatpush.xpose.msra.mxu0 %v1007
        %4286 = vmatpush.xpose.msra.mxu0 %v1004
        %4287 = vmatpush.xpose.msra.mxu0 %v1001
        %4288 = vmatpush.xpose.msra.mxu0 %v998
        %4289 = vmatpush.xpose.msra.mxu0 %v995
        %4290 = vmatmul.f32.gmra.mxu0 %v995
        %v4291 = vpop.f32.mrf.mxu0
        %v4292 = vadd.f32 0.0, %v4291
        %4293 = vmatmul.f32.gmra.mxu0 %v998
        %v4294 = vpop.f32.mrf.mxu0
        %v4295 = vadd.f32 0.0, %v4294
        %4296 = vmatmul.f32.gmra.mxu0 %v1001
        %v4297 = vpop.f32.mrf.mxu0
        %v4298 = vadd.f32 0.0, %v4297
        %4299 = vmatmul.f32.gmra.mxu0 %v1004
        %v4300 = vpop.f32.mrf.mxu0
        %v4301 = vadd.f32 0.0, %v4300
        %4302 = vmatmul.f32.gmra.mxu0 %v1007
        %v4303 = vpop.f32.mrf.mxu0
        %v4304 = vadd.f32 0.0, %v4303
        %4305 = vmatmul.f32.gmra.mxu0 %v1010
        %v4306 = vpop.f32.mrf.mxu0
        %v4307 = vadd.f32 0.0, %v4306
        %4308 = vmatmul.f32.gmra.mxu0 %v1013
        %v4309 = vpop.f32.mrf.mxu0
        %v4310 = vadd.f32 0.0, %v4309
        %4311 = vmatmul.f32.gmra.mxu0 %v1016
        %v4312 = vpop.f32.mrf.mxu0
        %v4313 = vadd.f32 0.0, %v4312
        %4314 = vmatmul.f32.gmra.mxu0 %v1019
        %v4315 = vpop.f32.mrf.mxu0
        %v4316 = vadd.f32 0.0, %v4315
        %4317 = vmatmul.f32.gmra.mxu0 %v1022
        %v4318 = vpop.f32.mrf.mxu0
        %v4319 = vadd.f32 0.0, %v4318
        %4320 = vmatmul.f32.gmra.mxu0 %v1025
        %v4321 = vpop.f32.mrf.mxu0
        %v4322 = vadd.f32 0.0, %v4321
        %4323 = vmatmul.f32.gmra.mxu0 %v1028
        %v4324 = vpop.f32.mrf.mxu0
        %v4325 = vadd.f32 0.0, %v4324
        %4326 = vmatmul.f32.gmra.mxu0 %v1031
        %v4327 = vpop.f32.mrf.mxu0
        %v4328 = vadd.f32 0.0, %v4327
        %4329 = vmatmul.f32.gmra.mxu0 %v1034
        %v4330 = vpop.f32.mrf.mxu0
        %v4331 = vadd.f32 0.0, %v4330
        %4332 = vmatmul.f32.gmra.mxu0 %v1037
        %v4333 = vpop.f32.mrf.mxu0
        %v4334 = vadd.f32 0.0, %v4333
        %4335 = vmatmul.f32.gmra.mxu0 %v1040
        %v4336 = vpop.f32.mrf.mxu0
        %v4337 = vadd.f32 0.0, %v4336
        %4338 = vdwg.mxu0
        %4339 = vmatpush.xpose.msra.mxu0 %v4272
        %4340 = vmatpush.xpose.msra.mxu0 %v4269
        %4341 = vmatpush.xpose.msra.mxu0 %v4266
        %4342 = vmatpush.xpose.msra.mxu0 %v4263
        %4343 = vmatpush.xpose.msra.mxu0 %v4260
        %4344 = vmatpush.xpose.msra.mxu0 %v4257
        %4345 = vmatpush.xpose.msra.mxu0 %v4254
        %4346 = vmatpush.xpose.msra.mxu0 %v4251
        %4347 = vmatpush.xpose.msra.mxu0 %v4248
        %4348 = vmatpush.xpose.msra.mxu0 %v4245
        %4349 = vmatpush.xpose.msra.mxu0 %v4242
        %4350 = vmatpush.xpose.msra.mxu0 %v4239
        %4351 = vmatpush.xpose.msra.mxu0 %v4236
        %4352 = vmatpush.xpose.msra.mxu0 %v4233
        %4353 = vmatpush.xpose.msra.mxu0 %v4230
        %4354 = vmatpush.xpose.msra.mxu0 %v4227
        %4355 = vmatmul.f32.gmra.mxu0 %v4227
        %v4356 = vpop.f32.mrf.mxu0
        %v4357 = vadd.f32 %v4292, %v4356
        %4358 = vmatmul.f32.gmra.mxu0 %v4230
        %v4359 = vpop.f32.mrf.mxu0
        %v4360 = vadd.f32 %v4295, %v4359
        %4361 = vmatmul.f32.gmra.mxu0 %v4233
        %v4362 = vpop.f32.mrf.mxu0
        %v4363 = vadd.f32 %v4298, %v4362
        %4364 = vmatmul.f32.gmra.mxu0 %v4236
        %v4365 = vpop.f32.mrf.mxu0
        %v4366 = vadd.f32 %v4301, %v4365
        %4367 = vmatmul.f32.gmra.mxu0 %v4239
        %v4368 = vpop.f32.mrf.mxu0
        %v4369 = vadd.f32 %v4304, %v4368
        %4370 = vmatmul.f32.gmra.mxu0 %v4242
        %v4371 = vpop.f32.mrf.mxu0
        %v4372 = vadd.f32 %v4307, %v4371
        %4373 = vmatmul.f32.gmra.mxu0 %v4245
        %v4374 = vpop.f32.mrf.mxu0
        %v4375 = vadd.f32 %v4310, %v4374
        %4376 = vmatmul.f32.gmra.mxu0 %v4248
        %v4377 = vpop.f32.mrf.mxu0
        %v4378 = vadd.f32 %v4313, %v4377
        %4379 = vmatmul.f32.gmra.mxu0 %v4251
        %v4380 = vpop.f32.mrf.mxu0
        %v4381 = vadd.f32 %v4316, %v4380
        %4382 = vmatmul.f32.gmra.mxu0 %v4254
        %v4383 = vpop.f32.mrf.mxu0
        %v4384 = vadd.f32 %v4319, %v4383
        %4385 = vmatmul.f32.gmra.mxu0 %v4257
        %v4386 = vpop.f32.mrf.mxu0
        %v4387 = vadd.f32 %v4322, %v4386
        %4388 = vmatmul.f32.gmra.mxu0 %v4260
        %v4389 = vpop.f32.mrf.mxu0
        %v4390 = vadd.f32 %v4325, %v4389
        %4391 = vmatmul.f32.gmra.mxu0 %v4263
        %v4392 = vpop.f32.mrf.mxu0
        %v4393 = vadd.f32 %v4328, %v4392
        %4394 = vmatmul.f32.gmra.mxu0 %v4266
        %v4395 = vpop.f32.mrf.mxu0
        %v4396 = vadd.f32 %v4331, %v4395
        %4397 = vmatmul.f32.gmra.mxu0 %v4269
        %v4398 = vpop.f32.mrf.mxu0
        %v4399 = vadd.f32 %v4334, %v4398
        %4400 = vmatmul.f32.gmra.mxu0 %v4272
        %v4401 = vpop.f32.mrf.mxu0
        %v4402 = vadd.f32 %v4337, %v4401
        %4403 = vdwg.mxu0
        %4404 = vmax.xlane.f32.xlu0 %v4357
        %v4405 = vpop.xlane.xlu0 %4404
        %4406 = vmax.xlane.f32.xlu0 %v4360
        %v4407 = vpop.xlane.xlu0 %4406
        %4408 = vmax.xlane.f32.xlu0 %v4363
        %v4409 = vpop.xlane.xlu0 %4408
        %4410 = vmax.xlane.f32.xlu0 %v4366
        %v4411 = vpop.xlane.xlu0 %4410
        %4412 = vmax.xlane.f32.xlu0 %v4369
        %v4413 = vpop.xlane.xlu0 %4412
        %4414 = vmax.xlane.f32.xlu0 %v4372
        %v4415 = vpop.xlane.xlu0 %4414
        %4416 = vmax.xlane.f32.xlu0 %v4375
        %v4417 = vpop.xlane.xlu0 %4416
        %4418 = vmax.xlane.f32.xlu0 %v4378
        %v4419 = vpop.xlane.xlu0 %4418
        %4420 = vmax.xlane.f32.xlu0 %v4381
        %v4421 = vpop.xlane.xlu0 %4420
        %4422 = vmax.xlane.f32.xlu0 %v4384
        %v4423 = vpop.xlane.xlu0 %4422
        %4424 = vmax.xlane.f32.xlu0 %v4387
        %v4425 = vpop.xlane.xlu0 %4424
        %4426 = vmax.xlane.f32.xlu0 %v4390
        %v4427 = vpop.xlane.xlu0 %4426
        %4428 = vmax.xlane.f32.xlu0 %v4393
        %v4429 = vpop.xlane.xlu0 %4428
        %4430 = vmax.xlane.f32.xlu0 %v4396
        %v4431 = vpop.xlane.xlu0 %4430
        %4432 = vmax.xlane.f32.xlu0 %v4399
        %v4433 = vpop.xlane.xlu0 %4432
        %4434 = vmax.xlane.f32.xlu0 %v4402
        %v4435 = vpop.xlane.xlu0 %4434
        %v4436 = vsub.f32 %v4405, %v4357
        %v4437 = vsub.f32 %v4407, %v4360
        %v4438 = vsub.f32 %v4409, %v4363
        %v4439 = vsub.f32 %v4411, %v4366
        %v4440 = vsub.f32 %v4413, %v4369
        %v4441 = vsub.f32 %v4415, %v4372
        %v4442 = vsub.f32 %v4417, %v4375
        %v4443 = vsub.f32 %v4419, %v4378
        %v4444 = vsub.f32 %v4421, %v4381
        %v4445 = vsub.f32 %v4423, %v4384
        %v4446 = vsub.f32 %v4425, %v4387
        %v4447 = vsub.f32 %v4427, %v4390
        %v4448 = vsub.f32 %v4429, %v4393
        %v4449 = vsub.f32 %v4431, %v4396
        %v4450 = vsub.f32 %v4433, %v4399
        %v4451 = vsub.f32 %v4435, %v4402
        %4452 = vmax.xlane.f32.xlu0 %v4436
        %v4453 = vpop.xlane.xlu0 %4452
        %4454 = vmax.xlane.f32.xlu0 %v4437
        %v4455 = vpop.xlane.xlu0 %4454
        %4456 = vmax.xlane.f32.xlu0 %v4438
        %v4457 = vpop.xlane.xlu0 %4456
        %4458 = vmax.xlane.f32.xlu0 %v4439
        %v4459 = vpop.xlane.xlu0 %4458
        %4460 = vmax.xlane.f32.xlu0 %v4440
        %v4461 = vpop.xlane.xlu0 %4460
        %4462 = vmax.xlane.f32.xlu0 %v4441
        %v4463 = vpop.xlane.xlu0 %4462
        %4464 = vmax.xlane.f32.xlu0 %v4442
        %v4465 = vpop.xlane.xlu0 %4464
        %4466 = vmax.xlane.f32.xlu0 %v4443
        %v4467 = vpop.xlane.xlu0 %4466
        %4468 = vmax.xlane.f32.xlu0 %v4444
        %v4469 = vpop.xlane.xlu0 %4468
        %4470 = vmax.xlane.f32.xlu0 %v4445
        %v4471 = vpop.xlane.xlu0 %4470
        %4472 = vmax.xlane.f32.xlu0 %v4446
        %v4473 = vpop.xlane.xlu0 %4472
        %4474 = vmax.xlane.f32.xlu0 %v4447
        %v4475 = vpop.xlane.xlu0 %4474
        %4476 = vmax.xlane.f32.xlu0 %v4448
        %v4477 = vpop.xlane.xlu0 %4476
        %4478 = vmax.xlane.f32.xlu0 %v4449
        %v4479 = vpop.xlane.xlu0 %4478
        %4480 = vmax.xlane.f32.xlu0 %v4450
        %v4481 = vpop.xlane.xlu0 %4480
        %4482 = vmax.xlane.f32.xlu0 %v4451
        %v4483 = vpop.xlane.xlu0 %4482
        %v4484 = vsub.f32 %v4436, %v4453
        %v4485 = vsub.f32 %v4437, %v4455
        %v4486 = vsub.f32 %v4438, %v4457
        %v4487 = vsub.f32 %v4439, %v4459
        %v4488 = vsub.f32 %v4440, %v4461
        %v4489 = vsub.f32 %v4441, %v4463
        %v4490 = vsub.f32 %v4442, %v4465
        %v4491 = vsub.f32 %v4443, %v4467
        %v4492 = vsub.f32 %v4444, %v4469
        %v4493 = vsub.f32 %v4445, %v4471
        %v4494 = vsub.f32 %v4446, %v4473
        %v4495 = vsub.f32 %v4447, %v4475
        %v4496 = vsub.f32 %v4448, %v4477
        %v4497 = vsub.f32 %v4449, %v4479
        %v4498 = vsub.f32 %v4450, %v4481
        %v4499 = vsub.f32 %v4451, %v4483
        %v4500 = vmul.f32 %v4484, 1.442695
        %v4501 = vpow.pop %v4500
        %v4502 = vmul.f32 %v4485, 1.442695
        %v4503 = vpow.pop %v4502
        %v4504 = vmul.f32 %v4486, 1.442695
        %v4505 = vpow.pop %v4504
        %v4506 = vmul.f32 %v4487, 1.442695
        %v4507 = vpow.pop %v4506
        %v4508 = vmul.f32 %v4488, 1.442695
        %v4509 = vpow.pop %v4508
        %v4510 = vmul.f32 %v4489, 1.442695
        %v4511 = vpow.pop %v4510
        %v4512 = vmul.f32 %v4490, 1.442695
        %v4513 = vpow.pop %v4512
        %v4514 = vmul.f32 %v4491, 1.442695
        %v4515 = vpow.pop %v4514
        %v4516 = vmul.f32 %v4492, 1.442695
        %v4517 = vpow.pop %v4516
        %v4518 = vmul.f32 %v4493, 1.442695
        %v4519 = vpow.pop %v4518
        %v4520 = vmul.f32 %v4494, 1.442695
        %v4521 = vpow.pop %v4520
        %v4522 = vmul.f32 %v4495, 1.442695
        %v4523 = vpow.pop %v4522
        %v4524 = vmul.f32 %v4496, 1.442695
        %v4525 = vpow.pop %v4524
        %v4526 = vmul.f32 %v4497, 1.442695
        %v4527 = vpow.pop %v4526
        %v4528 = vmul.f32 %v4498, 1.442695
        %v4529 = vpow.pop %v4528
        %v4530 = vmul.f32 %v4499, 1.442695
        %v4531 = vpow.pop %v4530
        %4532 = vadd.xlane.f32.xlu0 %v4501
        %v4533 = vpop.xlane.xlu0 %4532
        %4534 = vadd.xlane.f32.xlu0 %v4503
        %v4535 = vpop.xlane.xlu0 %4534
        %4536 = vadd.xlane.f32.xlu0 %v4505
        %v4537 = vpop.xlane.xlu0 %4536
        %4538 = vadd.xlane.f32.xlu0 %v4507
        %v4539 = vpop.xlane.xlu0 %4538
        %4540 = vadd.xlane.f32.xlu0 %v4509
        %v4541 = vpop.xlane.xlu0 %4540
        %4542 = vadd.xlane.f32.xlu0 %v4511
        %v4543 = vpop.xlane.xlu0 %4542
        %4544 = vadd.xlane.f32.xlu0 %v4513
        %v4545 = vpop.xlane.xlu0 %4544
        %4546 = vadd.xlane.f32.xlu0 %v4515
        %v4547 = vpop.xlane.xlu0 %4546
        %4548 = vadd.xlane.f32.xlu0 %v4517
        %v4549 = vpop.xlane.xlu0 %4548
        %4550 = vadd.xlane.f32.xlu0 %v4519
        %v4551 = vpop.xlane.xlu0 %4550
        %4552 = vadd.xlane.f32.xlu0 %v4521
        %v4553 = vpop.xlane.xlu0 %4552
        %4554 = vadd.xlane.f32.xlu0 %v4523
        %v4555 = vpop.xlane.xlu0 %4554
        %4556 = vadd.xlane.f32.xlu0 %v4525
        %v4557 = vpop.xlane.xlu0 %4556
        %4558 = vadd.xlane.f32.xlu0 %v4527
        %v4559 = vpop.xlane.xlu0 %4558
        %4560 = vadd.xlane.f32.xlu0 %v4529
        %v4561 = vpop.xlane.xlu0 %4560
        %4562 = vadd.xlane.f32.xlu0 %v4531
        %v4563 = vpop.xlane.xlu0 %4562
        %v4564 = vrcp.pop %v4533
        %v4565 = vmul.f32 %v4533, %v4564
        %v4566 = vsub.f32 1.0, %v4565
        %v4567 = vmul.f32 %v4564, %v4566
        %v4568 = vadd.f32 %v4564, %v4567
        %vm4569 = vweird.f32 %v4533
        %vm4570 = vweird.f32 %v4564
        %vm4571 = vmor %vm4569, %vm4570
        %v4572 = vsel %vm4571, %v4564, %v4568
        %v4573 = vand.u32 2147483647, %v4533
        %vm4574 = vcmp.eq.f32.partialorder %v4573, 8.507059e+37
        %v4575 = vand.u32 %v4533, 2147483648
        %v4576 = vor.u32 1.1754944e-38, %v4575
        %v4577 = vsel %vm4574, %v4576, %v4572
        %v4578 = vmul.f32 %v4501, %v4577
        %v4579 = vrcp.pop %v4535
        %v4580 = vmul.f32 %v4535, %v4579
        %v4581 = vsub.f32 1.0, %v4580
        %v4582 = vmul.f32 %v4579, %v4581
        %v4583 = vadd.f32 %v4579, %v4582
        %vm4584 = vweird.f32 %v4535
        %vm4585 = vweird.f32 %v4579
        %vm4586 = vmor %vm4584, %vm4585
        %v4587 = vsel %vm4586, %v4579, %v4583
        %v4588 = vand.u32 2147483647, %v4535
        %vm4589 = vcmp.eq.f32.partialorder %v4588, 8.507059e+37
        %v4590 = vand.u32 %v4535, 2147483648
        %v4591 = vor.u32 1.1754944e-38, %v4590
        %v4592 = vsel %vm4589, %v4591, %v4587
        %v4593 = vmul.f32 %v4503, %v4592
        %v4594 = vrcp.pop %v4537
        %v4595 = vmul.f32 %v4537, %v4594
        %v4596 = vsub.f32 1.0, %v4595
        %v4597 = vmul.f32 %v4594, %v4596
        %v4598 = vadd.f32 %v4594, %v4597
        %vm4599 = vweird.f32 %v4537
        %vm4600 = vweird.f32 %v4594
        %vm4601 = vmor %vm4599, %vm4600
        %v4602 = vsel %vm4601, %v4594, %v4598
        %v4603 = vand.u32 2147483647, %v4537
        %vm4604 = vcmp.eq.f32.partialorder %v4603, 8.507059e+37
        %v4605 = vand.u32 %v4537, 2147483648
        %v4606 = vor.u32 1.1754944e-38, %v4605
        %v4607 = vsel %vm4604, %v4606, %v4602
        %v4608 = vmul.f32 %v4505, %v4607
        %v4609 = vrcp.pop %v4539
        %v4610 = vmul.f32 %v4539, %v4609
        %v4611 = vsub.f32 1.0, %v4610
        %v4612 = vmul.f32 %v4609, %v4611
        %v4613 = vadd.f32 %v4609, %v4612
        %vm4614 = vweird.f32 %v4539
        %vm4615 = vweird.f32 %v4609
        %vm4616 = vmor %vm4614, %vm4615
        %v4617 = vsel %vm4616, %v4609, %v4613
        %v4618 = vand.u32 2147483647, %v4539
        %vm4619 = vcmp.eq.f32.partialorder %v4618, 8.507059e+37
        %v4620 = vand.u32 %v4539, 2147483648
        %v4621 = vor.u32 1.1754944e-38, %v4620
        %v4622 = vsel %vm4619, %v4621, %v4617
        %v4623 = vmul.f32 %v4507, %v4622
        %v4624 = vrcp.pop %v4541
        %v4625 = vmul.f32 %v4541, %v4624
        %v4626 = vsub.f32 1.0, %v4625
        %v4627 = vmul.f32 %v4624, %v4626
        %v4628 = vadd.f32 %v4624, %v4627
        %vm4629 = vweird.f32 %v4541
        %vm4630 = vweird.f32 %v4624
        %vm4631 = vmor %vm4629, %vm4630
        %v4632 = vsel %vm4631, %v4624, %v4628
        %v4633 = vand.u32 2147483647, %v4541
        %vm4634 = vcmp.eq.f32.partialorder %v4633, 8.507059e+37
        %v4635 = vand.u32 %v4541, 2147483648
        %v4636 = vor.u32 1.1754944e-38, %v4635
        %v4637 = vsel %vm4634, %v4636, %v4632
        %v4638 = vmul.f32 %v4509, %v4637
        %v4639 = vrcp.pop %v4543
        %v4640 = vmul.f32 %v4543, %v4639
        %v4641 = vsub.f32 1.0, %v4640
        %v4642 = vmul.f32 %v4639, %v4641
        %v4643 = vadd.f32 %v4639, %v4642
        %vm4644 = vweird.f32 %v4543
        %vm4645 = vweird.f32 %v4639
        %vm4646 = vmor %vm4644, %vm4645
        %v4647 = vsel %vm4646, %v4639, %v4643
        %v4648 = vand.u32 2147483647, %v4543
        %vm4649 = vcmp.eq.f32.partialorder %v4648, 8.507059e+37
        %v4650 = vand.u32 %v4543, 2147483648
        %v4651 = vor.u32 1.1754944e-38, %v4650
        %v4652 = vsel %vm4649, %v4651, %v4647
        %v4653 = vmul.f32 %v4511, %v4652
        %v4654 = vrcp.pop %v4545
        %v4655 = vmul.f32 %v4545, %v4654
        %v4656 = vsub.f32 1.0, %v4655
        %v4657 = vmul.f32 %v4654, %v4656
        %v4658 = vadd.f32 %v4654, %v4657
        %vm4659 = vweird.f32 %v4545
        %vm4660 = vweird.f32 %v4654
        %vm4661 = vmor %vm4659, %vm4660
        %v4662 = vsel %vm4661, %v4654, %v4658
        %v4663 = vand.u32 2147483647, %v4545
        %vm4664 = vcmp.eq.f32.partialorder %v4663, 8.507059e+37
        %v4665 = vand.u32 %v4545, 2147483648
        %v4666 = vor.u32 1.1754944e-38, %v4665
        %v4667 = vsel %vm4664, %v4666, %v4662
        %v4668 = vmul.f32 %v4513, %v4667
        %v4669 = vrcp.pop %v4547
        %v4670 = vmul.f32 %v4547, %v4669
        %v4671 = vsub.f32 1.0, %v4670
        %v4672 = vmul.f32 %v4669, %v4671
        %v4673 = vadd.f32 %v4669, %v4672
        %vm4674 = vweird.f32 %v4547
        %vm4675 = vweird.f32 %v4669
        %vm4676 = vmor %vm4674, %vm4675
        %v4677 = vsel %vm4676, %v4669, %v4673
        %v4678 = vand.u32 2147483647, %v4547
        %vm4679 = vcmp.eq.f32.partialorder %v4678, 8.507059e+37
        %v4680 = vand.u32 %v4547, 2147483648
        %v4681 = vor.u32 1.1754944e-38, %v4680
        %v4682 = vsel %vm4679, %v4681, %v4677
        %v4683 = vmul.f32 %v4515, %v4682
        %v4684 = vrcp.pop %v4549
        %v4685 = vmul.f32 %v4549, %v4684
        %v4686 = vsub.f32 1.0, %v4685
        %v4687 = vmul.f32 %v4684, %v4686
        %v4688 = vadd.f32 %v4684, %v4687
        %vm4689 = vweird.f32 %v4549
        %vm4690 = vweird.f32 %v4684
        %vm4691 = vmor %vm4689, %vm4690
        %v4692 = vsel %vm4691, %v4684, %v4688
        %v4693 = vand.u32 2147483647, %v4549
        %vm4694 = vcmp.eq.f32.partialorder %v4693, 8.507059e+37
        %v4695 = vand.u32 %v4549, 2147483648
        %v4696 = vor.u32 1.1754944e-38, %v4695
        %v4697 = vsel %vm4694, %v4696, %v4692
        %v4698 = vmul.f32 %v4517, %v4697
        %v4699 = vrcp.pop %v4551
        %v4700 = vmul.f32 %v4551, %v4699
        %v4701 = vsub.f32 1.0, %v4700
        %v4702 = vmul.f32 %v4699, %v4701
        %v4703 = vadd.f32 %v4699, %v4702
        %vm4704 = vweird.f32 %v4551
        %vm4705 = vweird.f32 %v4699
        %vm4706 = vmor %vm4704, %vm4705
        %v4707 = vsel %vm4706, %v4699, %v4703
        %v4708 = vand.u32 2147483647, %v4551
        %vm4709 = vcmp.eq.f32.partialorder %v4708, 8.507059e+37
        %v4710 = vand.u32 %v4551, 2147483648
        %v4711 = vor.u32 1.1754944e-38, %v4710
        %v4712 = vsel %vm4709, %v4711, %v4707
        %v4713 = vmul.f32 %v4519, %v4712
        %v4714 = vrcp.pop %v4553
        %v4715 = vmul.f32 %v4553, %v4714
        %v4716 = vsub.f32 1.0, %v4715
        %v4717 = vmul.f32 %v4714, %v4716
        %v4718 = vadd.f32 %v4714, %v4717
        %vm4719 = vweird.f32 %v4553
        %vm4720 = vweird.f32 %v4714
        %vm4721 = vmor %vm4719, %vm4720
        %v4722 = vsel %vm4721, %v4714, %v4718
        %v4723 = vand.u32 2147483647, %v4553
        %vm4724 = vcmp.eq.f32.partialorder %v4723, 8.507059e+37
        %v4725 = vand.u32 %v4553, 2147483648
        %v4726 = vor.u32 1.1754944e-38, %v4725
        %v4727 = vsel %vm4724, %v4726, %v4722
        %v4728 = vmul.f32 %v4521, %v4727
        %v4729 = vrcp.pop %v4555
        %v4730 = vmul.f32 %v4555, %v4729
        %v4731 = vsub.f32 1.0, %v4730
        %v4732 = vmul.f32 %v4729, %v4731
        %v4733 = vadd.f32 %v4729, %v4732
        %vm4734 = vweird.f32 %v4555
        %vm4735 = vweird.f32 %v4729
        %vm4736 = vmor %vm4734, %vm4735
        %v4737 = vsel %vm4736, %v4729, %v4733
        %v4738 = vand.u32 2147483647, %v4555
        %vm4739 = vcmp.eq.f32.partialorder %v4738, 8.507059e+37
        %v4740 = vand.u32 %v4555, 2147483648
        %v4741 = vor.u32 1.1754944e-38, %v4740
        %v4742 = vsel %vm4739, %v4741, %v4737
        %v4743 = vmul.f32 %v4523, %v4742
        %v4744 = vrcp.pop %v4557
        %v4745 = vmul.f32 %v4557, %v4744
        %v4746 = vsub.f32 1.0, %v4745
        %v4747 = vmul.f32 %v4744, %v4746
        %v4748 = vadd.f32 %v4744, %v4747
        %vm4749 = vweird.f32 %v4557
        %vm4750 = vweird.f32 %v4744
        %vm4751 = vmor %vm4749, %vm4750
        %v4752 = vsel %vm4751, %v4744, %v4748
        %v4753 = vand.u32 2147483647, %v4557
        %vm4754 = vcmp.eq.f32.partialorder %v4753, 8.507059e+37
        %v4755 = vand.u32 %v4557, 2147483648
        %v4756 = vor.u32 1.1754944e-38, %v4755
        %v4757 = vsel %vm4754, %v4756, %v4752
        %v4758 = vmul.f32 %v4525, %v4757
        %v4759 = vrcp.pop %v4559
        %v4760 = vmul.f32 %v4559, %v4759
        %v4761 = vsub.f32 1.0, %v4760
        %v4762 = vmul.f32 %v4759, %v4761
        %v4763 = vadd.f32 %v4759, %v4762
        %vm4764 = vweird.f32 %v4559
        %vm4765 = vweird.f32 %v4759
        %vm4766 = vmor %vm4764, %vm4765
        %v4767 = vsel %vm4766, %v4759, %v4763
        %v4768 = vand.u32 2147483647, %v4559
        %vm4769 = vcmp.eq.f32.partialorder %v4768, 8.507059e+37
        %v4770 = vand.u32 %v4559, 2147483648
        %v4771 = vor.u32 1.1754944e-38, %v4770
        %v4772 = vsel %vm4769, %v4771, %v4767
        %v4773 = vmul.f32 %v4527, %v4772
        %v4774 = vrcp.pop %v4561
        %v4775 = vmul.f32 %v4561, %v4774
        %v4776 = vsub.f32 1.0, %v4775
        %v4777 = vmul.f32 %v4774, %v4776
        %v4778 = vadd.f32 %v4774, %v4777
        %vm4779 = vweird.f32 %v4561
        %vm4780 = vweird.f32 %v4774
        %vm4781 = vmor %vm4779, %vm4780
        %v4782 = vsel %vm4781, %v4774, %v4778
        %v4783 = vand.u32 2147483647, %v4561
        %vm4784 = vcmp.eq.f32.partialorder %v4783, 8.507059e+37
        %v4785 = vand.u32 %v4561, 2147483648
        %v4786 = vor.u32 1.1754944e-38, %v4785
        %v4787 = vsel %vm4784, %v4786, %v4782
        %v4788 = vmul.f32 %v4529, %v4787
        %v4789 = vrcp.pop %v4563
        %v4790 = vmul.f32 %v4563, %v4789
        %v4791 = vsub.f32 1.0, %v4790
        %v4792 = vmul.f32 %v4789, %v4791
        %v4793 = vadd.f32 %v4789, %v4792
        %vm4794 = vweird.f32 %v4563
        %vm4795 = vweird.f32 %v4789
        %vm4796 = vmor %vm4794, %vm4795
        %v4797 = vsel %vm4796, %v4789, %v4793
        %v4798 = vand.u32 2147483647, %v4563
        %vm4799 = vcmp.eq.f32.partialorder %v4798, 8.507059e+37
        %v4800 = vand.u32 %v4563, 2147483648
        %v4801 = vor.u32 1.1754944e-38, %v4800
        %v4802 = vsel %vm4799, %v4801, %v4797
        %v4803 = vmul.f32 %v4531, %v4802
        %4804 = vmatpush.msra.mxu0 %v1040
        %4805 = vmatpush.msra.mxu0 %v1037
        %4806 = vmatpush.msra.mxu0 %v1034
        %4807 = vmatpush.msra.mxu0 %v1031
        %4808 = vmatpush.msra.mxu0 %v1028
        %4809 = vmatpush.msra.mxu0 %v1025
        %4810 = vmatpush.msra.mxu0 %v1022
        %4811 = vmatpush.msra.mxu0 %v1019
        %4812 = vmatpush.msra.mxu0 %v1016
        %4813 = vmatpush.msra.mxu0 %v1013
        %4814 = vmatpush.msra.mxu0 %v1010
        %4815 = vmatpush.msra.mxu0 %v1007
        %4816 = vmatpush.msra.mxu0 %v1004
        %4817 = vmatpush.msra.mxu0 %v1001
        %4818 = vmatpush.msra.mxu0 %v998
        %4819 = vmatpush.msra.mxu0 %v995
        %4820 = vmatmul.f32.gmra.mxu0 %v4578
        %v4821 = vpop.f32.mrf.mxu0
        %v4822 = vadd.f32 0.0, %v4821
        %4823 = vmatmul.f32.gmra.mxu0 %v4593
        %v4824 = vpop.f32.mrf.mxu0
        %v4825 = vadd.f32 0.0, %v4824
        %4826 = vmatmul.f32.gmra.mxu0 %v4608
        %v4827 = vpop.f32.mrf.mxu0
        %v4828 = vadd.f32 0.0, %v4827
        %4829 = vmatmul.f32.gmra.mxu0 %v4623
        %v4830 = vpop.f32.mrf.mxu0
        %v4831 = vadd.f32 0.0, %v4830
        %4832 = vmatmul.f32.gmra.mxu0 %v4638
        %v4833 = vpop.f32.mrf.mxu0
        %v4834 = vadd.f32 0.0, %v4833
        %4835 = vmatmul.f32.gmra.mxu0 %v4653
        %v4836 = vpop.f32.mrf.mxu0
        %v4837 = vadd.f32 0.0, %v4836
        %4838 = vmatmul.f32.gmra.mxu0 %v4668
        %v4839 = vpop.f32.mrf.mxu0
        %v4840 = vadd.f32 0.0, %v4839
        %4841 = vmatmul.f32.gmra.mxu0 %v4683
        %v4842 = vpop.f32.mrf.mxu0
        %v4843 = vadd.f32 0.0, %v4842
        %4844 = vmatmul.f32.gmra.mxu0 %v4698
        %v4845 = vpop.f32.mrf.mxu0
        %v4846 = vadd.f32 0.0, %v4845
        %4847 = vmatmul.f32.gmra.mxu0 %v4713
        %v4848 = vpop.f32.mrf.mxu0
        %v4849 = vadd.f32 0.0, %v4848
        %4850 = vmatmul.f32.gmra.mxu0 %v4728
        %v4851 = vpop.f32.mrf.mxu0
        %v4852 = vadd.f32 0.0, %v4851
        %4853 = vmatmul.f32.gmra.mxu0 %v4743
        %v4854 = vpop.f32.mrf.mxu0
        %v4855 = vadd.f32 0.0, %v4854
        %4856 = vmatmul.f32.gmra.mxu0 %v4758
        %v4857 = vpop.f32.mrf.mxu0
        %v4858 = vadd.f32 0.0, %v4857
        %4859 = vmatmul.f32.gmra.mxu0 %v4773
        %v4860 = vpop.f32.mrf.mxu0
        %v4861 = vadd.f32 0.0, %v4860
        %4862 = vmatmul.f32.gmra.mxu0 %v4788
        %v4863 = vpop.f32.mrf.mxu0
        %v4864 = vadd.f32 0.0, %v4863
        %4865 = vmatmul.f32.gmra.mxu0 %v4803
        %v4866 = vpop.f32.mrf.mxu0
        %v4867 = vadd.f32 0.0, %v4866
        %4868 = vdwg.mxu0
        %4869 = vmatpush.msra.mxu0 %v1153
        %4870 = vmatpush.msra.mxu0 %v1150
        %4871 = vmatpush.msra.mxu0 %v1147
        %4872 = vmatpush.msra.mxu0 %v1144
        %4873 = vmatpush.msra.mxu0 %v1141
        %4874 = vmatpush.msra.mxu0 %v1138
        %4875 = vmatpush.msra.mxu0 %v1135
        %4876 = vmatpush.msra.mxu0 %v1132
        %4877 = vmatpush.msra.mxu0 %v1129
        %4878 = vmatpush.msra.mxu0 %v1126
        %4879 = vmatpush.msra.mxu0 %v1123
        %4880 = vmatpush.msra.mxu0 %v1120
        %4881 = vmatpush.msra.mxu0 %v1117
        %4882 = vmatpush.msra.mxu0 %v1114
        %4883 = vmatpush.msra.mxu0 %v1111
        %4884 = vmatpush.msra.mxu0 %v1108
        %4885 = vmatmul.f32.gmra.mxu0 %v4578
        %v4886 = vpop.f32.mrf.mxu0
        %v4887 = vadd.f32 0.0, %v4886
        %4888 = vmatmul.f32.gmra.mxu0 %v4593
        %v4889 = vpop.f32.mrf.mxu0
        %v4890 = vadd.f32 0.0, %v4889
        %4891 = vmatmul.f32.gmra.mxu0 %v4608
        %v4892 = vpop.f32.mrf.mxu0
        %v4893 = vadd.f32 0.0, %v4892
        %4894 = vmatmul.f32.gmra.mxu0 %v4623
        %v4895 = vpop.f32.mrf.mxu0
        %v4896 = vadd.f32 0.0, %v4895
        %4897 = vmatmul.f32.gmra.mxu0 %v4638
        %v4898 = vpop.f32.mrf.mxu0
        %v4899 = vadd.f32 0.0, %v4898
        %4900 = vmatmul.f32.gmra.mxu0 %v4653
        %v4901 = vpop.f32.mrf.mxu0
        %v4902 = vadd.f32 0.0, %v4901
        %4903 = vmatmul.f32.gmra.mxu0 %v4668
        %v4904 = vpop.f32.mrf.mxu0
        %v4905 = vadd.f32 0.0, %v4904
        %4906 = vmatmul.f32.gmra.mxu0 %v4683
        %v4907 = vpop.f32.mrf.mxu0
        %v4908 = vadd.f32 0.0, %v4907
        %4909 = vmatmul.f32.gmra.mxu0 %v4698
        %v4910 = vpop.f32.mrf.mxu0
        %v4911 = vadd.f32 0.0, %v4910
        %4912 = vmatmul.f32.gmra.mxu0 %v4713
        %v4913 = vpop.f32.mrf.mxu0
        %v4914 = vadd.f32 0.0, %v4913
        %4915 = vmatmul.f32.gmra.mxu0 %v4728
        %v4916 = vpop.f32.mrf.mxu0
        %v4917 = vadd.f32 0.0, %v4916
        %4918 = vmatmul.f32.gmra.mxu0 %v4743
        %v4919 = vpop.f32.mrf.mxu0
        %v4920 = vadd.f32 0.0, %v4919
        %4921 = vmatmul.f32.gmra.mxu0 %v4758
        %v4922 = vpop.f32.mrf.mxu0
        %v4923 = vadd.f32 0.0, %v4922
        %4924 = vmatmul.f32.gmra.mxu0 %v4773
        %v4925 = vpop.f32.mrf.mxu0
        %v4926 = vadd.f32 0.0, %v4925
        %4927 = vmatmul.f32.gmra.mxu0 %v4788
        %v4928 = vpop.f32.mrf.mxu0
        %v4929 = vadd.f32 0.0, %v4928
        %4930 = vmatmul.f32.gmra.mxu0 %v4803
        %v4931 = vpop.f32.mrf.mxu0
        %v4932 = vadd.f32 0.0, %v4931
        %4933 = vdwg.mxu0
        %s4934 = sld [smem:[#allocation2 + $0x80]]
        %v4935 = vstv %s4934
        %v4936 = vmul.f32 %v4935, %v4049
        %v4937 = vmul.f32 %v4935, %v4179
        %v4938 = vmul.f32 %v4935, %v4052
        %v4939 = vmul.f32 %v4935, %v4182
        %v4940 = vmul.f32 %v4935, %v4055
        %v4941 = vmul.f32 %v4935, %v4185
        %v4942 = vmul.f32 %v4935, %v4058
        %v4943 = vmul.f32 %v4935, %v4188
        %v4944 = vmul.f32 %v4935, %v4061
        %v4945 = vmul.f32 %v4935, %v4191
        %v4946 = vmul.f32 %v4935, %v4064
        %v4947 = vmul.f32 %v4935, %v4194
        %v4948 = vmul.f32 %v4935, %v4067
        %v4949 = vmul.f32 %v4935, %v4197
        %v4950 = vmul.f32 %v4935, %v4070
        %v4951 = vmul.f32 %v4935, %v4200
        %v4952 = vmul.f32 %v4935, %v4073
        %v4953 = vmul.f32 %v4935, %v4203
        %v4954 = vmul.f32 %v4935, %v4076
        %v4955 = vmul.f32 %v4935, %v4206
        %v4956 = vmul.f32 %v4935, %v4079
        %v4957 = vmul.f32 %v4935, %v4209
        %v4958 = vmul.f32 %v4935, %v4082
        %v4959 = vmul.f32 %v4935, %v4212
        %v4960 = vmul.f32 %v4935, %v4085
        %v4961 = vmul.f32 %v4935, %v4215
        %v4962 = vmul.f32 %v4935, %v4088
        %v4963 = vmul.f32 %v4935, %v4218
        %v4964 = vmul.f32 %v4935, %v4091
        %v4965 = vmul.f32 %v4935, %v4221
        %v4966 = vmul.f32 %v4935, %v4094
        %v4967 = vmul.f32 %v4935, %v4224
        %s4968 = sld [smem:[#allocation2 + $0x81]]
        %v4969 = vstv %s4968
        %v4970 = vmul.f32 %v4969, %v4822
        %v4971 = vmul.f32 %v4969, %v4887
        %v4972 = vmul.f32 %v4969, %v4825
        %v4973 = vmul.f32 %v4969, %v4890
        %v4974 = vmul.f32 %v4969, %v4828
        %v4975 = vmul.f32 %v4969, %v4893
        %v4976 = vmul.f32 %v4969, %v4831
        %v4977 = vmul.f32 %v4969, %v4896
        %v4978 = vmul.f32 %v4969, %v4834
        %v4979 = vmul.f32 %v4969, %v4899
        %v4980 = vmul.f32 %v4969, %v4837
        %v4981 = vmul.f32 %v4969, %v4902
        %v4982 = vmul.f32 %v4969, %v4840
        %v4983 = vmul.f32 %v4969, %v4905
        %v4984 = vmul.f32 %v4969, %v4843
        %v4985 = vmul.f32 %v4969, %v4908
        %v4986 = vmul.f32 %v4969, %v4846
        %v4987 = vmul.f32 %v4969, %v4911
        %v4988 = vmul.f32 %v4969, %v4849
        %v4989 = vmul.f32 %v4969, %v4914
        %v4990 = vmul.f32 %v4969, %v4852
        %v4991 = vmul.f32 %v4969, %v4917
        %v4992 = vmul.f32 %v4969, %v4855
        %v4993 = vmul.f32 %v4969, %v4920
        %v4994 = vmul.f32 %v4969, %v4858
        %v4995 = vmul.f32 %v4969, %v4923
        %v4996 = vmul.f32 %v4969, %v4861
        %v4997 = vmul.f32 %v4969, %v4926
        %v4998 = vmul.f32 %v4969, %v4864
        %v4999 = vmul.f32 %v4969, %v4929
        %v5000 = vmul.f32 %v4969, %v4867
        %v5001 = vmul.f32 %v4969, %v4932
        %v5002 = vadd.f32 %v4936, %v4970
        %v5003 = vadd.f32 %v4937, %v4971
        %v5004 = vadd.f32 %v4938, %v4972
        %v5005 = vadd.f32 %v4939, %v4973
        %v5006 = vadd.f32 %v4940, %v4974
        %v5007 = vadd.f32 %v4941, %v4975
        %v5008 = vadd.f32 %v4942, %v4976
        %v5009 = vadd.f32 %v4943, %v4977
        %v5010 = vadd.f32 %v4944, %v4978
        %v5011 = vadd.f32 %v4945, %v4979
        %v5012 = vadd.f32 %v4946, %v4980
        %v5013 = vadd.f32 %v4947, %v4981
        %v5014 = vadd.f32 %v4948, %v4982
        %v5015 = vadd.f32 %v4949, %v4983
        %v5016 = vadd.f32 %v4950, %v4984
        %v5017 = vadd.f32 %v4951, %v4985
        %v5018 = vadd.f32 %v4952, %v4986
        %v5019 = vadd.f32 %v4953, %v4987
        %v5020 = vadd.f32 %v4954, %v4988
        %v5021 = vadd.f32 %v4955, %v4989
        %v5022 = vadd.f32 %v4956, %v4990
        %v5023 = vadd.f32 %v4957, %v4991
        %v5024 = vadd.f32 %v4958, %v4992
        %v5025 = vadd.f32 %v4959, %v4993
        %v5026 = vadd.f32 %v4960, %v4994
        %v5027 = vadd.f32 %v4961, %v4995
        %v5028 = vadd.f32 %v4962, %v4996
        %v5029 = vadd.f32 %v4963, %v4997
        %v5030 = vadd.f32 %v4964, %v4998
        %v5031 = vadd.f32 %v4965, %v4999
        %v5032 = vadd.f32 %v4966, %v5000
        %v5033 = vadd.f32 %v4967, %v5001
        %v5034 = vmul.f32 %v995, 2.0
        %v5035 = vmul.f32 %v1108, 2.0
        %v5036 = vmul.f32 %v998, 2.0
        %v5037 = vmul.f32 %v1111, 2.0
        %v5038 = vmul.f32 %v1001, 2.0
        %v5039 = vmul.f32 %v1114, 2.0
        %v5040 = vmul.f32 %v1004, 2.0
        %v5041 = vmul.f32 %v1117, 2.0
        %v5042 = vmul.f32 %v1007, 2.0
        %v5043 = vmul.f32 %v1120, 2.0
        %v5044 = vmul.f32 %v1010, 2.0
        %v5045 = vmul.f32 %v1123, 2.0
        %v5046 = vmul.f32 %v1013, 2.0
        %v5047 = vmul.f32 %v1126, 2.0
        %v5048 = vmul.f32 %v1016, 2.0
        %v5049 = vmul.f32 %v1129, 2.0
        %v5050 = vmul.f32 %v1019, 2.0
        %v5051 = vmul.f32 %v1132, 2.0
        %v5052 = vmul.f32 %v1022, 2.0
        %v5053 = vmul.f32 %v1135, 2.0
        %v5054 = vmul.f32 %v1025, 2.0
        %v5055 = vmul.f32 %v1138, 2.0
        %v5056 = vmul.f32 %v1028, 2.0
        %v5057 = vmul.f32 %v1141, 2.0
        %v5058 = vmul.f32 %v1031, 2.0
        %v5059 = vmul.f32 %v1144, 2.0
        %v5060 = vmul.f32 %v1034, 2.0
        %v5061 = vmul.f32 %v1147, 2.0
        %v5062 = vmul.f32 %v1037, 2.0
        %v5063 = vmul.f32 %v1150, 2.0
        %v5064 = vmul.f32 %v1040, 2.0
        %v5065 = vmul.f32 %v1153, 2.0
        %v5066 = vadd.f32 %v5002, %v5034
        %v5067 = vadd.f32 %v5003, %v5035
        %v5068 = vadd.f32 %v5004, %v5036
        %v5069 = vadd.f32 %v5005, %v5037
        %v5070 = vadd.f32 %v5006, %v5038
        %v5071 = vadd.f32 %v5007, %v5039
        %v5072 = vadd.f32 %v5008, %v5040
        %v5073 = vadd.f32 %v5009, %v5041
        %v5074 = vadd.f32 %v5010, %v5042
        %v5075 = vadd.f32 %v5011, %v5043
        %v5076 = vadd.f32 %v5012, %v5044
        %v5077 = vadd.f32 %v5013, %v5045
        %v5078 = vadd.f32 %v5014, %v5046
        %v5079 = vadd.f32 %v5015, %v5047
        %v5080 = vadd.f32 %v5016, %v5048
        %v5081 = vadd.f32 %v5017, %v5049
        %v5082 = vadd.f32 %v5018, %v5050
        %v5083 = vadd.f32 %v5019, %v5051
        %v5084 = vadd.f32 %v5020, %v5052
        %v5085 = vadd.f32 %v5021, %v5053
        %v5086 = vadd.f32 %v5022, %v5054
        %v5087 = vadd.f32 %v5023, %v5055
        %v5088 = vadd.f32 %v5024, %v5056
        %v5089 = vadd.f32 %v5025, %v5057
        %v5090 = vadd.f32 %v5026, %v5058
        %v5091 = vadd.f32 %v5027, %v5059
        %v5092 = vadd.f32 %v5028, %v5060
        %v5093 = vadd.f32 %v5029, %v5061
        %v5094 = vadd.f32 %v5030, %v5062
        %v5095 = vadd.f32 %v5031, %v5063
        %v5096 = vadd.f32 %v5032, %v5064
        %v5097 = vadd.f32 %v5033, %v5065
        %v5098 = vsel %vm3125, %v5067, 0.0
        %v5099 = vadd.f32 %v5066, %v5098
        %5100 = vadd.xlane.f32.xlu0 %v5099
        %v5101 = vpop.xlane.xlu0 %5100
        %v5102 = vsel %vm3125, %v5069, 0.0
        %v5103 = vadd.f32 %v5068, %v5102
        %5104 = vadd.xlane.f32.xlu0 %v5103
        %v5105 = vpop.xlane.xlu0 %5104
        %v5106 = vsel %vm3125, %v5071, 0.0
        %v5107 = vadd.f32 %v5070, %v5106
        %5108 = vadd.xlane.f32.xlu0 %v5107
        %v5109 = vpop.xlane.xlu0 %5108
        %v5110 = vsel %vm3125, %v5073, 0.0
        %v5111 = vadd.f32 %v5072, %v5110
        %5112 = vadd.xlane.f32.xlu0 %v5111
        %v5113 = vpop.xlane.xlu0 %5112
        %v5114 = vsel %vm3125, %v5075, 0.0
        %v5115 = vadd.f32 %v5074, %v5114
        %5116 = vadd.xlane.f32.xlu0 %v5115
        %v5117 = vpop.xlane.xlu0 %5116
        %v5118 = vsel %vm3125, %v5077, 0.0
        %v5119 = vadd.f32 %v5076, %v5118
        %5120 = vadd.xlane.f32.xlu0 %v5119
        %v5121 = vpop.xlane.xlu0 %5120
        %v5122 = vsel %vm3125, %v5079, 0.0
        %v5123 = vadd.f32 %v5078, %v5122
        %5124 = vadd.xlane.f32.xlu0 %v5123
        %v5125 = vpop.xlane.xlu0 %5124
        %v5126 = vsel %vm3125, %v5081, 0.0
        %v5127 = vadd.f32 %v5080, %v5126
        %5128 = vadd.xlane.f32.xlu0 %v5127
        %v5129 = vpop.xlane.xlu0 %5128
        %v5130 = vsel %vm3125, %v5083, 0.0
        %v5131 = vadd.f32 %v5082, %v5130
        %5132 = vadd.xlane.f32.xlu0 %v5131
        %v5133 = vpop.xlane.xlu0 %5132
        %v5134 = vsel %vm3125, %v5085, 0.0
        %v5135 = vadd.f32 %v5084, %v5134
        %5136 = vadd.xlane.f32.xlu0 %v5135
        %v5137 = vpop.xlane.xlu0 %5136
        %v5138 = vsel %vm3125, %v5087, 0.0
        %v5139 = vadd.f32 %v5086, %v5138
        %5140 = vadd.xlane.f32.xlu0 %v5139
        %v5141 = vpop.xlane.xlu0 %5140
        %v5142 = vsel %vm3125, %v5089, 0.0
        %v5143 = vadd.f32 %v5088, %v5142
        %5144 = vadd.xlane.f32.xlu0 %v5143
        %v5145 = vpop.xlane.xlu0 %5144
        %v5146 = vsel %vm3125, %v5091, 0.0
        %v5147 = vadd.f32 %v5090, %v5146
        %5148 = vadd.xlane.f32.xlu0 %v5147
        %v5149 = vpop.xlane.xlu0 %5148
        %v5150 = vsel %vm3125, %v5093, 0.0
        %v5151 = vadd.f32 %v5092, %v5150
        %5152 = vadd.xlane.f32.xlu0 %v5151
        %v5153 = vpop.xlane.xlu0 %5152
        %v5154 = vsel %vm3125, %v5095, 0.0
        %v5155 = vadd.f32 %v5094, %v5154
        %5156 = vadd.xlane.f32.xlu0 %v5155
        %v5157 = vpop.xlane.xlu0 %5156
        %v5158 = vsel %vm3125, %v5097, 0.0
        %v5159 = vadd.f32 %v5096, %v5158
        %5160 = vadd.xlane.f32.xlu0 %v5159
        %v5161 = vpop.xlane.xlu0 %5160
        %v5162 = vrcp.pop 192.0
        %v5163 = vmul.f32 192.0, %v5162
        %v5164 = vsub.f32 1.0, %v5163
        %v5165 = vmul.f32 %v5162, %v5164
        %v5166 = vadd.f32 %v5162, %v5165
        %vm5167 = vweird.f32 %v5162
        %v5168 = vsel %vm5167, %v5162, %v5166
        %v5169 = vmul.f32 %v5101, %v5168
        %v5170 = vmul.f32 %v5105, %v5168
        %v5171 = vmul.f32 %v5109, %v5168
        %v5172 = vmul.f32 %v5113, %v5168
        %v5173 = vmul.f32 %v5117, %v5168
        %v5174 = vmul.f32 %v5121, %v5168
        %v5175 = vmul.f32 %v5125, %v5168
        %v5176 = vmul.f32 %v5129, %v5168
        %v5177 = vmul.f32 %v5133, %v5168
        %v5178 = vmul.f32 %v5137, %v5168
        %v5179 = vmul.f32 %v5141, %v5168
        %v5180 = vmul.f32 %v5145, %v5168
        %v5181 = vmul.f32 %v5149, %v5168
        %v5182 = vmul.f32 %v5153, %v5168
        %v5183 = vmul.f32 %v5157, %v5168
        %v5184 = vmul.f32 %v5161, %v5168
        %s5185 = scalar_lea.vmem %s5, 320
        %v5186 = vld [vmem:[%s5185] sm:$0xff]
        %v5187 = vld [vmem:[%s5185 + $0x8] sm:$0xff]
        %v5188 = vld [vmem:[%s5185 + $0x10] sm:$0xff]
        %v5189 = vld [vmem:[%s5185 + $0x18] sm:$0xff]
        %v5190 = vld [vmem:[%s5185 + $0x20] sm:$0xff]
        %v5191 = vld [vmem:[%s5185 + $0x28] sm:$0xff]
        %v5192 = vld [vmem:[%s5185 + $0x30] sm:$0xff]
        %v5193 = vld [vmem:[%s5185 + $0x38] sm:$0xff]
        %v5194 = vld [vmem:[%s5185 + $0x40] sm:$0xff]
        %v5195 = vld [vmem:[%s5185 + $0x48] sm:$0xff]
        %v5196 = vld [vmem:[%s5185 + $0x50] sm:$0xff]
        %v5197 = vld [vmem:[%s5185 + $0x58] sm:$0xff]
        %v5198 = vld [vmem:[%s5185 + $0x60] sm:$0xff]
        %v5199 = vld [vmem:[%s5185 + $0x68] sm:$0xff]
        %v5200 = vld [vmem:[%s5185 + $0x70] sm:$0xff]
        %v5201 = vld [vmem:[%s5185 + $0x78] sm:$0xff]
        %v5202 = vld [vmem:[%s5185 + $0x80] sm:$0xff]
        %v5203 = vld [vmem:[%s5185 + $0x88] sm:$0xff]
        %v5204 = vld [vmem:[%s5185 + $0x90] sm:$0xff]
        %v5205 = vld [vmem:[%s5185 + $0x98] sm:$0xff]
        %s5206 = scalar_lea.vmem %s6, 320
        %v5207 = vld [vmem:[%s5206] sm:$0xff]
        %v5208 = vld [vmem:[%s5206 + $0x8] sm:$0xff]
        %v5209 = vld [vmem:[%s5206 + $0x10] sm:$0xff]
        %v5210 = vld [vmem:[%s5206 + $0x18] sm:$0xff]
        %v5211 = vld [vmem:[%s5206 + $0x20] sm:$0xff]
        %v5212 = vld [vmem:[%s5206 + $0x28] sm:$0xff]
        %v5213 = vld [vmem:[%s5206 + $0x30] sm:$0xff]
        %v5214 = vld [vmem:[%s5206 + $0x38] sm:$0xff]
        %v5215 = vld [vmem:[%s5206 + $0x40] sm:$0xff]
        %v5216 = vld [vmem:[%s5206 + $0x48] sm:$0xff]
        %v5217 = vld [vmem:[%s5206 + $0x50] sm:$0xff]
        %v5218 = vld [vmem:[%s5206 + $0x58] sm:$0xff]
        %v5219 = vld [vmem:[%s5206 + $0x60] sm:$0xff]
        %v5220 = vld [vmem:[%s5206 + $0x68] sm:$0xff]
        %v5221 = vld [vmem:[%s5206 + $0x70] sm:$0xff]
        %v5222 = vld [vmem:[%s5206 + $0x78] sm:$0xff]
        %v5223 = vld [vmem:[%s5206 + $0x80] sm:$0xff]
        %v5224 = vld [vmem:[%s5206 + $0x88] sm:$0xff]
        %v5225 = vld [vmem:[%s5206 + $0x90] sm:$0xff]
        %v5226 = vld [vmem:[%s5206 + $0x98] sm:$0xff]
        %5228 = vset.pattern.permute.xlu0 0
        %5229 = vperm.xlu0 %5228, %v5207
        %v5230 = vpop.permute.xlu0 %5229
        %5233 = vset.pattern.permute.xlu0 0
        %5234 = vperm.xlu0 %5233, %v5208
        %v5235 = vpop.permute.xlu0 %5234
        %5238 = vset.pattern.permute.xlu0 0
        %5239 = vperm.xlu0 %5238, %v5209
        %v5240 = vpop.permute.xlu0 %5239
        %5243 = vset.pattern.permute.xlu0 0
        %5244 = vperm.xlu0 %5243, %v5210
        %v5245 = vpop.permute.xlu0 %5244
        %5248 = vset.pattern.permute.xlu0 0
        %5249 = vperm.xlu0 %5248, %v5211
        %v5250 = vpop.permute.xlu0 %5249
        %5253 = vset.pattern.permute.xlu0 0
        %5254 = vperm.xlu0 %5253, %v5212
        %v5255 = vpop.permute.xlu0 %5254
        %5258 = vset.pattern.permute.xlu0 0
        %5259 = vperm.xlu0 %5258, %v5213
        %v5260 = vpop.permute.xlu0 %5259
        %5263 = vset.pattern.permute.xlu0 0
        %5264 = vperm.xlu0 %5263, %v5214
        %v5265 = vpop.permute.xlu0 %5264
        %5268 = vset.pattern.permute.xlu0 0
        %5269 = vperm.xlu0 %5268, %v5215
        %v5270 = vpop.permute.xlu0 %5269
        %5273 = vset.pattern.permute.xlu0 0
        %5274 = vperm.xlu0 %5273, %v5216
        %v5275 = vpop.permute.xlu0 %5274
        %5278 = vset.pattern.permute.xlu0 0
        %5279 = vperm.xlu0 %5278, %v5217
        %v5280 = vpop.permute.xlu0 %5279
        %5283 = vset.pattern.permute.xlu0 0
        %5284 = vperm.xlu0 %5283, %v5218
        %v5285 = vpop.permute.xlu0 %5284
        %5288 = vset.pattern.permute.xlu0 0
        %5289 = vperm.xlu0 %5288, %v5219
        %v5290 = vpop.permute.xlu0 %5289
        %5293 = vset.pattern.permute.xlu0 0
        %5294 = vperm.xlu0 %5293, %v5220
        %v5295 = vpop.permute.xlu0 %5294
        %5298 = vset.pattern.permute.xlu0 0
        %5299 = vperm.xlu0 %5298, %v5221
        %v5300 = vpop.permute.xlu0 %5299
        %5303 = vset.pattern.permute.xlu0 0
        %5304 = vperm.xlu0 %5303, %v5222
        %v5305 = vpop.permute.xlu0 %5304
        %5308 = vset.pattern.permute.xlu0 0
        %5309 = vperm.xlu0 %5308, %v5223
        %v5310 = vpop.permute.xlu0 %5309
        %5313 = vset.pattern.permute.xlu0 0
        %5314 = vperm.xlu0 %5313, %v5224
        %v5315 = vpop.permute.xlu0 %5314
        %5318 = vset.pattern.permute.xlu0 0
        %5319 = vperm.xlu0 %5318, %v5225
        %v5320 = vpop.permute.xlu0 %5319
        %5323 = vset.pattern.permute.xlu0 0
        %5324 = vperm.xlu0 %5323, %v5226
        %v5325 = vpop.permute.xlu0 %5324
        %5327 = vmatpush.msra.mxu0 %v1088
        %5328 = vmatpush.msra.mxu0 %v1085
        %5329 = vmatpush.msra.mxu0 %v1082
        %5330 = vmatpush.msra.mxu0 %v1079
        %5331 = vmatpush.msra.mxu0 %v1076
        %5332 = vmatpush.msra.mxu0 %v1073
        %5333 = vmatpush.msra.mxu0 %v1070
        %5334 = vmatpush.msra.mxu0 %v1067
        %5335 = vmatpush.msra.mxu0 %v1064
        %5336 = vmatpush.msra.mxu0 %v1061
        %5337 = vmatpush.msra.mxu0 %v1058
        %5338 = vmatpush.msra.mxu0 %v1055
        %5339 = vmatpush.msra.mxu0 %v1052
        %5340 = vmatpush.msra.mxu0 %v1049
        %5341 = vmatpush.msra.mxu0 %v1046
        %5342 = vmatpush.msra.mxu0 %v1043
        %5343 = vmatmul.f32.gmra.mxu0 %v5186
        %v5344 = vpop.f32.mrf.mxu0
        %v5345 = vadd.f32 %v5230, %v5344
        %5346 = vmatmul.f32.gmra.mxu0 %v5187
        %v5347 = vpop.f32.mrf.mxu0
        %v5348 = vadd.f32 %v5235, %v5347
        %5349 = vmatmul.f32.gmra.mxu0 %v5188
        %v5350 = vpop.f32.mrf.mxu0
        %v5351 = vadd.f32 %v5240, %v5350
        %5352 = vmatmul.f32.gmra.mxu0 %v5189
        %v5353 = vpop.f32.mrf.mxu0
        %v5354 = vadd.f32 %v5245, %v5353
        %5355 = vmatmul.f32.gmra.mxu0 %v5190
        %v5356 = vpop.f32.mrf.mxu0
        %v5357 = vadd.f32 %v5250, %v5356
        %5358 = vmatmul.f32.gmra.mxu0 %v5191
        %v5359 = vpop.f32.mrf.mxu0
        %v5360 = vadd.f32 %v5255, %v5359
        %5361 = vmatmul.f32.gmra.mxu0 %v5192
        %v5362 = vpop.f32.mrf.mxu0
        %v5363 = vadd.f32 %v5260, %v5362
        %5364 = vmatmul.f32.gmra.mxu0 %v5193
        %v5365 = vpop.f32.mrf.mxu0
        %v5366 = vadd.f32 %v5265, %v5365
        %5367 = vmatmul.f32.gmra.mxu0 %v5194
        %v5368 = vpop.f32.mrf.mxu0
        %v5369 = vadd.f32 %v5270, %v5368
        %5370 = vmatmul.f32.gmra.mxu0 %v5195
        %v5371 = vpop.f32.mrf.mxu0
        %v5372 = vadd.f32 %v5275, %v5371
        %5373 = vmatmul.f32.gmra.mxu0 %v5196
        %v5374 = vpop.f32.mrf.mxu0
        %v5375 = vadd.f32 %v5280, %v5374
        %5376 = vmatmul.f32.gmra.mxu0 %v5197
        %v5377 = vpop.f32.mrf.mxu0
        %v5378 = vadd.f32 %v5285, %v5377
        %5379 = vmatmul.f32.gmra.mxu0 %v5198
        %v5380 = vpop.f32.mrf.mxu0
        %v5381 = vadd.f32 %v5290, %v5380
        %5382 = vmatmul.f32.gmra.mxu0 %v5199
        %v5383 = vpop.f32.mrf.mxu0
        %v5384 = vadd.f32 %v5295, %v5383
        %5385 = vmatmul.f32.gmra.mxu0 %v5200
        %v5386 = vpop.f32.mrf.mxu0
        %v5387 = vadd.f32 %v5300, %v5386
        %5388 = vmatmul.f32.gmra.mxu0 %v5201
        %v5389 = vpop.f32.mrf.mxu0
        %v5390 = vadd.f32 %v5305, %v5389
        %5391 = vmatmul.f32.gmra.mxu0 %v5202
        %v5392 = vpop.f32.mrf.mxu0
        %v5393 = vadd.f32 %v5310, %v5392
        %5394 = vmatmul.f32.gmra.mxu0 %v5203
        %v5395 = vpop.f32.mrf.mxu0
        %v5396 = vadd.f32 %v5315, %v5395
        %5397 = vmatmul.f32.gmra.mxu0 %v5204
        %v5398 = vpop.f32.mrf.mxu0
        %v5399 = vadd.f32 %v5320, %v5398
        %5400 = vmatmul.f32.gmra.mxu0 %v5205
        %v5401 = vpop.f32.mrf.mxu0
        %v5402 = vadd.f32 %v5325, %v5401
        %5403 = vdwg.mxu0
        %5404 = vmatpush.msra.mxu0 %v1201
        %5405 = vmatpush.msra.mxu0 %v1198
        %5406 = vmatpush.msra.mxu0 %v1195
        %5407 = vmatpush.msra.mxu0 %v1192
        %5408 = vmatpush.msra.mxu0 %v1189
        %5409 = vmatpush.msra.mxu0 %v1186
        %5410 = vmatpush.msra.mxu0 %v1183
        %5411 = vmatpush.msra.mxu0 %v1180
        %5412 = vmatpush.msra.mxu0 %v1177
        %5413 = vmatpush.msra.mxu0 %v1174
        %5414 = vmatpush.msra.mxu0 %v1171
        %5415 = vmatpush.msra.mxu0 %v1168
        %5416 = vmatpush.msra.mxu0 %v1165
        %5417 = vmatpush.msra.mxu0 %v1162
        %5418 = vmatpush.msra.mxu0 %v1159
        %5419 = vmatpush.msra.mxu0 %v1156
        %5420 = vmatmul.f32.gmra.mxu0 %v5186
        %v5421 = vpop.f32.mrf.mxu0
        %v5422 = vadd.f32 %v5230, %v5421
        %5423 = vmatmul.f32.gmra.mxu0 %v5187
        %v5424 = vpop.f32.mrf.mxu0
        %v5425 = vadd.f32 %v5235, %v5424
        %5426 = vmatmul.f32.gmra.mxu0 %v5188
        %v5427 = vpop.f32.mrf.mxu0
        %v5428 = vadd.f32 %v5240, %v5427
        %5429 = vmatmul.f32.gmra.mxu0 %v5189
        %v5430 = vpop.f32.mrf.mxu0
        %v5431 = vadd.f32 %v5245, %v5430
        %5432 = vmatmul.f32.gmra.mxu0 %v5190
        %v5433 = vpop.f32.mrf.mxu0
        %v5434 = vadd.f32 %v5250, %v5433
        %5435 = vmatmul.f32.gmra.mxu0 %v5191
        %v5436 = vpop.f32.mrf.mxu0
        %v5437 = vadd.f32 %v5255, %v5436
        %5438 = vmatmul.f32.gmra.mxu0 %v5192
        %v5439 = vpop.f32.mrf.mxu0
        %v5440 = vadd.f32 %v5260, %v5439
        %5441 = vmatmul.f32.gmra.mxu0 %v5193
        %v5442 = vpop.f32.mrf.mxu0
        %v5443 = vadd.f32 %v5265, %v5442
        %5444 = vmatmul.f32.gmra.mxu0 %v5194
        %v5445 = vpop.f32.mrf.mxu0
        %v5446 = vadd.f32 %v5270, %v5445
        %5447 = vmatmul.f32.gmra.mxu0 %v5195
        %v5448 = vpop.f32.mrf.mxu0
        %v5449 = vadd.f32 %v5275, %v5448
        %5450 = vmatmul.f32.gmra.mxu0 %v5196
        %v5451 = vpop.f32.mrf.mxu0
        %v5452 = vadd.f32 %v5280, %v5451
        %5453 = vmatmul.f32.gmra.mxu0 %v5197
        %v5454 = vpop.f32.mrf.mxu0
        %v5455 = vadd.f32 %v5285, %v5454
        %5456 = vmatmul.f32.gmra.mxu0 %v5198
        %v5457 = vpop.f32.mrf.mxu0
        %v5458 = vadd.f32 %v5290, %v5457
        %5459 = vmatmul.f32.gmra.mxu0 %v5199
        %v5460 = vpop.f32.mrf.mxu0
        %v5461 = vadd.f32 %v5295, %v5460
        %5462 = vmatmul.f32.gmra.mxu0 %v5200
        %v5463 = vpop.f32.mrf.mxu0
        %v5464 = vadd.f32 %v5300, %v5463
        %5465 = vmatmul.f32.gmra.mxu0 %v5201
        %v5466 = vpop.f32.mrf.mxu0
        %v5467 = vadd.f32 %v5305, %v5466
        %5468 = vmatmul.f32.gmra.mxu0 %v5202
        %v5469 = vpop.f32.mrf.mxu0
        %v5470 = vadd.f32 %v5310, %v5469
        %5471 = vmatmul.f32.gmra.mxu0 %v5203
        %v5472 = vpop.f32.mrf.mxu0
        %v5473 = vadd.f32 %v5315, %v5472
        %5474 = vmatmul.f32.gmra.mxu0 %v5204
        %v5475 = vpop.f32.mrf.mxu0
        %v5476 = vadd.f32 %v5320, %v5475
        %5477 = vmatmul.f32.gmra.mxu0 %v5205
        %v5478 = vpop.f32.mrf.mxu0
        %v5479 = vadd.f32 %v5325, %v5478
        %5480 = vdwg.mxu0
        %5481 = vxpose.xlu0.b32.start [1/16] %v5345, 128
        %5482 = vxpose.xlu0.b32.cont [2/16] %v5348, 128
        %5483 = vxpose.xlu0.b32.cont [3/16] 0.0, 128
        %5484 = vxpose.xlu0.b32.cont [4/16] 0.0, 128
        %5485 = vxpose.xlu0.b32.cont [5/16] 0.0, 128
        %5486 = vxpose.xlu0.b32.cont [6/16] 0.0, 128
        %5487 = vxpose.xlu0.b32.cont [7/16] 0.0, 128
        %5488 = vxpose.xlu0.b32.cont [8/16] 0.0, 128
        %5489 = vxpose.xlu0.b32.cont [9/16] 0.0, 128
        %5490 = vxpose.xlu0.b32.cont [10/16] 0.0, 128
        %5491 = vxpose.xlu0.b32.cont [11/16] 0.0, 128
        %5492 = vxpose.xlu0.b32.cont [12/16] 0.0, 128
        %5493 = vxpose.xlu0.b32.cont [13/16] 0.0, 128
        %5494 = vxpose.xlu0.b32.cont [14/16] 0.0, 128
        %5495 = vxpose.xlu0.b32.cont [15/16] 0.0, 128
        %5496 = vxpose.xlu0.b32.end [16/16] 0.0, 128
        %v5497 = vpop.trf.xlu0
        %v5498 = vpop.trf.xlu0
        %v5499 = vpop.trf.xlu0
        %v5500 = vpop.trf.xlu0
        %v5501 = vpop.trf.xlu0
        %v5502 = vpop.trf.xlu0
        %v5503 = vpop.trf.xlu0
        %v5504 = vpop.trf.xlu0
        %v5505 = vpop.trf.xlu0
        %v5506 = vpop.trf.xlu0
        %v5507 = vpop.trf.xlu0
        %v5508 = vpop.trf.xlu0
        %v5509 = vpop.trf.xlu0
        %v5510 = vpop.trf.xlu0
        %v5511 = vpop.trf.xlu0
        %v5512 = vpop.trf.xlu0
        %5513 = vxpose.xlu0.b32.start [1/16] %v5422, 128
        %5514 = vxpose.xlu0.b32.cont [2/16] %v5425, 128
        %5515 = vxpose.xlu0.b32.cont [3/16] 0.0, 128
        %5516 = vxpose.xlu0.b32.cont [4/16] 0.0, 128
        %5517 = vxpose.xlu0.b32.cont [5/16] 0.0, 128
        %5518 = vxpose.xlu0.b32.cont [6/16] 0.0, 128
        %5519 = vxpose.xlu0.b32.cont [7/16] 0.0, 128
        %5520 = vxpose.xlu0.b32.cont [8/16] 0.0, 128
        %5521 = vxpose.xlu0.b32.cont [9/16] 0.0, 128
        %5522 = vxpose.xlu0.b32.cont [10/16] 0.0, 128
        %5523 = vxpose.xlu0.b32.cont [11/16] 0.0, 128
        %5524 = vxpose.xlu0.b32.cont [12/16] 0.0, 128
        %5525 = vxpose.xlu0.b32.cont [13/16] 0.0, 128
        %5526 = vxpose.xlu0.b32.cont [14/16] 0.0, 128
        %5527 = vxpose.xlu0.b32.cont [15/16] 0.0, 128
        %5528 = vxpose.xlu0.b32.end [16/16] 0.0, 128
        %v5529 = vpop.trf.xlu0
        %v5530 = vpop.trf.xlu0
        %v5531 = vpop.trf.xlu0
        %v5532 = vpop.trf.xlu0
        %v5533 = vpop.trf.xlu0
        %v5534 = vpop.trf.xlu0
        %v5535 = vpop.trf.xlu0
        %v5536 = vpop.trf.xlu0
        %v5537 = vpop.trf.xlu0
        %v5538 = vpop.trf.xlu0
        %v5539 = vpop.trf.xlu0
        %v5540 = vpop.trf.xlu0
        %v5541 = vpop.trf.xlu0
        %v5542 = vpop.trf.xlu0
        %v5543 = vpop.trf.xlu0
        %v5544 = vpop.trf.xlu0
        %v5546 = vsel %vm1452, %v5497, 0
        %v5549 = vsel %vm1452, %v5498, 0
        %v5552 = vsel %vm1452, %v5499, 0
        %v5555 = vsel %vm1452, %v5500, 0
        %v5558 = vsel %vm1452, %v5501, 0
        %v5561 = vsel %vm1452, %v5502, 0
        %v5564 = vsel %vm1452, %v5503, 0
        %v5567 = vsel %vm1452, %v5504, 0
        %v5570 = vsel %vm1452, %v5505, 0
        %v5573 = vsel %vm1452, %v5506, 0
        %v5576 = vsel %vm1452, %v5507, 0
        %v5579 = vsel %vm1452, %v5508, 0
        %v5582 = vsel %vm1452, %v5509, 0
        %v5585 = vsel %vm1452, %v5510, 0
        %v5588 = vsel %vm1452, %v5511, 0
        %v5591 = vsel %vm1452, %v5512, 0
        %v5594 = vsel %vm1452, %v5529, 0
        %v5597 = vsel %vm1452, %v5530, 0
        %v5600 = vsel %vm1452, %v5531, 0
        %v5603 = vsel %vm1452, %v5532, 0
        %v5606 = vsel %vm1452, %v5533, 0
        %v5609 = vsel %vm1452, %v5534, 0
        %v5612 = vsel %vm1452, %v5535, 0
        %v5615 = vsel %vm1452, %v5536, 0
        %5617 = vmatpush.msra.mxu0 0.0
        %5618 = vmatpush.msra.mxu0 0.0
        %5619 = vmatpush.msra.mxu0 0.0
        %5620 = vmatpush.msra.mxu0 0.0
        %5621 = vmatpush.msra.mxu0 0.0
        %5622 = vmatpush.msra.mxu0 0.0
        %5623 = vmatpush.msra.mxu0 0.0
        %5624 = vmatpush.msra.mxu0 0.0
        %5625 = vmatpush.msra.mxu0 0.0
        %5626 = vmatpush.msra.mxu0 0.0
        %5627 = vmatpush.msra.mxu0 0.0
        %5628 = vmatpush.msra.mxu0 0.0
        %5629 = vmatpush.msra.mxu0 0.0
        %5630 = vmatpush.msra.mxu0 0.0
        %5631 = vmatpush.msra.mxu0 %v5354
        %5632 = vmatpush.msra.mxu0 %v5351
        %5633 = vmatmul.f32.gmra.mxu0 %v5546
        %v5634 = vpop.f32.mrf.mxu0
        %v5635 = vadd.f32 0.0, %v5634
        %5636 = vmatmul.f32.gmra.mxu0 %v5549
        %v5637 = vpop.f32.mrf.mxu0
        %v5638 = vadd.f32 0.0, %v5637
        %5639 = vmatmul.f32.gmra.mxu0 %v5552
        %v5640 = vpop.f32.mrf.mxu0
        %v5641 = vadd.f32 0.0, %v5640
        %5642 = vmatmul.f32.gmra.mxu0 %v5555
        %v5643 = vpop.f32.mrf.mxu0
        %v5644 = vadd.f32 0.0, %v5643
        %5645 = vmatmul.f32.gmra.mxu0 %v5558
        %v5646 = vpop.f32.mrf.mxu0
        %v5647 = vadd.f32 0.0, %v5646
        %5648 = vmatmul.f32.gmra.mxu0 %v5561
        %v5649 = vpop.f32.mrf.mxu0
        %v5650 = vadd.f32 0.0, %v5649
        %5651 = vmatmul.f32.gmra.mxu0 %v5564
        %v5652 = vpop.f32.mrf.mxu0
        %v5653 = vadd.f32 0.0, %v5652
        %5654 = vmatmul.f32.gmra.mxu0 %v5567
        %v5655 = vpop.f32.mrf.mxu0
        %v5656 = vadd.f32 0.0, %v5655
        %5657 = vmatmul.f32.gmra.mxu0 %v5570
        %v5658 = vpop.f32.mrf.mxu0
        %v5659 = vadd.f32 0.0, %v5658
        %5660 = vmatmul.f32.gmra.mxu0 %v5573
        %v5661 = vpop.f32.mrf.mxu0
        %v5662 = vadd.f32 0.0, %v5661
        %5663 = vmatmul.f32.gmra.mxu0 %v5576
        %v5664 = vpop.f32.mrf.mxu0
        %v5665 = vadd.f32 0.0, %v5664
        %5666 = vmatmul.f32.gmra.mxu0 %v5579
        %v5667 = vpop.f32.mrf.mxu0
        %v5668 = vadd.f32 0.0, %v5667
        %5669 = vmatmul.f32.gmra.mxu0 %v5582
        %v5670 = vpop.f32.mrf.mxu0
        %v5671 = vadd.f32 0.0, %v5670
        %5672 = vmatmul.f32.gmra.mxu0 %v5585
        %v5673 = vpop.f32.mrf.mxu0
        %v5674 = vadd.f32 0.0, %v5673
        %5675 = vmatmul.f32.gmra.mxu0 %v5588
        %v5676 = vpop.f32.mrf.mxu0
        %v5677 = vadd.f32 0.0, %v5676
        %5678 = vmatmul.f32.gmra.mxu0 %v5591
        %v5679 = vpop.f32.mrf.mxu0
        %v5680 = vadd.f32 0.0, %v5679
        %5681 = vmatmul.f32.gmra.mxu0 %v5594
        %v5682 = vpop.f32.mrf.mxu0
        %v5683 = vadd.f32 0.0, %v5682
        %5684 = vmatmul.f32.gmra.mxu0 %v5597
        %v5685 = vpop.f32.mrf.mxu0
        %v5686 = vadd.f32 0.0, %v5685
        %5687 = vmatmul.f32.gmra.mxu0 %v5600
        %v5688 = vpop.f32.mrf.mxu0
        %v5689 = vadd.f32 0.0, %v5688
        %5690 = vmatmul.f32.gmra.mxu0 %v5603
        %v5691 = vpop.f32.mrf.mxu0
        %v5692 = vadd.f32 0.0, %v5691
        %5693 = vmatmul.f32.gmra.mxu0 %v5606
        %v5694 = vpop.f32.mrf.mxu0
        %v5695 = vadd.f32 0.0, %v5694
        %5696 = vmatmul.f32.gmra.mxu0 %v5609
        %v5697 = vpop.f32.mrf.mxu0
        %v5698 = vadd.f32 0.0, %v5697
        %5699 = vmatmul.f32.gmra.mxu0 %v5612
        %v5700 = vpop.f32.mrf.mxu0
        %v5701 = vadd.f32 0.0, %v5700
        %5702 = vmatmul.f32.gmra.mxu0 %v5615
        %v5703 = vpop.f32.mrf.mxu0
        %v5704 = vadd.f32 0.0, %v5703
        %5705 = vdwg.mxu0
        %5706 = vmatpush.msra.mxu0 0.0
        %5707 = vmatpush.msra.mxu0 0.0
        %5708 = vmatpush.msra.mxu0 0.0
        %5709 = vmatpush.msra.mxu0 0.0
        %5710 = vmatpush.msra.mxu0 0.0
        %5711 = vmatpush.msra.mxu0 0.0
        %5712 = vmatpush.msra.mxu0 0.0
        %5713 = vmatpush.msra.mxu0 0.0
        %5714 = vmatpush.msra.mxu0 0.0
        %5715 = vmatpush.msra.mxu0 0.0
        %5716 = vmatpush.msra.mxu0 0.0
        %5717 = vmatpush.msra.mxu0 0.0
        %5718 = vmatpush.msra.mxu0 0.0
        %5719 = vmatpush.msra.mxu0 0.0
        %5720 = vmatpush.msra.mxu0 %v5431
        %5721 = vmatpush.msra.mxu0 %v5428
        %5722 = vmatmul.f32.gmra.mxu0 %v5546
        %v5723 = vpop.f32.mrf.mxu0
        %v5724 = vadd.f32 0.0, %v5723
        %5725 = vmatmul.f32.gmra.mxu0 %v5549
        %v5726 = vpop.f32.mrf.mxu0
        %v5727 = vadd.f32 0.0, %v5726
        %5728 = vmatmul.f32.gmra.mxu0 %v5552
        %v5729 = vpop.f32.mrf.mxu0
        %v5730 = vadd.f32 0.0, %v5729
        %5731 = vmatmul.f32.gmra.mxu0 %v5555
        %v5732 = vpop.f32.mrf.mxu0
        %v5733 = vadd.f32 0.0, %v5732
        %5734 = vmatmul.f32.gmra.mxu0 %v5558
        %v5735 = vpop.f32.mrf.mxu0
        %v5736 = vadd.f32 0.0, %v5735
        %5737 = vmatmul.f32.gmra.mxu0 %v5561
        %v5738 = vpop.f32.mrf.mxu0
        %v5739 = vadd.f32 0.0, %v5738
        %5740 = vmatmul.f32.gmra.mxu0 %v5564
        %v5741 = vpop.f32.mrf.mxu0
        %v5742 = vadd.f32 0.0, %v5741
        %5743 = vmatmul.f32.gmra.mxu0 %v5567
        %v5744 = vpop.f32.mrf.mxu0
        %v5745 = vadd.f32 0.0, %v5744
        %5746 = vmatmul.f32.gmra.mxu0 %v5570
        %v5747 = vpop.f32.mrf.mxu0
        %v5748 = vadd.f32 0.0, %v5747
        %5749 = vmatmul.f32.gmra.mxu0 %v5573
        %v5750 = vpop.f32.mrf.mxu0
        %v5751 = vadd.f32 0.0, %v5750
        %5752 = vmatmul.f32.gmra.mxu0 %v5576
        %v5753 = vpop.f32.mrf.mxu0
        %v5754 = vadd.f32 0.0, %v5753
        %5755 = vmatmul.f32.gmra.mxu0 %v5579
        %v5756 = vpop.f32.mrf.mxu0
        %v5757 = vadd.f32 0.0, %v5756
        %5758 = vmatmul.f32.gmra.mxu0 %v5582
        %v5759 = vpop.f32.mrf.mxu0
        %v5760 = vadd.f32 0.0, %v5759
        %5761 = vmatmul.f32.gmra.mxu0 %v5585
        %v5762 = vpop.f32.mrf.mxu0
        %v5763 = vadd.f32 0.0, %v5762
        %5764 = vmatmul.f32.gmra.mxu0 %v5588
        %v5765 = vpop.f32.mrf.mxu0
        %v5766 = vadd.f32 0.0, %v5765
        %5767 = vmatmul.f32.gmra.mxu0 %v5591
        %v5768 = vpop.f32.mrf.mxu0
        %v5769 = vadd.f32 0.0, %v5768
        %5770 = vmatmul.f32.gmra.mxu0 %v5594
        %v5771 = vpop.f32.mrf.mxu0
        %v5772 = vadd.f32 0.0, %v5771
        %5773 = vmatmul.f32.gmra.mxu0 %v5597
        %v5774 = vpop.f32.mrf.mxu0
        %v5775 = vadd.f32 0.0, %v5774
        %5776 = vmatmul.f32.gmra.mxu0 %v5600
        %v5777 = vpop.f32.mrf.mxu0
        %v5778 = vadd.f32 0.0, %v5777
        %5779 = vmatmul.f32.gmra.mxu0 %v5603
        %v5780 = vpop.f32.mrf.mxu0
        %v5781 = vadd.f32 0.0, %v5780
        %5782 = vmatmul.f32.gmra.mxu0 %v5606
        %v5783 = vpop.f32.mrf.mxu0
        %v5784 = vadd.f32 0.0, %v5783
        %5785 = vmatmul.f32.gmra.mxu0 %v5609
        %v5786 = vpop.f32.mrf.mxu0
        %v5787 = vadd.f32 0.0, %v5786
        %5788 = vmatmul.f32.gmra.mxu0 %v5612
        %v5789 = vpop.f32.mrf.mxu0
        %v5790 = vadd.f32 0.0, %v5789
        %5791 = vmatmul.f32.gmra.mxu0 %v5615
        %v5792 = vpop.f32.mrf.mxu0
        %v5793 = vadd.f32 0.0, %v5792
        %5794 = vdwg.mxu0
        %v5795 = vsel %vm3125, %v5724, -inf
        %v5796 = vmax.f32 %v5635, %v5795
        %5797 = vmax.xlane.f32.xlu0 %v5796
        %v5798 = vpop.xlane.xlu0 %5797
        %v5799 = vsel %vm3125, %v5727, -inf
        %v5800 = vmax.f32 %v5638, %v5799
        %5801 = vmax.xlane.f32.xlu0 %v5800
        %v5802 = vpop.xlane.xlu0 %5801
        %v5803 = vsel %vm3125, %v5730, -inf
        %v5804 = vmax.f32 %v5641, %v5803
        %5805 = vmax.xlane.f32.xlu0 %v5804
        %v5806 = vpop.xlane.xlu0 %5805
        %v5807 = vsel %vm3125, %v5733, -inf
        %v5808 = vmax.f32 %v5644, %v5807
        %5809 = vmax.xlane.f32.xlu0 %v5808
        %v5810 = vpop.xlane.xlu0 %5809
        %v5811 = vsel %vm3125, %v5736, -inf
        %v5812 = vmax.f32 %v5647, %v5811
        %5813 = vmax.xlane.f32.xlu0 %v5812
        %v5814 = vpop.xlane.xlu0 %5813
        %v5815 = vsel %vm3125, %v5739, -inf
        %v5816 = vmax.f32 %v5650, %v5815
        %5817 = vmax.xlane.f32.xlu0 %v5816
        %v5818 = vpop.xlane.xlu0 %5817
        %v5819 = vsel %vm3125, %v5742, -inf
        %v5820 = vmax.f32 %v5653, %v5819
        %5821 = vmax.xlane.f32.xlu0 %v5820
        %v5822 = vpop.xlane.xlu0 %5821
        %v5823 = vsel %vm3125, %v5745, -inf
        %v5824 = vmax.f32 %v5656, %v5823
        %5825 = vmax.xlane.f32.xlu0 %v5824
        %v5826 = vpop.xlane.xlu0 %5825
        %v5827 = vsel %vm3125, %v5748, -inf
        %v5828 = vmax.f32 %v5659, %v5827
        %5829 = vmax.xlane.f32.xlu0 %v5828
        %v5830 = vpop.xlane.xlu0 %5829
        %v5831 = vsel %vm3125, %v5751, -inf
        %v5832 = vmax.f32 %v5662, %v5831
        %5833 = vmax.xlane.f32.xlu0 %v5832
        %v5834 = vpop.xlane.xlu0 %5833
        %v5835 = vsel %vm3125, %v5754, -inf
        %v5836 = vmax.f32 %v5665, %v5835
        %5837 = vmax.xlane.f32.xlu0 %v5836
        %v5838 = vpop.xlane.xlu0 %5837
        %v5839 = vsel %vm3125, %v5757, -inf
        %v5840 = vmax.f32 %v5668, %v5839
        %5841 = vmax.xlane.f32.xlu0 %v5840
        %v5842 = vpop.xlane.xlu0 %5841
        %v5843 = vsel %vm3125, %v5760, -inf
        %v5844 = vmax.f32 %v5671, %v5843
        %5845 = vmax.xlane.f32.xlu0 %v5844
        %v5846 = vpop.xlane.xlu0 %5845
        %v5847 = vsel %vm3125, %v5763, -inf
        %v5848 = vmax.f32 %v5674, %v5847
        %5849 = vmax.xlane.f32.xlu0 %v5848
        %v5850 = vpop.xlane.xlu0 %5849
        %v5851 = vsel %vm3125, %v5766, -inf
        %v5852 = vmax.f32 %v5677, %v5851
        %5853 = vmax.xlane.f32.xlu0 %v5852
        %v5854 = vpop.xlane.xlu0 %5853
        %v5855 = vsel %vm3125, %v5769, -inf
        %v5856 = vmax.f32 %v5680, %v5855
        %5857 = vmax.xlane.f32.xlu0 %v5856
        %v5858 = vpop.xlane.xlu0 %5857
        %v5859 = vsel %vm3125, %v5772, -inf
        %v5860 = vmax.f32 %v5683, %v5859
        %5861 = vmax.xlane.f32.xlu0 %v5860
        %v5862 = vpop.xlane.xlu0 %5861
        %v5863 = vsel %vm3125, %v5775, -inf
        %v5864 = vmax.f32 %v5686, %v5863
        %5865 = vmax.xlane.f32.xlu0 %v5864
        %v5866 = vpop.xlane.xlu0 %5865
        %v5867 = vsel %vm3125, %v5778, -inf
        %v5868 = vmax.f32 %v5689, %v5867
        %5869 = vmax.xlane.f32.xlu0 %v5868
        %v5870 = vpop.xlane.xlu0 %5869
        %v5871 = vsel %vm3125, %v5781, -inf
        %v5872 = vmax.f32 %v5692, %v5871
        %5873 = vmax.xlane.f32.xlu0 %v5872
        %v5874 = vpop.xlane.xlu0 %5873
        %v5875 = vsel %vm3125, %v5784, -inf
        %v5876 = vmax.f32 %v5695, %v5875
        %5877 = vmax.xlane.f32.xlu0 %v5876
        %v5878 = vpop.xlane.xlu0 %5877
        %v5879 = vsel %vm3125, %v5787, -inf
        %v5880 = vmax.f32 %v5698, %v5879
        %5881 = vmax.xlane.f32.xlu0 %v5880
        %v5882 = vpop.xlane.xlu0 %5881
        %v5883 = vsel %vm3125, %v5790, -inf
        %v5884 = vmax.f32 %v5701, %v5883
        %5885 = vmax.xlane.f32.xlu0 %v5884
        %v5886 = vpop.xlane.xlu0 %5885
        %v5887 = vsel %vm3125, %v5793, -inf
        %v5888 = vmax.f32 %v5704, %v5887
        %5889 = vmax.xlane.f32.xlu0 %v5888
        %v5890 = vpop.xlane.xlu0 %5889
        %v5891 = vsub.f32 %v5635, %v5798
        %v5892 = vsub.f32 %v5724, %v5798
        %v5893 = vsub.f32 %v5638, %v5802
        %v5894 = vsub.f32 %v5727, %v5802
        %v5895 = vsub.f32 %v5641, %v5806
        %v5896 = vsub.f32 %v5730, %v5806
        %v5897 = vsub.f32 %v5644, %v5810
        %v5898 = vsub.f32 %v5733, %v5810
        %v5899 = vsub.f32 %v5647, %v5814
        %v5900 = vsub.f32 %v5736, %v5814
        %v5901 = vsub.f32 %v5650, %v5818
        %v5902 = vsub.f32 %v5739, %v5818
        %v5903 = vsub.f32 %v5653, %v5822
        %v5904 = vsub.f32 %v5742, %v5822
        %v5905 = vsub.f32 %v5656, %v5826
        %v5906 = vsub.f32 %v5745, %v5826
        %v5907 = vsub.f32 %v5659, %v5830
        %v5908 = vsub.f32 %v5748, %v5830
        %v5909 = vsub.f32 %v5662, %v5834
        %v5910 = vsub.f32 %v5751, %v5834
        %v5911 = vsub.f32 %v5665, %v5838
        %v5912 = vsub.f32 %v5754, %v5838
        %v5913 = vsub.f32 %v5668, %v5842
        %v5914 = vsub.f32 %v5757, %v5842
        %v5915 = vsub.f32 %v5671, %v5846
        %v5916 = vsub.f32 %v5760, %v5846
        %v5917 = vsub.f32 %v5674, %v5850
        %v5918 = vsub.f32 %v5763, %v5850
        %v5919 = vsub.f32 %v5677, %v5854
        %v5920 = vsub.f32 %v5766, %v5854
        %v5921 = vsub.f32 %v5680, %v5858
        %v5922 = vsub.f32 %v5769, %v5858
        %v5923 = vsub.f32 %v5683, %v5862
        %v5924 = vsub.f32 %v5772, %v5862
        %v5925 = vsub.f32 %v5686, %v5866
        %v5926 = vsub.f32 %v5775, %v5866
        %v5927 = vsub.f32 %v5689, %v5870
        %v5928 = vsub.f32 %v5778, %v5870
        %v5929 = vsub.f32 %v5692, %v5874
        %v5930 = vsub.f32 %v5781, %v5874
        %v5931 = vsub.f32 %v5695, %v5878
        %v5932 = vsub.f32 %v5784, %v5878
        %v5933 = vsub.f32 %v5698, %v5882
        %v5934 = vsub.f32 %v5787, %v5882
        %v5935 = vsub.f32 %v5701, %v5886
        %v5936 = vsub.f32 %v5790, %v5886
        %v5937 = vsub.f32 %v5704, %v5890
        %v5938 = vsub.f32 %v5793, %v5890
        %v5939 = vmul.f32 %v5891, 1.442695
        %v5940 = vpow.pop %v5939
        %v5941 = vmul.f32 %v5892, 1.442695
        %v5942 = vpow.pop %v5941
        %v5943 = vmul.f32 %v5893, 1.442695
        %v5944 = vpow.pop %v5943
        %v5945 = vmul.f32 %v5894, 1.442695
        %v5946 = vpow.pop %v5945
        %v5947 = vmul.f32 %v5895, 1.442695
        %v5948 = vpow.pop %v5947
        %v5949 = vmul.f32 %v5896, 1.442695
        %v5950 = vpow.pop %v5949
        %v5951 = vmul.f32 %v5897, 1.442695
        %v5952 = vpow.pop %v5951
        %v5953 = vmul.f32 %v5898, 1.442695
        %v5954 = vpow.pop %v5953
        %v5955 = vmul.f32 %v5899, 1.442695
        %v5956 = vpow.pop %v5955
        %v5957 = vmul.f32 %v5900, 1.442695
        %v5958 = vpow.pop %v5957
        %v5959 = vmul.f32 %v5901, 1.442695
        %v5960 = vpow.pop %v5959
        %v5961 = vmul.f32 %v5902, 1.442695
        %v5962 = vpow.pop %v5961
        %v5963 = vmul.f32 %v5903, 1.442695
        %v5964 = vpow.pop %v5963
        %v5965 = vmul.f32 %v5904, 1.442695
        %v5966 = vpow.pop %v5965
        %v5967 = vmul.f32 %v5905, 1.442695
        %v5968 = vpow.pop %v5967
        %v5969 = vmul.f32 %v5906, 1.442695
        %v5970 = vpow.pop %v5969
        %v5971 = vmul.f32 %v5907, 1.442695
        %v5972 = vpow.pop %v5971
        %v5973 = vmul.f32 %v5908, 1.442695
        %v5974 = vpow.pop %v5973
        %v5975 = vmul.f32 %v5909, 1.442695
        %v5976 = vpow.pop %v5975
        %v5977 = vmul.f32 %v5910, 1.442695
        %v5978 = vpow.pop %v5977
        %v5979 = vmul.f32 %v5911, 1.442695
        %v5980 = vpow.pop %v5979
        %v5981 = vmul.f32 %v5912, 1.442695
        %v5982 = vpow.pop %v5981
        %v5983 = vmul.f32 %v5913, 1.442695
        %v5984 = vpow.pop %v5983
        %v5985 = vmul.f32 %v5914, 1.442695
        %v5986 = vpow.pop %v5985
        %v5987 = vmul.f32 %v5915, 1.442695
        %v5988 = vpow.pop %v5987
        %v5989 = vmul.f32 %v5916, 1.442695
        %v5990 = vpow.pop %v5989
        %v5991 = vmul.f32 %v5917, 1.442695
        %v5992 = vpow.pop %v5991
        %v5993 = vmul.f32 %v5918, 1.442695
        %v5994 = vpow.pop %v5993
        %v5995 = vmul.f32 %v5919, 1.442695
        %v5996 = vpow.pop %v5995
        %v5997 = vmul.f32 %v5920, 1.442695
        %v5998 = vpow.pop %v5997
        %v5999 = vmul.f32 %v5921, 1.442695
        %v6000 = vpow.pop %v5999
        %v6001 = vmul.f32 %v5922, 1.442695
        %v6002 = vpow.pop %v6001
        %v6003 = vmul.f32 %v5923, 1.442695
        %v6004 = vpow.pop %v6003
        %v6005 = vmul.f32 %v5924, 1.442695
        %v6006 = vpow.pop %v6005
        %v6007 = vmul.f32 %v5925, 1.442695
        %v6008 = vpow.pop %v6007
        %v6009 = vmul.f32 %v5926, 1.442695
        %v6010 = vpow.pop %v6009
        %v6011 = vmul.f32 %v5927, 1.442695
        %v6012 = vpow.pop %v6011
        %v6013 = vmul.f32 %v5928, 1.442695
        %v6014 = vpow.pop %v6013
        %v6015 = vmul.f32 %v5929, 1.442695
        %v6016 = vpow.pop %v6015
        %v6017 = vmul.f32 %v5930, 1.442695
        %v6018 = vpow.pop %v6017
        %v6019 = vmul.f32 %v5931, 1.442695
        %v6020 = vpow.pop %v6019
        %v6021 = vmul.f32 %v5932, 1.442695
        %v6022 = vpow.pop %v6021
        %v6023 = vmul.f32 %v5933, 1.442695
        %v6024 = vpow.pop %v6023
        %v6025 = vmul.f32 %v5934, 1.442695
        %v6026 = vpow.pop %v6025
        %v6027 = vmul.f32 %v5935, 1.442695
        %v6028 = vpow.pop %v6027
        %v6029 = vmul.f32 %v5936, 1.442695
        %v6030 = vpow.pop %v6029
        %v6031 = vmul.f32 %v5937, 1.442695
        %v6032 = vpow.pop %v6031
        %v6033 = vmul.f32 %v5938, 1.442695
        %v6034 = vpow.pop %v6033
        %v6035 = vsel %vm3125, %v5942, 0.0
        %v6036 = vadd.f32 %v5940, %v6035
        %6037 = vadd.xlane.f32.xlu0 %v6036
        %v6038 = vpop.xlane.xlu0 %6037
        %v6039 = vsel %vm3125, %v5946, 0.0
        %v6040 = vadd.f32 %v5944, %v6039
        %6041 = vadd.xlane.f32.xlu0 %v6040
        %v6042 = vpop.xlane.xlu0 %6041
        %v6043 = vsel %vm3125, %v5950, 0.0
        %v6044 = vadd.f32 %v5948, %v6043
        %6045 = vadd.xlane.f32.xlu0 %v6044
        %v6046 = vpop.xlane.xlu0 %6045
        %v6047 = vsel %vm3125, %v5954, 0.0
        %v6048 = vadd.f32 %v5952, %v6047
        %6049 = vadd.xlane.f32.xlu0 %v6048
        %v6050 = vpop.xlane.xlu0 %6049
        %v6051 = vsel %vm3125, %v5958, 0.0
        %v6052 = vadd.f32 %v5956, %v6051
        %6053 = vadd.xlane.f32.xlu0 %v6052
        %v6054 = vpop.xlane.xlu0 %6053
        %v6055 = vsel %vm3125, %v5962, 0.0
        %v6056 = vadd.f32 %v5960, %v6055
        %6057 = vadd.xlane.f32.xlu0 %v6056
        %v6058 = vpop.xlane.xlu0 %6057
        %v6059 = vsel %vm3125, %v5966, 0.0
        %v6060 = vadd.f32 %v5964, %v6059
        %6061 = vadd.xlane.f32.xlu0 %v6060
        %v6062 = vpop.xlane.xlu0 %6061
        %v6063 = vsel %vm3125, %v5970, 0.0
        %v6064 = vadd.f32 %v5968, %v6063
        %6065 = vadd.xlane.f32.xlu0 %v6064
        %v6066 = vpop.xlane.xlu0 %6065
        %v6067 = vsel %vm3125, %v5974, 0.0
        %v6068 = vadd.f32 %v5972, %v6067
        %6069 = vadd.xlane.f32.xlu0 %v6068
        %v6070 = vpop.xlane.xlu0 %6069
        %v6071 = vsel %vm3125, %v5978, 0.0
        %v6072 = vadd.f32 %v5976, %v6071
        %6073 = vadd.xlane.f32.xlu0 %v6072
        %v6074 = vpop.xlane.xlu0 %6073
        %v6075 = vsel %vm3125, %v5982, 0.0
        %v6076 = vadd.f32 %v5980, %v6075
        %6077 = vadd.xlane.f32.xlu0 %v6076
        %v6078 = vpop.xlane.xlu0 %6077
        %v6079 = vsel %vm3125, %v5986, 0.0
        %v6080 = vadd.f32 %v5984, %v6079
        %6081 = vadd.xlane.f32.xlu0 %v6080
        %v6082 = vpop.xlane.xlu0 %6081
        %v6083 = vsel %vm3125, %v5990, 0.0
        %v6084 = vadd.f32 %v5988, %v6083
        %6085 = vadd.xlane.f32.xlu0 %v6084
        %v6086 = vpop.xlane.xlu0 %6085
        %v6087 = vsel %vm3125, %v5994, 0.0
        %v6088 = vadd.f32 %v5992, %v6087
        %6089 = vadd.xlane.f32.xlu0 %v6088
        %v6090 = vpop.xlane.xlu0 %6089
        %v6091 = vsel %vm3125, %v5998, 0.0
        %v6092 = vadd.f32 %v5996, %v6091
        %6093 = vadd.xlane.f32.xlu0 %v6092
        %v6094 = vpop.xlane.xlu0 %6093
        %v6095 = vsel %vm3125, %v6002, 0.0
        %v6096 = vadd.f32 %v6000, %v6095
        %6097 = vadd.xlane.f32.xlu0 %v6096
        %v6098 = vpop.xlane.xlu0 %6097
        %v6099 = vsel %vm3125, %v6006, 0.0
        %v6100 = vadd.f32 %v6004, %v6099
        %6101 = vadd.xlane.f32.xlu0 %v6100
        %v6102 = vpop.xlane.xlu0 %6101
        %v6103 = vsel %vm3125, %v6010, 0.0
        %v6104 = vadd.f32 %v6008, %v6103
        %6105 = vadd.xlane.f32.xlu0 %v6104
        %v6106 = vpop.xlane.xlu0 %6105
        %v6107 = vsel %vm3125, %v6014, 0.0
        %v6108 = vadd.f32 %v6012, %v6107
        %6109 = vadd.xlane.f32.xlu0 %v6108
        %v6110 = vpop.xlane.xlu0 %6109
        %v6111 = vsel %vm3125, %v6018, 0.0
        %v6112 = vadd.f32 %v6016, %v6111
        %6113 = vadd.xlane.f32.xlu0 %v6112
        %v6114 = vpop.xlane.xlu0 %6113
        %v6115 = vsel %vm3125, %v6022, 0.0
        %v6116 = vadd.f32 %v6020, %v6115
        %6117 = vadd.xlane.f32.xlu0 %v6116
        %v6118 = vpop.xlane.xlu0 %6117
        %v6119 = vsel %vm3125, %v6026, 0.0
        %v6120 = vadd.f32 %v6024, %v6119
        %6121 = vadd.xlane.f32.xlu0 %v6120
        %v6122 = vpop.xlane.xlu0 %6121
        %v6123 = vsel %vm3125, %v6030, 0.0
        %v6124 = vadd.f32 %v6028, %v6123
        %6125 = vadd.xlane.f32.xlu0 %v6124
        %v6126 = vpop.xlane.xlu0 %6125
        %v6127 = vsel %vm3125, %v6034, 0.0
        %v6128 = vadd.f32 %v6032, %v6127
        %6129 = vadd.xlane.f32.xlu0 %v6128
        %v6130 = vpop.xlane.xlu0 %6129
        %v6131 = vrcp.pop %v6038
        %v6132 = vmul.f32 %v6038, %v6131
        %v6133 = vsub.f32 1.0, %v6132
        %v6134 = vmul.f32 %v6131, %v6133
        %v6135 = vadd.f32 %v6131, %v6134
        %vm6136 = vweird.f32 %v6038
        %vm6137 = vweird.f32 %v6131
        %vm6138 = vmor %vm6136, %vm6137
        %v6139 = vsel %vm6138, %v6131, %v6135
        %v6140 = vand.u32 2147483647, %v6038
        %vm6141 = vcmp.eq.f32.partialorder %v6140, 8.507059e+37
        %v6142 = vand.u32 %v6038, 2147483648
        %v6143 = vor.u32 1.1754944e-38, %v6142
        %v6144 = vsel %vm6141, %v6143, %v6139
        %v6145 = vmul.f32 %v5940, %v6144
        %v6146 = vmul.f32 %v5942, %v6144
        %v6147 = vrcp.pop %v6042
        %v6148 = vmul.f32 %v6042, %v6147
        %v6149 = vsub.f32 1.0, %v6148
        %v6150 = vmul.f32 %v6147, %v6149
        %v6151 = vadd.f32 %v6147, %v6150
        %vm6152 = vweird.f32 %v6042
        %vm6153 = vweird.f32 %v6147
        %vm6154 = vmor %vm6152, %vm6153
        %v6155 = vsel %vm6154, %v6147, %v6151
        %v6156 = vand.u32 2147483647, %v6042
        %vm6157 = vcmp.eq.f32.partialorder %v6156, 8.507059e+37
        %v6158 = vand.u32 %v6042, 2147483648
        %v6159 = vor.u32 1.1754944e-38, %v6158
        %v6160 = vsel %vm6157, %v6159, %v6155
        %v6161 = vmul.f32 %v5944, %v6160
        %v6162 = vmul.f32 %v5946, %v6160
        %v6163 = vrcp.pop %v6046
        %v6164 = vmul.f32 %v6046, %v6163
        %v6165 = vsub.f32 1.0, %v6164
        %v6166 = vmul.f32 %v6163, %v6165
        %v6167 = vadd.f32 %v6163, %v6166
        %vm6168 = vweird.f32 %v6046
        %vm6169 = vweird.f32 %v6163
        %vm6170 = vmor %vm6168, %vm6169
        %v6171 = vsel %vm6170, %v6163, %v6167
        %v6172 = vand.u32 2147483647, %v6046
        %vm6173 = vcmp.eq.f32.partialorder %v6172, 8.507059e+37
        %v6174 = vand.u32 %v6046, 2147483648
        %v6175 = vor.u32 1.1754944e-38, %v6174
        %v6176 = vsel %vm6173, %v6175, %v6171
        %v6177 = vmul.f32 %v5948, %v6176
        %v6178 = vmul.f32 %v5950, %v6176
        %v6179 = vrcp.pop %v6050
        %v6180 = vmul.f32 %v6050, %v6179
        %v6181 = vsub.f32 1.0, %v6180
        %v6182 = vmul.f32 %v6179, %v6181
        %v6183 = vadd.f32 %v6179, %v6182
        %vm6184 = vweird.f32 %v6050
        %vm6185 = vweird.f32 %v6179
        %vm6186 = vmor %vm6184, %vm6185
        %v6187 = vsel %vm6186, %v6179, %v6183
        %v6188 = vand.u32 2147483647, %v6050
        %vm6189 = vcmp.eq.f32.partialorder %v6188, 8.507059e+37
        %v6190 = vand.u32 %v6050, 2147483648
        %v6191 = vor.u32 1.1754944e-38, %v6190
        %v6192 = vsel %vm6189, %v6191, %v6187
        %v6193 = vmul.f32 %v5952, %v6192
        %v6194 = vmul.f32 %v5954, %v6192
        %v6195 = vrcp.pop %v6054
        %v6196 = vmul.f32 %v6054, %v6195
        %v6197 = vsub.f32 1.0, %v6196
        %v6198 = vmul.f32 %v6195, %v6197
        %v6199 = vadd.f32 %v6195, %v6198
        %vm6200 = vweird.f32 %v6054
        %vm6201 = vweird.f32 %v6195
        %vm6202 = vmor %vm6200, %vm6201
        %v6203 = vsel %vm6202, %v6195, %v6199
        %v6204 = vand.u32 2147483647, %v6054
        %vm6205 = vcmp.eq.f32.partialorder %v6204, 8.507059e+37
        %v6206 = vand.u32 %v6054, 2147483648
        %v6207 = vor.u32 1.1754944e-38, %v6206
        %v6208 = vsel %vm6205, %v6207, %v6203
        %v6209 = vmul.f32 %v5956, %v6208
        %v6210 = vmul.f32 %v5958, %v6208
        %v6211 = vrcp.pop %v6058
        %v6212 = vmul.f32 %v6058, %v6211
        %v6213 = vsub.f32 1.0, %v6212
        %v6214 = vmul.f32 %v6211, %v6213
        %v6215 = vadd.f32 %v6211, %v6214
        %vm6216 = vweird.f32 %v6058
        %vm6217 = vweird.f32 %v6211
        %vm6218 = vmor %vm6216, %vm6217
        %v6219 = vsel %vm6218, %v6211, %v6215
        %v6220 = vand.u32 2147483647, %v6058
        %vm6221 = vcmp.eq.f32.partialorder %v6220, 8.507059e+37
        %v6222 = vand.u32 %v6058, 2147483648
        %v6223 = vor.u32 1.1754944e-38, %v6222
        %v6224 = vsel %vm6221, %v6223, %v6219
        %v6225 = vmul.f32 %v5960, %v6224
        %v6226 = vmul.f32 %v5962, %v6224
        %v6227 = vrcp.pop %v6062
        %v6228 = vmul.f32 %v6062, %v6227
        %v6229 = vsub.f32 1.0, %v6228
        %v6230 = vmul.f32 %v6227, %v6229
        %v6231 = vadd.f32 %v6227, %v6230
        %vm6232 = vweird.f32 %v6062
        %vm6233 = vweird.f32 %v6227
        %vm6234 = vmor %vm6232, %vm6233
        %v6235 = vsel %vm6234, %v6227, %v6231
        %v6236 = vand.u32 2147483647, %v6062
        %vm6237 = vcmp.eq.f32.partialorder %v6236, 8.507059e+37
        %v6238 = vand.u32 %v6062, 2147483648
        %v6239 = vor.u32 1.1754944e-38, %v6238
        %v6240 = vsel %vm6237, %v6239, %v6235
        %v6241 = vmul.f32 %v5964, %v6240
        %v6242 = vmul.f32 %v5966, %v6240
        %v6243 = vrcp.pop %v6066
        %v6244 = vmul.f32 %v6066, %v6243
        %v6245 = vsub.f32 1.0, %v6244
        %v6246 = vmul.f32 %v6243, %v6245
        %v6247 = vadd.f32 %v6243, %v6246
        %vm6248 = vweird.f32 %v6066
        %vm6249 = vweird.f32 %v6243
        %vm6250 = vmor %vm6248, %vm6249
        %v6251 = vsel %vm6250, %v6243, %v6247
        %v6252 = vand.u32 2147483647, %v6066
        %vm6253 = vcmp.eq.f32.partialorder %v6252, 8.507059e+37
        %v6254 = vand.u32 %v6066, 2147483648
        %v6255 = vor.u32 1.1754944e-38, %v6254
        %v6256 = vsel %vm6253, %v6255, %v6251
        %v6257 = vmul.f32 %v5968, %v6256
        %v6258 = vmul.f32 %v5970, %v6256
        %v6259 = vrcp.pop %v6070
        %v6260 = vmul.f32 %v6070, %v6259
        %v6261 = vsub.f32 1.0, %v6260
        %v6262 = vmul.f32 %v6259, %v6261
        %v6263 = vadd.f32 %v6259, %v6262
        %vm6264 = vweird.f32 %v6070
        %vm6265 = vweird.f32 %v6259
        %vm6266 = vmor %vm6264, %vm6265
        %v6267 = vsel %vm6266, %v6259, %v6263
        %v6268 = vand.u32 2147483647, %v6070
        %vm6269 = vcmp.eq.f32.partialorder %v6268, 8.507059e+37
        %v6270 = vand.u32 %v6070, 2147483648
        %v6271 = vor.u32 1.1754944e-38, %v6270
        %v6272 = vsel %vm6269, %v6271, %v6267
        %v6273 = vmul.f32 %v5972, %v6272
        %v6274 = vmul.f32 %v5974, %v6272
        %v6275 = vrcp.pop %v6074
        %v6276 = vmul.f32 %v6074, %v6275
        %v6277 = vsub.f32 1.0, %v6276
        %v6278 = vmul.f32 %v6275, %v6277
        %v6279 = vadd.f32 %v6275, %v6278
        %vm6280 = vweird.f32 %v6074
        %vm6281 = vweird.f32 %v6275
        %vm6282 = vmor %vm6280, %vm6281
        %v6283 = vsel %vm6282, %v6275, %v6279
        %v6284 = vand.u32 2147483647, %v6074
        %vm6285 = vcmp.eq.f32.partialorder %v6284, 8.507059e+37
        %v6286 = vand.u32 %v6074, 2147483648
        %v6287 = vor.u32 1.1754944e-38, %v6286
        %v6288 = vsel %vm6285, %v6287, %v6283
        %v6289 = vmul.f32 %v5976, %v6288
        %v6290 = vmul.f32 %v5978, %v6288
        %v6291 = vrcp.pop %v6078
        %v6292 = vmul.f32 %v6078, %v6291
        %v6293 = vsub.f32 1.0, %v6292
        %v6294 = vmul.f32 %v6291, %v6293
        %v6295 = vadd.f32 %v6291, %v6294
        %vm6296 = vweird.f32 %v6078
        %vm6297 = vweird.f32 %v6291
        %vm6298 = vmor %vm6296, %vm6297
        %v6299 = vsel %vm6298, %v6291, %v6295
        %v6300 = vand.u32 2147483647, %v6078
        %vm6301 = vcmp.eq.f32.partialorder %v6300, 8.507059e+37
        %v6302 = vand.u32 %v6078, 2147483648
        %v6303 = vor.u32 1.1754944e-38, %v6302
        %v6304 = vsel %vm6301, %v6303, %v6299
        %v6305 = vmul.f32 %v5980, %v6304
        %v6306 = vmul.f32 %v5982, %v6304
        %v6307 = vrcp.pop %v6082
        %v6308 = vmul.f32 %v6082, %v6307
        %v6309 = vsub.f32 1.0, %v6308
        %v6310 = vmul.f32 %v6307, %v6309
        %v6311 = vadd.f32 %v6307, %v6310
        %vm6312 = vweird.f32 %v6082
        %vm6313 = vweird.f32 %v6307
        %vm6314 = vmor %vm6312, %vm6313
        %v6315 = vsel %vm6314, %v6307, %v6311
        %v6316 = vand.u32 2147483647, %v6082
        %vm6317 = vcmp.eq.f32.partialorder %v6316, 8.507059e+37
        %v6318 = vand.u32 %v6082, 2147483648
        %v6319 = vor.u32 1.1754944e-38, %v6318
        %v6320 = vsel %vm6317, %v6319, %v6315
        %v6321 = vmul.f32 %v5984, %v6320
        %v6322 = vmul.f32 %v5986, %v6320
        %v6323 = vrcp.pop %v6086
        %v6324 = vmul.f32 %v6086, %v6323
        %v6325 = vsub.f32 1.0, %v6324
        %v6326 = vmul.f32 %v6323, %v6325
        %v6327 = vadd.f32 %v6323, %v6326
        %vm6328 = vweird.f32 %v6086
        %vm6329 = vweird.f32 %v6323
        %vm6330 = vmor %vm6328, %vm6329
        %v6331 = vsel %vm6330, %v6323, %v6327
        %v6332 = vand.u32 2147483647, %v6086
        %vm6333 = vcmp.eq.f32.partialorder %v6332, 8.507059e+37
        %v6334 = vand.u32 %v6086, 2147483648
        %v6335 = vor.u32 1.1754944e-38, %v6334
        %v6336 = vsel %vm6333, %v6335, %v6331
        %v6337 = vmul.f32 %v5988, %v6336
        %v6338 = vmul.f32 %v5990, %v6336
        %v6339 = vrcp.pop %v6090
        %v6340 = vmul.f32 %v6090, %v6339
        %v6341 = vsub.f32 1.0, %v6340
        %v6342 = vmul.f32 %v6339, %v6341
        %v6343 = vadd.f32 %v6339, %v6342
        %vm6344 = vweird.f32 %v6090
        %vm6345 = vweird.f32 %v6339
        %vm6346 = vmor %vm6344, %vm6345
        %v6347 = vsel %vm6346, %v6339, %v6343
        %v6348 = vand.u32 2147483647, %v6090
        %vm6349 = vcmp.eq.f32.partialorder %v6348, 8.507059e+37
        %v6350 = vand.u32 %v6090, 2147483648
        %v6351 = vor.u32 1.1754944e-38, %v6350
        %v6352 = vsel %vm6349, %v6351, %v6347
        %v6353 = vmul.f32 %v5992, %v6352
        %v6354 = vmul.f32 %v5994, %v6352
        %v6355 = vrcp.pop %v6094
        %v6356 = vmul.f32 %v6094, %v6355
        %v6357 = vsub.f32 1.0, %v6356
        %v6358 = vmul.f32 %v6355, %v6357
        %v6359 = vadd.f32 %v6355, %v6358
        %vm6360 = vweird.f32 %v6094
        %vm6361 = vweird.f32 %v6355
        %vm6362 = vmor %vm6360, %vm6361
        %v6363 = vsel %vm6362, %v6355, %v6359
        %v6364 = vand.u32 2147483647, %v6094
        %vm6365 = vcmp.eq.f32.partialorder %v6364, 8.507059e+37
        %v6366 = vand.u32 %v6094, 2147483648
        %v6367 = vor.u32 1.1754944e-38, %v6366
        %v6368 = vsel %vm6365, %v6367, %v6363
        %v6369 = vmul.f32 %v5996, %v6368
        %v6370 = vmul.f32 %v5998, %v6368
        %v6371 = vrcp.pop %v6098
        %v6372 = vmul.f32 %v6098, %v6371
        %v6373 = vsub.f32 1.0, %v6372
        %v6374 = vmul.f32 %v6371, %v6373
        %v6375 = vadd.f32 %v6371, %v6374
        %vm6376 = vweird.f32 %v6098
        %vm6377 = vweird.f32 %v6371
        %vm6378 = vmor %vm6376, %vm6377
        %v6379 = vsel %vm6378, %v6371, %v6375
        %v6380 = vand.u32 2147483647, %v6098
        %vm6381 = vcmp.eq.f32.partialorder %v6380, 8.507059e+37
        %v6382 = vand.u32 %v6098, 2147483648
        %v6383 = vor.u32 1.1754944e-38, %v6382
        %v6384 = vsel %vm6381, %v6383, %v6379
        %v6385 = vmul.f32 %v6000, %v6384
        %v6386 = vmul.f32 %v6002, %v6384
        %v6387 = vrcp.pop %v6102
        %v6388 = vmul.f32 %v6102, %v6387
        %v6389 = vsub.f32 1.0, %v6388
        %v6390 = vmul.f32 %v6387, %v6389
        %v6391 = vadd.f32 %v6387, %v6390
        %vm6392 = vweird.f32 %v6102
        %vm6393 = vweird.f32 %v6387
        %vm6394 = vmor %vm6392, %vm6393
        %v6395 = vsel %vm6394, %v6387, %v6391
        %v6396 = vand.u32 2147483647, %v6102
        %vm6397 = vcmp.eq.f32.partialorder %v6396, 8.507059e+37
        %v6398 = vand.u32 %v6102, 2147483648
        %v6399 = vor.u32 1.1754944e-38, %v6398
        %v6400 = vsel %vm6397, %v6399, %v6395
        %v6401 = vmul.f32 %v6004, %v6400
        %v6402 = vmul.f32 %v6006, %v6400
        %v6403 = vrcp.pop %v6106
        %v6404 = vmul.f32 %v6106, %v6403
        %v6405 = vsub.f32 1.0, %v6404
        %v6406 = vmul.f32 %v6403, %v6405
        %v6407 = vadd.f32 %v6403, %v6406
        %vm6408 = vweird.f32 %v6106
        %vm6409 = vweird.f32 %v6403
        %vm6410 = vmor %vm6408, %vm6409
        %v6411 = vsel %vm6410, %v6403, %v6407
        %v6412 = vand.u32 2147483647, %v6106
        %vm6413 = vcmp.eq.f32.partialorder %v6412, 8.507059e+37
        %v6414 = vand.u32 %v6106, 2147483648
        %v6415 = vor.u32 1.1754944e-38, %v6414
        %v6416 = vsel %vm6413, %v6415, %v6411
        %v6417 = vmul.f32 %v6008, %v6416
        %v6418 = vmul.f32 %v6010, %v6416
        %v6419 = vrcp.pop %v6110
        %v6420 = vmul.f32 %v6110, %v6419
        %v6421 = vsub.f32 1.0, %v6420
        %v6422 = vmul.f32 %v6419, %v6421
        %v6423 = vadd.f32 %v6419, %v6422
        %vm6424 = vweird.f32 %v6110
        %vm6425 = vweird.f32 %v6419
        %vm6426 = vmor %vm6424, %vm6425
        %v6427 = vsel %vm6426, %v6419, %v6423
        %v6428 = vand.u32 2147483647, %v6110
        %vm6429 = vcmp.eq.f32.partialorder %v6428, 8.507059e+37
        %v6430 = vand.u32 %v6110, 2147483648
        %v6431 = vor.u32 1.1754944e-38, %v6430
        %v6432 = vsel %vm6429, %v6431, %v6427
        %v6433 = vmul.f32 %v6012, %v6432
        %v6434 = vmul.f32 %v6014, %v6432
        %v6435 = vrcp.pop %v6114
        %v6436 = vmul.f32 %v6114, %v6435
        %v6437 = vsub.f32 1.0, %v6436
        %v6438 = vmul.f32 %v6435, %v6437
        %v6439 = vadd.f32 %v6435, %v6438
        %vm6440 = vweird.f32 %v6114
        %vm6441 = vweird.f32 %v6435
        %vm6442 = vmor %vm6440, %vm6441
        %v6443 = vsel %vm6442, %v6435, %v6439
        %v6444 = vand.u32 2147483647, %v6114
        %vm6445 = vcmp.eq.f32.partialorder %v6444, 8.507059e+37
        %v6446 = vand.u32 %v6114, 2147483648
        %v6447 = vor.u32 1.1754944e-38, %v6446
        %v6448 = vsel %vm6445, %v6447, %v6443
        %v6449 = vmul.f32 %v6016, %v6448
        %v6450 = vmul.f32 %v6018, %v6448
        %v6451 = vrcp.pop %v6118
        %v6452 = vmul.f32 %v6118, %v6451
        %v6453 = vsub.f32 1.0, %v6452
        %v6454 = vmul.f32 %v6451, %v6453
        %v6455 = vadd.f32 %v6451, %v6454
        %vm6456 = vweird.f32 %v6118
        %vm6457 = vweird.f32 %v6451
        %vm6458 = vmor %vm6456, %vm6457
        %v6459 = vsel %vm6458, %v6451, %v6455
        %v6460 = vand.u32 2147483647, %v6118
        %vm6461 = vcmp.eq.f32.partialorder %v6460, 8.507059e+37
        %v6462 = vand.u32 %v6118, 2147483648
        %v6463 = vor.u32 1.1754944e-38, %v6462
        %v6464 = vsel %vm6461, %v6463, %v6459
        %v6465 = vmul.f32 %v6020, %v6464
        %v6466 = vmul.f32 %v6022, %v6464
        %v6467 = vrcp.pop %v6122
        %v6468 = vmul.f32 %v6122, %v6467
        %v6469 = vsub.f32 1.0, %v6468
        %v6470 = vmul.f32 %v6467, %v6469
        %v6471 = vadd.f32 %v6467, %v6470
        %vm6472 = vweird.f32 %v6122
        %vm6473 = vweird.f32 %v6467
        %vm6474 = vmor %vm6472, %vm6473
        %v6475 = vsel %vm6474, %v6467, %v6471
        %v6476 = vand.u32 2147483647, %v6122
        %vm6477 = vcmp.eq.f32.partialorder %v6476, 8.507059e+37
        %v6478 = vand.u32 %v6122, 2147483648
        %v6479 = vor.u32 1.1754944e-38, %v6478
        %v6480 = vsel %vm6477, %v6479, %v6475
        %v6481 = vmul.f32 %v6024, %v6480
        %v6482 = vmul.f32 %v6026, %v6480
        %v6483 = vrcp.pop %v6126
        %v6484 = vmul.f32 %v6126, %v6483
        %v6485 = vsub.f32 1.0, %v6484
        %v6486 = vmul.f32 %v6483, %v6485
        %v6487 = vadd.f32 %v6483, %v6486
        %vm6488 = vweird.f32 %v6126
        %vm6489 = vweird.f32 %v6483
        %vm6490 = vmor %vm6488, %vm6489
        %v6491 = vsel %vm6490, %v6483, %v6487
        %v6492 = vand.u32 2147483647, %v6126
        %vm6493 = vcmp.eq.f32.partialorder %v6492, 8.507059e+37
        %v6494 = vand.u32 %v6126, 2147483648
        %v6495 = vor.u32 1.1754944e-38, %v6494
        %v6496 = vsel %vm6493, %v6495, %v6491
        %v6497 = vmul.f32 %v6028, %v6496
        %v6498 = vmul.f32 %v6030, %v6496
        %v6499 = vrcp.pop %v6130
        %v6500 = vmul.f32 %v6130, %v6499
        %v6501 = vsub.f32 1.0, %v6500
        %v6502 = vmul.f32 %v6499, %v6501
        %v6503 = vadd.f32 %v6499, %v6502
        %vm6504 = vweird.f32 %v6130
        %vm6505 = vweird.f32 %v6499
        %vm6506 = vmor %vm6504, %vm6505
        %v6507 = vsel %vm6506, %v6499, %v6503
        %v6508 = vand.u32 2147483647, %v6130
        %vm6509 = vcmp.eq.f32.partialorder %v6508, 8.507059e+37
        %v6510 = vand.u32 %v6130, 2147483648
        %v6511 = vor.u32 1.1754944e-38, %v6510
        %v6512 = vsel %vm6509, %v6511, %v6507
        %v6513 = vmul.f32 %v6032, %v6512
        %v6514 = vmul.f32 %v6034, %v6512
        %v6516 = vsel %vm3125, %v5434, 0
        %v6519 = vsel %vm3125, %v5437, 0
        %v6522 = vsel %vm3125, %v5440, 0
        %v6525 = vsel %vm3125, %v5443, 0
        %v6528 = vsel %vm3125, %v5446, 0
        %v6531 = vsel %vm3125, %v5449, 0
        %v6534 = vsel %vm3125, %v5452, 0
        %v6537 = vsel %vm3125, %v5455, 0
        %v6540 = vsel %vm3125, %v5458, 0
        %v6543 = vsel %vm3125, %v5461, 0
        %v6546 = vsel %vm3125, %v5464, 0
        %v6549 = vsel %vm3125, %v5467, 0
        %v6552 = vsel %vm3125, %v5470, 0
        %v6555 = vsel %vm3125, %v5473, 0
        %v6558 = vsel %vm3125, %v5476, 0
        %v6561 = vsel %vm3125, %v5479, 0
        %v6564 = vsel %vm3125, %v6146, 0
        %v6567 = vsel %vm3125, %v6162, 0
        %v6570 = vsel %vm3125, %v6178, 0
        %v6573 = vsel %vm3125, %v6194, 0
        %v6576 = vsel %vm3125, %v6210, 0
        %v6579 = vsel %vm3125, %v6226, 0
        %v6582 = vsel %vm3125, %v6242, 0
        %v6585 = vsel %vm3125, %v6258, 0
        %v6588 = vsel %vm3125, %v6274, 0
        %v6591 = vsel %vm3125, %v6290, 0
        %v6594 = vsel %vm3125, %v6306, 0
        %v6597 = vsel %vm3125, %v6322, 0
        %v6600 = vsel %vm3125, %v6338, 0
        %v6603 = vsel %vm3125, %v6354, 0
        %v6606 = vsel %vm3125, %v6370, 0
        %v6609 = vsel %vm3125, %v6386, 0
        %v6612 = vsel %vm3125, %v6402, 0
        %v6615 = vsel %vm3125, %v6418, 0
        %v6618 = vsel %vm3125, %v6434, 0
        %v6621 = vsel %vm3125, %v6450, 0
        %v6624 = vsel %vm3125, %v6466, 0
        %v6627 = vsel %vm3125, %v6482, 0
        %v6630 = vsel %vm3125, %v6498, 0
        %v6633 = vsel %vm3125, %v6514, 0
        %6635 = vmatpush.xpose.msra.mxu0 %v6385
        %6636 = vmatpush.xpose.msra.mxu0 %v6369
        %6637 = vmatpush.xpose.msra.mxu0 %v6353
        %6638 = vmatpush.xpose.msra.mxu0 %v6337
        %6639 = vmatpush.xpose.msra.mxu0 %v6321
        %6640 = vmatpush.xpose.msra.mxu0 %v6305
        %6641 = vmatpush.xpose.msra.mxu0 %v6289
        %6642 = vmatpush.xpose.msra.mxu0 %v6273
        %6643 = vmatpush.xpose.msra.mxu0 %v6257
        %6644 = vmatpush.xpose.msra.mxu0 %v6241
        %6645 = vmatpush.xpose.msra.mxu0 %v6225
        %6646 = vmatpush.xpose.msra.mxu0 %v6209
        %6647 = vmatpush.xpose.msra.mxu0 %v6193
        %6648 = vmatpush.xpose.msra.mxu0 %v6177
        %6649 = vmatpush.xpose.msra.mxu0 %v6161
        %6650 = vmatpush.xpose.msra.mxu0 %v6145
        %6651 = vmatmul.f32.gmra.mxu0 %v5357
        %v6652 = vpop.f32.mrf.mxu0
        %v6653 = vadd.f32 0.0, %v6652
        %6654 = vmatmul.f32.gmra.mxu0 %v5360
        %v6655 = vpop.f32.mrf.mxu0
        %v6656 = vadd.f32 0.0, %v6655
        %6657 = vmatmul.f32.gmra.mxu0 %v5363
        %v6658 = vpop.f32.mrf.mxu0
        %v6659 = vadd.f32 0.0, %v6658
        %6660 = vmatmul.f32.gmra.mxu0 %v5366
        %v6661 = vpop.f32.mrf.mxu0
        %v6662 = vadd.f32 0.0, %v6661
        %6663 = vmatmul.f32.gmra.mxu0 %v5369
        %v6664 = vpop.f32.mrf.mxu0
        %v6665 = vadd.f32 0.0, %v6664
        %6666 = vmatmul.f32.gmra.mxu0 %v5372
        %v6667 = vpop.f32.mrf.mxu0
        %v6668 = vadd.f32 0.0, %v6667
        %6669 = vmatmul.f32.gmra.mxu0 %v5375
        %v6670 = vpop.f32.mrf.mxu0
        %v6671 = vadd.f32 0.0, %v6670
        %6672 = vmatmul.f32.gmra.mxu0 %v5378
        %v6673 = vpop.f32.mrf.mxu0
        %v6674 = vadd.f32 0.0, %v6673
        %6675 = vmatmul.f32.gmra.mxu0 %v5381
        %v6676 = vpop.f32.mrf.mxu0
        %v6677 = vadd.f32 0.0, %v6676
        %6678 = vmatmul.f32.gmra.mxu0 %v5384
        %v6679 = vpop.f32.mrf.mxu0
        %v6680 = vadd.f32 0.0, %v6679
        %6681 = vmatmul.f32.gmra.mxu0 %v5387
        %v6682 = vpop.f32.mrf.mxu0
        %v6683 = vadd.f32 0.0, %v6682
        %6684 = vmatmul.f32.gmra.mxu0 %v5390
        %v6685 = vpop.f32.mrf.mxu0
        %v6686 = vadd.f32 0.0, %v6685
        %6687 = vmatmul.f32.gmra.mxu0 %v5393
        %v6688 = vpop.f32.mrf.mxu0
        %v6689 = vadd.f32 0.0, %v6688
        %6690 = vmatmul.f32.gmra.mxu0 %v5396
        %v6691 = vpop.f32.mrf.mxu0
        %v6692 = vadd.f32 0.0, %v6691
        %6693 = vmatmul.f32.gmra.mxu0 %v5399
        %v6694 = vpop.f32.mrf.mxu0
        %v6695 = vadd.f32 0.0, %v6694
        %6696 = vmatmul.f32.gmra.mxu0 %v5402
        %v6697 = vpop.f32.mrf.mxu0
        %v6698 = vadd.f32 0.0, %v6697
        %6699 = vdwg.mxu0
        %6700 = vmatpush.xpose.msra.mxu0 %v6609
        %6701 = vmatpush.xpose.msra.mxu0 %v6606
        %6702 = vmatpush.xpose.msra.mxu0 %v6603
        %6703 = vmatpush.xpose.msra.mxu0 %v6600
        %6704 = vmatpush.xpose.msra.mxu0 %v6597
        %6705 = vmatpush.xpose.msra.mxu0 %v6594
        %6706 = vmatpush.xpose.msra.mxu0 %v6591
        %6707 = vmatpush.xpose.msra.mxu0 %v6588
        %6708 = vmatpush.xpose.msra.mxu0 %v6585
        %6709 = vmatpush.xpose.msra.mxu0 %v6582
        %6710 = vmatpush.xpose.msra.mxu0 %v6579
        %6711 = vmatpush.xpose.msra.mxu0 %v6576
        %6712 = vmatpush.xpose.msra.mxu0 %v6573
        %6713 = vmatpush.xpose.msra.mxu0 %v6570
        %6714 = vmatpush.xpose.msra.mxu0 %v6567
        %6715 = vmatpush.xpose.msra.mxu0 %v6564
        %6716 = vmatmul.f32.gmra.mxu0 %v6516
        %v6717 = vpop.f32.mrf.mxu0
        %v6718 = vadd.f32 %v6653, %v6717
        %6719 = vmatmul.f32.gmra.mxu0 %v6519
        %v6720 = vpop.f32.mrf.mxu0
        %v6721 = vadd.f32 %v6656, %v6720
        %6722 = vmatmul.f32.gmra.mxu0 %v6522
        %v6723 = vpop.f32.mrf.mxu0
        %v6724 = vadd.f32 %v6659, %v6723
        %6725 = vmatmul.f32.gmra.mxu0 %v6525
        %v6726 = vpop.f32.mrf.mxu0
        %v6727 = vadd.f32 %v6662, %v6726
        %6728 = vmatmul.f32.gmra.mxu0 %v6528
        %v6729 = vpop.f32.mrf.mxu0
        %v6730 = vadd.f32 %v6665, %v6729
        %6731 = vmatmul.f32.gmra.mxu0 %v6531
        %v6732 = vpop.f32.mrf.mxu0
        %v6733 = vadd.f32 %v6668, %v6732
        %6734 = vmatmul.f32.gmra.mxu0 %v6534
        %v6735 = vpop.f32.mrf.mxu0
        %v6736 = vadd.f32 %v6671, %v6735
        %6737 = vmatmul.f32.gmra.mxu0 %v6537
        %v6738 = vpop.f32.mrf.mxu0
        %v6739 = vadd.f32 %v6674, %v6738
        %6740 = vmatmul.f32.gmra.mxu0 %v6540
        %v6741 = vpop.f32.mrf.mxu0
        %v6742 = vadd.f32 %v6677, %v6741
        %6743 = vmatmul.f32.gmra.mxu0 %v6543
        %v6744 = vpop.f32.mrf.mxu0
        %v6745 = vadd.f32 %v6680, %v6744
        %6746 = vmatmul.f32.gmra.mxu0 %v6546
        %v6747 = vpop.f32.mrf.mxu0
        %v6748 = vadd.f32 %v6683, %v6747
        %6749 = vmatmul.f32.gmra.mxu0 %v6549
        %v6750 = vpop.f32.mrf.mxu0
        %v6751 = vadd.f32 %v6686, %v6750
        %6752 = vmatmul.f32.gmra.mxu0 %v6552
        %v6753 = vpop.f32.mrf.mxu0
        %v6754 = vadd.f32 %v6689, %v6753
        %6755 = vmatmul.f32.gmra.mxu0 %v6555
        %v6756 = vpop.f32.mrf.mxu0
        %v6757 = vadd.f32 %v6692, %v6756
        %6758 = vmatmul.f32.gmra.mxu0 %v6558
        %v6759 = vpop.f32.mrf.mxu0
        %v6760 = vadd.f32 %v6695, %v6759
        %6761 = vmatmul.f32.gmra.mxu0 %v6561
        %v6762 = vpop.f32.mrf.mxu0
        %v6763 = vadd.f32 %v6698, %v6762
        %6764 = vdwg.mxu0
        %6765 = vmatpush.xpose.msra.mxu0 0.0
        %6766 = vmatpush.xpose.msra.mxu0 0.0
        %6767 = vmatpush.xpose.msra.mxu0 0.0
        %6768 = vmatpush.xpose.msra.mxu0 0.0
        %6769 = vmatpush.xpose.msra.mxu0 0.0
        %6770 = vmatpush.xpose.msra.mxu0 0.0
        %6771 = vmatpush.xpose.msra.mxu0 0.0
        %6772 = vmatpush.xpose.msra.mxu0 0.0
        %6773 = vmatpush.xpose.msra.mxu0 %v6513
        %6774 = vmatpush.xpose.msra.mxu0 %v6497
        %6775 = vmatpush.xpose.msra.mxu0 %v6481
        %6776 = vmatpush.xpose.msra.mxu0 %v6465
        %6777 = vmatpush.xpose.msra.mxu0 %v6449
        %6778 = vmatpush.xpose.msra.mxu0 %v6433
        %6779 = vmatpush.xpose.msra.mxu0 %v6417
        %6780 = vmatpush.xpose.msra.mxu0 %v6401
        %6781 = vmatmul.f32.gmra.mxu0 %v5357
        %v6782 = vpop.f32.mrf.mxu0
        %v6783 = vadd.f32 0.0, %v6782
        %6784 = vmatmul.f32.gmra.mxu0 %v5360
        %v6785 = vpop.f32.mrf.mxu0
        %v6786 = vadd.f32 0.0, %v6785
        %6787 = vmatmul.f32.gmra.mxu0 %v5363
        %v6788 = vpop.f32.mrf.mxu0
        %v6789 = vadd.f32 0.0, %v6788
        %6790 = vmatmul.f32.gmra.mxu0 %v5366
        %v6791 = vpop.f32.mrf.mxu0
        %v6792 = vadd.f32 0.0, %v6791
        %6793 = vmatmul.f32.gmra.mxu0 %v5369
        %v6794 = vpop.f32.mrf.mxu0
        %v6795 = vadd.f32 0.0, %v6794
        %6796 = vmatmul.f32.gmra.mxu0 %v5372
        %v6797 = vpop.f32.mrf.mxu0
        %v6798 = vadd.f32 0.0, %v6797
        %6799 = vmatmul.f32.gmra.mxu0 %v5375
        %v6800 = vpop.f32.mrf.mxu0
        %v6801 = vadd.f32 0.0, %v6800
        %6802 = vmatmul.f32.gmra.mxu0 %v5378
        %v6803 = vpop.f32.mrf.mxu0
        %v6804 = vadd.f32 0.0, %v6803
        %6805 = vmatmul.f32.gmra.mxu0 %v5381
        %v6806 = vpop.f32.mrf.mxu0
        %v6807 = vadd.f32 0.0, %v6806
        %6808 = vmatmul.f32.gmra.mxu0 %v5384
        %v6809 = vpop.f32.mrf.mxu0
        %v6810 = vadd.f32 0.0, %v6809
        %6811 = vmatmul.f32.gmra.mxu0 %v5387
        %v6812 = vpop.f32.mrf.mxu0
        %v6813 = vadd.f32 0.0, %v6812
        %6814 = vmatmul.f32.gmra.mxu0 %v5390
        %v6815 = vpop.f32.mrf.mxu0
        %v6816 = vadd.f32 0.0, %v6815
        %6817 = vmatmul.f32.gmra.mxu0 %v5393
        %v6818 = vpop.f32.mrf.mxu0
        %v6819 = vadd.f32 0.0, %v6818
        %6820 = vmatmul.f32.gmra.mxu0 %v5396
        %v6821 = vpop.f32.mrf.mxu0
        %v6822 = vadd.f32 0.0, %v6821
        %6823 = vmatmul.f32.gmra.mxu0 %v5399
        %v6824 = vpop.f32.mrf.mxu0
        %v6825 = vadd.f32 0.0, %v6824
        %6826 = vmatmul.f32.gmra.mxu0 %v5402
        %v6827 = vpop.f32.mrf.mxu0
        %v6828 = vadd.f32 0.0, %v6827
        %6829 = vdwg.mxu0
        %6830 = vmatpush.xpose.msra.mxu0 0.0
        %6831 = vmatpush.xpose.msra.mxu0 0.0
        %6832 = vmatpush.xpose.msra.mxu0 0.0
        %6833 = vmatpush.xpose.msra.mxu0 0.0
        %6834 = vmatpush.xpose.msra.mxu0 0.0
        %6835 = vmatpush.xpose.msra.mxu0 0.0
        %6836 = vmatpush.xpose.msra.mxu0 0.0
        %6837 = vmatpush.xpose.msra.mxu0 0.0
        %6838 = vmatpush.xpose.msra.mxu0 %v6633
        %6839 = vmatpush.xpose.msra.mxu0 %v6630
        %6840 = vmatpush.xpose.msra.mxu0 %v6627
        %6841 = vmatpush.xpose.msra.mxu0 %v6624
        %6842 = vmatpush.xpose.msra.mxu0 %v6621
        %6843 = vmatpush.xpose.msra.mxu0 %v6618
        %6844 = vmatpush.xpose.msra.mxu0 %v6615
        %6845 = vmatpush.xpose.msra.mxu0 %v6612
        %6846 = vmatmul.f32.gmra.mxu0 %v6516
        %v6847 = vpop.f32.mrf.mxu0
        %v6848 = vadd.f32 %v6783, %v6847
        %6849 = vmatmul.f32.gmra.mxu0 %v6519
        %v6850 = vpop.f32.mrf.mxu0
        %v6851 = vadd.f32 %v6786, %v6850
        %6852 = vmatmul.f32.gmra.mxu0 %v6522
        %v6853 = vpop.f32.mrf.mxu0
        %v6854 = vadd.f32 %v6789, %v6853
        %6855 = vmatmul.f32.gmra.mxu0 %v6525
        %v6856 = vpop.f32.mrf.mxu0
        %v6857 = vadd.f32 %v6792, %v6856
        %6858 = vmatmul.f32.gmra.mxu0 %v6528
        %v6859 = vpop.f32.mrf.mxu0
        %v6860 = vadd.f32 %v6795, %v6859
        %6861 = vmatmul.f32.gmra.mxu0 %v6531
        %v6862 = vpop.f32.mrf.mxu0
        %v6863 = vadd.f32 %v6798, %v6862
        %6864 = vmatmul.f32.gmra.mxu0 %v6534
        %v6865 = vpop.f32.mrf.mxu0
        %v6866 = vadd.f32 %v6801, %v6865
        %6867 = vmatmul.f32.gmra.mxu0 %v6537
        %v6868 = vpop.f32.mrf.mxu0
        %v6869 = vadd.f32 %v6804, %v6868
        %6870 = vmatmul.f32.gmra.mxu0 %v6540
        %v6871 = vpop.f32.mrf.mxu0
        %v6872 = vadd.f32 %v6807, %v6871
        %6873 = vmatmul.f32.gmra.mxu0 %v6543
        %v6874 = vpop.f32.mrf.mxu0
        %v6875 = vadd.f32 %v6810, %v6874
        %6876 = vmatmul.f32.gmra.mxu0 %v6546
        %v6877 = vpop.f32.mrf.mxu0
        %v6878 = vadd.f32 %v6813, %v6877
        %6879 = vmatmul.f32.gmra.mxu0 %v6549
        %v6880 = vpop.f32.mrf.mxu0
        %v6881 = vadd.f32 %v6816, %v6880
        %6882 = vmatmul.f32.gmra.mxu0 %v6552
        %v6883 = vpop.f32.mrf.mxu0
        %v6884 = vadd.f32 %v6819, %v6883
        %6885 = vmatmul.f32.gmra.mxu0 %v6555
        %v6886 = vpop.f32.mrf.mxu0
        %v6887 = vadd.f32 %v6822, %v6886
        %6888 = vmatmul.f32.gmra.mxu0 %v6558
        %v6889 = vpop.f32.mrf.mxu0
        %v6890 = vadd.f32 %v6825, %v6889
        %6891 = vmatmul.f32.gmra.mxu0 %v6561
        %v6892 = vpop.f32.mrf.mxu0
        %v6893 = vadd.f32 %v6828, %v6892
        %6894 = vdwg.mxu0
        %v6896 = vsel %vm3125, %v1156, 0
        %v6899 = vsel %vm3125, %v1159, 0
        %v6902 = vsel %vm3125, %v1162, 0
        %v6905 = vsel %vm3125, %v1165, 0
        %v6908 = vsel %vm3125, %v1168, 0
        %v6911 = vsel %vm3125, %v1171, 0
        %v6914 = vsel %vm3125, %v1174, 0
        %v6917 = vsel %vm3125, %v1177, 0
        %v6920 = vsel %vm3125, %v1180, 0
        %v6923 = vsel %vm3125, %v1183, 0
        %v6926 = vsel %vm3125, %v1186, 0
        %v6929 = vsel %vm3125, %v1189, 0
        %v6932 = vsel %vm3125, %v1192, 0
        %v6935 = vsel %vm3125, %v1195, 0
        %v6938 = vsel %vm3125, %v1198, 0
        %v6941 = vsel %vm3125, %v1201, 0
        %6943 = vmatpush.xpose.msra.mxu0 %v1088
        %6944 = vmatpush.xpose.msra.mxu0 %v1085
        %6945 = vmatpush.xpose.msra.mxu0 %v1082
        %6946 = vmatpush.xpose.msra.mxu0 %v1079
        %6947 = vmatpush.xpose.msra.mxu0 %v1076
        %6948 = vmatpush.xpose.msra.mxu0 %v1073
        %6949 = vmatpush.xpose.msra.mxu0 %v1070
        %6950 = vmatpush.xpose.msra.mxu0 %v1067
        %6951 = vmatpush.xpose.msra.mxu0 %v1064
        %6952 = vmatpush.xpose.msra.mxu0 %v1061
        %6953 = vmatpush.xpose.msra.mxu0 %v1058
        %6954 = vmatpush.xpose.msra.mxu0 %v1055
        %6955 = vmatpush.xpose.msra.mxu0 %v1052
        %6956 = vmatpush.xpose.msra.mxu0 %v1049
        %6957 = vmatpush.xpose.msra.mxu0 %v1046
        %6958 = vmatpush.xpose.msra.mxu0 %v1043
        %6959 = vmatmul.f32.gmra.mxu0 %v1043
        %v6960 = vpop.f32.mrf.mxu0
        %v6961 = vadd.f32 0.0, %v6960
        %6962 = vmatmul.f32.gmra.mxu0 %v1046
        %v6963 = vpop.f32.mrf.mxu0
        %v6964 = vadd.f32 0.0, %v6963
        %6965 = vmatmul.f32.gmra.mxu0 %v1049
        %v6966 = vpop.f32.mrf.mxu0
        %v6967 = vadd.f32 0.0, %v6966
        %6968 = vmatmul.f32.gmra.mxu0 %v1052
        %v6969 = vpop.f32.mrf.mxu0
        %v6970 = vadd.f32 0.0, %v6969
        %6971 = vmatmul.f32.gmra.mxu0 %v1055
        %v6972 = vpop.f32.mrf.mxu0
        %v6973 = vadd.f32 0.0, %v6972
        %6974 = vmatmul.f32.gmra.mxu0 %v1058
        %v6975 = vpop.f32.mrf.mxu0
        %v6976 = vadd.f32 0.0, %v6975
        %6977 = vmatmul.f32.gmra.mxu0 %v1061
        %v6978 = vpop.f32.mrf.mxu0
        %v6979 = vadd.f32 0.0, %v6978
        %6980 = vmatmul.f32.gmra.mxu0 %v1064
        %v6981 = vpop.f32.mrf.mxu0
        %v6982 = vadd.f32 0.0, %v6981
        %6983 = vmatmul.f32.gmra.mxu0 %v1067
        %v6984 = vpop.f32.mrf.mxu0
        %v6985 = vadd.f32 0.0, %v6984
        %6986 = vmatmul.f32.gmra.mxu0 %v1070
        %v6987 = vpop.f32.mrf.mxu0
        %v6988 = vadd.f32 0.0, %v6987
        %6989 = vmatmul.f32.gmra.mxu0 %v1073
        %v6990 = vpop.f32.mrf.mxu0
        %v6991 = vadd.f32 0.0, %v6990
        %6992 = vmatmul.f32.gmra.mxu0 %v1076
        %v6993 = vpop.f32.mrf.mxu0
        %v6994 = vadd.f32 0.0, %v6993
        %6995 = vmatmul.f32.gmra.mxu0 %v1079
        %v6996 = vpop.f32.mrf.mxu0
        %v6997 = vadd.f32 0.0, %v6996
        %6998 = vmatmul.f32.gmra.mxu0 %v1082
        %v6999 = vpop.f32.mrf.mxu0
        %v7000 = vadd.f32 0.0, %v6999
        %7001 = vmatmul.f32.gmra.mxu0 %v1085
        %v7002 = vpop.f32.mrf.mxu0
        %v7003 = vadd.f32 0.0, %v7002
        %7004 = vmatmul.f32.gmra.mxu0 %v1088
        %v7005 = vpop.f32.mrf.mxu0
        %v7006 = vadd.f32 0.0, %v7005
        %7007 = vdwg.mxu0
        %7008 = vmatpush.xpose.msra.mxu0 %v6941
        %7009 = vmatpush.xpose.msra.mxu0 %v6938
        %7010 = vmatpush.xpose.msra.mxu0 %v6935
        %7011 = vmatpush.xpose.msra.mxu0 %v6932
        %7012 = vmatpush.xpose.msra.mxu0 %v6929
        %7013 = vmatpush.xpose.msra.mxu0 %v6926
        %7014 = vmatpush.xpose.msra.mxu0 %v6923
        %7015 = vmatpush.xpose.msra.mxu0 %v6920
        %7016 = vmatpush.xpose.msra.mxu0 %v6917
        %7017 = vmatpush.xpose.msra.mxu0 %v6914
        %7018 = vmatpush.xpose.msra.mxu0 %v6911
        %7019 = vmatpush.xpose.msra.mxu0 %v6908
        %7020 = vmatpush.xpose.msra.mxu0 %v6905
        %7021 = vmatpush.xpose.msra.mxu0 %v6902
        %7022 = vmatpush.xpose.msra.mxu0 %v6899
        %7023 = vmatpush.xpose.msra.mxu0 %v6896
        %7024 = vmatmul.f32.gmra.mxu0 %v6896
        %v7025 = vpop.f32.mrf.mxu0
        %v7026 = vadd.f32 %v6961, %v7025
        %7027 = vmatmul.f32.gmra.mxu0 %v6899
        %v7028 = vpop.f32.mrf.mxu0
        %v7029 = vadd.f32 %v6964, %v7028
        %7030 = vmatmul.f32.gmra.mxu0 %v6902
        %v7031 = vpop.f32.mrf.mxu0
        %v7032 = vadd.f32 %v6967, %v7031
        %7033 = vmatmul.f32.gmra.mxu0 %v6905
        %v7034 = vpop.f32.mrf.mxu0
        %v7035 = vadd.f32 %v6970, %v7034
        %7036 = vmatmul.f32.gmra.mxu0 %v6908
        %v7037 = vpop.f32.mrf.mxu0
        %v7038 = vadd.f32 %v6973, %v7037
        %7039 = vmatmul.f32.gmra.mxu0 %v6911
        %v7040 = vpop.f32.mrf.mxu0
        %v7041 = vadd.f32 %v6976, %v7040
        %7042 = vmatmul.f32.gmra.mxu0 %v6914
        %v7043 = vpop.f32.mrf.mxu0
        %v7044 = vadd.f32 %v6979, %v7043
        %7045 = vmatmul.f32.gmra.mxu0 %v6917
        %v7046 = vpop.f32.mrf.mxu0
        %v7047 = vadd.f32 %v6982, %v7046
        %7048 = vmatmul.f32.gmra.mxu0 %v6920
        %v7049 = vpop.f32.mrf.mxu0
        %v7050 = vadd.f32 %v6985, %v7049
        %7051 = vmatmul.f32.gmra.mxu0 %v6923
        %v7052 = vpop.f32.mrf.mxu0
        %v7053 = vadd.f32 %v6988, %v7052
        %7054 = vmatmul.f32.gmra.mxu0 %v6926
        %v7055 = vpop.f32.mrf.mxu0
        %v7056 = vadd.f32 %v6991, %v7055
        %7057 = vmatmul.f32.gmra.mxu0 %v6929
        %v7058 = vpop.f32.mrf.mxu0
        %v7059 = vadd.f32 %v6994, %v7058
        %7060 = vmatmul.f32.gmra.mxu0 %v6932
        %v7061 = vpop.f32.mrf.mxu0
        %v7062 = vadd.f32 %v6997, %v7061
        %7063 = vmatmul.f32.gmra.mxu0 %v6935
        %v7064 = vpop.f32.mrf.mxu0
        %v7065 = vadd.f32 %v7000, %v7064
        %7066 = vmatmul.f32.gmra.mxu0 %v6938
        %v7067 = vpop.f32.mrf.mxu0
        %v7068 = vadd.f32 %v7003, %v7067
        %7069 = vmatmul.f32.gmra.mxu0 %v6941
        %v7070 = vpop.f32.mrf.mxu0
        %v7071 = vadd.f32 %v7006, %v7070
        %7072 = vdwg.mxu0
        %7073 = vmax.xlane.f32.xlu0 %v7026
        %v7074 = vpop.xlane.xlu0 %7073
        %7075 = vmax.xlane.f32.xlu0 %v7029
        %v7076 = vpop.xlane.xlu0 %7075
        %7077 = vmax.xlane.f32.xlu0 %v7032
        %v7078 = vpop.xlane.xlu0 %7077
        %7079 = vmax.xlane.f32.xlu0 %v7035
        %v7080 = vpop.xlane.xlu0 %7079
        %7081 = vmax.xlane.f32.xlu0 %v7038
        %v7082 = vpop.xlane.xlu0 %7081
        %7083 = vmax.xlane.f32.xlu0 %v7041
        %v7084 = vpop.xlane.xlu0 %7083
        %7085 = vmax.xlane.f32.xlu0 %v7044
        %v7086 = vpop.xlane.xlu0 %7085
        %7087 = vmax.xlane.f32.xlu0 %v7047
        %v7088 = vpop.xlane.xlu0 %7087
        %7089 = vmax.xlane.f32.xlu0 %v7050
        %v7090 = vpop.xlane.xlu0 %7089
        %7091 = vmax.xlane.f32.xlu0 %v7053
        %v7092 = vpop.xlane.xlu0 %7091
        %7093 = vmax.xlane.f32.xlu0 %v7056
        %v7094 = vpop.xlane.xlu0 %7093
        %7095 = vmax.xlane.f32.xlu0 %v7059
        %v7096 = vpop.xlane.xlu0 %7095
        %7097 = vmax.xlane.f32.xlu0 %v7062
        %v7098 = vpop.xlane.xlu0 %7097
        %7099 = vmax.xlane.f32.xlu0 %v7065
        %v7100 = vpop.xlane.xlu0 %7099
        %7101 = vmax.xlane.f32.xlu0 %v7068
        %v7102 = vpop.xlane.xlu0 %7101
        %7103 = vmax.xlane.f32.xlu0 %v7071
        %v7104 = vpop.xlane.xlu0 %7103
        %v7105 = vsub.f32 %v7074, %v7026
        %v7106 = vsub.f32 %v7076, %v7029
        %v7107 = vsub.f32 %v7078, %v7032
        %v7108 = vsub.f32 %v7080, %v7035
        %v7109 = vsub.f32 %v7082, %v7038
        %v7110 = vsub.f32 %v7084, %v7041
        %v7111 = vsub.f32 %v7086, %v7044
        %v7112 = vsub.f32 %v7088, %v7047
        %v7113 = vsub.f32 %v7090, %v7050
        %v7114 = vsub.f32 %v7092, %v7053
        %v7115 = vsub.f32 %v7094, %v7056
        %v7116 = vsub.f32 %v7096, %v7059
        %v7117 = vsub.f32 %v7098, %v7062
        %v7118 = vsub.f32 %v7100, %v7065
        %v7119 = vsub.f32 %v7102, %v7068
        %v7120 = vsub.f32 %v7104, %v7071
        %7121 = vmax.xlane.f32.xlu0 %v7105
        %v7122 = vpop.xlane.xlu0 %7121
        %7123 = vmax.xlane.f32.xlu0 %v7106
        %v7124 = vpop.xlane.xlu0 %7123
        %7125 = vmax.xlane.f32.xlu0 %v7107
        %v7126 = vpop.xlane.xlu0 %7125
        %7127 = vmax.xlane.f32.xlu0 %v7108
        %v7128 = vpop.xlane.xlu0 %7127
        %7129 = vmax.xlane.f32.xlu0 %v7109
        %v7130 = vpop.xlane.xlu0 %7129
        %7131 = vmax.xlane.f32.xlu0 %v7110
        %v7132 = vpop.xlane.xlu0 %7131
        %7133 = vmax.xlane.f32.xlu0 %v7111
        %v7134 = vpop.xlane.xlu0 %7133
        %7135 = vmax.xlane.f32.xlu0 %v7112
        %v7136 = vpop.xlane.xlu0 %7135
        %7137 = vmax.xlane.f32.xlu0 %v7113
        %v7138 = vpop.xlane.xlu0 %7137
        %7139 = vmax.xlane.f32.xlu0 %v7114
        %v7140 = vpop.xlane.xlu0 %7139
        %7141 = vmax.xlane.f32.xlu0 %v7115
        %v7142 = vpop.xlane.xlu0 %7141
        %7143 = vmax.xlane.f32.xlu0 %v7116
        %v7144 = vpop.xlane.xlu0 %7143
        %7145 = vmax.xlane.f32.xlu0 %v7117
        %v7146 = vpop.xlane.xlu0 %7145
        %7147 = vmax.xlane.f32.xlu0 %v7118
        %v7148 = vpop.xlane.xlu0 %7147
        %7149 = vmax.xlane.f32.xlu0 %v7119
        %v7150 = vpop.xlane.xlu0 %7149
        %7151 = vmax.xlane.f32.xlu0 %v7120
        %v7152 = vpop.xlane.xlu0 %7151
        %v7153 = vsub.f32 %v7105, %v7122
        %v7154 = vsub.f32 %v7106, %v7124
        %v7155 = vsub.f32 %v7107, %v7126
        %v7156 = vsub.f32 %v7108, %v7128
        %v7157 = vsub.f32 %v7109, %v7130
        %v7158 = vsub.f32 %v7110, %v7132
        %v7159 = vsub.f32 %v7111, %v7134
        %v7160 = vsub.f32 %v7112, %v7136
        %v7161 = vsub.f32 %v7113, %v7138
        %v7162 = vsub.f32 %v7114, %v7140
        %v7163 = vsub.f32 %v7115, %v7142
        %v7164 = vsub.f32 %v7116, %v7144
        %v7165 = vsub.f32 %v7117, %v7146
        %v7166 = vsub.f32 %v7118, %v7148
        %v7167 = vsub.f32 %v7119, %v7150
        %v7168 = vsub.f32 %v7120, %v7152
        %v7169 = vmul.f32 %v7153, 1.442695
        %v7170 = vpow.pop %v7169
        %v7171 = vmul.f32 %v7154, 1.442695
        %v7172 = vpow.pop %v7171
        %v7173 = vmul.f32 %v7155, 1.442695
        %v7174 = vpow.pop %v7173
        %v7175 = vmul.f32 %v7156, 1.442695
        %v7176 = vpow.pop %v7175
        %v7177 = vmul.f32 %v7157, 1.442695
        %v7178 = vpow.pop %v7177
        %v7179 = vmul.f32 %v7158, 1.442695
        %v7180 = vpow.pop %v7179
        %v7181 = vmul.f32 %v7159, 1.442695
        %v7182 = vpow.pop %v7181
        %v7183 = vmul.f32 %v7160, 1.442695
        %v7184 = vpow.pop %v7183
        %v7185 = vmul.f32 %v7161, 1.442695
        %v7186 = vpow.pop %v7185
        %v7187 = vmul.f32 %v7162, 1.442695
        %v7188 = vpow.pop %v7187
        %v7189 = vmul.f32 %v7163, 1.442695
        %v7190 = vpow.pop %v7189
        %v7191 = vmul.f32 %v7164, 1.442695
        %v7192 = vpow.pop %v7191
        %v7193 = vmul.f32 %v7165, 1.442695
        %v7194 = vpow.pop %v7193
        %v7195 = vmul.f32 %v7166, 1.442695
        %v7196 = vpow.pop %v7195
        %v7197 = vmul.f32 %v7167, 1.442695
        %v7198 = vpow.pop %v7197
        %v7199 = vmul.f32 %v7168, 1.442695
        %v7200 = vpow.pop %v7199
        %7201 = vadd.xlane.f32.xlu0 %v7170
        %v7202 = vpop.xlane.xlu0 %7201
        %7203 = vadd.xlane.f32.xlu0 %v7172
        %v7204 = vpop.xlane.xlu0 %7203
        %7205 = vadd.xlane.f32.xlu0 %v7174
        %v7206 = vpop.xlane.xlu0 %7205
        %7207 = vadd.xlane.f32.xlu0 %v7176
        %v7208 = vpop.xlane.xlu0 %7207
        %7209 = vadd.xlane.f32.xlu0 %v7178
        %v7210 = vpop.xlane.xlu0 %7209
        %7211 = vadd.xlane.f32.xlu0 %v7180
        %v7212 = vpop.xlane.xlu0 %7211
        %7213 = vadd.xlane.f32.xlu0 %v7182
        %v7214 = vpop.xlane.xlu0 %7213
        %7215 = vadd.xlane.f32.xlu0 %v7184
        %v7216 = vpop.xlane.xlu0 %7215
        %7217 = vadd.xlane.f32.xlu0 %v7186
        %v7218 = vpop.xlane.xlu0 %7217
        %7219 = vadd.xlane.f32.xlu0 %v7188
        %v7220 = vpop.xlane.xlu0 %7219
        %7221 = vadd.xlane.f32.xlu0 %v7190
        %v7222 = vpop.xlane.xlu0 %7221
        %7223 = vadd.xlane.f32.xlu0 %v7192
        %v7224 = vpop.xlane.xlu0 %7223
        %7225 = vadd.xlane.f32.xlu0 %v7194
        %v7226 = vpop.xlane.xlu0 %7225
        %7227 = vadd.xlane.f32.xlu0 %v7196
        %v7228 = vpop.xlane.xlu0 %7227
        %7229 = vadd.xlane.f32.xlu0 %v7198
        %v7230 = vpop.xlane.xlu0 %7229
        %7231 = vadd.xlane.f32.xlu0 %v7200
        %v7232 = vpop.xlane.xlu0 %7231
        %v7233 = vrcp.pop %v7202
        %v7234 = vmul.f32 %v7202, %v7233
        %v7235 = vsub.f32 1.0, %v7234
        %v7236 = vmul.f32 %v7233, %v7235
        %v7237 = vadd.f32 %v7233, %v7236
        %vm7238 = vweird.f32 %v7202
        %vm7239 = vweird.f32 %v7233
        %vm7240 = vmor %vm7238, %vm7239
        %v7241 = vsel %vm7240, %v7233, %v7237
        %v7242 = vand.u32 2147483647, %v7202
        %vm7243 = vcmp.eq.f32.partialorder %v7242, 8.507059e+37
        %v7244 = vand.u32 %v7202, 2147483648
        %v7245 = vor.u32 1.1754944e-38, %v7244
        %v7246 = vsel %vm7243, %v7245, %v7241
        %v7247 = vmul.f32 %v7170, %v7246
        %v7248 = vrcp.pop %v7204
        %v7249 = vmul.f32 %v7204, %v7248
        %v7250 = vsub.f32 1.0, %v7249
        %v7251 = vmul.f32 %v7248, %v7250
        %v7252 = vadd.f32 %v7248, %v7251
        %vm7253 = vweird.f32 %v7204
        %vm7254 = vweird.f32 %v7248
        %vm7255 = vmor %vm7253, %vm7254
        %v7256 = vsel %vm7255, %v7248, %v7252
        %v7257 = vand.u32 2147483647, %v7204
        %vm7258 = vcmp.eq.f32.partialorder %v7257, 8.507059e+37
        %v7259 = vand.u32 %v7204, 2147483648
        %v7260 = vor.u32 1.1754944e-38, %v7259
        %v7261 = vsel %vm7258, %v7260, %v7256
        %v7262 = vmul.f32 %v7172, %v7261
        %v7263 = vrcp.pop %v7206
        %v7264 = vmul.f32 %v7206, %v7263
        %v7265 = vsub.f32 1.0, %v7264
        %v7266 = vmul.f32 %v7263, %v7265
        %v7267 = vadd.f32 %v7263, %v7266
        %vm7268 = vweird.f32 %v7206
        %vm7269 = vweird.f32 %v7263
        %vm7270 = vmor %vm7268, %vm7269
        %v7271 = vsel %vm7270, %v7263, %v7267
        %v7272 = vand.u32 2147483647, %v7206
        %vm7273 = vcmp.eq.f32.partialorder %v7272, 8.507059e+37
        %v7274 = vand.u32 %v7206, 2147483648
        %v7275 = vor.u32 1.1754944e-38, %v7274
        %v7276 = vsel %vm7273, %v7275, %v7271
        %v7277 = vmul.f32 %v7174, %v7276
        %v7278 = vrcp.pop %v7208
        %v7279 = vmul.f32 %v7208, %v7278
        %v7280 = vsub.f32 1.0, %v7279
        %v7281 = vmul.f32 %v7278, %v7280
        %v7282 = vadd.f32 %v7278, %v7281
        %vm7283 = vweird.f32 %v7208
        %vm7284 = vweird.f32 %v7278
        %vm7285 = vmor %vm7283, %vm7284
        %v7286 = vsel %vm7285, %v7278, %v7282
        %v7287 = vand.u32 2147483647, %v7208
        %vm7288 = vcmp.eq.f32.partialorder %v7287, 8.507059e+37
        %v7289 = vand.u32 %v7208, 2147483648
        %v7290 = vor.u32 1.1754944e-38, %v7289
        %v7291 = vsel %vm7288, %v7290, %v7286
        %v7292 = vmul.f32 %v7176, %v7291
        %v7293 = vrcp.pop %v7210
        %v7294 = vmul.f32 %v7210, %v7293
        %v7295 = vsub.f32 1.0, %v7294
        %v7296 = vmul.f32 %v7293, %v7295
        %v7297 = vadd.f32 %v7293, %v7296
        %vm7298 = vweird.f32 %v7210
        %vm7299 = vweird.f32 %v7293
        %vm7300 = vmor %vm7298, %vm7299
        %v7301 = vsel %vm7300, %v7293, %v7297
        %v7302 = vand.u32 2147483647, %v7210
        %vm7303 = vcmp.eq.f32.partialorder %v7302, 8.507059e+37
        %v7304 = vand.u32 %v7210, 2147483648
        %v7305 = vor.u32 1.1754944e-38, %v7304
        %v7306 = vsel %vm7303, %v7305, %v7301
        %v7307 = vmul.f32 %v7178, %v7306
        %v7308 = vrcp.pop %v7212
        %v7309 = vmul.f32 %v7212, %v7308
        %v7310 = vsub.f32 1.0, %v7309
        %v7311 = vmul.f32 %v7308, %v7310
        %v7312 = vadd.f32 %v7308, %v7311
        %vm7313 = vweird.f32 %v7212
        %vm7314 = vweird.f32 %v7308
        %vm7315 = vmor %vm7313, %vm7314
        %v7316 = vsel %vm7315, %v7308, %v7312
        %v7317 = vand.u32 2147483647, %v7212
        %vm7318 = vcmp.eq.f32.partialorder %v7317, 8.507059e+37
        %v7319 = vand.u32 %v7212, 2147483648
        %v7320 = vor.u32 1.1754944e-38, %v7319
        %v7321 = vsel %vm7318, %v7320, %v7316
        %v7322 = vmul.f32 %v7180, %v7321
        %v7323 = vrcp.pop %v7214
        %v7324 = vmul.f32 %v7214, %v7323
        %v7325 = vsub.f32 1.0, %v7324
        %v7326 = vmul.f32 %v7323, %v7325
        %v7327 = vadd.f32 %v7323, %v7326
        %vm7328 = vweird.f32 %v7214
        %vm7329 = vweird.f32 %v7323
        %vm7330 = vmor %vm7328, %vm7329
        %v7331 = vsel %vm7330, %v7323, %v7327
        %v7332 = vand.u32 2147483647, %v7214
        %vm7333 = vcmp.eq.f32.partialorder %v7332, 8.507059e+37
        %v7334 = vand.u32 %v7214, 2147483648
        %v7335 = vor.u32 1.1754944e-38, %v7334
        %v7336 = vsel %vm7333, %v7335, %v7331
        %v7337 = vmul.f32 %v7182, %v7336
        %v7338 = vrcp.pop %v7216
        %v7339 = vmul.f32 %v7216, %v7338
        %v7340 = vsub.f32 1.0, %v7339
        %v7341 = vmul.f32 %v7338, %v7340
        %v7342 = vadd.f32 %v7338, %v7341
        %vm7343 = vweird.f32 %v7216
        %vm7344 = vweird.f32 %v7338
        %vm7345 = vmor %vm7343, %vm7344
        %v7346 = vsel %vm7345, %v7338, %v7342
        %v7347 = vand.u32 2147483647, %v7216
        %vm7348 = vcmp.eq.f32.partialorder %v7347, 8.507059e+37
        %v7349 = vand.u32 %v7216, 2147483648
        %v7350 = vor.u32 1.1754944e-38, %v7349
        %v7351 = vsel %vm7348, %v7350, %v7346
        %v7352 = vmul.f32 %v7184, %v7351
        %v7353 = vrcp.pop %v7218
        %v7354 = vmul.f32 %v7218, %v7353
        %v7355 = vsub.f32 1.0, %v7354
        %v7356 = vmul.f32 %v7353, %v7355
        %v7357 = vadd.f32 %v7353, %v7356
        %vm7358 = vweird.f32 %v7218
        %vm7359 = vweird.f32 %v7353
        %vm7360 = vmor %vm7358, %vm7359
        %v7361 = vsel %vm7360, %v7353, %v7357
        %v7362 = vand.u32 2147483647, %v7218
        %vm7363 = vcmp.eq.f32.partialorder %v7362, 8.507059e+37
        %v7364 = vand.u32 %v7218, 2147483648
        %v7365 = vor.u32 1.1754944e-38, %v7364
        %v7366 = vsel %vm7363, %v7365, %v7361
        %v7367 = vmul.f32 %v7186, %v7366
        %v7368 = vrcp.pop %v7220
        %v7369 = vmul.f32 %v7220, %v7368
        %v7370 = vsub.f32 1.0, %v7369
        %v7371 = vmul.f32 %v7368, %v7370
        %v7372 = vadd.f32 %v7368, %v7371
        %vm7373 = vweird.f32 %v7220
        %vm7374 = vweird.f32 %v7368
        %vm7375 = vmor %vm7373, %vm7374
        %v7376 = vsel %vm7375, %v7368, %v7372
        %v7377 = vand.u32 2147483647, %v7220
        %vm7378 = vcmp.eq.f32.partialorder %v7377, 8.507059e+37
        %v7379 = vand.u32 %v7220, 2147483648
        %v7380 = vor.u32 1.1754944e-38, %v7379
        %v7381 = vsel %vm7378, %v7380, %v7376
        %v7382 = vmul.f32 %v7188, %v7381
        %v7383 = vrcp.pop %v7222
        %v7384 = vmul.f32 %v7222, %v7383
        %v7385 = vsub.f32 1.0, %v7384
        %v7386 = vmul.f32 %v7383, %v7385
        %v7387 = vadd.f32 %v7383, %v7386
        %vm7388 = vweird.f32 %v7222
        %vm7389 = vweird.f32 %v7383
        %vm7390 = vmor %vm7388, %vm7389
        %v7391 = vsel %vm7390, %v7383, %v7387
        %v7392 = vand.u32 2147483647, %v7222
        %vm7393 = vcmp.eq.f32.partialorder %v7392, 8.507059e+37
        %v7394 = vand.u32 %v7222, 2147483648
        %v7395 = vor.u32 1.1754944e-38, %v7394
        %v7396 = vsel %vm7393, %v7395, %v7391
        %v7397 = vmul.f32 %v7190, %v7396
        %v7398 = vrcp.pop %v7224
        %v7399 = vmul.f32 %v7224, %v7398
        %v7400 = vsub.f32 1.0, %v7399
        %v7401 = vmul.f32 %v7398, %v7400
        %v7402 = vadd.f32 %v7398, %v7401
        %vm7403 = vweird.f32 %v7224
        %vm7404 = vweird.f32 %v7398
        %vm7405 = vmor %vm7403, %vm7404
        %v7406 = vsel %vm7405, %v7398, %v7402
        %v7407 = vand.u32 2147483647, %v7224
        %vm7408 = vcmp.eq.f32.partialorder %v7407, 8.507059e+37
        %v7409 = vand.u32 %v7224, 2147483648
        %v7410 = vor.u32 1.1754944e-38, %v7409
        %v7411 = vsel %vm7408, %v7410, %v7406
        %v7412 = vmul.f32 %v7192, %v7411
        %v7413 = vrcp.pop %v7226
        %v7414 = vmul.f32 %v7226, %v7413
        %v7415 = vsub.f32 1.0, %v7414
        %v7416 = vmul.f32 %v7413, %v7415
        %v7417 = vadd.f32 %v7413, %v7416
        %vm7418 = vweird.f32 %v7226
        %vm7419 = vweird.f32 %v7413
        %vm7420 = vmor %vm7418, %vm7419
        %v7421 = vsel %vm7420, %v7413, %v7417
        %v7422 = vand.u32 2147483647, %v7226
        %vm7423 = vcmp.eq.f32.partialorder %v7422, 8.507059e+37
        %v7424 = vand.u32 %v7226, 2147483648
        %v7425 = vor.u32 1.1754944e-38, %v7424
        %v7426 = vsel %vm7423, %v7425, %v7421
        %v7427 = vmul.f32 %v7194, %v7426
        %v7428 = vrcp.pop %v7228
        %v7429 = vmul.f32 %v7228, %v7428
        %v7430 = vsub.f32 1.0, %v7429
        %v7431 = vmul.f32 %v7428, %v7430
        %v7432 = vadd.f32 %v7428, %v7431
        %vm7433 = vweird.f32 %v7228
        %vm7434 = vweird.f32 %v7428
        %vm7435 = vmor %vm7433, %vm7434
        %v7436 = vsel %vm7435, %v7428, %v7432
        %v7437 = vand.u32 2147483647, %v7228
        %vm7438 = vcmp.eq.f32.partialorder %v7437, 8.507059e+37
        %v7439 = vand.u32 %v7228, 2147483648
        %v7440 = vor.u32 1.1754944e-38, %v7439
        %v7441 = vsel %vm7438, %v7440, %v7436
        %v7442 = vmul.f32 %v7196, %v7441
        %v7443 = vrcp.pop %v7230
        %v7444 = vmul.f32 %v7230, %v7443
        %v7445 = vsub.f32 1.0, %v7444
        %v7446 = vmul.f32 %v7443, %v7445
        %v7447 = vadd.f32 %v7443, %v7446
        %vm7448 = vweird.f32 %v7230
        %vm7449 = vweird.f32 %v7443
        %vm7450 = vmor %vm7448, %vm7449
        %v7451 = vsel %vm7450, %v7443, %v7447
        %v7452 = vand.u32 2147483647, %v7230
        %vm7453 = vcmp.eq.f32.partialorder %v7452, 8.507059e+37
        %v7454 = vand.u32 %v7230, 2147483648
        %v7455 = vor.u32 1.1754944e-38, %v7454
        %v7456 = vsel %vm7453, %v7455, %v7451
        %v7457 = vmul.f32 %v7198, %v7456
        %v7458 = vrcp.pop %v7232
        %v7459 = vmul.f32 %v7232, %v7458
        %v7460 = vsub.f32 1.0, %v7459
        %v7461 = vmul.f32 %v7458, %v7460
        %v7462 = vadd.f32 %v7458, %v7461
        %vm7463 = vweird.f32 %v7232
        %vm7464 = vweird.f32 %v7458
        %vm7465 = vmor %vm7463, %vm7464
        %v7466 = vsel %vm7465, %v7458, %v7462
        %v7467 = vand.u32 2147483647, %v7232
        %vm7468 = vcmp.eq.f32.partialorder %v7467, 8.507059e+37
        %v7469 = vand.u32 %v7232, 2147483648
        %v7470 = vor.u32 1.1754944e-38, %v7469
        %v7471 = vsel %vm7468, %v7470, %v7466
        %v7472 = vmul.f32 %v7200, %v7471
        %7473 = vmatpush.msra.mxu0 %v1088
        %7474 = vmatpush.msra.mxu0 %v1085
        %7475 = vmatpush.msra.mxu0 %v1082
        %7476 = vmatpush.msra.mxu0 %v1079
        %7477 = vmatpush.msra.mxu0 %v1076
        %7478 = vmatpush.msra.mxu0 %v1073
        %7479 = vmatpush.msra.mxu0 %v1070
        %7480 = vmatpush.msra.mxu0 %v1067
        %7481 = vmatpush.msra.mxu0 %v1064
        %7482 = vmatpush.msra.mxu0 %v1061
        %7483 = vmatpush.msra.mxu0 %v1058
        %7484 = vmatpush.msra.mxu0 %v1055
        %7485 = vmatpush.msra.mxu0 %v1052
        %7486 = vmatpush.msra.mxu0 %v1049
        %7487 = vmatpush.msra.mxu0 %v1046
        %7488 = vmatpush.msra.mxu0 %v1043
        %7489 = vmatmul.f32.gmra.mxu0 %v7247
        %v7490 = vpop.f32.mrf.mxu0
        %v7491 = vadd.f32 0.0, %v7490
        %7492 = vmatmul.f32.gmra.mxu0 %v7262
        %v7493 = vpop.f32.mrf.mxu0
        %v7494 = vadd.f32 0.0, %v7493
        %7495 = vmatmul.f32.gmra.mxu0 %v7277
        %v7496 = vpop.f32.mrf.mxu0
        %v7497 = vadd.f32 0.0, %v7496
        %7498 = vmatmul.f32.gmra.mxu0 %v7292
        %v7499 = vpop.f32.mrf.mxu0
        %v7500 = vadd.f32 0.0, %v7499
        %7501 = vmatmul.f32.gmra.mxu0 %v7307
        %v7502 = vpop.f32.mrf.mxu0
        %v7503 = vadd.f32 0.0, %v7502
        %7504 = vmatmul.f32.gmra.mxu0 %v7322
        %v7505 = vpop.f32.mrf.mxu0
        %v7506 = vadd.f32 0.0, %v7505
        %7507 = vmatmul.f32.gmra.mxu0 %v7337
        %v7508 = vpop.f32.mrf.mxu0
        %v7509 = vadd.f32 0.0, %v7508
        %7510 = vmatmul.f32.gmra.mxu0 %v7352
        %v7511 = vpop.f32.mrf.mxu0
        %v7512 = vadd.f32 0.0, %v7511
        %7513 = vmatmul.f32.gmra.mxu0 %v7367
        %v7514 = vpop.f32.mrf.mxu0
        %v7515 = vadd.f32 0.0, %v7514
        %7516 = vmatmul.f32.gmra.mxu0 %v7382
        %v7517 = vpop.f32.mrf.mxu0
        %v7518 = vadd.f32 0.0, %v7517
        %7519 = vmatmul.f32.gmra.mxu0 %v7397
        %v7520 = vpop.f32.mrf.mxu0
        %v7521 = vadd.f32 0.0, %v7520
        %7522 = vmatmul.f32.gmra.mxu0 %v7412
        %v7523 = vpop.f32.mrf.mxu0
        %v7524 = vadd.f32 0.0, %v7523
        %7525 = vmatmul.f32.gmra.mxu0 %v7427
        %v7526 = vpop.f32.mrf.mxu0
        %v7527 = vadd.f32 0.0, %v7526
        %7528 = vmatmul.f32.gmra.mxu0 %v7442
        %v7529 = vpop.f32.mrf.mxu0
        %v7530 = vadd.f32 0.0, %v7529
        %7531 = vmatmul.f32.gmra.mxu0 %v7457
        %v7532 = vpop.f32.mrf.mxu0
        %v7533 = vadd.f32 0.0, %v7532
        %7534 = vmatmul.f32.gmra.mxu0 %v7472
        %v7535 = vpop.f32.mrf.mxu0
        %v7536 = vadd.f32 0.0, %v7535
        %7537 = vdwg.mxu0
        %7538 = vmatpush.msra.mxu0 %v1201
        %7539 = vmatpush.msra.mxu0 %v1198
        %7540 = vmatpush.msra.mxu0 %v1195
        %7541 = vmatpush.msra.mxu0 %v1192
        %7542 = vmatpush.msra.mxu0 %v1189
        %7543 = vmatpush.msra.mxu0 %v1186
        %7544 = vmatpush.msra.mxu0 %v1183
        %7545 = vmatpush.msra.mxu0 %v1180
        %7546 = vmatpush.msra.mxu0 %v1177
        %7547 = vmatpush.msra.mxu0 %v1174
        %7548 = vmatpush.msra.mxu0 %v1171
        %7549 = vmatpush.msra.mxu0 %v1168
        %7550 = vmatpush.msra.mxu0 %v1165
        %7551 = vmatpush.msra.mxu0 %v1162
        %7552 = vmatpush.msra.mxu0 %v1159
        %7553 = vmatpush.msra.mxu0 %v1156
        %7554 = vmatmul.f32.gmra.mxu0 %v7247
        %v7555 = vpop.f32.mrf.mxu0
        %v7556 = vadd.f32 0.0, %v7555
        %7557 = vmatmul.f32.gmra.mxu0 %v7262
        %v7558 = vpop.f32.mrf.mxu0
        %v7559 = vadd.f32 0.0, %v7558
        %7560 = vmatmul.f32.gmra.mxu0 %v7277
        %v7561 = vpop.f32.mrf.mxu0
        %v7562 = vadd.f32 0.0, %v7561
        %7563 = vmatmul.f32.gmra.mxu0 %v7292
        %v7564 = vpop.f32.mrf.mxu0
        %v7565 = vadd.f32 0.0, %v7564
        %7566 = vmatmul.f32.gmra.mxu0 %v7307
        %v7567 = vpop.f32.mrf.mxu0
        %v7568 = vadd.f32 0.0, %v7567
        %7569 = vmatmul.f32.gmra.mxu0 %v7322
        %v7570 = vpop.f32.mrf.mxu0
        %v7571 = vadd.f32 0.0, %v7570
        %7572 = vmatmul.f32.gmra.mxu0 %v7337
        %v7573 = vpop.f32.mrf.mxu0
        %v7574 = vadd.f32 0.0, %v7573
        %7575 = vmatmul.f32.gmra.mxu0 %v7352
        %v7576 = vpop.f32.mrf.mxu0
        %v7577 = vadd.f32 0.0, %v7576
        %7578 = vmatmul.f32.gmra.mxu0 %v7367
        %v7579 = vpop.f32.mrf.mxu0
        %v7580 = vadd.f32 0.0, %v7579
        %7581 = vmatmul.f32.gmra.mxu0 %v7382
        %v7582 = vpop.f32.mrf.mxu0
        %v7583 = vadd.f32 0.0, %v7582
        %7584 = vmatmul.f32.gmra.mxu0 %v7397
        %v7585 = vpop.f32.mrf.mxu0
        %v7586 = vadd.f32 0.0, %v7585
        %7587 = vmatmul.f32.gmra.mxu0 %v7412
        %v7588 = vpop.f32.mrf.mxu0
        %v7589 = vadd.f32 0.0, %v7588
        %7590 = vmatmul.f32.gmra.mxu0 %v7427
        %v7591 = vpop.f32.mrf.mxu0
        %v7592 = vadd.f32 0.0, %v7591
        %7593 = vmatmul.f32.gmra.mxu0 %v7442
        %v7594 = vpop.f32.mrf.mxu0
        %v7595 = vadd.f32 0.0, %v7594
        %7596 = vmatmul.f32.gmra.mxu0 %v7457
        %v7597 = vpop.f32.mrf.mxu0
        %v7598 = vadd.f32 0.0, %v7597
        %7599 = vmatmul.f32.gmra.mxu0 %v7472
        %v7600 = vpop.f32.mrf.mxu0
        %v7601 = vadd.f32 0.0, %v7600
        %7602 = vdwg.mxu0
        %s7603 = sld [smem:[#allocation2 + $0x100]]
        %v7604 = vstv %s7603
        %v7605 = vmul.f32 %v7604, %v6718
        %v7606 = vmul.f32 %v7604, %v6848
        %v7607 = vmul.f32 %v7604, %v6721
        %v7608 = vmul.f32 %v7604, %v6851
        %v7609 = vmul.f32 %v7604, %v6724
        %v7610 = vmul.f32 %v7604, %v6854
        %v7611 = vmul.f32 %v7604, %v6727
        %v7612 = vmul.f32 %v7604, %v6857
        %v7613 = vmul.f32 %v7604, %v6730
        %v7614 = vmul.f32 %v7604, %v6860
        %v7615 = vmul.f32 %v7604, %v6733
        %v7616 = vmul.f32 %v7604, %v6863
        %v7617 = vmul.f32 %v7604, %v6736
        %v7618 = vmul.f32 %v7604, %v6866
        %v7619 = vmul.f32 %v7604, %v6739
        %v7620 = vmul.f32 %v7604, %v6869
        %v7621 = vmul.f32 %v7604, %v6742
        %v7622 = vmul.f32 %v7604, %v6872
        %v7623 = vmul.f32 %v7604, %v6745
        %v7624 = vmul.f32 %v7604, %v6875
        %v7625 = vmul.f32 %v7604, %v6748
        %v7626 = vmul.f32 %v7604, %v6878
        %v7627 = vmul.f32 %v7604, %v6751
        %v7628 = vmul.f32 %v7604, %v6881
        %v7629 = vmul.f32 %v7604, %v6754
        %v7630 = vmul.f32 %v7604, %v6884
        %v7631 = vmul.f32 %v7604, %v6757
        %v7632 = vmul.f32 %v7604, %v6887
        %v7633 = vmul.f32 %v7604, %v6760
        %v7634 = vmul.f32 %v7604, %v6890
        %v7635 = vmul.f32 %v7604, %v6763
        %v7636 = vmul.f32 %v7604, %v6893
        %s7637 = sld [smem:[#allocation2 + $0x101]]
        %v7638 = vstv %s7637
        %v7639 = vmul.f32 %v7638, %v7491
        %v7640 = vmul.f32 %v7638, %v7556
        %v7641 = vmul.f32 %v7638, %v7494
        %v7642 = vmul.f32 %v7638, %v7559
        %v7643 = vmul.f32 %v7638, %v7497
        %v7644 = vmul.f32 %v7638, %v7562
        %v7645 = vmul.f32 %v7638, %v7500
        %v7646 = vmul.f32 %v7638, %v7565
        %v7647 = vmul.f32 %v7638, %v7503
        %v7648 = vmul.f32 %v7638, %v7568
        %v7649 = vmul.f32 %v7638, %v7506
        %v7650 = vmul.f32 %v7638, %v7571
        %v7651 = vmul.f32 %v7638, %v7509
        %v7652 = vmul.f32 %v7638, %v7574
        %v7653 = vmul.f32 %v7638, %v7512
        %v7654 = vmul.f32 %v7638, %v7577
        %v7655 = vmul.f32 %v7638, %v7515
        %v7656 = vmul.f32 %v7638, %v7580
        %v7657 = vmul.f32 %v7638, %v7518
        %v7658 = vmul.f32 %v7638, %v7583
        %v7659 = vmul.f32 %v7638, %v7521
        %v7660 = vmul.f32 %v7638, %v7586
        %v7661 = vmul.f32 %v7638, %v7524
        %v7662 = vmul.f32 %v7638, %v7589
        %v7663 = vmul.f32 %v7638, %v7527
        %v7664 = vmul.f32 %v7638, %v7592
        %v7665 = vmul.f32 %v7638, %v7530
        %v7666 = vmul.f32 %v7638, %v7595
        %v7667 = vmul.f32 %v7638, %v7533
        %v7668 = vmul.f32 %v7638, %v7598
        %v7669 = vmul.f32 %v7638, %v7536
        %v7670 = vmul.f32 %v7638, %v7601
        %v7671 = vadd.f32 %v7605, %v7639
        %v7672 = vadd.f32 %v7606, %v7640
        %v7673 = vadd.f32 %v7607, %v7641
        %v7674 = vadd.f32 %v7608, %v7642
        %v7675 = vadd.f32 %v7609, %v7643
        %v7676 = vadd.f32 %v7610, %v7644
        %v7677 = vadd.f32 %v7611, %v7645
        %v7678 = vadd.f32 %v7612, %v7646
        %v7679 = vadd.f32 %v7613, %v7647
        %v7680 = vadd.f32 %v7614, %v7648
        %v7681 = vadd.f32 %v7615, %v7649
        %v7682 = vadd.f32 %v7616, %v7650
        %v7683 = vadd.f32 %v7617, %v7651
        %v7684 = vadd.f32 %v7618, %v7652
        %v7685 = vadd.f32 %v7619, %v7653
        %v7686 = vadd.f32 %v7620, %v7654
        %v7687 = vadd.f32 %v7621, %v7655
        %v7688 = vadd.f32 %v7622, %v7656
        %v7689 = vadd.f32 %v7623, %v7657
        %v7690 = vadd.f32 %v7624, %v7658
        %v7691 = vadd.f32 %v7625, %v7659
        %v7692 = vadd.f32 %v7626, %v7660
        %v7693 = vadd.f32 %v7627, %v7661
        %v7694 = vadd.f32 %v7628, %v7662
        %v7695 = vadd.f32 %v7629, %v7663
        %v7696 = vadd.f32 %v7630, %v7664
        %v7697 = vadd.f32 %v7631, %v7665
        %v7698 = vadd.f32 %v7632, %v7666
        %v7699 = vadd.f32 %v7633, %v7667
        %v7700 = vadd.f32 %v7634, %v7668
        %v7701 = vadd.f32 %v7635, %v7669
        %v7702 = vadd.f32 %v7636, %v7670
        %v7703 = vmul.f32 %v1043, 2.0
        %v7704 = vmul.f32 %v1156, 2.0
        %v7705 = vmul.f32 %v1046, 2.0
        %v7706 = vmul.f32 %v1159, 2.0
        %v7707 = vmul.f32 %v1049, 2.0
        %v7708 = vmul.f32 %v1162, 2.0
        %v7709 = vmul.f32 %v1052, 2.0
        %v7710 = vmul.f32 %v1165, 2.0
        %v7711 = vmul.f32 %v1055, 2.0
        %v7712 = vmul.f32 %v1168, 2.0
        %v7713 = vmul.f32 %v1058, 2.0
        %v7714 = vmul.f32 %v1171, 2.0
        %v7715 = vmul.f32 %v1061, 2.0
        %v7716 = vmul.f32 %v1174, 2.0
        %v7717 = vmul.f32 %v1064, 2.0
        %v7718 = vmul.f32 %v1177, 2.0
        %v7719 = vmul.f32 %v1067, 2.0
        %v7720 = vmul.f32 %v1180, 2.0
        %v7721 = vmul.f32 %v1070, 2.0
        %v7722 = vmul.f32 %v1183, 2.0
        %v7723 = vmul.f32 %v1073, 2.0
        %v7724 = vmul.f32 %v1186, 2.0
        %v7725 = vmul.f32 %v1076, 2.0
        %v7726 = vmul.f32 %v1189, 2.0
        %v7727 = vmul.f32 %v1079, 2.0
        %v7728 = vmul.f32 %v1192, 2.0
        %v7729 = vmul.f32 %v1082, 2.0
        %v7730 = vmul.f32 %v1195, 2.0
        %v7731 = vmul.f32 %v1085, 2.0
        %v7732 = vmul.f32 %v1198, 2.0
        %v7733 = vmul.f32 %v1088, 2.0
        %v7734 = vmul.f32 %v1201, 2.0
        %v7735 = vadd.f32 %v7671, %v7703
        %v7736 = vadd.f32 %v7672, %v7704
        %v7737 = vadd.f32 %v7673, %v7705
        %v7738 = vadd.f32 %v7674, %v7706
        %v7739 = vadd.f32 %v7675, %v7707
        %v7740 = vadd.f32 %v7676, %v7708
        %v7741 = vadd.f32 %v7677, %v7709
        %v7742 = vadd.f32 %v7678, %v7710
        %v7743 = vadd.f32 %v7679, %v7711
        %v7744 = vadd.f32 %v7680, %v7712
        %v7745 = vadd.f32 %v7681, %v7713
        %v7746 = vadd.f32 %v7682, %v7714
        %v7747 = vadd.f32 %v7683, %v7715
        %v7748 = vadd.f32 %v7684, %v7716
        %v7749 = vadd.f32 %v7685, %v7717
        %v7750 = vadd.f32 %v7686, %v7718
        %v7751 = vadd.f32 %v7687, %v7719
        %v7752 = vadd.f32 %v7688, %v7720
        %v7753 = vadd.f32 %v7689, %v7721
        %v7754 = vadd.f32 %v7690, %v7722
        %v7755 = vadd.f32 %v7691, %v7723
        %v7756 = vadd.f32 %v7692, %v7724
        %v7757 = vadd.f32 %v7693, %v7725
        %v7758 = vadd.f32 %v7694, %v7726
        %v7759 = vadd.f32 %v7695, %v7727
        %v7760 = vadd.f32 %v7696, %v7728
        %v7761 = vadd.f32 %v7697, %v7729
        %v7762 = vadd.f32 %v7698, %v7730
        %v7763 = vadd.f32 %v7699, %v7731
        %v7764 = vadd.f32 %v7700, %v7732
        %v7765 = vadd.f32 %v7701, %v7733
        %v7766 = vadd.f32 %v7702, %v7734
        %v7767 = vsel %vm3125, %v7736, 0.0
        %v7768 = vadd.f32 %v7735, %v7767
        %7769 = vadd.xlane.f32.xlu0 %v7768
        %v7770 = vpop.xlane.xlu0 %7769
        %v7771 = vsel %vm3125, %v7738, 0.0
        %v7772 = vadd.f32 %v7737, %v7771
        %7773 = vadd.xlane.f32.xlu0 %v7772
        %v7774 = vpop.xlane.xlu0 %7773
        %v7775 = vsel %vm3125, %v7740, 0.0
        %v7776 = vadd.f32 %v7739, %v7775
        %7777 = vadd.xlane.f32.xlu0 %v7776
        %v7778 = vpop.xlane.xlu0 %7777
        %v7779 = vsel %vm3125, %v7742, 0.0
        %v7780 = vadd.f32 %v7741, %v7779
        %7781 = vadd.xlane.f32.xlu0 %v7780
        %v7782 = vpop.xlane.xlu0 %7781
        %v7783 = vsel %vm3125, %v7744, 0.0
        %v7784 = vadd.f32 %v7743, %v7783
        %7785 = vadd.xlane.f32.xlu0 %v7784
        %v7786 = vpop.xlane.xlu0 %7785
        %v7787 = vsel %vm3125, %v7746, 0.0
        %v7788 = vadd.f32 %v7745, %v7787
        %7789 = vadd.xlane.f32.xlu0 %v7788
        %v7790 = vpop.xlane.xlu0 %7789
        %v7791 = vsel %vm3125, %v7748, 0.0
        %v7792 = vadd.f32 %v7747, %v7791
        %7793 = vadd.xlane.f32.xlu0 %v7792
        %v7794 = vpop.xlane.xlu0 %7793
        %v7795 = vsel %vm3125, %v7750, 0.0
        %v7796 = vadd.f32 %v7749, %v7795
        %7797 = vadd.xlane.f32.xlu0 %v7796
        %v7798 = vpop.xlane.xlu0 %7797
        %v7799 = vsel %vm3125, %v7752, 0.0
        %v7800 = vadd.f32 %v7751, %v7799
        %7801 = vadd.xlane.f32.xlu0 %v7800
        %v7802 = vpop.xlane.xlu0 %7801
        %v7803 = vsel %vm3125, %v7754, 0.0
        %v7804 = vadd.f32 %v7753, %v7803
        %7805 = vadd.xlane.f32.xlu0 %v7804
        %v7806 = vpop.xlane.xlu0 %7805
        %v7807 = vsel %vm3125, %v7756, 0.0
        %v7808 = vadd.f32 %v7755, %v7807
        %7809 = vadd.xlane.f32.xlu0 %v7808
        %v7810 = vpop.xlane.xlu0 %7809
        %v7811 = vsel %vm3125, %v7758, 0.0
        %v7812 = vadd.f32 %v7757, %v7811
        %7813 = vadd.xlane.f32.xlu0 %v7812
        %v7814 = vpop.xlane.xlu0 %7813
        %v7815 = vsel %vm3125, %v7760, 0.0
        %v7816 = vadd.f32 %v7759, %v7815
        %7817 = vadd.xlane.f32.xlu0 %v7816
        %v7818 = vpop.xlane.xlu0 %7817
        %v7819 = vsel %vm3125, %v7762, 0.0
        %v7820 = vadd.f32 %v7761, %v7819
        %7821 = vadd.xlane.f32.xlu0 %v7820
        %v7822 = vpop.xlane.xlu0 %7821
        %v7823 = vsel %vm3125, %v7764, 0.0
        %v7824 = vadd.f32 %v7763, %v7823
        %7825 = vadd.xlane.f32.xlu0 %v7824
        %v7826 = vpop.xlane.xlu0 %7825
        %v7827 = vsel %vm3125, %v7766, 0.0
        %v7828 = vadd.f32 %v7765, %v7827
        %7829 = vadd.xlane.f32.xlu0 %v7828
        %v7830 = vpop.xlane.xlu0 %7829
        %v7831 = vmul.f32 %v7770, %v5168
        %v7832 = vmul.f32 %v7774, %v5168
        %v7833 = vmul.f32 %v7778, %v5168
        %v7834 = vmul.f32 %v7782, %v5168
        %v7835 = vmul.f32 %v7786, %v5168
        %v7836 = vmul.f32 %v7790, %v5168
        %v7837 = vmul.f32 %v7794, %v5168
        %v7838 = vmul.f32 %v7798, %v5168
        %v7839 = vmul.f32 %v7802, %v5168
        %v7840 = vmul.f32 %v7806, %v5168
        %v7841 = vmul.f32 %v7810, %v5168
        %v7842 = vmul.f32 %v7814, %v5168
        %v7843 = vmul.f32 %v7818, %v5168
        %v7844 = vmul.f32 %v7822, %v5168
        %v7845 = vmul.f32 %v7826, %v5168
        %v7846 = vmul.f32 %v7830, %v5168
        %vm7847 = vcmask 785408
        %v7848 = vsel %vm7847, %v995, 0.0
        %7849 = vadd.xlane.f32.xlu0 %v7848
        %v7850 = vpop.xlane.xlu0 %7849
        %v7851 = vsel %vm7847, %v998, 0.0
        %7852 = vadd.xlane.f32.xlu0 %v7851
        %v7853 = vpop.xlane.xlu0 %7852
        %v7854 = vsel %vm7847, %v1001, 0.0
        %7855 = vadd.xlane.f32.xlu0 %v7854
        %v7856 = vpop.xlane.xlu0 %7855
        %v7857 = vsel %vm7847, %v1004, 0.0
        %7858 = vadd.xlane.f32.xlu0 %v7857
        %v7859 = vpop.xlane.xlu0 %7858
        %v7860 = vsel %vm7847, %v1007, 0.0
        %7861 = vadd.xlane.f32.xlu0 %v7860
        %v7862 = vpop.xlane.xlu0 %7861
        %v7863 = vsel %vm7847, %v1010, 0.0
        %7864 = vadd.xlane.f32.xlu0 %v7863
        %v7865 = vpop.xlane.xlu0 %7864
        %v7866 = vsel %vm7847, %v1013, 0.0
        %7867 = vadd.xlane.f32.xlu0 %v7866
        %v7868 = vpop.xlane.xlu0 %7867
        %v7869 = vsel %vm7847, %v1016, 0.0
        %7870 = vadd.xlane.f32.xlu0 %v7869
        %v7871 = vpop.xlane.xlu0 %7870
        %v7872 = vsel %vm7847, %v1019, 0.0
        %7873 = vadd.xlane.f32.xlu0 %v7872
        %v7874 = vpop.xlane.xlu0 %7873
        %v7875 = vsel %vm7847, %v1022, 0.0
        %7876 = vadd.xlane.f32.xlu0 %v7875
        %v7877 = vpop.xlane.xlu0 %7876
        %v7878 = vsel %vm7847, %v1025, 0.0
        %7879 = vadd.xlane.f32.xlu0 %v7878
        %v7880 = vpop.xlane.xlu0 %7879
        %v7881 = vsel %vm7847, %v1028, 0.0
        %7882 = vadd.xlane.f32.xlu0 %v7881
        %v7883 = vpop.xlane.xlu0 %7882
        %v7884 = vsel %vm7847, %v1031, 0.0
        %7885 = vadd.xlane.f32.xlu0 %v7884
        %v7886 = vpop.xlane.xlu0 %7885
        %v7887 = vsel %vm7847, %v1034, 0.0
        %7888 = vadd.xlane.f32.xlu0 %v7887
        %v7889 = vpop.xlane.xlu0 %7888
        %v7890 = vsel %vm7847, %v1037, 0.0
        %7891 = vadd.xlane.f32.xlu0 %v7890
        %v7892 = vpop.xlane.xlu0 %7891
        %v7893 = vsel %vm7847, %v1040, 0.0
        %7894 = vadd.xlane.f32.xlu0 %v7893
        %v7895 = vpop.xlane.xlu0 %7894
        %v7896 = vrcp.pop 96.0
        %v7897 = vmul.f32 96.0, %v7896
        %v7898 = vsub.f32 1.0, %v7897
        %v7899 = vmul.f32 %v7896, %v7898
        %v7900 = vadd.f32 %v7896, %v7899
        %vm7901 = vweird.f32 %v7896
        %v7902 = vsel %vm7901, %v7896, %v7900
        %v7903 = vmul.f32 %v7850, %v7902
        %v7904 = vmul.f32 %v7853, %v7902
        %v7905 = vmul.f32 %v7856, %v7902
        %v7906 = vmul.f32 %v7859, %v7902
        %v7907 = vmul.f32 %v7862, %v7902
        %v7908 = vmul.f32 %v7865, %v7902
        %v7909 = vmul.f32 %v7868, %v7902
        %v7910 = vmul.f32 %v7871, %v7902
        %v7911 = vmul.f32 %v7874, %v7902
        %v7912 = vmul.f32 %v7877, %v7902
        %v7913 = vmul.f32 %v7880, %v7902
        %v7914 = vmul.f32 %v7883, %v7902
        %v7915 = vmul.f32 %v7886, %v7902
        %v7916 = vmul.f32 %v7889, %v7902
        %v7917 = vmul.f32 %v7892, %v7902
        %v7918 = vmul.f32 %v7895, %v7902
        %7935 = vrot.lane.b32.xlu0 %v995, 32
        %v7936 = vpop.permute.xlu0 %7935
        %7937 = vrot.lane.b32.xlu0 %v1108, 32
        %v7938 = vpop.permute.xlu0 %7937
        %7939 = vrot.lane.b32.xlu0 %v998, 32
        %v7940 = vpop.permute.xlu0 %7939
        %7941 = vrot.lane.b32.xlu0 %v1111, 32
        %v7942 = vpop.permute.xlu0 %7941
        %7943 = vrot.lane.b32.xlu0 %v1001, 32
        %v7944 = vpop.permute.xlu0 %7943
        %7945 = vrot.lane.b32.xlu0 %v1114, 32
        %v7946 = vpop.permute.xlu0 %7945
        %7947 = vrot.lane.b32.xlu0 %v1004, 32
        %v7948 = vpop.permute.xlu0 %7947
        %7949 = vrot.lane.b32.xlu0 %v1117, 32
        %v7950 = vpop.permute.xlu0 %7949
        %7951 = vrot.lane.b32.xlu0 %v1007, 32
        %v7952 = vpop.permute.xlu0 %7951
        %7953 = vrot.lane.b32.xlu0 %v1120, 32
        %v7954 = vpop.permute.xlu0 %7953
        %7955 = vrot.lane.b32.xlu0 %v1010, 32
        %v7956 = vpop.permute.xlu0 %7955
        %7957 = vrot.lane.b32.xlu0 %v1123, 32
        %v7958 = vpop.permute.xlu0 %7957
        %7959 = vrot.lane.b32.xlu0 %v1013, 32
        %v7960 = vpop.permute.xlu0 %7959
        %7961 = vrot.lane.b32.xlu0 %v1126, 32
        %v7962 = vpop.permute.xlu0 %7961
        %7963 = vrot.lane.b32.xlu0 %v1016, 32
        %v7964 = vpop.permute.xlu0 %7963
        %7965 = vrot.lane.b32.xlu0 %v1129, 32
        %v7966 = vpop.permute.xlu0 %7965
        %7967 = vrot.lane.b32.xlu0 %v1019, 32
        %v7968 = vpop.permute.xlu0 %7967
        %7969 = vrot.lane.b32.xlu0 %v1132, 32
        %v7970 = vpop.permute.xlu0 %7969
        %7971 = vrot.lane.b32.xlu0 %v1022, 32
        %v7972 = vpop.permute.xlu0 %7971
        %7973 = vrot.lane.b32.xlu0 %v1135, 32
        %v7974 = vpop.permute.xlu0 %7973
        %7975 = vrot.lane.b32.xlu0 %v1025, 32
        %v7976 = vpop.permute.xlu0 %7975
        %7977 = vrot.lane.b32.xlu0 %v1138, 32
        %v7978 = vpop.permute.xlu0 %7977
        %7979 = vrot.lane.b32.xlu0 %v1028, 32
        %v7980 = vpop.permute.xlu0 %7979
        %7981 = vrot.lane.b32.xlu0 %v1141, 32
        %v7982 = vpop.permute.xlu0 %7981
        %7983 = vrot.lane.b32.xlu0 %v1031, 32
        %v7984 = vpop.permute.xlu0 %7983
        %7985 = vrot.lane.b32.xlu0 %v1144, 32
        %v7986 = vpop.permute.xlu0 %7985
        %7987 = vrot.lane.b32.xlu0 %v1034, 32
        %v7988 = vpop.permute.xlu0 %7987
        %7989 = vrot.lane.b32.xlu0 %v1147, 32
        %v7990 = vpop.permute.xlu0 %7989
        %7991 = vrot.lane.b32.xlu0 %v1037, 32
        %v7992 = vpop.permute.xlu0 %7991
        %7993 = vrot.lane.b32.xlu0 %v1150, 32
        %v7994 = vpop.permute.xlu0 %7993
        %7995 = vrot.lane.b32.xlu0 %v1040, 32
        %v7996 = vpop.permute.xlu0 %7995
        %7997 = vrot.lane.b32.xlu0 %v1153, 32
        %v7998 = vpop.permute.xlu0 %7997
        %vm7999 = vcmask 261120
        %v8000 = vsel %vm7999, %v7936, %v7938
        %v8001 = vsel %vm7999, %v7940, %v7942
        %v8002 = vsel %vm7999, %v7944, %v7946
        %v8003 = vsel %vm7999, %v7948, %v7950
        %v8004 = vsel %vm7999, %v7952, %v7954
        %v8005 = vsel %vm7999, %v7956, %v7958
        %v8006 = vsel %vm7999, %v7960, %v7962
        %v8007 = vsel %vm7999, %v7964, %v7966
        %v8008 = vsel %vm7999, %v7968, %v7970
        %v8009 = vsel %vm7999, %v7972, %v7974
        %v8010 = vsel %vm7999, %v7976, %v7978
        %v8011 = vsel %vm7999, %v7980, %v7982
        %v8012 = vsel %vm7999, %v7984, %v7986
        %v8013 = vsel %vm7999, %v7988, %v7990
        %v8014 = vsel %vm7999, %v7992, %v7994
        %v8015 = vsel %vm7999, %v7996, %v7998
        %v8032 = vsel %vm7847, %v8000, 0.0
        %8033 = vadd.xlane.f32.xlu0 %v8032
        %v8034 = vpop.xlane.xlu0 %8033
        %v8035 = vsel %vm7847, %v8001, 0.0
        %8036 = vadd.xlane.f32.xlu0 %v8035
        %v8037 = vpop.xlane.xlu0 %8036
        %v8038 = vsel %vm7847, %v8002, 0.0
        %8039 = vadd.xlane.f32.xlu0 %v8038
        %v8040 = vpop.xlane.xlu0 %8039
        %v8041 = vsel %vm7847, %v8003, 0.0
        %8042 = vadd.xlane.f32.xlu0 %v8041
        %v8043 = vpop.xlane.xlu0 %8042
        %v8044 = vsel %vm7847, %v8004, 0.0
        %8045 = vadd.xlane.f32.xlu0 %v8044
        %v8046 = vpop.xlane.xlu0 %8045
        %v8047 = vsel %vm7847, %v8005, 0.0
        %8048 = vadd.xlane.f32.xlu0 %v8047
        %v8049 = vpop.xlane.xlu0 %8048
        %v8050 = vsel %vm7847, %v8006, 0.0
        %8051 = vadd.xlane.f32.xlu0 %v8050
        %v8052 = vpop.xlane.xlu0 %8051
        %v8053 = vsel %vm7847, %v8007, 0.0
        %8054 = vadd.xlane.f32.xlu0 %v8053
        %v8055 = vpop.xlane.xlu0 %8054
        %v8056 = vsel %vm7847, %v8008, 0.0
        %8057 = vadd.xlane.f32.xlu0 %v8056
        %v8058 = vpop.xlane.xlu0 %8057
        %v8059 = vsel %vm7847, %v8009, 0.0
        %8060 = vadd.xlane.f32.xlu0 %v8059
        %v8061 = vpop.xlane.xlu0 %8060
        %v8062 = vsel %vm7847, %v8010, 0.0
        %8063 = vadd.xlane.f32.xlu0 %v8062
        %v8064 = vpop.xlane.xlu0 %8063
        %v8065 = vsel %vm7847, %v8011, 0.0
        %8066 = vadd.xlane.f32.xlu0 %v8065
        %v8067 = vpop.xlane.xlu0 %8066
        %v8068 = vsel %vm7847, %v8012, 0.0
        %8069 = vadd.xlane.f32.xlu0 %v8068
        %v8070 = vpop.xlane.xlu0 %8069
        %v8071 = vsel %vm7847, %v8013, 0.0
        %8072 = vadd.xlane.f32.xlu0 %v8071
        %v8073 = vpop.xlane.xlu0 %8072
        %v8074 = vsel %vm7847, %v8014, 0.0
        %8075 = vadd.xlane.f32.xlu0 %v8074
        %v8076 = vpop.xlane.xlu0 %8075
        %v8077 = vsel %vm7847, %v8015, 0.0
        %8078 = vadd.xlane.f32.xlu0 %v8077
        %v8079 = vpop.xlane.xlu0 %8078
        %v8080 = vmul.f32 %v8034, %v7902
        %v8081 = vmul.f32 %v8037, %v7902
        %v8082 = vmul.f32 %v8040, %v7902
        %v8083 = vmul.f32 %v8043, %v7902
        %v8084 = vmul.f32 %v8046, %v7902
        %v8085 = vmul.f32 %v8049, %v7902
        %v8086 = vmul.f32 %v8052, %v7902
        %v8087 = vmul.f32 %v8055, %v7902
        %v8088 = vmul.f32 %v8058, %v7902
        %v8089 = vmul.f32 %v8061, %v7902
        %v8090 = vmul.f32 %v8064, %v7902
        %v8091 = vmul.f32 %v8067, %v7902
        %v8092 = vmul.f32 %v8070, %v7902
        %v8093 = vmul.f32 %v8073, %v7902
        %v8094 = vmul.f32 %v8076, %v7902
        %v8095 = vmul.f32 %v8079, %v7902
        %v8096 = vsel %vm3125, %v1043, 0.0
        %8097 = vadd.xlane.f32.xlu0 %v8096
        %v8098 = vpop.xlane.xlu0 %8097
        %v8099 = vsel %vm3125, %v1046, 0.0
        %8100 = vadd.xlane.f32.xlu0 %v8099
        %v8101 = vpop.xlane.xlu0 %8100
        %v8102 = vsel %vm3125, %v1049, 0.0
        %8103 = vadd.xlane.f32.xlu0 %v8102
        %v8104 = vpop.xlane.xlu0 %8103
        %v8105 = vsel %vm3125, %v1052, 0.0
        %8106 = vadd.xlane.f32.xlu0 %v8105
        %v8107 = vpop.xlane.xlu0 %8106
        %v8108 = vsel %vm3125, %v1055, 0.0
        %8109 = vadd.xlane.f32.xlu0 %v8108
        %v8110 = vpop.xlane.xlu0 %8109
        %v8111 = vsel %vm3125, %v1058, 0.0
        %8112 = vadd.xlane.f32.xlu0 %v8111
        %v8113 = vpop.xlane.xlu0 %8112
        %v8114 = vsel %vm3125, %v1061, 0.0
        %8115 = vadd.xlane.f32.xlu0 %v8114
        %v8116 = vpop.xlane.xlu0 %8115
        %v8117 = vsel %vm3125, %v1064, 0.0
        %8118 = vadd.xlane.f32.xlu0 %v8117
        %v8119 = vpop.xlane.xlu0 %8118
        %v8120 = vsel %vm3125, %v1067, 0.0
        %8121 = vadd.xlane.f32.xlu0 %v8120
        %v8122 = vpop.xlane.xlu0 %8121
        %v8123 = vsel %vm3125, %v1070, 0.0
        %8124 = vadd.xlane.f32.xlu0 %v8123
        %v8125 = vpop.xlane.xlu0 %8124
        %v8126 = vsel %vm3125, %v1073, 0.0
        %8127 = vadd.xlane.f32.xlu0 %v8126
        %v8128 = vpop.xlane.xlu0 %8127
        %v8129 = vsel %vm3125, %v1076, 0.0
        %8130 = vadd.xlane.f32.xlu0 %v8129
        %v8131 = vpop.xlane.xlu0 %8130
        %v8132 = vsel %vm3125, %v1079, 0.0
        %8133 = vadd.xlane.f32.xlu0 %v8132
        %v8134 = vpop.xlane.xlu0 %8133
        %v8135 = vsel %vm3125, %v1082, 0.0
        %8136 = vadd.xlane.f32.xlu0 %v8135
        %v8137 = vpop.xlane.xlu0 %8136
        %v8138 = vsel %vm3125, %v1085, 0.0
        %8139 = vadd.xlane.f32.xlu0 %v8138
        %v8140 = vpop.xlane.xlu0 %8139
        %v8141 = vsel %vm3125, %v1088, 0.0
        %8142 = vadd.xlane.f32.xlu0 %v8141
        %v8143 = vpop.xlane.xlu0 %8142
        %v8144 = vrcp.pop 64.0
        %v8145 = vmul.f32 64.0, %v8144
        %v8146 = vsub.f32 1.0, %v8145
        %v8147 = vmul.f32 %v8144, %v8146
        %v8148 = vadd.f32 %v8144, %v8147
        %vm8149 = vweird.f32 %v8144
        %v8150 = vsel %vm8149, %v8144, %v8148
        %v8151 = vmul.f32 %v8098, %v8150
        %v8152 = vmul.f32 %v8101, %v8150
        %v8153 = vmul.f32 %v8104, %v8150
        %v8154 = vmul.f32 %v8107, %v8150
        %v8155 = vmul.f32 %v8110, %v8150
        %v8156 = vmul.f32 %v8113, %v8150
        %v8157 = vmul.f32 %v8116, %v8150
        %v8158 = vmul.f32 %v8119, %v8150
        %v8159 = vmul.f32 %v8122, %v8150
        %v8160 = vmul.f32 %v8125, %v8150
        %v8161 = vmul.f32 %v8128, %v8150
        %v8162 = vmul.f32 %v8131, %v8150
        %v8163 = vmul.f32 %v8134, %v8150
        %v8164 = vmul.f32 %v8137, %v8150
        %v8165 = vmul.f32 %v8140, %v8150
        %v8166 = vmul.f32 %v8143, %v8150
        %8183 = vrot.lane.b32.xlu0 %v1043, 64
        %v8184 = vpop.permute.xlu0 %8183
        %8185 = vrot.lane.b32.xlu0 %v1046, 64
        %v8186 = vpop.permute.xlu0 %8185
        %8187 = vrot.lane.b32.xlu0 %v1049, 64
        %v8188 = vpop.permute.xlu0 %8187
        %8189 = vrot.lane.b32.xlu0 %v1052, 64
        %v8190 = vpop.permute.xlu0 %8189
        %8191 = vrot.lane.b32.xlu0 %v1055, 64
        %v8192 = vpop.permute.xlu0 %8191
        %8193 = vrot.lane.b32.xlu0 %v1058, 64
        %v8194 = vpop.permute.xlu0 %8193
        %8195 = vrot.lane.b32.xlu0 %v1061, 64
        %v8196 = vpop.permute.xlu0 %8195
        %8197 = vrot.lane.b32.xlu0 %v1064, 64
        %v8198 = vpop.permute.xlu0 %8197
        %8199 = vrot.lane.b32.xlu0 %v1067, 64
        %v8200 = vpop.permute.xlu0 %8199
        %8201 = vrot.lane.b32.xlu0 %v1070, 64
        %v8202 = vpop.permute.xlu0 %8201
        %8203 = vrot.lane.b32.xlu0 %v1073, 64
        %v8204 = vpop.permute.xlu0 %8203
        %8205 = vrot.lane.b32.xlu0 %v1076, 64
        %v8206 = vpop.permute.xlu0 %8205
        %8207 = vrot.lane.b32.xlu0 %v1079, 64
        %v8208 = vpop.permute.xlu0 %8207
        %8209 = vrot.lane.b32.xlu0 %v1082, 64
        %v8210 = vpop.permute.xlu0 %8209
        %8211 = vrot.lane.b32.xlu0 %v1085, 64
        %v8212 = vpop.permute.xlu0 %8211
        %8213 = vrot.lane.b32.xlu0 %v1088, 64
        %v8214 = vpop.permute.xlu0 %8213
        %v8231 = vsel %vm3125, %v8184, 0.0
        %8232 = vadd.xlane.f32.xlu0 %v8231
        %v8233 = vpop.xlane.xlu0 %8232
        %v8234 = vsel %vm3125, %v8186, 0.0
        %8235 = vadd.xlane.f32.xlu0 %v8234
        %v8236 = vpop.xlane.xlu0 %8235
        %v8237 = vsel %vm3125, %v8188, 0.0
        %8238 = vadd.xlane.f32.xlu0 %v8237
        %v8239 = vpop.xlane.xlu0 %8238
        %v8240 = vsel %vm3125, %v8190, 0.0
        %8241 = vadd.xlane.f32.xlu0 %v8240
        %v8242 = vpop.xlane.xlu0 %8241
        %v8243 = vsel %vm3125, %v8192, 0.0
        %8244 = vadd.xlane.f32.xlu0 %v8243
        %v8245 = vpop.xlane.xlu0 %8244
        %v8246 = vsel %vm3125, %v8194, 0.0
        %8247 = vadd.xlane.f32.xlu0 %v8246
        %v8248 = vpop.xlane.xlu0 %8247
        %v8249 = vsel %vm3125, %v8196, 0.0
        %8250 = vadd.xlane.f32.xlu0 %v8249
        %v8251 = vpop.xlane.xlu0 %8250
        %v8252 = vsel %vm3125, %v8198, 0.0
        %8253 = vadd.xlane.f32.xlu0 %v8252
        %v8254 = vpop.xlane.xlu0 %8253
        %v8255 = vsel %vm3125, %v8200, 0.0
        %8256 = vadd.xlane.f32.xlu0 %v8255
        %v8257 = vpop.xlane.xlu0 %8256
        %v8258 = vsel %vm3125, %v8202, 0.0
        %8259 = vadd.xlane.f32.xlu0 %v8258
        %v8260 = vpop.xlane.xlu0 %8259
        %v8261 = vsel %vm3125, %v8204, 0.0
        %8262 = vadd.xlane.f32.xlu0 %v8261
        %v8263 = vpop.xlane.xlu0 %8262
        %v8264 = vsel %vm3125, %v8206, 0.0
        %8265 = vadd.xlane.f32.xlu0 %v8264
        %v8266 = vpop.xlane.xlu0 %8265
        %v8267 = vsel %vm3125, %v8208, 0.0
        %8268 = vadd.xlane.f32.xlu0 %v8267
        %v8269 = vpop.xlane.xlu0 %8268
        %v8270 = vsel %vm3125, %v8210, 0.0
        %8271 = vadd.xlane.f32.xlu0 %v8270
        %v8272 = vpop.xlane.xlu0 %8271
        %v8273 = vsel %vm3125, %v8212, 0.0
        %8274 = vadd.xlane.f32.xlu0 %v8273
        %v8275 = vpop.xlane.xlu0 %8274
        %v8276 = vsel %vm3125, %v8214, 0.0
        %8277 = vadd.xlane.f32.xlu0 %v8276
        %v8278 = vpop.xlane.xlu0 %8277
        %v8279 = vmul.f32 %v8233, %v8150
        %v8280 = vmul.f32 %v8236, %v8150
        %v8281 = vmul.f32 %v8239, %v8150
        %v8282 = vmul.f32 %v8242, %v8150
        %v8283 = vmul.f32 %v8245, %v8150
        %v8284 = vmul.f32 %v8248, %v8150
        %v8285 = vmul.f32 %v8251, %v8150
        %v8286 = vmul.f32 %v8254, %v8150
        %v8287 = vmul.f32 %v8257, %v8150
        %v8288 = vmul.f32 %v8260, %v8150
        %v8289 = vmul.f32 %v8263, %v8150
        %v8290 = vmul.f32 %v8266, %v8150
        %v8291 = vmul.f32 %v8269, %v8150
        %v8292 = vmul.f32 %v8272, %v8150
        %v8293 = vmul.f32 %v8275, %v8150
        %v8294 = vmul.f32 %v8278, %v8150
        %v8295 = vsel %vm3125, %v1156, 0.0
        %8296 = vadd.xlane.f32.xlu0 %v8295
        %v8297 = vpop.xlane.xlu0 %8296
        %v8298 = vsel %vm3125, %v1159, 0.0
        %8299 = vadd.xlane.f32.xlu0 %v8298
        %v8300 = vpop.xlane.xlu0 %8299
        %v8301 = vsel %vm3125, %v1162, 0.0
        %8302 = vadd.xlane.f32.xlu0 %v8301
        %v8303 = vpop.xlane.xlu0 %8302
        %v8304 = vsel %vm3125, %v1165, 0.0
        %8305 = vadd.xlane.f32.xlu0 %v8304
        %v8306 = vpop.xlane.xlu0 %8305
        %v8307 = vsel %vm3125, %v1168, 0.0
        %8308 = vadd.xlane.f32.xlu0 %v8307
        %v8309 = vpop.xlane.xlu0 %8308
        %v8310 = vsel %vm3125, %v1171, 0.0
        %8311 = vadd.xlane.f32.xlu0 %v8310
        %v8312 = vpop.xlane.xlu0 %8311
        %v8313 = vsel %vm3125, %v1174, 0.0
        %8314 = vadd.xlane.f32.xlu0 %v8313
        %v8315 = vpop.xlane.xlu0 %8314
        %v8316 = vsel %vm3125, %v1177, 0.0
        %8317 = vadd.xlane.f32.xlu0 %v8316
        %v8318 = vpop.xlane.xlu0 %8317
        %v8319 = vsel %vm3125, %v1180, 0.0
        %8320 = vadd.xlane.f32.xlu0 %v8319
        %v8321 = vpop.xlane.xlu0 %8320
        %v8322 = vsel %vm3125, %v1183, 0.0
        %8323 = vadd.xlane.f32.xlu0 %v8322
        %v8324 = vpop.xlane.xlu0 %8323
        %v8325 = vsel %vm3125, %v1186, 0.0
        %8326 = vadd.xlane.f32.xlu0 %v8325
        %v8327 = vpop.xlane.xlu0 %8326
        %v8328 = vsel %vm3125, %v1189, 0.0
        %8329 = vadd.xlane.f32.xlu0 %v8328
        %v8330 = vpop.xlane.xlu0 %8329
        %v8331 = vsel %vm3125, %v1192, 0.0
        %8332 = vadd.xlane.f32.xlu0 %v8331
        %v8333 = vpop.xlane.xlu0 %8332
        %v8334 = vsel %vm3125, %v1195, 0.0
        %8335 = vadd.xlane.f32.xlu0 %v8334
        %v8336 = vpop.xlane.xlu0 %8335
        %v8337 = vsel %vm3125, %v1198, 0.0
        %8338 = vadd.xlane.f32.xlu0 %v8337
        %v8339 = vpop.xlane.xlu0 %8338
        %v8340 = vsel %vm3125, %v1201, 0.0
        %8341 = vadd.xlane.f32.xlu0 %v8340
        %v8342 = vpop.xlane.xlu0 %8341
        %v8343 = vmul.f32 %v8297, %v8150
        %v8344 = vmul.f32 %v8300, %v8150
        %v8345 = vmul.f32 %v8303, %v8150
        %v8346 = vmul.f32 %v8306, %v8150
        %v8347 = vmul.f32 %v8309, %v8150
        %v8348 = vmul.f32 %v8312, %v8150
        %v8349 = vmul.f32 %v8315, %v8150
        %v8350 = vmul.f32 %v8318, %v8150
        %v8351 = vmul.f32 %v8321, %v8150
        %v8352 = vmul.f32 %v8324, %v8150
        %v8353 = vmul.f32 %v8327, %v8150
        %v8354 = vmul.f32 %v8330, %v8150
        %v8355 = vmul.f32 %v8333, %v8150
        %v8356 = vmul.f32 %v8336, %v8150
        %v8357 = vmul.f32 %v8339, %v8150
        %v8358 = vmul.f32 %v8342, %v8150
        %vm8359 = vcmask 7168
        %v8360 = vsel %vm8359, %v2499, %v5169
        %v8361 = vsel %vm8359, %v2500, %v5170
        %v8362 = vsel %vm8359, %v2501, %v5171
        %v8363 = vsel %vm8359, %v2502, %v5172
        %v8364 = vsel %vm8359, %v2503, %v5173
        %v8365 = vsel %vm8359, %v2504, %v5174
        %v8366 = vsel %vm8359, %v2505, %v5175
        %v8367 = vsel %vm8359, %v2506, %v5176
        %v8368 = vsel %vm8359, %v2507, %v5177
        %v8369 = vsel %vm8359, %v2508, %v5178
        %v8370 = vsel %vm8359, %v2509, %v5179
        %v8371 = vsel %vm8359, %v2510, %v5180
        %v8372 = vsel %vm8359, %v2511, %v5181
        %v8373 = vsel %vm8359, %v2512, %v5182
        %v8374 = vsel %vm8359, %v2513, %v5183
        %v8375 = vsel %vm8359, %v2514, %v5184
        %vm8376 = vcmask 15360
        %v8377 = vsel %vm8376, %v8360, %v7831
        %v8378 = vsel %vm8376, %v8361, %v7832
        %v8379 = vsel %vm8376, %v8362, %v7833
        %v8380 = vsel %vm8376, %v8363, %v7834
        %v8381 = vsel %vm8376, %v8364, %v7835
        %v8382 = vsel %vm8376, %v8365, %v7836
        %v8383 = vsel %vm8376, %v8366, %v7837
        %v8384 = vsel %vm8376, %v8367, %v7838
        %v8385 = vsel %vm8376, %v8368, %v7839
        %v8386 = vsel %vm8376, %v8369, %v7840
        %v8387 = vsel %vm8376, %v8370, %v7841
        %v8388 = vsel %vm8376, %v8371, %v7842
        %v8389 = vsel %vm8376, %v8372, %v7843
        %v8390 = vsel %vm8376, %v8373, %v7844
        %v8391 = vsel %vm8376, %v8374, %v7845
        %v8392 = vsel %vm8376, %v8375, %v7846
        %vm8393 = vcmask 23552
        %v8394 = vsel %vm8393, %v8377, %v7903
        %v8395 = vsel %vm8393, %v8378, %v7904
        %v8396 = vsel %vm8393, %v8379, %v7905
        %v8397 = vsel %vm8393, %v8380, %v7906
        %v8398 = vsel %vm8393, %v8381, %v7907
        %v8399 = vsel %vm8393, %v8382, %v7908
        %v8400 = vsel %vm8393, %v8383, %v7909
        %v8401 = vsel %vm8393, %v8384, %v7910
        %v8402 = vsel %vm8393, %v8385, %v7911
        %v8403 = vsel %vm8393, %v8386, %v7912
        %v8404 = vsel %vm8393, %v8387, %v7913
        %v8405 = vsel %vm8393, %v8388, %v7914
        %v8406 = vsel %vm8393, %v8389, %v7915
        %v8407 = vsel %vm8393, %v8390, %v7916
        %v8408 = vsel %vm8393, %v8391, %v7917
        %v8409 = vsel %vm8393, %v8392, %v7918
        %vm8410 = vcmask 31744
        %v8411 = vsel %vm8410, %v8394, %v8080
        %v8412 = vsel %vm8410, %v8395, %v8081
        %v8413 = vsel %vm8410, %v8396, %v8082
        %v8414 = vsel %vm8410, %v8397, %v8083
        %v8415 = vsel %vm8410, %v8398, %v8084
        %v8416 = vsel %vm8410, %v8399, %v8085
        %v8417 = vsel %vm8410, %v8400, %v8086
        %v8418 = vsel %vm8410, %v8401, %v8087
        %v8419 = vsel %vm8410, %v8402, %v8088
        %v8420 = vsel %vm8410, %v8403, %v8089
        %v8421 = vsel %vm8410, %v8404, %v8090
        %v8422 = vsel %vm8410, %v8405, %v8091
        %v8423 = vsel %vm8410, %v8406, %v8092
        %v8424 = vsel %vm8410, %v8407, %v8093
        %v8425 = vsel %vm8410, %v8408, %v8094
        %v8426 = vsel %vm8410, %v8409, %v8095
        %vm8427 = vcmask 39936
        %v8428 = vsel %vm8427, %v8411, %v8151
        %v8429 = vsel %vm8427, %v8412, %v8152
        %v8430 = vsel %vm8427, %v8413, %v8153
        %v8431 = vsel %vm8427, %v8414, %v8154
        %v8432 = vsel %vm8427, %v8415, %v8155
        %v8433 = vsel %vm8427, %v8416, %v8156
        %v8434 = vsel %vm8427, %v8417, %v8157
        %v8435 = vsel %vm8427, %v8418, %v8158
        %v8436 = vsel %vm8427, %v8419, %v8159
        %v8437 = vsel %vm8427, %v8420, %v8160
        %v8438 = vsel %vm8427, %v8421, %v8161
        %v8439 = vsel %vm8427, %v8422, %v8162
        %v8440 = vsel %vm8427, %v8423, %v8163
        %v8441 = vsel %vm8427, %v8424, %v8164
        %v8442 = vsel %vm8427, %v8425, %v8165
        %v8443 = vsel %vm8427, %v8426, %v8166
        %vm8444 = vcmask 48128
        %v8445 = vsel %vm8444, %v8428, %v8279
        %v8446 = vsel %vm8444, %v8429, %v8280
        %v8447 = vsel %vm8444, %v8430, %v8281
        %v8448 = vsel %vm8444, %v8431, %v8282
        %v8449 = vsel %vm8444, %v8432, %v8283
        %v8450 = vsel %vm8444, %v8433, %v8284
        %v8451 = vsel %vm8444, %v8434, %v8285
        %v8452 = vsel %vm8444, %v8435, %v8286
        %v8453 = vsel %vm8444, %v8436, %v8287
        %v8454 = vsel %vm8444, %v8437, %v8288
        %v8455 = vsel %vm8444, %v8438, %v8289
        %v8456 = vsel %vm8444, %v8439, %v8290
        %v8457 = vsel %vm8444, %v8440, %v8291
        %v8458 = vsel %vm8444, %v8441, %v8292
        %v8459 = vsel %vm8444, %v8442, %v8293
        %v8460 = vsel %vm8444, %v8443, %v8294
        %vm8461 = vcmask 56320
        %v8462 = vsel %vm8461, %v8445, %v8343
        %v8463 = vsel %vm8461, %v8446, %v8344
        %v8464 = vsel %vm8461, %v8447, %v8345
        %v8465 = vsel %vm8461, %v8448, %v8346
        %v8466 = vsel %vm8461, %v8449, %v8347
        %v8467 = vsel %vm8461, %v8450, %v8348
        %v8468 = vsel %vm8461, %v8451, %v8349
        %v8469 = vsel %vm8461, %v8452, %v8350
        %v8470 = vsel %vm8461, %v8453, %v8351
        %v8471 = vsel %vm8461, %v8454, %v8352
        %v8472 = vsel %vm8461, %v8455, %v8353
        %v8473 = vsel %vm8461, %v8456, %v8354
        %v8474 = vsel %vm8461, %v8457, %v8355
        %v8475 = vsel %vm8461, %v8458, %v8356
        %v8476 = vsel %vm8461, %v8459, %v8357
        %v8477 = vsel %vm8461, %v8460, %v8358
        %vm8478 = vcmask 64512
        %8479 = vst.msk [vmem:[%s309] sm:$0xff] %vm8478, %v8462
        %8480 = vst.msk [vmem:[%s309 + $0x8] sm:$0xff] %vm8478, %v8463
        %8481 = vst.msk [vmem:[%s309 + $0x10] sm:$0xff] %vm8478, %v8464
        %8482 = vst.msk [vmem:[%s309 + $0x18] sm:$0xff] %vm8478, %v8465
        %8483 = vst.msk [vmem:[%s309 + $0x20] sm:$0xff] %vm8478, %v8466
        %8484 = vst.msk [vmem:[%s309 + $0x28] sm:$0xff] %vm8478, %v8467
        %8485 = vst.msk [vmem:[%s309 + $0x30] sm:$0xff] %vm8478, %v8468
        %8486 = vst.msk [vmem:[%s309 + $0x38] sm:$0xff] %vm8478, %v8469
        %8487 = vst.msk [vmem:[%s309 + $0x40] sm:$0xff] %vm8478, %v8470
        %8488 = vst.msk [vmem:[%s309 + $0x48] sm:$0xff] %vm8478, %v8471
        %8489 = vst.msk [vmem:[%s309 + $0x50] sm:$0xff] %vm8478, %v8472
        %8490 = vst.msk [vmem:[%s309 + $0x58] sm:$0xff] %vm8478, %v8473
        %8491 = vst.msk [vmem:[%s309 + $0x60] sm:$0xff] %vm8478, %v8474
        %8492 = vst.msk [vmem:[%s309 + $0x68] sm:$0xff] %vm8478, %v8475
        %8493 = vst.msk [vmem:[%s309 + $0x70] sm:$0xff] %vm8478, %v8476
        %8494 = vst.msk [vmem:[%s309 + $0x78] sm:$0xff] %vm8478, %v8477
        %p8495 = scmp.lt.s32.totalorder %s19, 1
        %s8496 = scalar_select %p8495, %s19, 1
        %s8497 = smul.addr %s8496, 16
        %s8498 = smul.addr %s8497, 8
        %s8499 = scalar_lea.vmem %s7, %s8498
        // Predicated region
        $region53: #{mgn_forward.2} parent=47 // pred_check
          %p8500 = pneg %p194
        $region54: #{mgn_forward.2} parent=47 // pred_check_branch
          %8502 = sbr.rel (%p8500) target = $region56
        $region55: #{mgn_forward.2} parent=47 // pred_region
          _
        $region56: #{mgn_forward.2} parent=47 // pred_fallthru
          _
      $region48: #{mgn_forward.2} parent=5 // pred_fallthru
        _
      %p8503 = scmp.le.s32.totalorder 2, %s14
      // Predicated region
      $region57: #{mgn_forward.2} parent=5 // pred_check
        %p8504 = pneg %p8503
      $region58: #{mgn_forward.2} parent=5 // pred_check_branch
        %8506 = sbr.rel (%p8504) target = $region60
      $region59: #{mgn_forward.2} parent=5 // pred_region
        %s8507 = ssub.s32 %s14, 2
        // Predicated region
        $region61: #{mgn_forward.2} parent=59 // pred_check
          %p8508 = pneg %p200
        $region62: #{mgn_forward.2} parent=59 // pred_check_branch
          %8510 = sbr.rel (%p8508) target = $region64
        $region63: #{mgn_forward.2} parent=59 // pred_region
          %p8511 = scmp.lt.s32.totalorder %s20, 1
          %s8512 = scalar_select %p8511, %s20, 1
          %s8513 = smul.addr %s8512, 16
          %s8514 = smul.addr %s8513, 8
          %s8515 = scalar_lea.vmem %s7, %s8514
        $region64: #{mgn_forward.2} parent=59 // pred_fallthru
          _
      $region60: #{mgn_forward.2} parent=5 // pred_fallthru
        _
    $region6: #{mgn_forward.2} parent=1 // loop_footer
      %s18 = sadd.s32 1, %s14
    $region7: #{mgn_forward.2} parent=1 // loop_footer_branch
      %13 = sbr.rel target = $region3
    $region8: #{mgn_forward.2} parent=1 // loop_exit
      _
    %8516 = vsyncpa [#allocation3], 1
    %s8517 = scalar_lea.sflag [#allocation3], 1
    %8518 = vsyncpa %s8517, 1

</llo_original>
